<compile_context>
chip_gen: v5e
topology: v5e:2x2
jax: 0.10.0
libtpu: 0.0.40
codegen_flags: <defaults>
</compile_context>

<pallas_src>
import functools

import jax
import jax.numpy as jnp
from jax.experimental import pallas as pl
from jax.experimental.pallas import tpu as pltpu

_LANE = 128
_SUBLANE = 8


def _basic_block_kernel(H, W, Wa, x_ref, w1_ref, b1_ref, w2_ref, b2_ref, o_ref):
    """One image per grid step.

    x_ref : ((H+4)*Wa, Cp)  bf16 flattened, spatially padded input
    w1_ref: (9*Cp, Cp)      bf16 conv1 weights (BN1 scale folded), im2col order
    b1_ref: (1, Cp)         f32  BN1 bias
    w2_ref: (9*Cp, Cp)      bf16 conv2 weights (BN2 scale folded)
    b2_ref: (1, Cp)         f32  BN2 bias
    o_ref : (H*Wa, Cp)      f32  flattened output frame (lane-dense, unmasked stores)
    """
    M, Cp = o_ref.shape          # M = H * Wa

    x = x_ref[...]               # ((H+4)*Wa, Cp) bf16, loaded once

    def conv3x3_as_one_matmul(src, w_ref):
        # Output position g = h*Wa + w' needs input flat index
        #     g + (ky+1)*Wa + (kx-1)   for ky, kx in {0, 1, 2},
        # so every tap is a static slice of `src`.  Concatenate the 9 taps along
        # channels and contract with K = 9*Cp in a single MXU matmul.
        taps = []
        for ky in range(3):
            for kx in range(3):
                d = (ky + 1) * Wa + (kx - 1)
                taps.append(src[d:d + M, :])
        cols = jnp.concatenate(taps, axis=-1)                  # (M, 9*Cp) bf16
        return jnp.dot(cols, w_ref[...],
                       preferred_element_type=jnp.float32)     # (M, Cp) f32

    # ---- conv1 (+ folded BN1 scale) + BN1 bias + ReLU ----
    acc1 = conv3x3_as_one_matmul(x, w1_ref)
    pre1 = (acc1 + b1_ref[...]).reshape(H, Wa, Cp)
    # Single select fuses ReLU with zeroing of the left/right conv-padding and
    # width-alignment columns (so they cannot contaminate conv2's edge taps).
    col = jax.lax.broadcasted_iota(jnp.int32, (H, Wa, Cp), 1)
    interior = jnp.logical_and(col >= 1, col <= W)
    h1 = jnp.where(interior, jnp.maximum(pre1, 0.0), 0.0).reshape(M, Cp)

    # Re-create the padded-row layout for conv2's input (only 2 small zero
    # blocks, no full-buffer zero fill, no VMEM store/load round trip).
    zrows = jnp.zeros((2 * Wa, Cp), jnp.bfloat16)
    mid = jnp.concatenate([zrows, h1.astype(jnp.bfloat16), zrows], axis=0)

    # ---- conv2 (+ folded BN2 scale) + BN2 bias + identity + ReLU ----
    acc2 = conv3x3_as_one_matmul(mid, w2_ref)
    identity = x[2 * Wa:2 * Wa + M, :].astype(jnp.float32)     # aligned slice of x
    out = jnp.maximum(acc2 + b2_ref[...] + identity, 0.0)

    # Store the full flattened frame (lane-dense, unmasked, contiguous); padded
    # columns / channels are dropped by XLA in the wrapper.
    o_ref[...] = out.astype(o_ref.dtype)


def basic_block(x_nchw, w1_oihw, bn1, w2_oihw, bn2, eps=1e-5):
    """Forward of BasicBlock (stride=1, inplanes==planes), eval-mode BatchNorm.

    x_nchw : (N, C, H, W) float32
    w*_oihw: (C, C, 3, 3) float32 conv weights (PyTorch OIHW convention)
    bn*    : dict(gamma, beta, mean, var) each of shape (C,)
    """
    N, C, H, W = x_nchw.shape
    assert w1_oihw.shape[0] == C and w2_oihw.shape[0] == C, \
        "identity add requires inplanes == planes (stride=1)"

    Cp = ((C + _LANE - 1) // _LANE) * _LANE                     # lane-dense channels
    Wa = ((W + 2 + _SUBLANE - 1) // _SUBLANE) * _SUBLANE        # aligned padded width
    LF = (H + 4) * Wa                                           # flattened padded rows
    M = H * Wa                                                  # flattened output rows

    # Activations: NCHW -> NHWC, bf16, pad (rows 2/2, cols 1/rest, channels), flatten.
    x = jnp.transpose(x_nchw, (0, 2, 3, 1)).astype(jnp.bfloat16)
    x = jnp.pad(x, ((0, 0), (2, 2), (1, Wa - W - 1), (0, Cp - C)))
    x_flat = x.reshape(N, LF, Cp)

    # Fold BN scale into conv weights (wrapper-side constant folding); keep bias.
    def fold(w_oihw, bn):
        scale = bn["gamma"] / jnp.sqrt(bn["var"] + eps)                 # (C,)
        bias = bn["beta"] - bn["mean"] * scale                          # (C,)
        w = w_oihw.astype(jnp.float32) * scale[:, None, None, None]     # scale out-ch
        w = jnp.transpose(w, (2, 3, 1, 0))                              # (3,3,Cin,Cout)
        w = jnp.pad(w, ((0, 0), (0, 0), (0, Cp - C), (0, Cp - C)))
        w = w.reshape(9 * Cp, Cp).astype(jnp.bfloat16)                  # im2col order
        b = jnp.pad(bias, (0, Cp - C)).reshape(1, Cp).astype(jnp.float32)
        return w, b

    w1m, b1v = fold(w1_oihw, bn1)
    w2m, b2v = fold(w2_oihw, bn2)

    out_flat = pl.pallas_call(
        functools.partial(_basic_block_kernel, H, W, Wa),
        out_shape=jax.ShapeDtypeStruct((N, M, Cp), jnp.float32),
        grid=(N,),
        in_specs=[
            pl.BlockSpec((None, LF, Cp), lambda b: (b, 0, 0)),
            pl.BlockSpec((9 * Cp, Cp), lambda b: (0, 0)),
            pl.BlockSpec((1, Cp), lambda b: (0, 0)),
            pl.BlockSpec((9 * Cp, Cp), lambda b: (0, 0)),
            pl.BlockSpec((1, Cp), lambda b: (0, 0)),
        ],
        out_specs=pl.BlockSpec((None, M, Cp), lambda b: (b, 0, 0)),
        compiler_params=pltpu.CompilerParams(
            dimension_semantics=("parallel",),
            vmem_limit_bytes=32 * 1024 * 1024),
    )(x_flat, w1m, b1v, w2m, b2v)

    # De-pad (XLA side): drop left/right alignment columns & channel padding,
    # then NHWC -> NCHW.
    out = out_flat.reshape(N, H, Wa, Cp)[:, :, 1:W + 1, :C]
    return jnp.transpose(out, (0, 3, 1, 2))


def _reference(x_nchw, w1, bn1, w2, bn2, eps=1e-5):
    """Plain-JAX f32 reference (eval-mode BN) for a correctness check."""
    def conv(x, w):
        return jax.lax.conv_general_dilated(
            x, w, window_strides=(1, 1), padding=((1, 1), (1, 1)),
            dimension_numbers=("NCHW", "OIHW", "NCHW"))

    def bn(x, p):
        s = (p["gamma"] / jnp.sqrt(p["var"] + eps)).reshape(1, -1, 1, 1)
        b = (p["beta"] - p["mean"] * p["gamma"] / jnp.sqrt(p["var"] + eps)
             ).reshape(1, -1, 1, 1)
        return x * s + b

    out = jax.nn.relu(bn(conv(x_nchw, w1), bn1))
    out = bn(conv(out, w2), bn2) + x_nchw
    return jax.nn.relu(out)


if __name__ == "__main__":
    key = jax.random.PRNGKey(0)
    N, C, H, W = 2, 8, 16, 16   # inplanes == planes == 8, stride == 1

    ks = jax.random.split(key, 9)
    x = jax.random.normal(ks[0], (N, C, H, W), jnp.float32)

    # conv weights in PyTorch OIHW convention
    w1 = jax.random.normal(ks[1], (C, C, 3, 3), jnp.float32) * 0.1
    w2 = jax.random.normal(ks[2], (C, C, 3, 3), jnp.float32) * 0.1

    bn1 = dict(
        gamma=1.0 + 0.1 * jax.random.normal(ks[3], (C,), jnp.float32),
        beta=0.1 * jax.random.normal(ks[4], (C,), jnp.float32),
        mean=0.1 * jax.random.normal(ks[5], (C,), jnp.float32),
        var=jnp.abs(jax.random.normal(ks[6], (C,), jnp.float32)) + 0.5,
    )
    bn2 = dict(
        gamma=1.0 + 0.1 * jax.random.normal(ks[7], (C,), jnp.float32),
        beta=0.1 * jax.random.normal(ks[8], (C,), jnp.float32),
        mean=jnp.zeros((C,), jnp.float32),
        var=jnp.ones((C,), jnp.float32),
    )

    out = basic_block(x, w1, bn1, w2, bn2)
    out = jax.block_until_ready(out)

    ref = _reference(x, w1, bn1, w2, bn2)
    assert out.shape == (N, C, H, W)
    # bf16 conv operands (f32 accumulation) -> loosened tolerance vs f32 reference.
    assert jnp.allclose(out, ref, atol=5e-2, rtol=5e-2), \
        f"max err {jnp.max(jnp.abs(out - ref))}"

    print("KERNEL_OK")
</pallas_src>

<mosaic_0001>
module attributes {stable_mosaic.version = 11 : i64} {
  func.func @_basic_block_kernel(%arg0: i32, %arg1: memref<1x480x128xbf16, #tpu.memory_space<vmem>>, %arg2: memref<1152x128xbf16, #tpu.memory_space<vmem>>, %arg3: memref<1x128xf32, #tpu.memory_space<vmem>>, %arg4: memref<1152x128xbf16, #tpu.memory_space<vmem>>, %arg5: memref<1x128xf32, #tpu.memory_space<vmem>>, %arg6: memref<1x384x128xf32, #tpu.memory_space<vmem>>) attributes {dimension_semantics = [#tpu.dimension_semantics<parallel>], iteration_bounds = array<i64: 2>, scalar_prefetch = 0 : i64, scratch_operands = 0 : i64, tpu.core_type = #tpu.core_type<tc>, window_params = [{transform_indices = @transform_0, window_bounds = array<i64: 1, 480, 128>}, {pipeline_mode = #tpu.pipeline_mode<synchronous>, transform_indices = @transform_1, window_bounds = array<i64: 1152, 128>}, {pipeline_mode = #tpu.pipeline_mode<synchronous>, transform_indices = @transform_2, window_bounds = array<i64: 1, 128>}, {pipeline_mode = #tpu.pipeline_mode<synchronous>, transform_indices = @transform_3, window_bounds = array<i64: 1152, 128>}, {pipeline_mode = #tpu.pipeline_mode<synchronous>, transform_indices = @transform_4, window_bounds = array<i64: 1, 128>}, {transform_indices = @transform_5, window_bounds = array<i64: 1, 384, 128>}]} {
    %c0 = arith.constant 0 : index
    %c0_0 = arith.constant 0 : index
    %c0_1 = arith.constant 0 : index
    %0 = vector.load %arg1[%c0, %c0_0, %c0_1] : memref<1x480x128xbf16, #tpu.memory_space<vmem>>, vector<1x480x128xbf16>
    %1 = vector.shape_cast %0 : vector<1x480x128xbf16> to vector<480x128xbf16>
    %2 = vector.extract_strided_slice %1 {offsets = [23, 0], sizes = [384, 128], strides = [1, 1]} : vector<480x128xbf16> to vector<384x128xbf16>
    %3 = vector.extract_strided_slice %1 {offsets = [24, 0], sizes = [384, 128], strides = [1, 1]} : vector<480x128xbf16> to vector<384x128xbf16>
    %4 = vector.extract_strided_slice %1 {offsets = [25, 0], sizes = [384, 128], strides = [1, 1]} : vector<480x128xbf16> to vector<384x128xbf16>
    %5 = vector.extract_strided_slice %1 {offsets = [47, 0], sizes = [384, 128], strides = [1, 1]} : vector<480x128xbf16> to vector<384x128xbf16>
    %6 = vector.extract_strided_slice %1 {offsets = [48, 0], sizes = [384, 128], strides = [1, 1]} : vector<480x128xbf16> to vector<384x128xbf16>
    %7 = vector.extract_strided_slice %1 {offsets = [49, 0], sizes = [384, 128], strides = [1, 1]} : vector<480x128xbf16> to vector<384x128xbf16>
    %8 = vector.extract_strided_slice %1 {offsets = [71, 0], sizes = [384, 128], strides = [1, 1]} : vector<480x128xbf16> to vector<384x128xbf16>
    %9 = vector.extract_strided_slice %1 {offsets = [72, 0], sizes = [384, 128], strides = [1, 1]} : vector<480x128xbf16> to vector<384x128xbf16>
    %10 = vector.extract_strided_slice %1 {offsets = [73, 0], sizes = [384, 128], strides = [1, 1]} : vector<480x128xbf16> to vector<384x128xbf16>
    %11 = tpu.concatenate %2, %3, %4, %5, %6, %7, %8, %9, %10 in 1 : vector<384x128xbf16>, vector<384x128xbf16>, vector<384x128xbf16>, vector<384x128xbf16>, vector<384x128xbf16>, vector<384x128xbf16>, vector<384x128xbf16>, vector<384x128xbf16>, vector<384x128xbf16> -> vector<384x1152xbf16>
    %c0_2 = arith.constant 0 : index
    %c0_3 = arith.constant 0 : index
    %12 = vector.load %arg2[%c0_2, %c0_3] : memref<1152x128xbf16, #tpu.memory_space<vmem>>, vector<1152x128xbf16>
    %cst = arith.constant dense<0.000000e+00> : vector<384x128xf32>
    %13 = tpu.matmul %11, %12, %cst {dimension_numbers = #tpu.dot_dimension_numbers<[1], [0], [0], [1], [0, 0, 1, 1], [], []>} : vector<384x1152xbf16>, vector<1152x128xbf16>, vector<384x128xf32> -> vector<384x128xf32>
    %c0_4 = arith.constant 0 : index
    %c0_5 = arith.constant 0 : index
    %14 = vector.load %arg3[%c0_4, %c0_5] : memref<1x128xf32, #tpu.memory_space<vmem>>, vector<1x128xf32>
    %15 = vector.broadcast %14 : vector<1x128xf32> to vector<384x128xf32>
    %16 = arith.addf %13, %15 : vector<384x128xf32>
    %17 = vector.shape_cast %16 : vector<384x128xf32> to vector<16x24x128xf32>
    %18 = tpu.iota {dimensions = array<i32: 1>} : vector<16x24x128xi32>
    %c1_i32 = arith.constant 1 : i32
    %19 = vector.broadcast %c1_i32 : i32 to vector<16x24x128xi32>
    %20 = arith.cmpi sge, %18, %19 : vector<16x24x128xi32>
    %c16_i32 = arith.constant 16 : i32
    %21 = vector.broadcast %c16_i32 : i32 to vector<16x24x128xi32>
    %22 = arith.cmpi sle, %18, %21 : vector<16x24x128xi32>
    %23 = arith.andi %20, %22 : vector<16x24x128xi1>
    %cst_6 = arith.constant 0.000000e+00 : f32
    %24 = vector.broadcast %cst_6 : f32 to vector<16x24x128xf32>
    %25 = arith.maximumf %17, %24 : vector<16x24x128xf32>
    %cst_7 = arith.constant 0.000000e+00 : f32
    %26 = vector.broadcast %cst_7 : f32 to vector<16x24x128xf32>
    %27 = arith.select %23, %25, %26 : vector<16x24x128xi1>, vector<16x24x128xf32>
    %28 = vector.shape_cast %27 : vector<16x24x128xf32> to vector<384x128xf32>
    %cst_8 = arith.constant 0.000000e+00 : bf16
    %29 = vector.broadcast %cst_8 : bf16 to vector<48x128xbf16>
    %30 = arith.truncf %28 : vector<384x128xf32> to vector<384x128xbf16>
    %31 = tpu.concatenate %29, %30, %29 in 0 : vector<48x128xbf16>, vector<384x128xbf16>, vector<48x128xbf16> -> vector<480x128xbf16>
    %32 = vector.extract_strided_slice %31 {offsets = [23, 0], sizes = [384, 128], strides = [1, 1]} : vector<480x128xbf16> to vector<384x128xbf16>
    %33 = vector.extract_strided_slice %31 {offsets = [24, 0], sizes = [384, 128], strides = [1, 1]} : vector<480x128xbf16> to vector<384x128xbf16>
    %34 = vector.extract_strided_slice %31 {offsets = [25, 0], sizes = [384, 128], strides = [1, 1]} : vector<480x128xbf16> to vector<384x128xbf16>
    %35 = vector.extract_strided_slice %31 {offsets = [47, 0], sizes = [384, 128], strides = [1, 1]} : vector<480x128xbf16> to vector<384x128xbf16>
    %36 = vector.extract_strided_slice %31 {offsets = [48, 0], sizes = [384, 128], strides = [1, 1]} : vector<480x128xbf16> to vector<384x128xbf16>
    %37 = vector.extract_strided_slice %31 {offsets = [49, 0], sizes = [384, 128], strides = [1, 1]} : vector<480x128xbf16> to vector<384x128xbf16>
    %38 = vector.extract_strided_slice %31 {offsets = [71, 0], sizes = [384, 128], strides = [1, 1]} : vector<480x128xbf16> to vector<384x128xbf16>
    %39 = vector.extract_strided_slice %31 {offsets = [72, 0], sizes = [384, 128], strides = [1, 1]} : vector<480x128xbf16> to vector<384x128xbf16>
    %40 = vector.extract_strided_slice %31 {offsets = [73, 0], sizes = [384, 128], strides = [1, 1]} : vector<480x128xbf16> to vector<384x128xbf16>
    %41 = tpu.concatenate %32, %33, %34, %35, %36, %37, %38, %39, %40 in 1 : vector<384x128xbf16>, vector<384x128xbf16>, vector<384x128xbf16>, vector<384x128xbf16>, vector<384x128xbf16>, vector<384x128xbf16>, vector<384x128xbf16>, vector<384x128xbf16>, vector<384x128xbf16> -> vector<384x1152xbf16>
    %c0_9 = arith.constant 0 : index
    %c0_10 = arith.constant 0 : index
    %42 = vector.load %arg4[%c0_9, %c0_10] : memref<1152x128xbf16, #tpu.memory_space<vmem>>, vector<1152x128xbf16>
    %cst_11 = arith.constant dense<0.000000e+00> : vector<384x128xf32>
    %43 = tpu.matmul %41, %42, %cst_11 {dimension_numbers = #tpu.dot_dimension_numbers<[1], [0], [0], [1], [0, 0, 1, 1], [], []>} : vector<384x1152xbf16>, vector<1152x128xbf16>, vector<384x128xf32> -> vector<384x128xf32>
    %44 = vector.extract_strided_slice %1 {offsets = [48, 0], sizes = [384, 128], strides = [1, 1]} : vector<480x128xbf16> to vector<384x128xbf16>
    %45 = arith.extf %44 : vector<384x128xbf16> to vector<384x128xf32>
    %c0_12 = arith.constant 0 : index
    %c0_13 = arith.constant 0 : index
    %46 = vector.load %arg5[%c0_12, %c0_13] : memref<1x128xf32, #tpu.memory_space<vmem>>, vector<1x128xf32>
    %47 = vector.broadcast %46 : vector<1x128xf32> to vector<384x128xf32>
    %48 = arith.addf %43, %47 : vector<384x128xf32>
    %49 = arith.addf %48, %45 : vector<384x128xf32>
    %cst_14 = arith.constant 0.000000e+00 : f32
    %50 = vector.broadcast %cst_14 : f32 to vector<384x128xf32>
    %51 = arith.maximumf %49, %50 : vector<384x128xf32>
    %c0_15 = arith.constant 0 : index
    %c0_16 = arith.constant 0 : index
    %c0_17 = arith.constant 0 : index
    %52 = vector.load %arg6[%c0_15, %c0_16, %c0_17] : memref<1x384x128xf32, #tpu.memory_space<vmem>>, vector<1x384x128xf32>
    %53 = vector.shape_cast %52 : vector<1x384x128xf32> to vector<384x128xf32>
    %54 = vector.shape_cast %51 : vector<384x128xf32> to vector<1x384x128xf32>
    tpu.vector_store %arg6[%c0_15, %c0_16, %c0_17], %54 {strides = array<i32>} : memref<1x384x128xf32, #tpu.memory_space<vmem>>, vector<1x384x128xf32>,
    return
  }
  func.func @transform_0(%arg0: i32) -> (i32, i32, i32) {
    %c0_i32 = arith.constant 0 : i32
    %c0_i32_0 = arith.constant 0 : i32
    %c0_i32_1 = arith.constant 0 : i32
    return %arg0, %c0_i32, %c0_i32_0 : i32, i32, i32
  }
  func.func @transform_1(%arg0: i32) -> (i32, i32) {
    %c0_i32 = arith.constant 0 : i32
    %c0_i32_0 = arith.constant 0 : i32
    %c0_i32_1 = arith.constant 0 : i32
    return %c0_i32, %c0_i32_0 : i32, i32
  }
  func.func @transform_2(%arg0: i32) -> (i32, i32) {
    %c0_i32 = arith.constant 0 : i32
    %c0_i32_0 = arith.constant 0 : i32
    %c0_i32_1 = arith.constant 0 : i32
    return %c0_i32, %c0_i32_0 : i32, i32
  }
  func.func @transform_3(%arg0: i32) -> (i32, i32) {
    %c0_i32 = arith.constant 0 : i32
    %c0_i32_0 = arith.constant 0 : i32
    %c0_i32_1 = arith.constant 0 : i32
    return %c0_i32, %c0_i32_0 : i32, i32
  }
  func.func @transform_4(%arg0: i32) -> (i32, i32) {
    %c0_i32 = arith.constant 0 : i32
    %c0_i32_0 = arith.constant 0 : i32
    %c0_i32_1 = arith.constant 0 : i32
    return %c0_i32, %c0_i32_0 : i32, i32
  }
  func.func @transform_5(%arg0: i32) -> (i32, i32, i32) {
    %c0_i32 = arith.constant 0 : i32
    %c0_i32_0 = arith.constant 0 : i32
    %c0_i32_1 = arith.constant 0 : i32
    return %arg0, %c0_i32, %c0_i32_0 : i32, i32, i32
  }
}

</mosaic_0001>

<llo_original>
// kernel: tpu_custom_call.1
$region0: #{tpu_custom_call.1}
  #allocation0 [shape = 'u32[]', space=smem, size = 0x4, offset = 0x4, fixed_abs, tag = 'smem constant byte address 0x4 - core index']
  #allocation1 [shape = 'u32[72,128]{1,0:T(1,128)}', space=vmem, size = 0x9000, scoped, tag = 'internal scratch']
  %s0 = inlined_call_operand.hbm [shape: bf16[2,480,128], index: 0, kind: input, shape index: {}]
  %s1 = inlined_call_operand.hbm [shape: bf16[1152,128], index: 1, kind: input, shape index: {}]
  %s2 = inlined_call_operand.vmem [shape: f32[1,128], index: 2, kind: input, shape index: {}]
  %s3 = inlined_call_operand.hbm [shape: bf16[1152,128], index: 3, kind: input, shape index: {}]
  %s4 = inlined_call_operand.vmem [shape: f32[1,128], index: 4, kind: input, shape index: {}]
  %s5 = inlined_call_operand.hbm [shape: f32[2,384,128], index: 5, kind: output, shape index: {}]
  %s6 = sld [smem:[#allocation0]]
  $region65: #{tpu_custom_call.1} parent=0
    _
  %s8 = ssub.s32 1, %s6
  %s9 = scalar_select 0, %s8, %s6
  $region1: #{tpu_custom_call.1} parent=0
    #allocation2 [shape = 'u8[245760]{0}', space=vmem, size = 0x3c000, scoped, tag = 'input window, operand 0']
    #allocation3 [shape = 's32[2]{0}', space=sflag, size = 0x8, scoped, tag = 'scoped memory for tpu_custom_call.1']
    #allocation4 [shape = 's32[2]{0}', space=sflag, size = 0x8, scoped, tag = 'scoped memory for tpu_custom_call.1']
    #allocation5 [shape = 'u8[294912]{0}', space=vmem, size = 0x48000, scoped, tag = 'input window, operand 1, single buffered']
    #allocation6 [shape = 's32[1]{0}', space=sflag, size = 0x4, scoped, tag = 'scoped memory for tpu_custom_call.1']
    #allocation7 [shape = 'u8[294912]{0}', space=vmem, size = 0x48000, scoped, tag = 'input window, operand 3, single buffered']
    #allocation8 [shape = 'u8[393216]{0}', space=vmem, size = 0x60000, scoped, tag = 'output window, operand 0']
    %10 = vsyncpa [#allocation3], 0
    %s11 = scalar_lea.sflag [#allocation3], 1
    %12 = vsyncpa %s11, 0
    %13 = vsyncpa [#allocation6], 0
    %14 = vsyncpa [#allocation4], 0
    %s15 = scalar_lea.sflag [#allocation4], 1
    %16 = vsyncpa %s15, 0
    loop: start=0, step=1, limit=4
    $region2: #{tpu_custom_call.1} parent=1 // loop_pre_header
      _
    $region3: #{tpu_custom_call.1} parent=1 // loop_header
      %s18 = sphi 0, %s22
      %p19 = scmp.ge.s32.totalorder %s18, 4
      %s28 = sphi 0, %s30
      %s31 = sphi 0, %s28
      %s32 = sphi 0, %s31
      %s48 = sphi 0, %s32
      %s52 = sphi 0, %s52
      %s54 = sphi 0, %s52
      %s55 = sphi 0, %s54
      %s69 = sphi 0, %s55
      %s73 = sphi 0, %s73
      %s75 = sphi 0, %s73
      %s76 = sphi 0, %s75
      %s90 = sphi 0, %s76
      %s94 = sphi 0, %s94
      %s96 = sphi 0, %s94
      %s97 = sphi 0, %s96
      %s111 = sphi 0, %s97
      %s115 = sphi 0, %s115
      %s117 = sphi 0, %s115
      %s118 = sphi 0, %s117
      %s132 = sphi 0, %s118
      %s138 = sphi 0, %s140
      %s141 = sphi 0, %s138
      %s142 = sphi 0, %s141
      %s158 = sphi 0, %s142
    $region4: #{tpu_custom_call.1} parent=1 // loop_header_branch
      %21 = sbr.rel (%p19) target = $region8
    $region5: #{tpu_custom_call.1} parent=1 // loop_body
      %s23 = ssub.s32 %s18, 1
      %s24 = ssub.s32 %s18, 2
      %s25 = sadd.s32 %s18, 1
      %s26 = ssub.s32 %s18, %s25
      %p27 = scmp.eq.s32.totalorder %s26, 0
      %s29 = sadd.s32 %s28, 1
      %s30 = scalar_select %p27, %s28, %s29
      %p33 = pneg %p27
      %p34 = scmp.eq.s32.totalorder %s18, 1
      %p35 = por %p33, %p34
      %p36 = scmp.ne.s32.totalorder %s28, %s31
      %p37 = scmp.eq.s32.totalorder %s18, 0
      %p38 = por %p36, %p37
      %p39 = scmp.ne.s32.totalorder %s28, %s31
      %p40 = scmp.eq.s32.totalorder %s23, 1
      %p41 = por %p39, %p40
      %p42 = scmp.ne.s32.totalorder %s31, %s32
      %p43 = scmp.eq.s32.totalorder %s23, 0
      %p44 = por %p42, %p43
      %p45 = scmp.ne.s32.totalorder %s31, %s32
      %p46 = scmp.eq.s32.totalorder %s24, 1
      %p47 = por %p45, %p46
      %p49 = scmp.ne.s32.totalorder %s32, %s48
      %p50 = scmp.eq.s32.totalorder %s24, 0
      %p51 = por %p49, %p50
      %s53 = sadd.s32 %s52, 1
      %p56 = scmp.eq.s32.totalorder %s18, 1
      %p57 = scmp.ne.s32.totalorder %s52, %s54
      %p58 = scmp.eq.s32.totalorder %s18, 0
      %p59 = por %p57, %p58
      %p60 = scmp.ne.s32.totalorder %s52, %s54
      %p61 = scmp.eq.s32.totalorder %s23, 1
      %p62 = por %p60, %p61
      %p63 = scmp.ne.s32.totalorder %s54, %s55
      %p64 = scmp.eq.s32.totalorder %s23, 0
      %p65 = por %p63, %p64
      %p66 = scmp.ne.s32.totalorder %s54, %s55
      %p67 = scmp.eq.s32.totalorder %s24, 1
      %p68 = por %p66, %p67
      %p70 = scmp.ne.s32.totalorder %s55, %s69
      %p71 = scmp.eq.s32.totalorder %s24, 0
      %p72 = por %p70, %p71
      %s74 = sadd.s32 %s73, 1
      %p77 = scmp.eq.s32.totalorder %s18, 1
      %p78 = scmp.ne.s32.totalorder %s73, %s75
      %p79 = scmp.eq.s32.totalorder %s18, 0
      %p80 = por %p78, %p79
      %p81 = scmp.ne.s32.totalorder %s73, %s75
      %p82 = scmp.eq.s32.totalorder %s23, 1
      %p83 = por %p81, %p82
      %p84 = scmp.ne.s32.totalorder %s75, %s76
      %p85 = scmp.eq.s32.totalorder %s23, 0
      %p86 = por %p84, %p85
      %p87 = scmp.ne.s32.totalorder %s75, %s76
      %p88 = scmp.eq.s32.totalorder %s24, 1
      %p89 = por %p87, %p88
      %p91 = scmp.ne.s32.totalorder %s76, %s90
      %p92 = scmp.eq.s32.totalorder %s24, 0
      %p93 = por %p91, %p92
      %s95 = sadd.s32 %s94, 1
      %p98 = scmp.eq.s32.totalorder %s18, 1
      %p99 = scmp.ne.s32.totalorder %s94, %s96
      %p100 = scmp.eq.s32.totalorder %s18, 0
      %p101 = por %p99, %p100
      %p102 = scmp.ne.s32.totalorder %s94, %s96
      %p103 = scmp.eq.s32.totalorder %s23, 1
      %p104 = por %p102, %p103
      %p105 = scmp.ne.s32.totalorder %s96, %s97
      %p106 = scmp.eq.s32.totalorder %s23, 0
      %p107 = por %p105, %p106
      %p108 = scmp.ne.s32.totalorder %s96, %s97
      %p109 = scmp.eq.s32.totalorder %s24, 1
      %p110 = por %p108, %p109
      %p112 = scmp.ne.s32.totalorder %s97, %s111
      %p113 = scmp.eq.s32.totalorder %s24, 0
      %p114 = por %p112, %p113
      %s116 = sadd.s32 %s115, 1
      %p119 = scmp.eq.s32.totalorder %s18, 1
      %p120 = scmp.ne.s32.totalorder %s115, %s117
      %p121 = scmp.eq.s32.totalorder %s18, 0
      %p122 = por %p120, %p121
      %p123 = scmp.ne.s32.totalorder %s115, %s117
      %p124 = scmp.eq.s32.totalorder %s23, 1
      %p125 = por %p123, %p124
      %p126 = scmp.ne.s32.totalorder %s117, %s118
      %p127 = scmp.eq.s32.totalorder %s23, 0
      %p128 = por %p126, %p127
      %p129 = scmp.ne.s32.totalorder %s117, %s118
      %p130 = scmp.eq.s32.totalorder %s24, 1
      %p131 = por %p129, %p130
      %p133 = scmp.ne.s32.totalorder %s118, %s132
      %p134 = scmp.eq.s32.totalorder %s24, 0
      %p135 = por %p133, %p134
      %s136 = ssub.s32 %s18, %s25
      %p137 = scmp.eq.s32.totalorder %s136, 0
      %s139 = sadd.s32 %s138, 1
      %s140 = scalar_select %p137, %s138, %s139
      %p143 = pneg %p137
      %p144 = scmp.eq.s32.totalorder %s18, 1
      %p145 = por %p143, %p144
      %p146 = scmp.ne.s32.totalorder %s138, %s141
      %p147 = scmp.eq.s32.totalorder %s18, 0
      %p148 = por %p146, %p147
      %p149 = scmp.ne.s32.totalorder %s138, %s141
      %p150 = scmp.eq.s32.totalorder %s23, 1
      %p151 = por %p149, %p150
      %p152 = scmp.ne.s32.totalorder %s141, %s142
      %p153 = scmp.eq.s32.totalorder %s23, 0
      %p154 = por %p152, %p153
      %p155 = scmp.ne.s32.totalorder %s141, %s142
      %p156 = scmp.eq.s32.totalorder %s24, 1
      %p157 = por %p155, %p156
      %p159 = scmp.ne.s32.totalorder %s142, %s158
      %p160 = scmp.eq.s32.totalorder %s24, 0
      %p161 = por %p159, %p160
      %p162 = scmp.le.s32.totalorder 1, %s18
      %p163 = scmp.lt.s32.totalorder %s18, 3
      %p164 = pnand %p162, %p163
      %p165 = pneg %p164
      // Predicated region
      $region9: #{tpu_custom_call.1} parent=5 // pred_check
        _
      $region10: #{tpu_custom_call.1} parent=5 // pred_check_branch
        %167 = sbr.rel (%p164) target = $region12
      $region11: #{tpu_custom_call.1} parent=5 // pred_region
        %s168 = ssub.s32 %s18, 1
        // Predicated region
        $region13: #{tpu_custom_call.1} parent=11 // pred_check
          %p169 = pneg %p65
        $region14: #{tpu_custom_call.1} parent=11 // pred_check_branch
          %171 = sbr.rel (%p169) target = $region16
        $region15: #{tpu_custom_call.1} parent=11 // pred_region
          %173 = vsyncadd [#allocation6], 0
          %s174 = sshll.u32 %s1, 4
          %s175 = int_to_ptr.hbm [resolvable:$true] %s174
          %s176 = sshll.u32 [#allocation5], 4
          %s177 = int_to_ptr.vmem [resolvable:$true] %s176
          %182 = dma.hbm_to_vmem [thread:$0]  %s175, 9216, %s177, [#allocation6], 64, 64, 4
        $region16: #{tpu_custom_call.1} parent=11 // pred_fallthru
          _
        // Predicated region
        $region17: #{tpu_custom_call.1} parent=11 // pred_check
          %p183 = pneg %p86
        $region18: #{tpu_custom_call.1} parent=11 // pred_check_branch
          %185 = sbr.rel (%p183) target = $region20
        $region19: #{tpu_custom_call.1} parent=11 // pred_region
          _
        $region20: #{tpu_custom_call.1} parent=11 // pred_fallthru
          _
        // Predicated region
        $region21: #{tpu_custom_call.1} parent=11 // pred_check
          %p186 = pneg %p107
        $region22: #{tpu_custom_call.1} parent=11 // pred_check_branch
          %188 = sbr.rel (%p186) target = $region24
        $region23: #{tpu_custom_call.1} parent=11 // pred_region
          %190 = vsyncadd [#allocation6], 0
          %s191 = sshll.u32 %s3, 4
          %s192 = int_to_ptr.hbm [resolvable:$true] %s191
          %s193 = sshll.u32 [#allocation7], 4
          %s194 = int_to_ptr.vmem [resolvable:$true] %s193
          %199 = dma.hbm_to_vmem [thread:$0]  %s192, 9216, %s194, [#allocation6], 64, 64, 4
        $region24: #{tpu_custom_call.1} parent=11 // pred_fallthru
          _
        // Predicated region
        $region25: #{tpu_custom_call.1} parent=11 // pred_check
          %p200 = pneg %p128
        $region26: #{tpu_custom_call.1} parent=11 // pred_check_branch
          %202 = sbr.rel (%p200) target = $region28
        $region27: #{tpu_custom_call.1} parent=11 // pred_region
          _
        $region28: #{tpu_custom_call.1} parent=11 // pred_fallthru
          _
      $region12: #{tpu_custom_call.1} parent=5 // pred_fallthru
        _
      %p203 = scmp.lt.s32.totalorder %s18, 2
      // Predicated region
      $region29: #{tpu_custom_call.1} parent=5 // pred_check
        %p204 = pneg %p203
      $region30: #{tpu_custom_call.1} parent=5 // pred_check_branch
        %206 = sbr.rel (%p204) target = $region32
      $region31: #{tpu_custom_call.1} parent=5 // pred_region
        // Predicated region
        $region33: #{tpu_custom_call.1} parent=31 // pred_check
          %p207 = pneg %p38
        $region34: #{tpu_custom_call.1} parent=31 // pred_check_branch
          %209 = sbr.rel (%p207) target = $region36
        $region35: #{tpu_custom_call.1} parent=31 // pred_region
          %s210 = sand.u32 %s28, 1
          %s211 = scalar_lea.sflag [#allocation3], %s210
          %s212 = sand.u32 %s28, 1
          %s213 = smul.addr %s212, 240
          %s214 = scalar_lea.vmem [#allocation2], %s213
          %216 = vsyncadd %s211, 0
          %s217 = smul.addr %s18, 60
          %s218 = smul.addr %s217, 4
          %s219 = scalar_lea.hbm %s0, %s218
          %s220 = sshll.u32 %s219, 4
          %s221 = int_to_ptr.hbm [resolvable:$true] %s220
          %s222 = sshll.u32 %s214, 4
          %s223 = int_to_ptr.vmem [resolvable:$true] %s222
          %228 = dma.hbm_to_vmem [thread:$0]  %s221, 3840, %s223, %s211, 64, 64, 4
        $region36: #{tpu_custom_call.1} parent=31 // pred_fallthru
          _
      $region32: #{tpu_custom_call.1} parent=5 // pred_fallthru
        _
      %p229 = scmp.le.s32.totalorder 1, %s18
      %p230 = scmp.lt.s32.totalorder %s18, 3
      %p231 = pnand %p229, %p230
      %p232 = pneg %p231
      // Predicated region
      $region37: #{tpu_custom_call.1} parent=5 // pred_check
        _
      $region38: #{tpu_custom_call.1} parent=5 // pred_check_branch
        %234 = sbr.rel (%p231) target = $region40
      $region39: #{tpu_custom_call.1} parent=5 // pred_region
        %s235 = ssub.s32 %s18, 1
        %s236 = sand.u32 %s31, 1
        %s237 = scalar_lea.sflag [#allocation3], %s236
        %s238 = sand.u32 %s31, 1
        %s239 = smul.addr %s238, 240
        %s240 = scalar_lea.vmem [#allocation2], %s239
        // Predicated region
        $region41: #{tpu_custom_call.1} parent=39 // pred_check
          %p241 = pneg %p44
        $region42: #{tpu_custom_call.1} parent=39 // pred_check_branch
          %243 = sbr.rel (%p241) target = $region44
        $region43: #{tpu_custom_call.1} parent=39 // pred_region
          %245 = dma.done %s237, 3840
        $region44: #{tpu_custom_call.1} parent=39 // pred_fallthru
          _
        // Predicated region
        $region45: #{tpu_custom_call.1} parent=39 // pred_check
          %p246 = pneg %p65
        $region46: #{tpu_custom_call.1} parent=39 // pred_check_branch
          %248 = sbr.rel (%p246) target = $region48
        $region47: #{tpu_custom_call.1} parent=39 // pred_region
          %250 = dma.done [#allocation6], 9216
        $region48: #{tpu_custom_call.1} parent=39 // pred_fallthru
          _
        // Predicated region
        $region49: #{tpu_custom_call.1} parent=39 // pred_check
          %p251 = pneg %p107
        $region50: #{tpu_custom_call.1} parent=39 // pred_check_branch
          %253 = sbr.rel (%p251) target = $region52
        $region51: #{tpu_custom_call.1} parent=39 // pred_region
          %255 = dma.done [#allocation6], 9216
        $region52: #{tpu_custom_call.1} parent=39 // pred_fallthru
          _
        %s256 = sand.u32 %s31, 1
        %s257 = scalar_lea.sflag [#allocation3], %s256
        %s258 = sand.u32 %s31, 1
        %s259 = smul.addr %s258, 240
        %s260 = scalar_lea.vmem [#allocation2], %s259
        %p261 = pneg %p44
        %p262 = pneg %p41
        %p263 = pneg %p65
        %p264 = pneg %p62
        %p265 = pneg %p86
        %p266 = pneg %p83
        %p267 = pneg %p107
        %p268 = pneg %p104
        %p269 = pneg %p128
        %p270 = pneg %p125
        %p271 = pneg %p154
        %p272 = pneg %p151
        %s273 = sand.u32 %s141, 1
        %s274 = scalar_lea.sflag [#allocation4], %s273
        %s275 = sand.u32 %s141, 1
        %s276 = smul.addr %s275, 384
        %s277 = scalar_lea.vmem [#allocation8], %s276
        %v279 = vld [vmem:[%s240 + $0x8] sm:$0xf]
        %v280 = vld [vmem:[%s240 + $0xc] sm:$0xf]
        %v281 = vld [vmem:[%s240 + $0x10] sm:$0xf]
        %v282 = vld [vmem:[%s240 + $0x14] sm:$0xf]
        %v283 = vld [vmem:[%s240 + $0x18] sm:$0xf]
        %v284 = vld [vmem:[%s240 + $0x1c] sm:$0xf]
        %v285 = vld [vmem:[%s240 + $0x20] sm:$0xf]
        %v286 = vld [vmem:[%s240 + $0x24] sm:$0xf]
        %v287 = vld [vmem:[%s240 + $0x28] sm:$0xf]
        %v288 = vld [vmem:[%s240 + $0x2c] sm:$0xf]
        %v289 = vld [vmem:[%s240 + $0x30] sm:$0xf]
        %v290 = vld [vmem:[%s240 + $0x34] sm:$0xf]
        %v291 = vld [vmem:[%s240 + $0x38] sm:$0xf]
        %v292 = vld [vmem:[%s240 + $0x3c] sm:$0xf]
        %v293 = vld [vmem:[%s240 + $0x40] sm:$0xf]
        %v294 = vld [vmem:[%s240 + $0x44] sm:$0xf]
        %v295 = vld [vmem:[%s240 + $0x48] sm:$0xf]
        %v296 = vld [vmem:[%s240 + $0x4c] sm:$0xf]
        %v297 = vld [vmem:[%s240 + $0x50] sm:$0xf]
        %v298 = vld [vmem:[%s240 + $0x54] sm:$0xf]
        %v299 = vld [vmem:[%s240 + $0x58] sm:$0xf]
        %v300 = vld [vmem:[%s240 + $0x5c] sm:$0xf]
        %v301 = vld [vmem:[%s240 + $0x60] sm:$0xf]
        %v302 = vld [vmem:[%s240 + $0x64] sm:$0xf]
        %v303 = vld [vmem:[%s240 + $0x68] sm:$0xf]
        %v304 = vld [vmem:[%s240 + $0x6c] sm:$0xf]
        %v305 = vld [vmem:[%s240 + $0x70] sm:$0xf]
        %v306 = vld [vmem:[%s240 + $0x74] sm:$0xf]
        %v307 = vld [vmem:[%s240 + $0x78] sm:$0xf]
        %v308 = vld [vmem:[%s240 + $0x7c] sm:$0xf]
        %v309 = vld [vmem:[%s240 + $0x80] sm:$0xf]
        %v310 = vld [vmem:[%s240 + $0x84] sm:$0xf]
        %v311 = vld [vmem:[%s240 + $0x88] sm:$0xf]
        %v312 = vld [vmem:[%s240 + $0x8c] sm:$0xf]
        %v313 = vld [vmem:[%s240 + $0x90] sm:$0xf]
        %v314 = vld [vmem:[%s240 + $0x94] sm:$0xf]
        %v315 = vld [vmem:[%s240 + $0x98] sm:$0xf]
        %v316 = vld [vmem:[%s240 + $0x9c] sm:$0xf]
        %v317 = vld [vmem:[%s240 + $0xa0] sm:$0xf]
        %v318 = vld [vmem:[%s240 + $0xa4] sm:$0xf]
        %v319 = vld [vmem:[%s240 + $0xa8] sm:$0xf]
        %v320 = vld [vmem:[%s240 + $0xac] sm:$0xf]
        %v321 = vld [vmem:[%s240 + $0xb0] sm:$0xf]
        %v322 = vld [vmem:[%s240 + $0xb4] sm:$0xf]
        %v323 = vld [vmem:[%s240 + $0xb8] sm:$0xf]
        %v324 = vld [vmem:[%s240 + $0xbc] sm:$0xf]
        %v325 = vld [vmem:[%s240 + $0xc0] sm:$0xf]
        %v326 = vld [vmem:[%s240 + $0xc4] sm:$0xf]
        %v327 = vld [vmem:[%s240 + $0xc8] sm:$0xf]
        %v328 = vld [vmem:[%s240 + $0xcc] sm:$0xf]
        %v329 = vld [vmem:[%s240 + $0xd0] sm:$0xf]
        %v330 = vld [vmem:[%s240 + $0xd4] sm:$0xf]
        %v331 = vld [vmem:[%s240 + $0xd8] sm:$0xf]
        %v332 = vld [vmem:[%s240 + $0xdc] sm:$0xf]
        %v333 = vld [vmem:[%s240 + $0xe0] sm:$0xf]
        %v334 = vld [vmem:[%s240 + $0xe4] sm:$0xf]
        %v384 = vunpack.c.l.b16 %v279
        %v385 = vunpack.c.l.b16 %v280
        %v386 = vunpack.c.l.b16 %v281
        %v387 = vunpack.c.l.b16 %v282
        %v388 = vunpack.c.l.b16 %v283
        %v389 = vunpack.c.l.b16 %v284
        %v390 = vunpack.c.l.b16 %v285
        %v391 = vunpack.c.l.b16 %v286
        %v392 = vunpack.c.l.b16 %v287
        %v393 = vunpack.c.l.b16 %v288
        %v394 = vunpack.c.l.b16 %v289
        %v395 = vunpack.c.l.b16 %v290
        %v396 = vunpack.c.l.b16 %v291
        %v397 = vunpack.c.l.b16 %v292
        %v398 = vunpack.c.l.b16 %v293
        %v399 = vunpack.c.l.b16 %v294
        %v400 = vunpack.c.l.b16 %v295
        %v401 = vunpack.c.l.b16 %v296
        %v402 = vunpack.c.l.b16 %v297
        %v403 = vunpack.c.l.b16 %v298
        %v404 = vunpack.c.l.b16 %v299
        %v405 = vunpack.c.l.b16 %v300
        %v406 = vunpack.c.l.b16 %v301
        %v407 = vunpack.c.l.b16 %v302
        %v408 = vunpack.c.l.b16 %v303
        %v409 = vunpack.c.l.b16 %v304
        %v410 = vunpack.c.l.b16 %v305
        %v411 = vunpack.c.l.b16 %v306
        %v412 = vunpack.c.l.b16 %v307
        %v413 = vunpack.c.l.b16 %v308
        %v414 = vunpack.c.l.b16 %v309
        %v415 = vunpack.c.l.b16 %v310
        %v416 = vunpack.c.l.b16 %v311
        %v417 = vunpack.c.l.b16 %v312
        %v418 = vunpack.c.l.b16 %v313
        %v419 = vunpack.c.l.b16 %v314
        %v420 = vunpack.c.l.b16 %v315
        %v421 = vunpack.c.l.b16 %v316
        %v422 = vunpack.c.l.b16 %v317
        %v423 = vunpack.c.l.b16 %v318
        %v424 = vunpack.c.l.b16 %v319
        %v425 = vunpack.c.l.b16 %v320
        %v426 = vunpack.c.l.b16 %v321
        %v427 = vunpack.c.l.b16 %v322
        %v428 = vunpack.c.l.b16 %v323
        %v429 = vunpack.c.l.b16 %v324
        %v430 = vunpack.c.l.b16 %v325
        %v431 = vunpack.c.l.b16 %v326
        %v432 = vunpack.c.l.b16 %v327
        %v433 = vpack.c.b16 %v385, %v384
        %v434 = vpack.c.b16 %v387, %v386
        %v435 = vpack.c.b16 %v389, %v388
        %v436 = vpack.c.b16 %v391, %v390
        %v437 = vpack.c.b16 %v393, %v392
        %v438 = vpack.c.b16 %v395, %v394
        %v439 = vpack.c.b16 %v397, %v396
        %v440 = vpack.c.b16 %v399, %v398
        %v441 = vpack.c.b16 %v401, %v400
        %v442 = vpack.c.b16 %v403, %v402
        %v443 = vpack.c.b16 %v405, %v404
        %v444 = vpack.c.b16 %v407, %v406
        %v445 = vpack.c.b16 %v409, %v408
        %v446 = vpack.c.b16 %v411, %v410
        %v447 = vpack.c.b16 %v413, %v412
        %v448 = vpack.c.b16 %v415, %v414
        %v449 = vpack.c.b16 %v417, %v416
        %v450 = vpack.c.b16 %v419, %v418
        %v451 = vpack.c.b16 %v421, %v420
        %v452 = vpack.c.b16 %v423, %v422
        %v453 = vpack.c.b16 %v425, %v424
        %v454 = vpack.c.b16 %v427, %v426
        %v455 = vpack.c.b16 %v429, %v428
        %v456 = vpack.c.b16 %v431, %v430
        %v457 = vpack.c.b16 %v432, %v432
        %v458 = vpack.c.b16 %v386, %v385
        %v459 = vpack.c.b16 %v388, %v387
        %v460 = vpack.c.b16 %v390, %v389
        %v461 = vpack.c.b16 %v392, %v391
        %v462 = vpack.c.b16 %v394, %v393
        %v463 = vpack.c.b16 %v396, %v395
        %v464 = vpack.c.b16 %v398, %v397
        %v465 = vpack.c.b16 %v400, %v399
        %v466 = vpack.c.b16 %v402, %v401
        %v467 = vpack.c.b16 %v404, %v403
        %v468 = vpack.c.b16 %v406, %v405
        %v469 = vpack.c.b16 %v408, %v407
        %v470 = vpack.c.b16 %v410, %v409
        %v471 = vpack.c.b16 %v412, %v411
        %v472 = vpack.c.b16 %v414, %v413
        %v473 = vpack.c.b16 %v416, %v415
        %v474 = vpack.c.b16 %v418, %v417
        %v475 = vpack.c.b16 %v420, %v419
        %v476 = vpack.c.b16 %v422, %v421
        %v477 = vpack.c.b16 %v424, %v423
        %v478 = vpack.c.b16 %v426, %v425
        %v479 = vpack.c.b16 %v428, %v427
        %v480 = vpack.c.b16 %v430, %v429
        %v481 = vpack.c.b16 %v432, %v431
        %vm482 = vsmask.f32 3328
        %v484 = vshrl.u32 %v458, 16
        %v486 = vrot.slane %v484, 4
        %v487 = vshll.u32 %v458, 16
        %v489 = vrot.slane %v487, 5
        %v490 = vor.u32 %v486, %v489
        %v492 = vshrl.u32 %v459, 16
        %v494 = vrot.slane %v492, 4
        %v495 = vshll.u32 %v459, 16
        %v497 = vrot.slane %v495, 5
        %v498 = vor.u32 %v494, %v497
        %v499 = vsel %vm482, %v490, %v498
        %v501 = vshrl.u32 %v460, 16
        %v503 = vrot.slane %v501, 4
        %v504 = vshll.u32 %v460, 16
        %v506 = vrot.slane %v504, 5
        %v507 = vor.u32 %v503, %v506
        %v508 = vsel %vm482, %v498, %v507
        %v510 = vshrl.u32 %v461, 16
        %v512 = vrot.slane %v510, 4
        %v513 = vshll.u32 %v461, 16
        %v515 = vrot.slane %v513, 5
        %v516 = vor.u32 %v512, %v515
        %v517 = vsel %vm482, %v507, %v516
        %v519 = vshrl.u32 %v462, 16
        %v521 = vrot.slane %v519, 4
        %v522 = vshll.u32 %v462, 16
        %v524 = vrot.slane %v522, 5
        %v525 = vor.u32 %v521, %v524
        %v526 = vsel %vm482, %v516, %v525
        %v528 = vshrl.u32 %v463, 16
        %v530 = vrot.slane %v528, 4
        %v531 = vshll.u32 %v463, 16
        %v533 = vrot.slane %v531, 5
        %v534 = vor.u32 %v530, %v533
        %v535 = vsel %vm482, %v525, %v534
        %v537 = vshrl.u32 %v464, 16
        %v539 = vrot.slane %v537, 4
        %v540 = vshll.u32 %v464, 16
        %v542 = vrot.slane %v540, 5
        %v543 = vor.u32 %v539, %v542
        %v544 = vsel %vm482, %v534, %v543
        %v546 = vshrl.u32 %v465, 16
        %v548 = vrot.slane %v546, 4
        %v549 = vshll.u32 %v465, 16
        %v551 = vrot.slane %v549, 5
        %v552 = vor.u32 %v548, %v551
        %v553 = vsel %vm482, %v543, %v552
        %v555 = vshrl.u32 %v466, 16
        %v557 = vrot.slane %v555, 4
        %v558 = vshll.u32 %v466, 16
        %v560 = vrot.slane %v558, 5
        %v561 = vor.u32 %v557, %v560
        %v562 = vsel %vm482, %v552, %v561
        %v564 = vshrl.u32 %v467, 16
        %v566 = vrot.slane %v564, 4
        %v567 = vshll.u32 %v467, 16
        %v569 = vrot.slane %v567, 5
        %v570 = vor.u32 %v566, %v569
        %v571 = vsel %vm482, %v561, %v570
        %v573 = vshrl.u32 %v468, 16
        %v575 = vrot.slane %v573, 4
        %v576 = vshll.u32 %v468, 16
        %v578 = vrot.slane %v576, 5
        %v579 = vor.u32 %v575, %v578
        %v580 = vsel %vm482, %v570, %v579
        %v582 = vshrl.u32 %v469, 16
        %v584 = vrot.slane %v582, 4
        %v585 = vshll.u32 %v469, 16
        %v587 = vrot.slane %v585, 5
        %v588 = vor.u32 %v584, %v587
        %v589 = vsel %vm482, %v579, %v588
        %v591 = vshrl.u32 %v470, 16
        %v593 = vrot.slane %v591, 4
        %v594 = vshll.u32 %v470, 16
        %v596 = vrot.slane %v594, 5
        %v597 = vor.u32 %v593, %v596
        %v598 = vsel %vm482, %v588, %v597
        %v600 = vshrl.u32 %v471, 16
        %v602 = vrot.slane %v600, 4
        %v603 = vshll.u32 %v471, 16
        %v605 = vrot.slane %v603, 5
        %v606 = vor.u32 %v602, %v605
        %v607 = vsel %vm482, %v597, %v606
        %v609 = vshrl.u32 %v472, 16
        %v611 = vrot.slane %v609, 4
        %v612 = vshll.u32 %v472, 16
        %v614 = vrot.slane %v612, 5
        %v615 = vor.u32 %v611, %v614
        %v616 = vsel %vm482, %v606, %v615
        %v618 = vshrl.u32 %v473, 16
        %v620 = vrot.slane %v618, 4
        %v621 = vshll.u32 %v473, 16
        %v623 = vrot.slane %v621, 5
        %v624 = vor.u32 %v620, %v623
        %v625 = vsel %vm482, %v615, %v624
        %v627 = vshrl.u32 %v474, 16
        %v629 = vrot.slane %v627, 4
        %v630 = vshll.u32 %v474, 16
        %v632 = vrot.slane %v630, 5
        %v633 = vor.u32 %v629, %v632
        %v634 = vsel %vm482, %v624, %v633
        %v636 = vshrl.u32 %v475, 16
        %v638 = vrot.slane %v636, 4
        %v639 = vshll.u32 %v475, 16
        %v641 = vrot.slane %v639, 5
        %v642 = vor.u32 %v638, %v641
        %v643 = vsel %vm482, %v633, %v642
        %v645 = vshrl.u32 %v476, 16
        %v647 = vrot.slane %v645, 4
        %v648 = vshll.u32 %v476, 16
        %v650 = vrot.slane %v648, 5
        %v651 = vor.u32 %v647, %v650
        %v652 = vsel %vm482, %v642, %v651
        %v654 = vshrl.u32 %v477, 16
        %v656 = vrot.slane %v654, 4
        %v657 = vshll.u32 %v477, 16
        %v659 = vrot.slane %v657, 5
        %v660 = vor.u32 %v656, %v659
        %v661 = vsel %vm482, %v651, %v660
        %v663 = vshrl.u32 %v478, 16
        %v665 = vrot.slane %v663, 4
        %v666 = vshll.u32 %v478, 16
        %v668 = vrot.slane %v666, 5
        %v669 = vor.u32 %v665, %v668
        %v670 = vsel %vm482, %v660, %v669
        %v672 = vshrl.u32 %v479, 16
        %v674 = vrot.slane %v672, 4
        %v675 = vshll.u32 %v479, 16
        %v677 = vrot.slane %v675, 5
        %v678 = vor.u32 %v674, %v677
        %v679 = vsel %vm482, %v669, %v678
        %v681 = vshrl.u32 %v480, 16
        %v683 = vrot.slane %v681, 4
        %v684 = vshll.u32 %v480, 16
        %v686 = vrot.slane %v684, 5
        %v687 = vor.u32 %v683, %v686
        %v688 = vsel %vm482, %v678, %v687
        %v690 = vshrl.u32 %v481, 16
        %v692 = vrot.slane %v690, 4
        %v693 = vshll.u32 %v481, 16
        %v695 = vrot.slane %v693, 5
        %v696 = vor.u32 %v692, %v695
        %v697 = vsel %vm482, %v687, %v696
        %v699 = vunpack.c.l.b16 %v328
        %v700 = vpack.c.b16 %v699, %v699
        %vm701 = vcmask 1042432
        %v702 = vrot.slane %v458, 5
        %v703 = vrot.slane %v459, 5
        %v704 = vsel %vm701, %v702, %v703
        %v705 = vrot.slane %v460, 5
        %v706 = vsel %vm701, %v703, %v705
        %v707 = vrot.slane %v461, 5
        %v708 = vsel %vm701, %v705, %v707
        %v709 = vrot.slane %v462, 5
        %v710 = vsel %vm701, %v707, %v709
        %v711 = vrot.slane %v463, 5
        %v712 = vsel %vm701, %v709, %v711
        %v713 = vrot.slane %v464, 5
        %v714 = vsel %vm701, %v711, %v713
        %v715 = vrot.slane %v465, 5
        %v716 = vsel %vm701, %v713, %v715
        %v717 = vrot.slane %v466, 5
        %v718 = vsel %vm701, %v715, %v717
        %v719 = vrot.slane %v467, 5
        %v720 = vsel %vm701, %v717, %v719
        %v721 = vrot.slane %v468, 5
        %v722 = vsel %vm701, %v719, %v721
        %v723 = vrot.slane %v469, 5
        %v724 = vsel %vm701, %v721, %v723
        %v725 = vrot.slane %v470, 5
        %v726 = vsel %vm701, %v723, %v725
        %v727 = vrot.slane %v471, 5
        %v728 = vsel %vm701, %v725, %v727
        %v729 = vrot.slane %v472, 5
        %v730 = vsel %vm701, %v727, %v729
        %v731 = vrot.slane %v473, 5
        %v732 = vsel %vm701, %v729, %v731
        %v733 = vrot.slane %v474, 5
        %v734 = vsel %vm701, %v731, %v733
        %v735 = vrot.slane %v475, 5
        %v736 = vsel %vm701, %v733, %v735
        %v737 = vrot.slane %v476, 5
        %v738 = vsel %vm701, %v735, %v737
        %v739 = vrot.slane %v477, 5
        %v740 = vsel %vm701, %v737, %v739
        %v741 = vrot.slane %v478, 5
        %v742 = vsel %vm701, %v739, %v741
        %v743 = vrot.slane %v479, 5
        %v744 = vsel %vm701, %v741, %v743
        %v745 = vrot.slane %v480, 5
        %v746 = vsel %vm701, %v743, %v745
        %v747 = vrot.slane %v481, 5
        %v748 = vsel %vm701, %v745, %v747
        %v749 = vrot.slane %v700, 5
        %v750 = vsel %vm701, %v747, %v749
        %v753 = vunpack.c.l.b16 %v329
        %v754 = vunpack.c.l.b16 %v330
        %v755 = vpack.c.b16 %v753, %v699
        %v756 = vpack.c.b16 %v754, %v754
        %v757 = vpack.c.b16 %v699, %v432
        %v758 = vpack.c.b16 %v754, %v753
        %v760 = vshrl.u32 %v435, 16
        %v762 = vrot.slane %v760, 4
        %v763 = vshll.u32 %v435, 16
        %v765 = vrot.slane %v763, 5
        %v766 = vor.u32 %v762, %v765
        %v768 = vshrl.u32 %v436, 16
        %v770 = vrot.slane %v768, 4
        %v771 = vshll.u32 %v436, 16
        %v773 = vrot.slane %v771, 5
        %v774 = vor.u32 %v770, %v773
        %v775 = vsel %vm482, %v766, %v774
        %v777 = vshrl.u32 %v437, 16
        %v779 = vrot.slane %v777, 4
        %v780 = vshll.u32 %v437, 16
        %v782 = vrot.slane %v780, 5
        %v783 = vor.u32 %v779, %v782
        %v784 = vsel %vm482, %v774, %v783
        %v786 = vshrl.u32 %v438, 16
        %v788 = vrot.slane %v786, 4
        %v789 = vshll.u32 %v438, 16
        %v791 = vrot.slane %v789, 5
        %v792 = vor.u32 %v788, %v791
        %v793 = vsel %vm482, %v783, %v792
        %v795 = vshrl.u32 %v439, 16
        %v797 = vrot.slane %v795, 4
        %v798 = vshll.u32 %v439, 16
        %v800 = vrot.slane %v798, 5
        %v801 = vor.u32 %v797, %v800
        %v802 = vsel %vm482, %v792, %v801
        %v804 = vshrl.u32 %v440, 16
        %v806 = vrot.slane %v804, 4
        %v807 = vshll.u32 %v440, 16
        %v809 = vrot.slane %v807, 5
        %v810 = vor.u32 %v806, %v809
        %v811 = vsel %vm482, %v801, %v810
        %v813 = vshrl.u32 %v441, 16
        %v815 = vrot.slane %v813, 4
        %v816 = vshll.u32 %v441, 16
        %v818 = vrot.slane %v816, 5
        %v819 = vor.u32 %v815, %v818
        %v820 = vsel %vm482, %v810, %v819
        %v822 = vshrl.u32 %v442, 16
        %v824 = vrot.slane %v822, 4
        %v825 = vshll.u32 %v442, 16
        %v827 = vrot.slane %v825, 5
        %v828 = vor.u32 %v824, %v827
        %v829 = vsel %vm482, %v819, %v828
        %v831 = vshrl.u32 %v443, 16
        %v833 = vrot.slane %v831, 4
        %v834 = vshll.u32 %v443, 16
        %v836 = vrot.slane %v834, 5
        %v837 = vor.u32 %v833, %v836
        %v838 = vsel %vm482, %v828, %v837
        %v840 = vshrl.u32 %v444, 16
        %v842 = vrot.slane %v840, 4
        %v843 = vshll.u32 %v444, 16
        %v845 = vrot.slane %v843, 5
        %v846 = vor.u32 %v842, %v845
        %v847 = vsel %vm482, %v837, %v846
        %v849 = vshrl.u32 %v445, 16
        %v851 = vrot.slane %v849, 4
        %v852 = vshll.u32 %v445, 16
        %v854 = vrot.slane %v852, 5
        %v855 = vor.u32 %v851, %v854
        %v856 = vsel %vm482, %v846, %v855
        %v858 = vshrl.u32 %v446, 16
        %v860 = vrot.slane %v858, 4
        %v861 = vshll.u32 %v446, 16
        %v863 = vrot.slane %v861, 5
        %v864 = vor.u32 %v860, %v863
        %v865 = vsel %vm482, %v855, %v864
        %v867 = vshrl.u32 %v447, 16
        %v869 = vrot.slane %v867, 4
        %v870 = vshll.u32 %v447, 16
        %v872 = vrot.slane %v870, 5
        %v873 = vor.u32 %v869, %v872
        %v874 = vsel %vm482, %v864, %v873
        %v876 = vshrl.u32 %v448, 16
        %v878 = vrot.slane %v876, 4
        %v879 = vshll.u32 %v448, 16
        %v881 = vrot.slane %v879, 5
        %v882 = vor.u32 %v878, %v881
        %v883 = vsel %vm482, %v873, %v882
        %v885 = vshrl.u32 %v449, 16
        %v887 = vrot.slane %v885, 4
        %v888 = vshll.u32 %v449, 16
        %v890 = vrot.slane %v888, 5
        %v891 = vor.u32 %v887, %v890
        %v892 = vsel %vm482, %v882, %v891
        %v894 = vshrl.u32 %v450, 16
        %v896 = vrot.slane %v894, 4
        %v897 = vshll.u32 %v450, 16
        %v899 = vrot.slane %v897, 5
        %v900 = vor.u32 %v896, %v899
        %v901 = vsel %vm482, %v891, %v900
        %v903 = vshrl.u32 %v451, 16
        %v905 = vrot.slane %v903, 4
        %v906 = vshll.u32 %v451, 16
        %v908 = vrot.slane %v906, 5
        %v909 = vor.u32 %v905, %v908
        %v910 = vsel %vm482, %v900, %v909
        %v912 = vshrl.u32 %v452, 16
        %v914 = vrot.slane %v912, 4
        %v915 = vshll.u32 %v452, 16
        %v917 = vrot.slane %v915, 5
        %v918 = vor.u32 %v914, %v917
        %v919 = vsel %vm482, %v909, %v918
        %v921 = vshrl.u32 %v453, 16
        %v923 = vrot.slane %v921, 4
        %v924 = vshll.u32 %v453, 16
        %v926 = vrot.slane %v924, 5
        %v927 = vor.u32 %v923, %v926
        %v928 = vsel %vm482, %v918, %v927
        %v930 = vshrl.u32 %v454, 16
        %v932 = vrot.slane %v930, 4
        %v933 = vshll.u32 %v454, 16
        %v935 = vrot.slane %v933, 5
        %v936 = vor.u32 %v932, %v935
        %v937 = vsel %vm482, %v927, %v936
        %v939 = vshrl.u32 %v455, 16
        %v941 = vrot.slane %v939, 4
        %v942 = vshll.u32 %v455, 16
        %v944 = vrot.slane %v942, 5
        %v945 = vor.u32 %v941, %v944
        %v946 = vsel %vm482, %v936, %v945
        %v948 = vshrl.u32 %v456, 16
        %v950 = vrot.slane %v948, 4
        %v951 = vshll.u32 %v456, 16
        %v953 = vrot.slane %v951, 5
        %v954 = vor.u32 %v950, %v953
        %v955 = vsel %vm482, %v945, %v954
        %v957 = vshrl.u32 %v757, 16
        %v959 = vrot.slane %v957, 4
        %v960 = vshll.u32 %v757, 16
        %v962 = vrot.slane %v960, 5
        %v963 = vor.u32 %v959, %v962
        %v964 = vsel %vm482, %v954, %v963
        %v966 = vshrl.u32 %v758, 16
        %v968 = vrot.slane %v966, 4
        %v969 = vshll.u32 %v758, 16
        %v971 = vrot.slane %v969, 5
        %v972 = vor.u32 %v968, %v971
        %v973 = vsel %vm482, %v963, %v972
        %v975 = vunpack.c.l.b16 %v331
        %v976 = vpack.c.b16 %v975, %v975
        %v977 = vrot.slane %v435, 5
        %v978 = vrot.slane %v436, 5
        %v979 = vsel %vm701, %v977, %v978
        %v980 = vrot.slane %v437, 5
        %v981 = vsel %vm701, %v978, %v980
        %v982 = vrot.slane %v438, 5
        %v983 = vsel %vm701, %v980, %v982
        %v984 = vrot.slane %v439, 5
        %v985 = vsel %vm701, %v982, %v984
        %v986 = vrot.slane %v440, 5
        %v987 = vsel %vm701, %v984, %v986
        %v988 = vrot.slane %v441, 5
        %v989 = vsel %vm701, %v986, %v988
        %v990 = vrot.slane %v442, 5
        %v991 = vsel %vm701, %v988, %v990
        %v992 = vrot.slane %v443, 5
        %v993 = vsel %vm701, %v990, %v992
        %v994 = vrot.slane %v444, 5
        %v995 = vsel %vm701, %v992, %v994
        %v996 = vrot.slane %v445, 5
        %v997 = vsel %vm701, %v994, %v996
        %v998 = vrot.slane %v446, 5
        %v999 = vsel %vm701, %v996, %v998
        %v1000 = vrot.slane %v447, 5
        %v1001 = vsel %vm701, %v998, %v1000
        %v1002 = vrot.slane %v448, 5
        %v1003 = vsel %vm701, %v1000, %v1002
        %v1004 = vrot.slane %v449, 5
        %v1005 = vsel %vm701, %v1002, %v1004
        %v1006 = vrot.slane %v450, 5
        %v1007 = vsel %vm701, %v1004, %v1006
        %v1008 = vrot.slane %v451, 5
        %v1009 = vsel %vm701, %v1006, %v1008
        %v1010 = vrot.slane %v452, 5
        %v1011 = vsel %vm701, %v1008, %v1010
        %v1012 = vrot.slane %v453, 5
        %v1013 = vsel %vm701, %v1010, %v1012
        %v1014 = vrot.slane %v454, 5
        %v1015 = vsel %vm701, %v1012, %v1014
        %v1016 = vrot.slane %v455, 5
        %v1017 = vsel %vm701, %v1014, %v1016
        %v1018 = vrot.slane %v456, 5
        %v1019 = vsel %vm701, %v1016, %v1018
        %v1020 = vrot.slane %v757, 5
        %v1021 = vsel %vm701, %v1018, %v1020
        %v1022 = vrot.slane %v758, 5
        %v1023 = vsel %vm701, %v1020, %v1022
        %v1024 = vrot.slane %v976, 5
        %v1025 = vsel %vm701, %v1022, %v1024
        %v1028 = vunpack.c.l.b16 %v332
        %v1029 = vunpack.c.l.b16 %v333
        %v1030 = vpack.c.b16 %v1028, %v975
        %v1031 = vpack.c.b16 %v1029, %v1029
        %v1032 = vpack.c.b16 %v975, %v754
        %v1033 = vpack.c.b16 %v1029, %v1028
        %v1035 = vshrl.u32 %v755, 16
        %v1037 = vrot.slane %v1035, 4
        %v1038 = vshll.u32 %v755, 16
        %v1040 = vrot.slane %v1038, 5
        %v1041 = vor.u32 %v1037, %v1040
        %v1042 = vsel %vm482, %v696, %v1041
        %v1044 = vshrl.u32 %v1032, 16
        %v1046 = vrot.slane %v1044, 4
        %v1047 = vshll.u32 %v1032, 16
        %v1049 = vrot.slane %v1047, 5
        %v1050 = vor.u32 %v1046, %v1049
        %v1051 = vsel %vm482, %v1041, %v1050
        %v1053 = vshrl.u32 %v1033, 16
        %v1055 = vrot.slane %v1053, 4
        %v1056 = vshll.u32 %v1033, 16
        %v1058 = vrot.slane %v1056, 5
        %v1059 = vor.u32 %v1055, %v1058
        %v1060 = vsel %vm482, %v1050, %v1059
        %v1062 = vunpack.c.l.b16 %v334
        %v1063 = vpack.c.b16 %v1062, %v1062
        %v1064 = vrot.slane %v755, 5
        %v1065 = vsel %vm701, %v747, %v1064
        %v1066 = vrot.slane %v1032, 5
        %v1067 = vsel %vm701, %v1064, %v1066
        %v1068 = vrot.slane %v1033, 5
        %v1069 = vsel %vm701, %v1066, %v1068
        %v1070 = vrot.slane %v1063, 5
        %v1071 = vsel %vm701, %v1068, %v1070
        %v1072 = vld [vmem:[#allocation5] sm:$0xf]
        %v1073 = vld [vmem:[#allocation5 + $0x4] sm:$0xf]
        %v1074 = vld [vmem:[#allocation5 + $0x8] sm:$0xf]
        %v1075 = vld [vmem:[#allocation5 + $0xc] sm:$0xf]
        %v1076 = vld [vmem:[#allocation5 + $0x10] sm:$0xf]
        %v1077 = vld [vmem:[#allocation5 + $0x14] sm:$0xf]
        %v1078 = vld [vmem:[#allocation5 + $0x18] sm:$0xf]
        %v1079 = vld [vmem:[#allocation5 + $0x1c] sm:$0xf]
        %v1080 = vld [vmem:[#allocation5 + $0x20] sm:$0xf]
        %v1081 = vld [vmem:[#allocation5 + $0x24] sm:$0xf]
        %v1082 = vld [vmem:[#allocation5 + $0x28] sm:$0xf]
        %v1083 = vld [vmem:[#allocation5 + $0x2c] sm:$0xf]
        %v1084 = vld [vmem:[#allocation5 + $0x30] sm:$0xf]
        %v1085 = vld [vmem:[#allocation5 + $0x34] sm:$0xf]
        %v1086 = vld [vmem:[#allocation5 + $0x38] sm:$0xf]
        %v1087 = vld [vmem:[#allocation5 + $0x3c] sm:$0xf]
        %v1088 = vld [vmem:[#allocation5 + $0x40] sm:$0xf]
        %v1089 = vld [vmem:[#allocation5 + $0x44] sm:$0xf]
        %v1090 = vld [vmem:[#allocation5 + $0x48] sm:$0xf]
        %v1091 = vld [vmem:[#allocation5 + $0x4c] sm:$0xf]
        %v1092 = vld [vmem:[#allocation5 + $0x50] sm:$0xf]
        %v1093 = vld [vmem:[#allocation5 + $0x54] sm:$0xf]
        %v1094 = vld [vmem:[#allocation5 + $0x58] sm:$0xf]
        %v1095 = vld [vmem:[#allocation5 + $0x5c] sm:$0xf]
        %v1096 = vld [vmem:[#allocation5 + $0x60] sm:$0xf]
        %v1097 = vld [vmem:[#allocation5 + $0x64] sm:$0xf]
        %v1098 = vld [vmem:[#allocation5 + $0x68] sm:$0xf]
        %v1099 = vld [vmem:[#allocation5 + $0x6c] sm:$0xf]
        %v1100 = vld [vmem:[#allocation5 + $0x70] sm:$0xf]
        %v1101 = vld [vmem:[#allocation5 + $0x74] sm:$0xf]
        %v1102 = vld [vmem:[#allocation5 + $0x78] sm:$0xf]
        %v1103 = vld [vmem:[#allocation5 + $0x7c] sm:$0xf]
        %v1104 = vld [vmem:[#allocation5 + $0x80] sm:$0xf]
        %v1105 = vld [vmem:[#allocation5 + $0x84] sm:$0xf]
        %v1106 = vld [vmem:[#allocation5 + $0x88] sm:$0xf]
        %v1107 = vld [vmem:[#allocation5 + $0x8c] sm:$0xf]
        %v1108 = vld [vmem:[#allocation5 + $0x90] sm:$0xf]
        %v1109 = vld [vmem:[#allocation5 + $0x94] sm:$0xf]
        %v1110 = vld [vmem:[#allocation5 + $0x98] sm:$0xf]
        %v1111 = vld [vmem:[#allocation5 + $0x9c] sm:$0xf]
        %v1112 = vld [vmem:[#allocation5 + $0xa0] sm:$0xf]
        %v1113 = vld [vmem:[#allocation5 + $0xa4] sm:$0xf]
        %v1114 = vld [vmem:[#allocation5 + $0xa8] sm:$0xf]
        %v1115 = vld [vmem:[#allocation5 + $0xac] sm:$0xf]
        %v1116 = vld [vmem:[#allocation5 + $0xb0] sm:$0xf]
        %v1117 = vld [vmem:[#allocation5 + $0xb4] sm:$0xf]
        %v1118 = vld [vmem:[#allocation5 + $0xb8] sm:$0xf]
        %v1119 = vld [vmem:[#allocation5 + $0xbc] sm:$0xf]
        %v1120 = vld [vmem:[#allocation5 + $0xc0] sm:$0xf]
        %v1121 = vld [vmem:[#allocation5 + $0xc4] sm:$0xf]
        %v1122 = vld [vmem:[#allocation5 + $0xc8] sm:$0xf]
        %v1123 = vld [vmem:[#allocation5 + $0xcc] sm:$0xf]
        %v1124 = vld [vmem:[#allocation5 + $0xd0] sm:$0xf]
        %v1125 = vld [vmem:[#allocation5 + $0xd4] sm:$0xf]
        %v1126 = vld [vmem:[#allocation5 + $0xd8] sm:$0xf]
        %v1127 = vld [vmem:[#allocation5 + $0xdc] sm:$0xf]
        %v1128 = vld [vmem:[#allocation5 + $0xe0] sm:$0xf]
        %v1129 = vld [vmem:[#allocation5 + $0xe4] sm:$0xf]
        %v1130 = vld [vmem:[#allocation5 + $0xe8] sm:$0xf]
        %v1131 = vld [vmem:[#allocation5 + $0xec] sm:$0xf]
        %v1132 = vld [vmem:[#allocation5 + $0xf0] sm:$0xf]
        %v1133 = vld [vmem:[#allocation5 + $0xf4] sm:$0xf]
        %v1134 = vld [vmem:[#allocation5 + $0xf8] sm:$0xf]
        %v1135 = vld [vmem:[#allocation5 + $0xfc] sm:$0xf]
        %v1136 = vld [vmem:[#allocation5 + $0x100] sm:$0xf]
        %v1137 = vld [vmem:[#allocation5 + $0x104] sm:$0xf]
        %v1138 = vld [vmem:[#allocation5 + $0x108] sm:$0xf]
        %v1139 = vld [vmem:[#allocation5 + $0x10c] sm:$0xf]
        %v1140 = vld [vmem:[#allocation5 + $0x110] sm:$0xf]
        %v1141 = vld [vmem:[#allocation5 + $0x114] sm:$0xf]
        %v1142 = vld [vmem:[#allocation5 + $0x118] sm:$0xf]
        %v1143 = vld [vmem:[#allocation5 + $0x11c] sm:$0xf]
        %v1144 = vld [vmem:[#allocation5 + $0x120] sm:$0xf]
        %v1145 = vld [vmem:[#allocation5 + $0x124] sm:$0xf]
        %v1146 = vld [vmem:[#allocation5 + $0x128] sm:$0xf]
        %v1147 = vld [vmem:[#allocation5 + $0x12c] sm:$0xf]
        %v1148 = vld [vmem:[#allocation5 + $0x130] sm:$0xf]
        %v1149 = vld [vmem:[#allocation5 + $0x134] sm:$0xf]
        %v1150 = vld [vmem:[#allocation5 + $0x138] sm:$0xf]
        %v1151 = vld [vmem:[#allocation5 + $0x13c] sm:$0xf]
        %v1152 = vld [vmem:[#allocation5 + $0x140] sm:$0xf]
        %v1153 = vld [vmem:[#allocation5 + $0x144] sm:$0xf]
        %v1154 = vld [vmem:[#allocation5 + $0x148] sm:$0xf]
        %v1155 = vld [vmem:[#allocation5 + $0x14c] sm:$0xf]
        %v1156 = vld [vmem:[#allocation5 + $0x150] sm:$0xf]
        %v1157 = vld [vmem:[#allocation5 + $0x154] sm:$0xf]
        %v1158 = vld [vmem:[#allocation5 + $0x158] sm:$0xf]
        %v1159 = vld [vmem:[#allocation5 + $0x15c] sm:$0xf]
        %v1160 = vld [vmem:[#allocation5 + $0x160] sm:$0xf]
        %v1161 = vld [vmem:[#allocation5 + $0x164] sm:$0xf]
        %v1162 = vld [vmem:[#allocation5 + $0x168] sm:$0xf]
        %v1163 = vld [vmem:[#allocation5 + $0x16c] sm:$0xf]
        %v1164 = vld [vmem:[#allocation5 + $0x170] sm:$0xf]
        %v1165 = vld [vmem:[#allocation5 + $0x174] sm:$0xf]
        %v1166 = vld [vmem:[#allocation5 + $0x178] sm:$0xf]
        %v1167 = vld [vmem:[#allocation5 + $0x17c] sm:$0xf]
        %v1168 = vld [vmem:[#allocation5 + $0x180] sm:$0xf]
        %v1169 = vld [vmem:[#allocation5 + $0x184] sm:$0xf]
        %v1170 = vld [vmem:[#allocation5 + $0x188] sm:$0xf]
        %v1171 = vld [vmem:[#allocation5 + $0x18c] sm:$0xf]
        %v1172 = vld [vmem:[#allocation5 + $0x190] sm:$0xf]
        %v1173 = vld [vmem:[#allocation5 + $0x194] sm:$0xf]
        %v1174 = vld [vmem:[#allocation5 + $0x198] sm:$0xf]
        %v1175 = vld [vmem:[#allocation5 + $0x19c] sm:$0xf]
        %v1176 = vld [vmem:[#allocation5 + $0x1a0] sm:$0xf]
        %v1177 = vld [vmem:[#allocation5 + $0x1a4] sm:$0xf]
        %v1178 = vld [vmem:[#allocation5 + $0x1a8] sm:$0xf]
        %v1179 = vld [vmem:[#allocation5 + $0x1ac] sm:$0xf]
        %v1180 = vld [vmem:[#allocation5 + $0x1b0] sm:$0xf]
        %v1181 = vld [vmem:[#allocation5 + $0x1b4] sm:$0xf]
        %v1182 = vld [vmem:[#allocation5 + $0x1b8] sm:$0xf]
        %v1183 = vld [vmem:[#allocation5 + $0x1bc] sm:$0xf]
        %v1184 = vld [vmem:[#allocation5 + $0x1c0] sm:$0xf]
        %v1185 = vld [vmem:[#allocation5 + $0x1c4] sm:$0xf]
        %v1186 = vld [vmem:[#allocation5 + $0x1c8] sm:$0xf]
        %v1187 = vld [vmem:[#allocation5 + $0x1cc] sm:$0xf]
        %v1188 = vld [vmem:[#allocation5 + $0x1d0] sm:$0xf]
        %v1189 = vld [vmem:[#allocation5 + $0x1d4] sm:$0xf]
        %v1190 = vld [vmem:[#allocation5 + $0x1d8] sm:$0xf]
        %v1191 = vld [vmem:[#allocation5 + $0x1dc] sm:$0xf]
        %v1192 = vld [vmem:[#allocation5 + $0x1e0] sm:$0xf]
        %v1193 = vld [vmem:[#allocation5 + $0x1e4] sm:$0xf]
        %v1194 = vld [vmem:[#allocation5 + $0x1e8] sm:$0xf]
        %v1195 = vld [vmem:[#allocation5 + $0x1ec] sm:$0xf]
        %v1196 = vld [vmem:[#allocation5 + $0x1f0] sm:$0xf]
        %v1197 = vld [vmem:[#allocation5 + $0x1f4] sm:$0xf]
        %v1198 = vld [vmem:[#allocation5 + $0x1f8] sm:$0xf]
        %v1199 = vld [vmem:[#allocation5 + $0x1fc] sm:$0xf]
        %v1200 = vld [vmem:[#allocation5 + $0x200] sm:$0xf]
        %v1201 = vld [vmem:[#allocation5 + $0x204] sm:$0xf]
        %v1202 = vld [vmem:[#allocation5 + $0x208] sm:$0xf]
        %v1203 = vld [vmem:[#allocation5 + $0x20c] sm:$0xf]
        %v1204 = vld [vmem:[#allocation5 + $0x210] sm:$0xf]
        %v1205 = vld [vmem:[#allocation5 + $0x214] sm:$0xf]
        %v1206 = vld [vmem:[#allocation5 + $0x218] sm:$0xf]
        %v1207 = vld [vmem:[#allocation5 + $0x21c] sm:$0xf]
        %v1208 = vld [vmem:[#allocation5 + $0x220] sm:$0xf]
        %v1209 = vld [vmem:[#allocation5 + $0x224] sm:$0xf]
        %v1210 = vld [vmem:[#allocation5 + $0x228] sm:$0xf]
        %v1211 = vld [vmem:[#allocation5 + $0x22c] sm:$0xf]
        %v1212 = vld [vmem:[#allocation5 + $0x230] sm:$0xf]
        %v1213 = vld [vmem:[#allocation5 + $0x234] sm:$0xf]
        %v1214 = vld [vmem:[#allocation5 + $0x238] sm:$0xf]
        %v1215 = vld [vmem:[#allocation5 + $0x23c] sm:$0xf]
        %v1216 = vld [vmem:[%s2] sm:$0x1]
        %v1218 = vperm.slane %v1216, 0
        %vm1220 = vsmask.f32 4352
        %v1222 = vshrl.u32 %v433, 16
        %v1224 = vrot.slane %v1222, 3
        %v1225 = vshll.u32 %v433, 16
        %v1227 = vrot.slane %v1225, 4
        %v1228 = vor.u32 %v1224, %v1227
        %v1230 = vshrl.u32 %v434, 16
        %v1232 = vrot.slane %v1230, 3
        %v1233 = vshll.u32 %v434, 16
        %v1235 = vrot.slane %v1233, 4
        %v1236 = vor.u32 %v1232, %v1235
        %v1237 = vsel %vm1220, %v1228, %v1236
        %v1239 = vshrl.u32 %v490, 16
        %v1241 = vrot.slane %v1239, 3
        %v1242 = vshll.u32 %v490, 16
        %v1244 = vrot.slane %v1242, 4
        %v1245 = vor.u32 %v1241, %v1244
        %v1247 = vshrl.u32 %v499, 16
        %v1249 = vrot.slane %v1247, 3
        %v1250 = vshll.u32 %v499, 16
        %v1252 = vrot.slane %v1250, 4
        %v1253 = vor.u32 %v1249, %v1252
        %v1254 = vsel %vm1220, %v1245, %v1253
        %v1256 = vshrl.u32 %v702, 16
        %v1258 = vrot.slane %v1256, 3
        %v1259 = vshll.u32 %v702, 16
        %v1261 = vrot.slane %v1259, 4
        %v1262 = vor.u32 %v1258, %v1261
        %v1264 = vshrl.u32 %v704, 16
        %v1266 = vrot.slane %v1264, 3
        %v1267 = vshll.u32 %v704, 16
        %v1269 = vrot.slane %v1267, 4
        %v1270 = vor.u32 %v1266, %v1269
        %v1271 = vsel %vm1220, %v1262, %v1270
        %v1272 = vrot.slane %v492, 3
        %v1273 = vrot.slane %v495, 4
        %v1274 = vor.u32 %v1272, %v1273
        %v1275 = vrot.slane %v501, 3
        %v1276 = vrot.slane %v504, 4
        %v1277 = vor.u32 %v1275, %v1276
        %v1278 = vsel %vm1220, %v1274, %v1277
        %v1280 = vshrl.u32 %v766, 16
        %v1282 = vrot.slane %v1280, 3
        %v1283 = vshll.u32 %v766, 16
        %v1285 = vrot.slane %v1283, 4
        %v1286 = vor.u32 %v1282, %v1285
        %v1288 = vshrl.u32 %v775, 16
        %v1290 = vrot.slane %v1288, 3
        %v1291 = vshll.u32 %v775, 16
        %v1293 = vrot.slane %v1291, 4
        %v1294 = vor.u32 %v1290, %v1293
        %v1295 = vsel %vm1220, %v1286, %v1294
        %v1297 = vshrl.u32 %v977, 16
        %v1299 = vrot.slane %v1297, 3
        %v1300 = vshll.u32 %v977, 16
        %v1302 = vrot.slane %v1300, 4
        %v1303 = vor.u32 %v1299, %v1302
        %v1305 = vshrl.u32 %v979, 16
        %v1307 = vrot.slane %v1305, 3
        %v1308 = vshll.u32 %v979, 16
        %v1310 = vrot.slane %v1308, 4
        %v1311 = vor.u32 %v1307, %v1310
        %v1312 = vsel %vm1220, %v1303, %v1311
        %v1313 = vrot.slane %v768, 3
        %v1314 = vrot.slane %v771, 4
        %v1315 = vor.u32 %v1313, %v1314
        %v1316 = vrot.slane %v777, 3
        %v1317 = vrot.slane %v780, 4
        %v1318 = vor.u32 %v1316, %v1317
        %v1319 = vsel %vm1220, %v1315, %v1318
        %v1321 = vshrl.u32 %v516, 16
        %v1323 = vrot.slane %v1321, 3
        %v1324 = vshll.u32 %v516, 16
        %v1326 = vrot.slane %v1324, 4
        %v1327 = vor.u32 %v1323, %v1326
        %v1329 = vshrl.u32 %v526, 16
        %v1331 = vrot.slane %v1329, 3
        %v1332 = vshll.u32 %v526, 16
        %v1334 = vrot.slane %v1332, 4
        %v1335 = vor.u32 %v1331, %v1334
        %v1336 = vsel %vm1220, %v1327, %v1335
        %v1338 = vshrl.u32 %v707, 16
        %v1340 = vrot.slane %v1338, 3
        %v1341 = vshll.u32 %v707, 16
        %v1343 = vrot.slane %v1341, 4
        %v1344 = vor.u32 %v1340, %v1343
        %v1346 = vshrl.u32 %v710, 16
        %v1348 = vrot.slane %v1346, 3
        %v1349 = vshll.u32 %v710, 16
        %v1351 = vrot.slane %v1349, 4
        %v1352 = vor.u32 %v1348, %v1351
        %v1353 = vsel %vm1220, %v1344, %v1352
        %v1354 = vrot.slane %v760, 3
        %v1355 = vrot.slane %v763, 4
        %v1356 = vor.u32 %v1354, %v1355
        %v1357 = vsel %vm1220, %v1236, %v1356
        %v1359 = vshrl.u32 %v508, 16
        %v1361 = vrot.slane %v1359, 3
        %v1362 = vshll.u32 %v508, 16
        %v1364 = vrot.slane %v1362, 4
        %v1365 = vor.u32 %v1361, %v1364
        %v1366 = vsel %vm1220, %v1253, %v1365
        %v1368 = vshrl.u32 %v706, 16
        %v1370 = vrot.slane %v1368, 3
        %v1371 = vshll.u32 %v706, 16
        %v1373 = vrot.slane %v1371, 4
        %v1374 = vor.u32 %v1370, %v1373
        %v1375 = vsel %vm1220, %v1270, %v1374
        %v1376 = vrot.slane %v510, 3
        %v1377 = vrot.slane %v513, 4
        %v1378 = vor.u32 %v1376, %v1377
        %v1379 = vsel %vm1220, %v1277, %v1378
        %v1381 = vshrl.u32 %v784, 16
        %v1383 = vrot.slane %v1381, 3
        %v1384 = vshll.u32 %v784, 16
        %v1386 = vrot.slane %v1384, 4
        %v1387 = vor.u32 %v1383, %v1386
        %v1388 = vsel %vm1220, %v1294, %v1387
        %v1390 = vshrl.u32 %v981, 16
        %v1392 = vrot.slane %v1390, 3
        %v1393 = vshll.u32 %v981, 16
        %v1395 = vrot.slane %v1393, 4
        %v1396 = vor.u32 %v1392, %v1395
        %v1397 = vsel %vm1220, %v1311, %v1396
        %v1398 = vrot.slane %v786, 3
        %v1399 = vrot.slane %v789, 4
        %v1400 = vor.u32 %v1398, %v1399
        %v1401 = vsel %vm1220, %v1318, %v1400
        %v1403 = vshrl.u32 %v535, 16
        %v1405 = vrot.slane %v1403, 3
        %v1406 = vshll.u32 %v535, 16
        %v1408 = vrot.slane %v1406, 4
        %v1409 = vor.u32 %v1405, %v1408
        %v1410 = vsel %vm1220, %v1335, %v1409
        %v1412 = vshrl.u32 %v712, 16
        %v1414 = vrot.slane %v1412, 3
        %v1415 = vshll.u32 %v712, 16
        %v1417 = vrot.slane %v1415, 4
        %v1418 = vor.u32 %v1414, %v1417
        %v1419 = vsel %vm1220, %v1352, %v1418
        %v1420 = vsel %vm1220, %v1356, %v1315
        %v1422 = vshrl.u32 %v517, 16
        %v1424 = vrot.slane %v1422, 3
        %v1425 = vshll.u32 %v517, 16
        %v1427 = vrot.slane %v1425, 4
        %v1428 = vor.u32 %v1424, %v1427
        %v1429 = vsel %vm1220, %v1365, %v1428
        %v1431 = vshrl.u32 %v708, 16
        %v1433 = vrot.slane %v1431, 3
        %v1434 = vshll.u32 %v708, 16
        %v1436 = vrot.slane %v1434, 4
        %v1437 = vor.u32 %v1433, %v1436
        %v1438 = vsel %vm1220, %v1374, %v1437
        %v1439 = vrot.slane %v519, 3
        %v1440 = vrot.slane %v522, 4
        %v1441 = vor.u32 %v1439, %v1440
        %v1442 = vsel %vm1220, %v1378, %v1441
        %v1444 = vshrl.u32 %v793, 16
        %v1446 = vrot.slane %v1444, 3
        %v1447 = vshll.u32 %v793, 16
        %v1449 = vrot.slane %v1447, 4
        %v1450 = vor.u32 %v1446, %v1449
        %v1451 = vsel %vm1220, %v1387, %v1450
        %v1453 = vshrl.u32 %v983, 16
        %v1455 = vrot.slane %v1453, 3
        %v1456 = vshll.u32 %v983, 16
        %v1458 = vrot.slane %v1456, 4
        %v1459 = vor.u32 %v1455, %v1458
        %v1460 = vsel %vm1220, %v1396, %v1459
        %v1461 = vrot.slane %v795, 3
        %v1462 = vrot.slane %v798, 4
        %v1463 = vor.u32 %v1461, %v1462
        %v1464 = vsel %vm1220, %v1400, %v1463
        %v1466 = vshrl.u32 %v544, 16
        %v1468 = vrot.slane %v1466, 3
        %v1469 = vshll.u32 %v544, 16
        %v1471 = vrot.slane %v1469, 4
        %v1472 = vor.u32 %v1468, %v1471
        %v1473 = vsel %vm1220, %v1409, %v1472
        %v1475 = vshrl.u32 %v714, 16
        %v1477 = vrot.slane %v1475, 3
        %v1478 = vshll.u32 %v714, 16
        %v1480 = vrot.slane %v1478, 4
        %v1481 = vor.u32 %v1477, %v1480
        %v1482 = vsel %vm1220, %v1418, %v1481
        %v1483 = vsel %vm1220, %v1428, %v1335
        %v1484 = vsel %vm1220, %v1437, %v1352
        %v1485 = vrot.slane %v528, 3
        %v1486 = vrot.slane %v531, 4
        %v1487 = vor.u32 %v1485, %v1486
        %v1488 = vsel %vm1220, %v1441, %v1487
        %v1490 = vshrl.u32 %v802, 16
        %v1492 = vrot.slane %v1490, 3
        %v1493 = vshll.u32 %v802, 16
        %v1495 = vrot.slane %v1493, 4
        %v1496 = vor.u32 %v1492, %v1495
        %v1497 = vsel %vm1220, %v1450, %v1496
        %v1499 = vshrl.u32 %v985, 16
        %v1501 = vrot.slane %v1499, 3
        %v1502 = vshll.u32 %v985, 16
        %v1504 = vrot.slane %v1502, 4
        %v1505 = vor.u32 %v1501, %v1504
        %v1506 = vsel %vm1220, %v1459, %v1505
        %v1507 = vrot.slane %v804, 3
        %v1508 = vrot.slane %v807, 4
        %v1509 = vor.u32 %v1507, %v1508
        %v1510 = vsel %vm1220, %v1463, %v1509
        %v1512 = vshrl.u32 %v553, 16
        %v1514 = vrot.slane %v1512, 3
        %v1515 = vshll.u32 %v553, 16
        %v1517 = vrot.slane %v1515, 4
        %v1518 = vor.u32 %v1514, %v1517
        %v1519 = vsel %vm1220, %v1472, %v1518
        %v1521 = vshrl.u32 %v716, 16
        %v1523 = vrot.slane %v1521, 3
        %v1524 = vshll.u32 %v716, 16
        %v1526 = vrot.slane %v1524, 4
        %v1527 = vor.u32 %v1523, %v1526
        %v1528 = vsel %vm1220, %v1481, %v1527
        %v1529 = vrot.slane %v537, 3
        %v1530 = vrot.slane %v540, 4
        %v1531 = vor.u32 %v1529, %v1530
        %v1532 = vsel %vm1220, %v1487, %v1531
        %v1534 = vshrl.u32 %v811, 16
        %v1536 = vrot.slane %v1534, 3
        %v1537 = vshll.u32 %v811, 16
        %v1539 = vrot.slane %v1537, 4
        %v1540 = vor.u32 %v1536, %v1539
        %v1541 = vsel %vm1220, %v1496, %v1540
        %v1543 = vshrl.u32 %v987, 16
        %v1545 = vrot.slane %v1543, 3
        %v1546 = vshll.u32 %v987, 16
        %v1548 = vrot.slane %v1546, 4
        %v1549 = vor.u32 %v1545, %v1548
        %v1550 = vsel %vm1220, %v1505, %v1549
        %v1551 = vrot.slane %v813, 3
        %v1552 = vrot.slane %v816, 4
        %v1553 = vor.u32 %v1551, %v1552
        %v1554 = vsel %vm1220, %v1509, %v1553
        %v1556 = vshrl.u32 %v562, 16
        %v1558 = vrot.slane %v1556, 3
        %v1559 = vshll.u32 %v562, 16
        %v1561 = vrot.slane %v1559, 4
        %v1562 = vor.u32 %v1558, %v1561
        %v1563 = vsel %vm1220, %v1518, %v1562
        %v1565 = vshrl.u32 %v718, 16
        %v1567 = vrot.slane %v1565, 3
        %v1568 = vshll.u32 %v718, 16
        %v1570 = vrot.slane %v1568, 4
        %v1571 = vor.u32 %v1567, %v1570
        %v1572 = vsel %vm1220, %v1527, %v1571
        %v1573 = vrot.slane %v546, 3
        %v1574 = vrot.slane %v549, 4
        %v1575 = vor.u32 %v1573, %v1574
        %v1576 = vsel %vm1220, %v1531, %v1575
        %v1578 = vshrl.u32 %v820, 16
        %v1580 = vrot.slane %v1578, 3
        %v1581 = vshll.u32 %v820, 16
        %v1583 = vrot.slane %v1581, 4
        %v1584 = vor.u32 %v1580, %v1583
        %v1585 = vsel %vm1220, %v1540, %v1584
        %v1587 = vshrl.u32 %v989, 16
        %v1589 = vrot.slane %v1587, 3
        %v1590 = vshll.u32 %v989, 16
        %v1592 = vrot.slane %v1590, 4
        %v1593 = vor.u32 %v1589, %v1592
        %v1594 = vsel %vm1220, %v1549, %v1593
        %v1595 = vrot.slane %v822, 3
        %v1596 = vrot.slane %v825, 4
        %v1597 = vor.u32 %v1595, %v1596
        %v1598 = vsel %vm1220, %v1553, %v1597
        %v1600 = vshrl.u32 %v571, 16
        %v1602 = vrot.slane %v1600, 3
        %v1603 = vshll.u32 %v571, 16
        %v1605 = vrot.slane %v1603, 4
        %v1606 = vor.u32 %v1602, %v1605
        %v1607 = vsel %vm1220, %v1562, %v1606
        %v1609 = vshrl.u32 %v720, 16
        %v1611 = vrot.slane %v1609, 3
        %v1612 = vshll.u32 %v720, 16
        %v1614 = vrot.slane %v1612, 4
        %v1615 = vor.u32 %v1611, %v1614
        %v1616 = vsel %vm1220, %v1571, %v1615
        %v1617 = vrot.slane %v555, 3
        %v1618 = vrot.slane %v558, 4
        %v1619 = vor.u32 %v1617, %v1618
        %v1620 = vsel %vm1220, %v1575, %v1619
        %v1622 = vshrl.u32 %v829, 16
        %v1624 = vrot.slane %v1622, 3
        %v1625 = vshll.u32 %v829, 16
        %v1627 = vrot.slane %v1625, 4
        %v1628 = vor.u32 %v1624, %v1627
        %v1629 = vsel %vm1220, %v1584, %v1628
        %v1631 = vshrl.u32 %v991, 16
        %v1633 = vrot.slane %v1631, 3
        %v1634 = vshll.u32 %v991, 16
        %v1636 = vrot.slane %v1634, 4
        %v1637 = vor.u32 %v1633, %v1636
        %v1638 = vsel %vm1220, %v1593, %v1637
        %v1639 = vrot.slane %v831, 3
        %v1640 = vrot.slane %v834, 4
        %v1641 = vor.u32 %v1639, %v1640
        %v1642 = vsel %vm1220, %v1597, %v1641
        %v1644 = vshrl.u32 %v580, 16
        %v1646 = vrot.slane %v1644, 3
        %v1647 = vshll.u32 %v580, 16
        %v1649 = vrot.slane %v1647, 4
        %v1650 = vor.u32 %v1646, %v1649
        %v1651 = vsel %vm1220, %v1606, %v1650
        %v1653 = vshrl.u32 %v722, 16
        %v1655 = vrot.slane %v1653, 3
        %v1656 = vshll.u32 %v722, 16
        %v1658 = vrot.slane %v1656, 4
        %v1659 = vor.u32 %v1655, %v1658
        %v1660 = vsel %vm1220, %v1615, %v1659
        %v1661 = vrot.slane %v564, 3
        %v1662 = vrot.slane %v567, 4
        %v1663 = vor.u32 %v1661, %v1662
        %v1664 = vsel %vm1220, %v1619, %v1663
        %v1666 = vshrl.u32 %v838, 16
        %v1668 = vrot.slane %v1666, 3
        %v1669 = vshll.u32 %v838, 16
        %v1671 = vrot.slane %v1669, 4
        %v1672 = vor.u32 %v1668, %v1671
        %v1673 = vsel %vm1220, %v1628, %v1672
        %v1675 = vshrl.u32 %v993, 16
        %v1677 = vrot.slane %v1675, 3
        %v1678 = vshll.u32 %v993, 16
        %v1680 = vrot.slane %v1678, 4
        %v1681 = vor.u32 %v1677, %v1680
        %v1682 = vsel %vm1220, %v1637, %v1681
        %v1683 = vrot.slane %v840, 3
        %v1684 = vrot.slane %v843, 4
        %v1685 = vor.u32 %v1683, %v1684
        %v1686 = vsel %vm1220, %v1641, %v1685
        %v1688 = vshrl.u32 %v589, 16
        %v1690 = vrot.slane %v1688, 3
        %v1691 = vshll.u32 %v589, 16
        %v1693 = vrot.slane %v1691, 4
        %v1694 = vor.u32 %v1690, %v1693
        %v1695 = vsel %vm1220, %v1650, %v1694
        %v1697 = vshrl.u32 %v724, 16
        %v1699 = vrot.slane %v1697, 3
        %v1700 = vshll.u32 %v724, 16
        %v1702 = vrot.slane %v1700, 4
        %v1703 = vor.u32 %v1699, %v1702
        %v1704 = vsel %vm1220, %v1659, %v1703
        %v1705 = vrot.slane %v573, 3
        %v1706 = vrot.slane %v576, 4
        %v1707 = vor.u32 %v1705, %v1706
        %v1708 = vsel %vm1220, %v1663, %v1707
        %v1710 = vshrl.u32 %v847, 16
        %v1712 = vrot.slane %v1710, 3
        %v1713 = vshll.u32 %v847, 16
        %v1715 = vrot.slane %v1713, 4
        %v1716 = vor.u32 %v1712, %v1715
        %v1717 = vsel %vm1220, %v1672, %v1716
        %v1719 = vshrl.u32 %v995, 16
        %v1721 = vrot.slane %v1719, 3
        %v1722 = vshll.u32 %v995, 16
        %v1724 = vrot.slane %v1722, 4
        %v1725 = vor.u32 %v1721, %v1724
        %v1726 = vsel %vm1220, %v1681, %v1725
        %v1727 = vrot.slane %v849, 3
        %v1728 = vrot.slane %v852, 4
        %v1729 = vor.u32 %v1727, %v1728
        %v1730 = vsel %vm1220, %v1685, %v1729
        %v1732 = vshrl.u32 %v598, 16
        %v1734 = vrot.slane %v1732, 3
        %v1735 = vshll.u32 %v598, 16
        %v1737 = vrot.slane %v1735, 4
        %v1738 = vor.u32 %v1734, %v1737
        %v1739 = vsel %vm1220, %v1694, %v1738
        %v1741 = vshrl.u32 %v726, 16
        %v1743 = vrot.slane %v1741, 3
        %v1744 = vshll.u32 %v726, 16
        %v1746 = vrot.slane %v1744, 4
        %v1747 = vor.u32 %v1743, %v1746
        %v1748 = vsel %vm1220, %v1703, %v1747
        %v1749 = vrot.slane %v582, 3
        %v1750 = vrot.slane %v585, 4
        %v1751 = vor.u32 %v1749, %v1750
        %v1752 = vsel %vm1220, %v1707, %v1751
        %v1754 = vshrl.u32 %v856, 16
        %v1756 = vrot.slane %v1754, 3
        %v1757 = vshll.u32 %v856, 16
        %v1759 = vrot.slane %v1757, 4
        %v1760 = vor.u32 %v1756, %v1759
        %v1761 = vsel %vm1220, %v1716, %v1760
        %v1763 = vshrl.u32 %v997, 16
        %v1765 = vrot.slane %v1763, 3
        %v1766 = vshll.u32 %v997, 16
        %v1768 = vrot.slane %v1766, 4
        %v1769 = vor.u32 %v1765, %v1768
        %v1770 = vsel %vm1220, %v1725, %v1769
        %v1771 = vrot.slane %v858, 3
        %v1772 = vrot.slane %v861, 4
        %v1773 = vor.u32 %v1771, %v1772
        %v1774 = vsel %vm1220, %v1729, %v1773
        %v1776 = vshrl.u32 %v607, 16
        %v1778 = vrot.slane %v1776, 3
        %v1779 = vshll.u32 %v607, 16
        %v1781 = vrot.slane %v1779, 4
        %v1782 = vor.u32 %v1778, %v1781
        %v1783 = vsel %vm1220, %v1738, %v1782
        %v1785 = vshrl.u32 %v728, 16
        %v1787 = vrot.slane %v1785, 3
        %v1788 = vshll.u32 %v728, 16
        %v1790 = vrot.slane %v1788, 4
        %v1791 = vor.u32 %v1787, %v1790
        %v1792 = vsel %vm1220, %v1747, %v1791
        %v1793 = vrot.slane %v591, 3
        %v1794 = vrot.slane %v594, 4
        %v1795 = vor.u32 %v1793, %v1794
        %v1796 = vsel %vm1220, %v1751, %v1795
        %v1798 = vshrl.u32 %v865, 16
        %v1800 = vrot.slane %v1798, 3
        %v1801 = vshll.u32 %v865, 16
        %v1803 = vrot.slane %v1801, 4
        %v1804 = vor.u32 %v1800, %v1803
        %v1805 = vsel %vm1220, %v1760, %v1804
        %v1807 = vshrl.u32 %v999, 16
        %v1809 = vrot.slane %v1807, 3
        %v1810 = vshll.u32 %v999, 16
        %v1812 = vrot.slane %v1810, 4
        %v1813 = vor.u32 %v1809, %v1812
        %v1814 = vsel %vm1220, %v1769, %v1813
        %v1815 = vrot.slane %v867, 3
        %v1816 = vrot.slane %v870, 4
        %v1817 = vor.u32 %v1815, %v1816
        %v1818 = vsel %vm1220, %v1773, %v1817
        %v1820 = vshrl.u32 %v616, 16
        %v1822 = vrot.slane %v1820, 3
        %v1823 = vshll.u32 %v616, 16
        %v1825 = vrot.slane %v1823, 4
        %v1826 = vor.u32 %v1822, %v1825
        %v1827 = vsel %vm1220, %v1782, %v1826
        %v1829 = vshrl.u32 %v730, 16
        %v1831 = vrot.slane %v1829, 3
        %v1832 = vshll.u32 %v730, 16
        %v1834 = vrot.slane %v1832, 4
        %v1835 = vor.u32 %v1831, %v1834
        %v1836 = vsel %vm1220, %v1791, %v1835
        %v1837 = vrot.slane %v600, 3
        %v1838 = vrot.slane %v603, 4
        %v1839 = vor.u32 %v1837, %v1838
        %v1840 = vsel %vm1220, %v1795, %v1839
        %v1842 = vshrl.u32 %v874, 16
        %v1844 = vrot.slane %v1842, 3
        %v1845 = vshll.u32 %v874, 16
        %v1847 = vrot.slane %v1845, 4
        %v1848 = vor.u32 %v1844, %v1847
        %v1849 = vsel %vm1220, %v1804, %v1848
        %v1851 = vshrl.u32 %v1001, 16
        %v1853 = vrot.slane %v1851, 3
        %v1854 = vshll.u32 %v1001, 16
        %v1856 = vrot.slane %v1854, 4
        %v1857 = vor.u32 %v1853, %v1856
        %v1858 = vsel %vm1220, %v1813, %v1857
        %v1859 = vrot.slane %v876, 3
        %v1860 = vrot.slane %v879, 4
        %v1861 = vor.u32 %v1859, %v1860
        %v1862 = vsel %vm1220, %v1817, %v1861
        %v1864 = vshrl.u32 %v625, 16
        %v1866 = vrot.slane %v1864, 3
        %v1867 = vshll.u32 %v625, 16
        %v1869 = vrot.slane %v1867, 4
        %v1870 = vor.u32 %v1866, %v1869
        %v1871 = vsel %vm1220, %v1826, %v1870
        %v1873 = vshrl.u32 %v732, 16
        %v1875 = vrot.slane %v1873, 3
        %v1876 = vshll.u32 %v732, 16
        %v1878 = vrot.slane %v1876, 4
        %v1879 = vor.u32 %v1875, %v1878
        %v1880 = vsel %vm1220, %v1835, %v1879
        %v1881 = vrot.slane %v609, 3
        %v1882 = vrot.slane %v612, 4
        %v1883 = vor.u32 %v1881, %v1882
        %v1884 = vsel %vm1220, %v1839, %v1883
        %v1886 = vshrl.u32 %v883, 16
        %v1888 = vrot.slane %v1886, 3
        %v1889 = vshll.u32 %v883, 16
        %v1891 = vrot.slane %v1889, 4
        %v1892 = vor.u32 %v1888, %v1891
        %v1893 = vsel %vm1220, %v1848, %v1892
        %v1895 = vshrl.u32 %v1003, 16
        %v1897 = vrot.slane %v1895, 3
        %v1898 = vshll.u32 %v1003, 16
        %v1900 = vrot.slane %v1898, 4
        %v1901 = vor.u32 %v1897, %v1900
        %v1902 = vsel %vm1220, %v1857, %v1901
        %v1903 = vrot.slane %v885, 3
        %v1904 = vrot.slane %v888, 4
        %v1905 = vor.u32 %v1903, %v1904
        %v1906 = vsel %vm1220, %v1861, %v1905
        %v1908 = vshrl.u32 %v634, 16
        %v1910 = vrot.slane %v1908, 3
        %v1911 = vshll.u32 %v634, 16
        %v1913 = vrot.slane %v1911, 4
        %v1914 = vor.u32 %v1910, %v1913
        %v1915 = vsel %vm1220, %v1870, %v1914
        %v1917 = vshrl.u32 %v734, 16
        %v1919 = vrot.slane %v1917, 3
        %v1920 = vshll.u32 %v734, 16
        %v1922 = vrot.slane %v1920, 4
        %v1923 = vor.u32 %v1919, %v1922
        %v1924 = vsel %vm1220, %v1879, %v1923
        %v1925 = vrot.slane %v618, 3
        %v1926 = vrot.slane %v621, 4
        %v1927 = vor.u32 %v1925, %v1926
        %v1928 = vsel %vm1220, %v1883, %v1927
        %v1930 = vshrl.u32 %v892, 16
        %v1932 = vrot.slane %v1930, 3
        %v1933 = vshll.u32 %v892, 16
        %v1935 = vrot.slane %v1933, 4
        %v1936 = vor.u32 %v1932, %v1935
        %v1937 = vsel %vm1220, %v1892, %v1936
        %v1939 = vshrl.u32 %v1005, 16
        %v1941 = vrot.slane %v1939, 3
        %v1942 = vshll.u32 %v1005, 16
        %v1944 = vrot.slane %v1942, 4
        %v1945 = vor.u32 %v1941, %v1944
        %v1946 = vsel %vm1220, %v1901, %v1945
        %v1947 = vrot.slane %v894, 3
        %v1948 = vrot.slane %v897, 4
        %v1949 = vor.u32 %v1947, %v1948
        %v1950 = vsel %vm1220, %v1905, %v1949
        %v1952 = vshrl.u32 %v643, 16
        %v1954 = vrot.slane %v1952, 3
        %v1955 = vshll.u32 %v643, 16
        %v1957 = vrot.slane %v1955, 4
        %v1958 = vor.u32 %v1954, %v1957
        %v1959 = vsel %vm1220, %v1914, %v1958
        %v1961 = vshrl.u32 %v736, 16
        %v1963 = vrot.slane %v1961, 3
        %v1964 = vshll.u32 %v736, 16
        %v1966 = vrot.slane %v1964, 4
        %v1967 = vor.u32 %v1963, %v1966
        %v1968 = vsel %vm1220, %v1923, %v1967
        %v1969 = vrot.slane %v627, 3
        %v1970 = vrot.slane %v630, 4
        %v1971 = vor.u32 %v1969, %v1970
        %v1972 = vsel %vm1220, %v1927, %v1971
        %v1974 = vshrl.u32 %v901, 16
        %v1976 = vrot.slane %v1974, 3
        %v1977 = vshll.u32 %v901, 16
        %v1979 = vrot.slane %v1977, 4
        %v1980 = vor.u32 %v1976, %v1979
        %v1981 = vsel %vm1220, %v1936, %v1980
        %v1983 = vshrl.u32 %v1007, 16
        %v1985 = vrot.slane %v1983, 3
        %v1986 = vshll.u32 %v1007, 16
        %v1988 = vrot.slane %v1986, 4
        %v1989 = vor.u32 %v1985, %v1988
        %v1990 = vsel %vm1220, %v1945, %v1989
        %v1991 = vrot.slane %v903, 3
        %v1992 = vrot.slane %v906, 4
        %v1993 = vor.u32 %v1991, %v1992
        %v1994 = vsel %vm1220, %v1949, %v1993
        %v1996 = vshrl.u32 %v652, 16
        %v1998 = vrot.slane %v1996, 3
        %v1999 = vshll.u32 %v652, 16
        %v2001 = vrot.slane %v1999, 4
        %v2002 = vor.u32 %v1998, %v2001
        %v2003 = vsel %vm1220, %v1958, %v2002
        %v2005 = vshrl.u32 %v738, 16
        %v2007 = vrot.slane %v2005, 3
        %v2008 = vshll.u32 %v738, 16
        %v2010 = vrot.slane %v2008, 4
        %v2011 = vor.u32 %v2007, %v2010
        %v2012 = vsel %vm1220, %v1967, %v2011
        %v2013 = vrot.slane %v636, 3
        %v2014 = vrot.slane %v639, 4
        %v2015 = vor.u32 %v2013, %v2014
        %v2016 = vsel %vm1220, %v1971, %v2015
        %v2018 = vshrl.u32 %v910, 16
        %v2020 = vrot.slane %v2018, 3
        %v2021 = vshll.u32 %v910, 16
        %v2023 = vrot.slane %v2021, 4
        %v2024 = vor.u32 %v2020, %v2023
        %v2025 = vsel %vm1220, %v1980, %v2024
        %v2027 = vshrl.u32 %v1009, 16
        %v2029 = vrot.slane %v2027, 3
        %v2030 = vshll.u32 %v1009, 16
        %v2032 = vrot.slane %v2030, 4
        %v2033 = vor.u32 %v2029, %v2032
        %v2034 = vsel %vm1220, %v1989, %v2033
        %v2035 = vrot.slane %v912, 3
        %v2036 = vrot.slane %v915, 4
        %v2037 = vor.u32 %v2035, %v2036
        %v2038 = vsel %vm1220, %v1993, %v2037
        %v2040 = vshrl.u32 %v661, 16
        %v2042 = vrot.slane %v2040, 3
        %v2043 = vshll.u32 %v661, 16
        %v2045 = vrot.slane %v2043, 4
        %v2046 = vor.u32 %v2042, %v2045
        %v2047 = vsel %vm1220, %v2002, %v2046
        %v2049 = vshrl.u32 %v740, 16
        %v2051 = vrot.slane %v2049, 3
        %v2052 = vshll.u32 %v740, 16
        %v2054 = vrot.slane %v2052, 4
        %v2055 = vor.u32 %v2051, %v2054
        %v2056 = vsel %vm1220, %v2011, %v2055
        %v2057 = vrot.slane %v645, 3
        %v2058 = vrot.slane %v648, 4
        %v2059 = vor.u32 %v2057, %v2058
        %v2060 = vsel %vm1220, %v2015, %v2059
        %v2062 = vshrl.u32 %v919, 16
        %v2064 = vrot.slane %v2062, 3
        %v2065 = vshll.u32 %v919, 16
        %v2067 = vrot.slane %v2065, 4
        %v2068 = vor.u32 %v2064, %v2067
        %v2069 = vsel %vm1220, %v2024, %v2068
        %v2071 = vshrl.u32 %v1011, 16
        %v2073 = vrot.slane %v2071, 3
        %v2074 = vshll.u32 %v1011, 16
        %v2076 = vrot.slane %v2074, 4
        %v2077 = vor.u32 %v2073, %v2076
        %v2078 = vsel %vm1220, %v2033, %v2077
        %v2079 = vrot.slane %v921, 3
        %v2080 = vrot.slane %v924, 4
        %v2081 = vor.u32 %v2079, %v2080
        %v2082 = vsel %vm1220, %v2037, %v2081
        %v2084 = vshrl.u32 %v670, 16
        %v2086 = vrot.slane %v2084, 3
        %v2087 = vshll.u32 %v670, 16
        %v2089 = vrot.slane %v2087, 4
        %v2090 = vor.u32 %v2086, %v2089
        %v2091 = vsel %vm1220, %v2046, %v2090
        %v2093 = vshrl.u32 %v742, 16
        %v2095 = vrot.slane %v2093, 3
        %v2096 = vshll.u32 %v742, 16
        %v2098 = vrot.slane %v2096, 4
        %v2099 = vor.u32 %v2095, %v2098
        %v2100 = vsel %vm1220, %v2055, %v2099
        %v2101 = vrot.slane %v654, 3
        %v2102 = vrot.slane %v657, 4
        %v2103 = vor.u32 %v2101, %v2102
        %v2104 = vsel %vm1220, %v2059, %v2103
        %v2106 = vshrl.u32 %v928, 16
        %v2108 = vrot.slane %v2106, 3
        %v2109 = vshll.u32 %v928, 16
        %v2111 = vrot.slane %v2109, 4
        %v2112 = vor.u32 %v2108, %v2111
        %v2113 = vsel %vm1220, %v2068, %v2112
        %v2115 = vshrl.u32 %v1013, 16
        %v2117 = vrot.slane %v2115, 3
        %v2118 = vshll.u32 %v1013, 16
        %v2120 = vrot.slane %v2118, 4
        %v2121 = vor.u32 %v2117, %v2120
        %v2122 = vsel %vm1220, %v2077, %v2121
        %v2123 = vrot.slane %v930, 3
        %v2124 = vrot.slane %v933, 4
        %v2125 = vor.u32 %v2123, %v2124
        %v2126 = vsel %vm1220, %v2081, %v2125
        %v2128 = vshrl.u32 %v679, 16
        %v2130 = vrot.slane %v2128, 3
        %v2131 = vshll.u32 %v679, 16
        %v2133 = vrot.slane %v2131, 4
        %v2134 = vor.u32 %v2130, %v2133
        %v2135 = vsel %vm1220, %v2090, %v2134
        %v2137 = vshrl.u32 %v744, 16
        %v2139 = vrot.slane %v2137, 3
        %v2140 = vshll.u32 %v744, 16
        %v2142 = vrot.slane %v2140, 4
        %v2143 = vor.u32 %v2139, %v2142
        %v2144 = vsel %vm1220, %v2099, %v2143
        %v2145 = vrot.slane %v663, 3
        %v2146 = vrot.slane %v666, 4
        %v2147 = vor.u32 %v2145, %v2146
        %v2148 = vsel %vm1220, %v2103, %v2147
        %v2150 = vshrl.u32 %v937, 16
        %v2152 = vrot.slane %v2150, 3
        %v2153 = vshll.u32 %v937, 16
        %v2155 = vrot.slane %v2153, 4
        %v2156 = vor.u32 %v2152, %v2155
        %v2157 = vsel %vm1220, %v2112, %v2156
        %v2159 = vshrl.u32 %v1015, 16
        %v2161 = vrot.slane %v2159, 3
        %v2162 = vshll.u32 %v1015, 16
        %v2164 = vrot.slane %v2162, 4
        %v2165 = vor.u32 %v2161, %v2164
        %v2166 = vsel %vm1220, %v2121, %v2165
        %v2167 = vrot.slane %v939, 3
        %v2168 = vrot.slane %v942, 4
        %v2169 = vor.u32 %v2167, %v2168
        %v2170 = vsel %vm1220, %v2125, %v2169
        %v2172 = vshrl.u32 %v688, 16
        %v2174 = vrot.slane %v2172, 3
        %v2175 = vshll.u32 %v688, 16
        %v2177 = vrot.slane %v2175, 4
        %v2178 = vor.u32 %v2174, %v2177
        %v2179 = vsel %vm1220, %v2134, %v2178
        %v2181 = vshrl.u32 %v746, 16
        %v2183 = vrot.slane %v2181, 3
        %v2184 = vshll.u32 %v746, 16
        %v2186 = vrot.slane %v2184, 4
        %v2187 = vor.u32 %v2183, %v2186
        %v2188 = vsel %vm1220, %v2143, %v2187
        %v2189 = vrot.slane %v672, 3
        %v2190 = vrot.slane %v675, 4
        %v2191 = vor.u32 %v2189, %v2190
        %v2192 = vsel %vm1220, %v2147, %v2191
        %v2194 = vshrl.u32 %v946, 16
        %v2196 = vrot.slane %v2194, 3
        %v2197 = vshll.u32 %v946, 16
        %v2199 = vrot.slane %v2197, 4
        %v2200 = vor.u32 %v2196, %v2199
        %v2201 = vsel %vm1220, %v2156, %v2200
        %v2203 = vshrl.u32 %v1017, 16
        %v2205 = vrot.slane %v2203, 3
        %v2206 = vshll.u32 %v1017, 16
        %v2208 = vrot.slane %v2206, 4
        %v2209 = vor.u32 %v2205, %v2208
        %v2210 = vsel %vm1220, %v2165, %v2209
        %v2211 = vrot.slane %v948, 3
        %v2212 = vrot.slane %v951, 4
        %v2213 = vor.u32 %v2211, %v2212
        %v2214 = vsel %vm1220, %v2169, %v2213
        %v2216 = vshrl.u32 %v697, 16
        %v2218 = vrot.slane %v2216, 3
        %v2219 = vshll.u32 %v697, 16
        %v2221 = vrot.slane %v2219, 4
        %v2222 = vor.u32 %v2218, %v2221
        %v2223 = vsel %vm1220, %v2178, %v2222
        %v2225 = vshrl.u32 %v748, 16
        %v2227 = vrot.slane %v2225, 3
        %v2228 = vshll.u32 %v748, 16
        %v2230 = vrot.slane %v2228, 4
        %v2231 = vor.u32 %v2227, %v2230
        %v2232 = vsel %vm1220, %v2187, %v2231
        %v2233 = vrot.slane %v681, 3
        %v2234 = vrot.slane %v684, 4
        %v2235 = vor.u32 %v2233, %v2234
        %v2236 = vsel %vm1220, %v2191, %v2235
        %v2238 = vshrl.u32 %v955, 16
        %v2240 = vrot.slane %v2238, 3
        %v2241 = vshll.u32 %v955, 16
        %v2243 = vrot.slane %v2241, 4
        %v2244 = vor.u32 %v2240, %v2243
        %v2245 = vsel %vm1220, %v2200, %v2244
        %v2247 = vshrl.u32 %v1019, 16
        %v2249 = vrot.slane %v2247, 3
        %v2250 = vshll.u32 %v1019, 16
        %v2252 = vrot.slane %v2250, 4
        %v2253 = vor.u32 %v2249, %v2252
        %v2254 = vsel %vm1220, %v2209, %v2253
        %v2255 = vrot.slane %v957, 3
        %v2256 = vrot.slane %v960, 4
        %v2257 = vor.u32 %v2255, %v2256
        %v2258 = vsel %vm1220, %v2213, %v2257
        %v2260 = vshrl.u32 %v1042, 16
        %v2262 = vrot.slane %v2260, 3
        %v2263 = vshll.u32 %v1042, 16
        %v2265 = vrot.slane %v2263, 4
        %v2266 = vor.u32 %v2262, %v2265
        %v2267 = vsel %vm1220, %v2222, %v2266
        %v2269 = vshrl.u32 %v1065, 16
        %v2271 = vrot.slane %v2269, 3
        %v2272 = vshll.u32 %v1065, 16
        %v2274 = vrot.slane %v2272, 4
        %v2275 = vor.u32 %v2271, %v2274
        %v2276 = vsel %vm1220, %v2231, %v2275
        %v2277 = vrot.slane %v690, 3
        %v2278 = vrot.slane %v693, 4
        %v2279 = vor.u32 %v2277, %v2278
        %v2280 = vsel %vm1220, %v2235, %v2279
        %v2282 = vshrl.u32 %v964, 16
        %v2284 = vrot.slane %v2282, 3
        %v2285 = vshll.u32 %v964, 16
        %v2287 = vrot.slane %v2285, 4
        %v2288 = vor.u32 %v2284, %v2287
        %v2289 = vsel %vm1220, %v2244, %v2288
        %v2291 = vshrl.u32 %v1021, 16
        %v2293 = vrot.slane %v2291, 3
        %v2294 = vshll.u32 %v1021, 16
        %v2296 = vrot.slane %v2294, 4
        %v2297 = vor.u32 %v2293, %v2296
        %v2298 = vsel %vm1220, %v2253, %v2297
        %v2299 = vrot.slane %v966, 3
        %v2300 = vrot.slane %v969, 4
        %v2301 = vor.u32 %v2299, %v2300
        %v2302 = vsel %vm1220, %v2257, %v2301
        %v2304 = vshrl.u32 %v1051, 16
        %v2306 = vrot.slane %v2304, 3
        %v2307 = vshll.u32 %v1051, 16
        %v2309 = vrot.slane %v2307, 4
        %v2310 = vor.u32 %v2306, %v2309
        %v2311 = vsel %vm1220, %v2266, %v2310
        %v2313 = vshrl.u32 %v1067, 16
        %v2315 = vrot.slane %v2313, 3
        %v2316 = vshll.u32 %v1067, 16
        %v2318 = vrot.slane %v2316, 4
        %v2319 = vor.u32 %v2315, %v2318
        %v2320 = vsel %vm1220, %v2275, %v2319
        %v2321 = vrot.slane %v1035, 3
        %v2322 = vrot.slane %v1038, 4
        %v2323 = vor.u32 %v2321, %v2322
        %v2324 = vsel %vm1220, %v2279, %v2323
        %v2326 = vshrl.u32 %v973, 16
        %v2328 = vrot.slane %v2326, 3
        %v2329 = vshll.u32 %v973, 16
        %v2331 = vrot.slane %v2329, 4
        %v2332 = vor.u32 %v2328, %v2331
        %v2333 = vsel %vm1220, %v2288, %v2332
        %v2335 = vshrl.u32 %v1023, 16
        %v2337 = vrot.slane %v2335, 3
        %v2338 = vshll.u32 %v1023, 16
        %v2340 = vrot.slane %v2338, 4
        %v2341 = vor.u32 %v2337, %v2340
        %v2342 = vsel %vm1220, %v2297, %v2341
        %v2344 = vshrl.u32 %v1030, 16
        %v2346 = vrot.slane %v2344, 3
        %v2347 = vshll.u32 %v1030, 16
        %v2349 = vrot.slane %v2347, 4
        %v2350 = vor.u32 %v2346, %v2349
        %v2351 = vsel %vm1220, %v2301, %v2350
        %v2353 = vshrl.u32 %v1060, 16
        %v2355 = vrot.slane %v2353, 3
        %v2356 = vshll.u32 %v1060, 16
        %v2358 = vrot.slane %v2356, 4
        %v2359 = vor.u32 %v2355, %v2358
        %v2360 = vsel %vm1220, %v2310, %v2359
        %v2362 = vshrl.u32 %v1069, 16
        %v2364 = vrot.slane %v2362, 3
        %v2365 = vshll.u32 %v1069, 16
        %v2367 = vrot.slane %v2365, 4
        %v2368 = vor.u32 %v2364, %v2367
        %v2369 = vsel %vm1220, %v2319, %v2368
        %v2371 = vshrl.u32 %v457, 16
        %v2373 = vrot.slane %v2371, 3
        %v2374 = vshll.u32 %v457, 16
        %v2376 = vrot.slane %v2374, 4
        %v2377 = vor.u32 %v2373, %v2376
        %v2378 = vsel %vm1220, %v2213, %v2377
        %v2380 = vshrl.u32 %v696, 16
        %v2382 = vrot.slane %v2380, 3
        %v2383 = vshll.u32 %v696, 16
        %v2385 = vrot.slane %v2383, 4
        %v2386 = vor.u32 %v2382, %v2385
        %v2387 = vsel %vm1220, %v2222, %v2386
        %v2389 = vshrl.u32 %v750, 16
        %v2391 = vrot.slane %v2389, 3
        %v2392 = vshll.u32 %v750, 16
        %v2394 = vrot.slane %v2392, 4
        %v2395 = vor.u32 %v2391, %v2394
        %v2396 = vsel %vm1220, %v2231, %v2395
        %v2398 = vshrl.u32 %v756, 16
        %v2400 = vrot.slane %v2398, 3
        %v2401 = vshll.u32 %v756, 16
        %v2403 = vrot.slane %v2401, 4
        %v2404 = vor.u32 %v2400, %v2403
        %v2405 = vsel %vm1220, %v2323, %v2404
        %v2407 = vshrl.u32 %v972, 16
        %v2409 = vrot.slane %v2407, 3
        %v2410 = vshll.u32 %v972, 16
        %v2412 = vrot.slane %v2410, 4
        %v2413 = vor.u32 %v2409, %v2412
        %v2414 = vsel %vm1220, %v2332, %v2413
        %v2416 = vshrl.u32 %v1025, 16
        %v2418 = vrot.slane %v2416, 3
        %v2419 = vshll.u32 %v1025, 16
        %v2421 = vrot.slane %v2419, 4
        %v2422 = vor.u32 %v2418, %v2421
        %v2423 = vsel %vm1220, %v2341, %v2422
        %v2425 = vshrl.u32 %v1031, 16
        %v2427 = vrot.slane %v2425, 3
        %v2428 = vshll.u32 %v1031, 16
        %v2430 = vrot.slane %v2428, 4
        %v2431 = vor.u32 %v2427, %v2430
        %v2432 = vsel %vm1220, %v2350, %v2431
        %v2434 = vshrl.u32 %v1059, 16
        %v2436 = vrot.slane %v2434, 3
        %v2437 = vshll.u32 %v1059, 16
        %v2439 = vrot.slane %v2437, 4
        %v2440 = vor.u32 %v2436, %v2439
        %v2441 = vsel %vm1220, %v2359, %v2440
        %v2443 = vshrl.u32 %v1071, 16
        %v2445 = vrot.slane %v2443, 3
        %v2446 = vshll.u32 %v1071, 16
        %v2448 = vrot.slane %v2446, 4
        %v2449 = vor.u32 %v2445, %v2448
        %v2450 = vsel %vm1220, %v2368, %v2449
        %v2753 = vunpack.c.l.b16 %v1072
        %v2754 = vunpack.c.l.b16 %v1073
        %v2755 = vunpack.c.l.b16 %v1074
        %v2756 = vunpack.c.l.b16 %v1075
        %v2757 = vunpack.c.l.b16 %v1076
        %v2758 = vunpack.c.l.b16 %v1077
        %v2759 = vunpack.c.l.b16 %v1078
        %v2760 = vunpack.c.l.b16 %v1079
        %v2761 = vunpack.c.l.b16 %v1080
        %v2762 = vunpack.c.l.b16 %v1081
        %v2763 = vunpack.c.l.b16 %v1082
        %v2764 = vunpack.c.l.b16 %v1083
        %v2765 = vunpack.c.l.b16 %v1084
        %v2766 = vunpack.c.l.b16 %v1085
        %v2767 = vunpack.c.l.b16 %v1086
        %v2768 = vunpack.c.l.b16 %v1087
        %v2769 = vunpack.c.l.b16 %v1088
        %v2770 = vunpack.c.l.b16 %v1089
        %v2771 = vunpack.c.l.b16 %v1090
        %v2772 = vunpack.c.l.b16 %v1091
        %v2773 = vunpack.c.l.b16 %v1092
        %v2774 = vunpack.c.l.b16 %v1093
        %v2775 = vunpack.c.l.b16 %v1094
        %v2776 = vunpack.c.l.b16 %v1095
        %v2777 = vunpack.c.l.b16 %v1096
        %v2778 = vunpack.c.l.b16 %v1097
        %v2779 = vunpack.c.l.b16 %v1098
        %v2780 = vunpack.c.l.b16 %v1099
        %v2781 = vunpack.c.l.b16 %v1100
        %v2782 = vunpack.c.l.b16 %v1101
        %v2783 = vunpack.c.l.b16 %v1102
        %v2784 = vunpack.c.l.b16 %v1103
        %v2785 = vunpack.c.l.b16 %v1104
        %v2786 = vunpack.c.l.b16 %v1105
        %v2787 = vunpack.c.l.b16 %v1106
        %v2788 = vunpack.c.l.b16 %v1107
        %v2789 = vunpack.c.l.b16 %v1108
        %v2790 = vunpack.c.l.b16 %v1109
        %v2791 = vunpack.c.l.b16 %v1110
        %v2792 = vunpack.c.l.b16 %v1111
        %v2793 = vunpack.c.l.b16 %v1112
        %v2794 = vunpack.c.l.b16 %v1113
        %v2795 = vunpack.c.l.b16 %v1114
        %v2796 = vunpack.c.l.b16 %v1115
        %v2797 = vunpack.c.l.b16 %v1116
        %v2798 = vunpack.c.l.b16 %v1117
        %v2799 = vunpack.c.l.b16 %v1118
        %v2800 = vunpack.c.l.b16 %v1119
        %v2801 = vunpack.c.l.b16 %v1120
        %v2802 = vunpack.c.l.b16 %v1121
        %v2803 = vunpack.c.l.b16 %v1122
        %v2804 = vunpack.c.l.b16 %v1123
        %v2805 = vunpack.c.l.b16 %v1124
        %v2806 = vunpack.c.l.b16 %v1125
        %v2807 = vunpack.c.l.b16 %v1126
        %v2808 = vunpack.c.l.b16 %v1127
        %v2809 = vunpack.c.l.b16 %v1128
        %v2810 = vunpack.c.l.b16 %v1129
        %v2811 = vunpack.c.l.b16 %v1130
        %v2812 = vunpack.c.l.b16 %v1131
        %v2813 = vunpack.c.l.b16 %v1132
        %v2814 = vunpack.c.l.b16 %v1133
        %v2815 = vunpack.c.l.b16 %v1134
        %v2816 = vunpack.c.l.b16 %v1135
        %v2817 = vunpack.c.l.b16 %v1136
        %v2818 = vunpack.c.l.b16 %v1137
        %v2819 = vunpack.c.l.b16 %v1138
        %v2820 = vunpack.c.l.b16 %v1139
        %v2821 = vunpack.c.l.b16 %v1140
        %v2822 = vunpack.c.l.b16 %v1141
        %v2823 = vunpack.c.l.b16 %v1142
        %v2824 = vunpack.c.l.b16 %v1143
        %v2825 = vunpack.c.l.b16 %v1144
        %v2826 = vunpack.c.l.b16 %v1145
        %v2827 = vunpack.c.l.b16 %v1146
        %v2828 = vunpack.c.l.b16 %v1147
        %v2829 = vunpack.c.l.b16 %v1148
        %v2830 = vunpack.c.l.b16 %v1149
        %v2831 = vunpack.c.l.b16 %v1150
        %v2832 = vunpack.c.l.b16 %v1151
        %v2833 = vunpack.c.l.b16 %v1152
        %v2834 = vunpack.c.l.b16 %v1153
        %v2835 = vunpack.c.l.b16 %v1154
        %v2836 = vunpack.c.l.b16 %v1155
        %v2837 = vunpack.c.l.b16 %v1156
        %v2838 = vunpack.c.l.b16 %v1157
        %v2839 = vunpack.c.l.b16 %v1158
        %v2840 = vunpack.c.l.b16 %v1159
        %v2841 = vunpack.c.l.b16 %v1160
        %v2842 = vunpack.c.l.b16 %v1161
        %v2843 = vunpack.c.l.b16 %v1162
        %v2844 = vunpack.c.l.b16 %v1163
        %v2845 = vunpack.c.l.b16 %v1164
        %v2846 = vunpack.c.l.b16 %v1165
        %v2847 = vunpack.c.l.b16 %v1166
        %v2848 = vunpack.c.l.b16 %v1167
        %v2849 = vunpack.c.l.b16 %v1168
        %v2850 = vunpack.c.l.b16 %v1169
        %v2851 = vunpack.c.l.b16 %v1170
        %v2852 = vunpack.c.l.b16 %v1171
        %v2853 = vunpack.c.l.b16 %v1172
        %v2854 = vunpack.c.l.b16 %v1173
        %v2855 = vunpack.c.l.b16 %v1174
        %v2856 = vunpack.c.l.b16 %v1175
        %v2857 = vunpack.c.l.b16 %v1176
        %v2858 = vunpack.c.l.b16 %v1177
        %v2859 = vunpack.c.l.b16 %v1178
        %v2860 = vunpack.c.l.b16 %v1179
        %v2861 = vunpack.c.l.b16 %v1180
        %v2862 = vunpack.c.l.b16 %v1181
        %v2863 = vunpack.c.l.b16 %v1182
        %v2864 = vunpack.c.l.b16 %v1183
        %v2865 = vunpack.c.l.b16 %v1184
        %v2866 = vunpack.c.l.b16 %v1185
        %v2867 = vunpack.c.l.b16 %v1186
        %v2868 = vunpack.c.l.b16 %v1187
        %v2869 = vunpack.c.l.b16 %v1188
        %v2870 = vunpack.c.l.b16 %v1189
        %v2871 = vunpack.c.l.b16 %v1190
        %v2872 = vunpack.c.l.b16 %v1191
        %v2873 = vunpack.c.l.b16 %v1192
        %v2874 = vunpack.c.l.b16 %v1193
        %v2875 = vunpack.c.l.b16 %v1194
        %v2876 = vunpack.c.l.b16 %v1195
        %v2877 = vunpack.c.l.b16 %v1196
        %v2878 = vunpack.c.l.b16 %v1197
        %v2879 = vunpack.c.l.b16 %v1198
        %v2880 = vunpack.c.l.b16 %v1199
        %v2881 = vunpack.c.l.b16 %v1200
        %v2882 = vunpack.c.l.b16 %v1201
        %v2883 = vunpack.c.l.b16 %v1202
        %v2884 = vunpack.c.l.b16 %v1203
        %v2885 = vunpack.c.l.b16 %v1204
        %v2886 = vunpack.c.l.b16 %v1205
        %v2887 = vunpack.c.l.b16 %v1206
        %v2888 = vunpack.c.l.b16 %v1207
        %v2889 = vunpack.c.l.b16 %v1208
        %v2890 = vunpack.c.l.b16 %v1209
        %v2891 = vunpack.c.l.b16 %v1210
        %v2892 = vunpack.c.l.b16 %v1211
        %v2893 = vunpack.c.l.b16 %v1212
        %v2894 = vunpack.c.l.b16 %v1213
        %v2895 = vunpack.c.l.b16 %v1214
        %v2896 = vunpack.c.l.b16 %v1215
        %v2897 = vpack.c.b16 %v2754, %v2753
        %v2898 = vpack.c.b16 %v2756, %v2755
        %v2899 = vpack.c.b16 %v2758, %v2757
        %v2900 = vpack.c.b16 %v2760, %v2759
        %v2901 = vpack.c.b16 %v2762, %v2761
        %v2902 = vpack.c.b16 %v2764, %v2763
        %v2903 = vpack.c.b16 %v2766, %v2765
        %v2904 = vpack.c.b16 %v2768, %v2767
        %v2905 = vpack.c.b16 %v2770, %v2769
        %v2906 = vpack.c.b16 %v2772, %v2771
        %v2907 = vpack.c.b16 %v2774, %v2773
        %v2908 = vpack.c.b16 %v2776, %v2775
        %v2909 = vpack.c.b16 %v2778, %v2777
        %v2910 = vpack.c.b16 %v2780, %v2779
        %v2911 = vpack.c.b16 %v2782, %v2781
        %v2912 = vpack.c.b16 %v2784, %v2783
        %v2913 = vpack.c.b16 %v2786, %v2785
        %v2914 = vpack.c.b16 %v2788, %v2787
        %v2915 = vpack.c.b16 %v2790, %v2789
        %v2916 = vpack.c.b16 %v2792, %v2791
        %v2917 = vpack.c.b16 %v2794, %v2793
        %v2918 = vpack.c.b16 %v2796, %v2795
        %v2919 = vpack.c.b16 %v2798, %v2797
        %v2920 = vpack.c.b16 %v2800, %v2799
        %v2921 = vpack.c.b16 %v2802, %v2801
        %v2922 = vpack.c.b16 %v2804, %v2803
        %v2923 = vpack.c.b16 %v2806, %v2805
        %v2924 = vpack.c.b16 %v2808, %v2807
        %v2925 = vpack.c.b16 %v2810, %v2809
        %v2926 = vpack.c.b16 %v2812, %v2811
        %v2927 = vpack.c.b16 %v2814, %v2813
        %v2928 = vpack.c.b16 %v2816, %v2815
        %v2929 = vpack.c.b16 %v2818, %v2817
        %v2930 = vpack.c.b16 %v2820, %v2819
        %v2931 = vpack.c.b16 %v2822, %v2821
        %v2932 = vpack.c.b16 %v2824, %v2823
        %v2933 = vpack.c.b16 %v2826, %v2825
        %v2934 = vpack.c.b16 %v2828, %v2827
        %v2935 = vpack.c.b16 %v2830, %v2829
        %v2936 = vpack.c.b16 %v2832, %v2831
        %v2937 = vpack.c.b16 %v2834, %v2833
        %v2938 = vpack.c.b16 %v2836, %v2835
        %v2939 = vpack.c.b16 %v2838, %v2837
        %v2940 = vpack.c.b16 %v2840, %v2839
        %v2941 = vpack.c.b16 %v2842, %v2841
        %v2942 = vpack.c.b16 %v2844, %v2843
        %v2943 = vpack.c.b16 %v2846, %v2845
        %v2944 = vpack.c.b16 %v2848, %v2847
        %v2945 = vpack.c.b16 %v2850, %v2849
        %v2946 = vpack.c.b16 %v2852, %v2851
        %v2947 = vpack.c.b16 %v2854, %v2853
        %v2948 = vpack.c.b16 %v2856, %v2855
        %v2949 = vpack.c.b16 %v2858, %v2857
        %v2950 = vpack.c.b16 %v2860, %v2859
        %v2951 = vpack.c.b16 %v2862, %v2861
        %v2952 = vpack.c.b16 %v2864, %v2863
        %v2953 = vpack.c.b16 %v2866, %v2865
        %v2954 = vpack.c.b16 %v2868, %v2867
        %v2955 = vpack.c.b16 %v2870, %v2869
        %v2956 = vpack.c.b16 %v2872, %v2871
        %v2957 = vpack.c.b16 %v2874, %v2873
        %v2958 = vpack.c.b16 %v2876, %v2875
        %v2959 = vpack.c.b16 %v2878, %v2877
        %v2960 = vpack.c.b16 %v2880, %v2879
        %v2961 = vpack.c.b16 %v2882, %v2881
        %v2962 = vpack.c.b16 %v2884, %v2883
        %v2963 = vpack.c.b16 %v2886, %v2885
        %v2964 = vpack.c.b16 %v2888, %v2887
        %v2965 = vpack.c.b16 %v2890, %v2889
        %v2966 = vpack.c.b16 %v2892, %v2891
        %v2967 = vpack.c.b16 %v2894, %v2893
        %v2968 = vpack.c.b16 %v2896, %v2895
        %3041 = vmatpush.bf16.msra.mxu0 %v2904
        %3042 = vmatpush.bf16.msra.mxu0 %v2903
        %3043 = vmatpush.bf16.msra.mxu0 %v2902
        %3044 = vmatpush.bf16.msra.mxu0 %v2901
        %3045 = vmatpush.bf16.msra.mxu0 %v2900
        %3046 = vmatpush.bf16.msra.mxu0 %v2899
        %3047 = vmatpush.bf16.msra.mxu0 %v2898
        %3048 = vmatpush.bf16.msra.mxu0 %v2897
        %3049 = vmatmul.bf16.gmra.mxu0 %v1237
        %v3050 = vpop.f32.mrf.mxu0
        %v3051 = vadd.f32 %v1218, %v3050
        %v3052 = vpop.f32.mrf.mxu0
        %v3053 = vadd.f32 %v1218, %v3052
        %3054 = vmatmul.bf16.gmra.mxu0 %v1357
        %v3055 = vpop.f32.mrf.mxu0
        %v3056 = vadd.f32 %v1218, %v3055
        %v3057 = vpop.f32.mrf.mxu0
        %v3058 = vadd.f32 %v1218, %v3057
        %3059 = vmatmul.bf16.gmra.mxu0 %v1420
        %v3060 = vpop.f32.mrf.mxu0
        %v3061 = vadd.f32 %v1218, %v3060
        %v3062 = vpop.f32.mrf.mxu0
        %v3063 = vadd.f32 %v1218, %v3062
        %3064 = vmatmul.bf16.gmra.mxu0 %v1319
        %v3065 = vpop.f32.mrf.mxu0
        %v3066 = vadd.f32 %v1218, %v3065
        %v3067 = vpop.f32.mrf.mxu0
        %v3068 = vadd.f32 %v1218, %v3067
        %3069 = vmatmul.bf16.gmra.mxu0 %v1401
        %v3070 = vpop.f32.mrf.mxu0
        %v3071 = vadd.f32 %v1218, %v3070
        %v3072 = vpop.f32.mrf.mxu0
        %v3073 = vadd.f32 %v1218, %v3072
        %3074 = vmatmul.bf16.gmra.mxu0 %v1464
        %v3075 = vpop.f32.mrf.mxu0
        %v3076 = vadd.f32 %v1218, %v3075
        %v3077 = vpop.f32.mrf.mxu0
        %v3078 = vadd.f32 %v1218, %v3077
        %3079 = vmatmul.bf16.gmra.mxu0 %v1510
        %v3080 = vpop.f32.mrf.mxu0
        %v3081 = vadd.f32 %v1218, %v3080
        %v3082 = vpop.f32.mrf.mxu0
        %v3083 = vadd.f32 %v1218, %v3082
        %3084 = vmatmul.bf16.gmra.mxu0 %v1554
        %v3085 = vpop.f32.mrf.mxu0
        %v3086 = vadd.f32 %v1218, %v3085
        %v3087 = vpop.f32.mrf.mxu0
        %v3088 = vadd.f32 %v1218, %v3087
        %3089 = vmatmul.bf16.gmra.mxu0 %v1598
        %v3090 = vpop.f32.mrf.mxu0
        %v3091 = vadd.f32 %v1218, %v3090
        %v3092 = vpop.f32.mrf.mxu0
        %v3093 = vadd.f32 %v1218, %v3092
        %3094 = vmatmul.bf16.gmra.mxu0 %v1642
        %v3095 = vpop.f32.mrf.mxu0
        %v3096 = vadd.f32 %v1218, %v3095
        %v3097 = vpop.f32.mrf.mxu0
        %v3098 = vadd.f32 %v1218, %v3097
        %3099 = vmatmul.bf16.gmra.mxu0 %v1686
        %v3100 = vpop.f32.mrf.mxu0
        %v3101 = vadd.f32 %v1218, %v3100
        %v3102 = vpop.f32.mrf.mxu0
        %v3103 = vadd.f32 %v1218, %v3102
        %3104 = vmatmul.bf16.gmra.mxu0 %v1730
        %v3105 = vpop.f32.mrf.mxu0
        %v3106 = vadd.f32 %v1218, %v3105
        %v3107 = vpop.f32.mrf.mxu0
        %v3108 = vadd.f32 %v1218, %v3107
        %3109 = vmatmul.bf16.gmra.mxu0 %v1774
        %v3110 = vpop.f32.mrf.mxu0
        %v3111 = vadd.f32 %v1218, %v3110
        %v3112 = vpop.f32.mrf.mxu0
        %v3113 = vadd.f32 %v1218, %v3112
        %3114 = vmatmul.bf16.gmra.mxu0 %v1818
        %v3115 = vpop.f32.mrf.mxu0
        %v3116 = vadd.f32 %v1218, %v3115
        %v3117 = vpop.f32.mrf.mxu0
        %v3118 = vadd.f32 %v1218, %v3117
        %3119 = vmatmul.bf16.gmra.mxu0 %v1862
        %v3120 = vpop.f32.mrf.mxu0
        %v3121 = vadd.f32 %v1218, %v3120
        %v3122 = vpop.f32.mrf.mxu0
        %v3123 = vadd.f32 %v1218, %v3122
        %3124 = vmatmul.bf16.gmra.mxu0 %v1906
        %v3125 = vpop.f32.mrf.mxu0
        %v3126 = vadd.f32 %v1218, %v3125
        %v3127 = vpop.f32.mrf.mxu0
        %v3128 = vadd.f32 %v1218, %v3127
        %3129 = vmatmul.bf16.gmra.mxu0 %v1950
        %v3130 = vpop.f32.mrf.mxu0
        %v3131 = vadd.f32 %v1218, %v3130
        %v3132 = vpop.f32.mrf.mxu0
        %v3133 = vadd.f32 %v1218, %v3132
        %3134 = vmatmul.bf16.gmra.mxu0 %v1994
        %v3135 = vpop.f32.mrf.mxu0
        %v3136 = vadd.f32 %v1218, %v3135
        %v3137 = vpop.f32.mrf.mxu0
        %v3138 = vadd.f32 %v1218, %v3137
        %3139 = vmatmul.bf16.gmra.mxu0 %v2038
        %v3140 = vpop.f32.mrf.mxu0
        %v3141 = vadd.f32 %v1218, %v3140
        %v3142 = vpop.f32.mrf.mxu0
        %v3143 = vadd.f32 %v1218, %v3142
        %3144 = vmatmul.bf16.gmra.mxu0 %v2082
        %v3145 = vpop.f32.mrf.mxu0
        %v3146 = vadd.f32 %v1218, %v3145
        %v3147 = vpop.f32.mrf.mxu0
        %v3148 = vadd.f32 %v1218, %v3147
        %3149 = vmatmul.bf16.gmra.mxu0 %v2126
        %v3150 = vpop.f32.mrf.mxu0
        %v3151 = vadd.f32 %v1218, %v3150
        %v3152 = vpop.f32.mrf.mxu0
        %v3153 = vadd.f32 %v1218, %v3152
        %3154 = vmatmul.bf16.gmra.mxu0 %v2170
        %v3155 = vpop.f32.mrf.mxu0
        %v3156 = vadd.f32 %v1218, %v3155
        %v3157 = vpop.f32.mrf.mxu0
        %v3158 = vadd.f32 %v1218, %v3157
        %3159 = vmatmul.bf16.gmra.mxu0 %v2214
        %v3160 = vpop.f32.mrf.mxu0
        %v3161 = vadd.f32 %v1218, %v3160
        %v3162 = vpop.f32.mrf.mxu0
        %v3163 = vadd.f32 %v1218, %v3162
        %3164 = vmatmul.bf16.gmra.mxu0 %v2378
        %v3165 = vpop.f32.mrf.mxu0
        %v3166 = vadd.f32 %v1218, %v3165
        %v3167 = vpop.f32.mrf.mxu0
        %v3168 = vadd.f32 %v1218, %v3167
        %3169 = vdwg.mxu0
        %3170 = vmatpush.bf16.msra.mxu0 %v2912
        %3171 = vmatpush.bf16.msra.mxu0 %v2911
        %3172 = vmatpush.bf16.msra.mxu0 %v2910
        %3173 = vmatpush.bf16.msra.mxu0 %v2909
        %3174 = vmatpush.bf16.msra.mxu0 %v2908
        %3175 = vmatpush.bf16.msra.mxu0 %v2907
        %3176 = vmatpush.bf16.msra.mxu0 %v2906
        %3177 = vmatpush.bf16.msra.mxu0 %v2905
        %3178 = vmatmul.bf16.gmra.mxu0 %v1254
        %v3179 = vpop.f32.mrf.mxu0
        %v3180 = vadd.f32 %v3051, %v3179
        %v3181 = vpop.f32.mrf.mxu0
        %v3182 = vadd.f32 %v3053, %v3181
        %3183 = vmatmul.bf16.gmra.mxu0 %v1366
        %v3184 = vpop.f32.mrf.mxu0
        %v3185 = vadd.f32 %v3056, %v3184
        %v3186 = vpop.f32.mrf.mxu0
        %v3187 = vadd.f32 %v3058, %v3186
        %3188 = vmatmul.bf16.gmra.mxu0 %v1429
        %v3189 = vpop.f32.mrf.mxu0
        %v3190 = vadd.f32 %v3061, %v3189
        %v3191 = vpop.f32.mrf.mxu0
        %v3192 = vadd.f32 %v3063, %v3191
        %3193 = vmatmul.bf16.gmra.mxu0 %v1483
        %v3194 = vpop.f32.mrf.mxu0
        %v3195 = vadd.f32 %v3066, %v3194
        %v3196 = vpop.f32.mrf.mxu0
        %v3197 = vadd.f32 %v3068, %v3196
        %3198 = vmatmul.bf16.gmra.mxu0 %v1410
        %v3199 = vpop.f32.mrf.mxu0
        %v3200 = vadd.f32 %v3071, %v3199
        %v3201 = vpop.f32.mrf.mxu0
        %v3202 = vadd.f32 %v3073, %v3201
        %3203 = vmatmul.bf16.gmra.mxu0 %v1473
        %v3204 = vpop.f32.mrf.mxu0
        %v3205 = vadd.f32 %v3076, %v3204
        %v3206 = vpop.f32.mrf.mxu0
        %v3207 = vadd.f32 %v3078, %v3206
        %3208 = vmatmul.bf16.gmra.mxu0 %v1519
        %v3209 = vpop.f32.mrf.mxu0
        %v3210 = vadd.f32 %v3081, %v3209
        %v3211 = vpop.f32.mrf.mxu0
        %v3212 = vadd.f32 %v3083, %v3211
        %3213 = vmatmul.bf16.gmra.mxu0 %v1563
        %v3214 = vpop.f32.mrf.mxu0
        %v3215 = vadd.f32 %v3086, %v3214
        %v3216 = vpop.f32.mrf.mxu0
        %v3217 = vadd.f32 %v3088, %v3216
        %3218 = vmatmul.bf16.gmra.mxu0 %v1607
        %v3219 = vpop.f32.mrf.mxu0
        %v3220 = vadd.f32 %v3091, %v3219
        %v3221 = vpop.f32.mrf.mxu0
        %v3222 = vadd.f32 %v3093, %v3221
        %3223 = vmatmul.bf16.gmra.mxu0 %v1651
        %v3224 = vpop.f32.mrf.mxu0
        %v3225 = vadd.f32 %v3096, %v3224
        %v3226 = vpop.f32.mrf.mxu0
        %v3227 = vadd.f32 %v3098, %v3226
        %3228 = vmatmul.bf16.gmra.mxu0 %v1695
        %v3229 = vpop.f32.mrf.mxu0
        %v3230 = vadd.f32 %v3101, %v3229
        %v3231 = vpop.f32.mrf.mxu0
        %v3232 = vadd.f32 %v3103, %v3231
        %3233 = vmatmul.bf16.gmra.mxu0 %v1739
        %v3234 = vpop.f32.mrf.mxu0
        %v3235 = vadd.f32 %v3106, %v3234
        %v3236 = vpop.f32.mrf.mxu0
        %v3237 = vadd.f32 %v3108, %v3236
        %3238 = vmatmul.bf16.gmra.mxu0 %v1783
        %v3239 = vpop.f32.mrf.mxu0
        %v3240 = vadd.f32 %v3111, %v3239
        %v3241 = vpop.f32.mrf.mxu0
        %v3242 = vadd.f32 %v3113, %v3241
        %3243 = vmatmul.bf16.gmra.mxu0 %v1827
        %v3244 = vpop.f32.mrf.mxu0
        %v3245 = vadd.f32 %v3116, %v3244
        %v3246 = vpop.f32.mrf.mxu0
        %v3247 = vadd.f32 %v3118, %v3246
        %3248 = vmatmul.bf16.gmra.mxu0 %v1871
        %v3249 = vpop.f32.mrf.mxu0
        %v3250 = vadd.f32 %v3121, %v3249
        %v3251 = vpop.f32.mrf.mxu0
        %v3252 = vadd.f32 %v3123, %v3251
        %3253 = vmatmul.bf16.gmra.mxu0 %v1915
        %v3254 = vpop.f32.mrf.mxu0
        %v3255 = vadd.f32 %v3126, %v3254
        %v3256 = vpop.f32.mrf.mxu0
        %v3257 = vadd.f32 %v3128, %v3256
        %3258 = vmatmul.bf16.gmra.mxu0 %v1959
        %v3259 = vpop.f32.mrf.mxu0
        %v3260 = vadd.f32 %v3131, %v3259
        %v3261 = vpop.f32.mrf.mxu0
        %v3262 = vadd.f32 %v3133, %v3261
        %3263 = vmatmul.bf16.gmra.mxu0 %v2003
        %v3264 = vpop.f32.mrf.mxu0
        %v3265 = vadd.f32 %v3136, %v3264
        %v3266 = vpop.f32.mrf.mxu0
        %v3267 = vadd.f32 %v3138, %v3266
        %3268 = vmatmul.bf16.gmra.mxu0 %v2047
        %v3269 = vpop.f32.mrf.mxu0
        %v3270 = vadd.f32 %v3141, %v3269
        %v3271 = vpop.f32.mrf.mxu0
        %v3272 = vadd.f32 %v3143, %v3271
        %3273 = vmatmul.bf16.gmra.mxu0 %v2091
        %v3274 = vpop.f32.mrf.mxu0
        %v3275 = vadd.f32 %v3146, %v3274
        %v3276 = vpop.f32.mrf.mxu0
        %v3277 = vadd.f32 %v3148, %v3276
        %3278 = vmatmul.bf16.gmra.mxu0 %v2135
        %v3279 = vpop.f32.mrf.mxu0
        %v3280 = vadd.f32 %v3151, %v3279
        %v3281 = vpop.f32.mrf.mxu0
        %v3282 = vadd.f32 %v3153, %v3281
        %3283 = vmatmul.bf16.gmra.mxu0 %v2179
        %v3284 = vpop.f32.mrf.mxu0
        %v3285 = vadd.f32 %v3156, %v3284
        %v3286 = vpop.f32.mrf.mxu0
        %v3287 = vadd.f32 %v3158, %v3286
        %3288 = vmatmul.bf16.gmra.mxu0 %v2223
        %v3289 = vpop.f32.mrf.mxu0
        %v3290 = vadd.f32 %v3161, %v3289
        %v3291 = vpop.f32.mrf.mxu0
        %v3292 = vadd.f32 %v3163, %v3291
        %3293 = vmatmul.bf16.gmra.mxu0 %v2387
        %v3294 = vpop.f32.mrf.mxu0
        %v3295 = vadd.f32 %v3166, %v3294
        %v3296 = vpop.f32.mrf.mxu0
        %v3297 = vadd.f32 %v3168, %v3296
        %3298 = vdwg.mxu0
        %3299 = vmatpush.bf16.msra.mxu0 %v2920
        %3300 = vmatpush.bf16.msra.mxu0 %v2919
        %3301 = vmatpush.bf16.msra.mxu0 %v2918
        %3302 = vmatpush.bf16.msra.mxu0 %v2917
        %3303 = vmatpush.bf16.msra.mxu0 %v2916
        %3304 = vmatpush.bf16.msra.mxu0 %v2915
        %3305 = vmatpush.bf16.msra.mxu0 %v2914
        %3306 = vmatpush.bf16.msra.mxu0 %v2913
        %3307 = vmatmul.bf16.gmra.mxu0 %v1271
        %v3308 = vpop.f32.mrf.mxu0
        %v3309 = vadd.f32 %v3180, %v3308
        %v3310 = vpop.f32.mrf.mxu0
        %v3311 = vadd.f32 %v3182, %v3310
        %3312 = vmatmul.bf16.gmra.mxu0 %v1375
        %v3313 = vpop.f32.mrf.mxu0
        %v3314 = vadd.f32 %v3185, %v3313
        %v3315 = vpop.f32.mrf.mxu0
        %v3316 = vadd.f32 %v3187, %v3315
        %3317 = vmatmul.bf16.gmra.mxu0 %v1438
        %v3318 = vpop.f32.mrf.mxu0
        %v3319 = vadd.f32 %v3190, %v3318
        %v3320 = vpop.f32.mrf.mxu0
        %v3321 = vadd.f32 %v3192, %v3320
        %3322 = vmatmul.bf16.gmra.mxu0 %v1484
        %v3323 = vpop.f32.mrf.mxu0
        %v3324 = vadd.f32 %v3195, %v3323
        %v3325 = vpop.f32.mrf.mxu0
        %v3326 = vadd.f32 %v3197, %v3325
        %3327 = vmatmul.bf16.gmra.mxu0 %v1419
        %v3328 = vpop.f32.mrf.mxu0
        %v3329 = vadd.f32 %v3200, %v3328
        %v3330 = vpop.f32.mrf.mxu0
        %v3331 = vadd.f32 %v3202, %v3330
        %3332 = vmatmul.bf16.gmra.mxu0 %v1482
        %v3333 = vpop.f32.mrf.mxu0
        %v3334 = vadd.f32 %v3205, %v3333
        %v3335 = vpop.f32.mrf.mxu0
        %v3336 = vadd.f32 %v3207, %v3335
        %3337 = vmatmul.bf16.gmra.mxu0 %v1528
        %v3338 = vpop.f32.mrf.mxu0
        %v3339 = vadd.f32 %v3210, %v3338
        %v3340 = vpop.f32.mrf.mxu0
        %v3341 = vadd.f32 %v3212, %v3340
        %3342 = vmatmul.bf16.gmra.mxu0 %v1572
        %v3343 = vpop.f32.mrf.mxu0
        %v3344 = vadd.f32 %v3215, %v3343
        %v3345 = vpop.f32.mrf.mxu0
        %v3346 = vadd.f32 %v3217, %v3345
        %3347 = vmatmul.bf16.gmra.mxu0 %v1616
        %v3348 = vpop.f32.mrf.mxu0
        %v3349 = vadd.f32 %v3220, %v3348
        %v3350 = vpop.f32.mrf.mxu0
        %v3351 = vadd.f32 %v3222, %v3350
        %3352 = vmatmul.bf16.gmra.mxu0 %v1660
        %v3353 = vpop.f32.mrf.mxu0
        %v3354 = vadd.f32 %v3225, %v3353
        %v3355 = vpop.f32.mrf.mxu0
        %v3356 = vadd.f32 %v3227, %v3355
        %3357 = vmatmul.bf16.gmra.mxu0 %v1704
        %v3358 = vpop.f32.mrf.mxu0
        %v3359 = vadd.f32 %v3230, %v3358
        %v3360 = vpop.f32.mrf.mxu0
        %v3361 = vadd.f32 %v3232, %v3360
        %3362 = vmatmul.bf16.gmra.mxu0 %v1748
        %v3363 = vpop.f32.mrf.mxu0
        %v3364 = vadd.f32 %v3235, %v3363
        %v3365 = vpop.f32.mrf.mxu0
        %v3366 = vadd.f32 %v3237, %v3365
        %3367 = vmatmul.bf16.gmra.mxu0 %v1792
        %v3368 = vpop.f32.mrf.mxu0
        %v3369 = vadd.f32 %v3240, %v3368
        %v3370 = vpop.f32.mrf.mxu0
        %v3371 = vadd.f32 %v3242, %v3370
        %3372 = vmatmul.bf16.gmra.mxu0 %v1836
        %v3373 = vpop.f32.mrf.mxu0
        %v3374 = vadd.f32 %v3245, %v3373
        %v3375 = vpop.f32.mrf.mxu0
        %v3376 = vadd.f32 %v3247, %v3375
        %3377 = vmatmul.bf16.gmra.mxu0 %v1880
        %v3378 = vpop.f32.mrf.mxu0
        %v3379 = vadd.f32 %v3250, %v3378
        %v3380 = vpop.f32.mrf.mxu0
        %v3381 = vadd.f32 %v3252, %v3380
        %3382 = vmatmul.bf16.gmra.mxu0 %v1924
        %v3383 = vpop.f32.mrf.mxu0
        %v3384 = vadd.f32 %v3255, %v3383
        %v3385 = vpop.f32.mrf.mxu0
        %v3386 = vadd.f32 %v3257, %v3385
        %3387 = vmatmul.bf16.gmra.mxu0 %v1968
        %v3388 = vpop.f32.mrf.mxu0
        %v3389 = vadd.f32 %v3260, %v3388
        %v3390 = vpop.f32.mrf.mxu0
        %v3391 = vadd.f32 %v3262, %v3390
        %3392 = vmatmul.bf16.gmra.mxu0 %v2012
        %v3393 = vpop.f32.mrf.mxu0
        %v3394 = vadd.f32 %v3265, %v3393
        %v3395 = vpop.f32.mrf.mxu0
        %v3396 = vadd.f32 %v3267, %v3395
        %3397 = vmatmul.bf16.gmra.mxu0 %v2056
        %v3398 = vpop.f32.mrf.mxu0
        %v3399 = vadd.f32 %v3270, %v3398
        %v3400 = vpop.f32.mrf.mxu0
        %v3401 = vadd.f32 %v3272, %v3400
        %3402 = vmatmul.bf16.gmra.mxu0 %v2100
        %v3403 = vpop.f32.mrf.mxu0
        %v3404 = vadd.f32 %v3275, %v3403
        %v3405 = vpop.f32.mrf.mxu0
        %v3406 = vadd.f32 %v3277, %v3405
        %3407 = vmatmul.bf16.gmra.mxu0 %v2144
        %v3408 = vpop.f32.mrf.mxu0
        %v3409 = vadd.f32 %v3280, %v3408
        %v3410 = vpop.f32.mrf.mxu0
        %v3411 = vadd.f32 %v3282, %v3410
        %3412 = vmatmul.bf16.gmra.mxu0 %v2188
        %v3413 = vpop.f32.mrf.mxu0
        %v3414 = vadd.f32 %v3285, %v3413
        %v3415 = vpop.f32.mrf.mxu0
        %v3416 = vadd.f32 %v3287, %v3415
        %3417 = vmatmul.bf16.gmra.mxu0 %v2232
        %v3418 = vpop.f32.mrf.mxu0
        %v3419 = vadd.f32 %v3290, %v3418
        %v3420 = vpop.f32.mrf.mxu0
        %v3421 = vadd.f32 %v3292, %v3420
        %3422 = vmatmul.bf16.gmra.mxu0 %v2396
        %v3423 = vpop.f32.mrf.mxu0
        %v3424 = vadd.f32 %v3295, %v3423
        %v3425 = vpop.f32.mrf.mxu0
        %v3426 = vadd.f32 %v3297, %v3425
        %3427 = vdwg.mxu0
        %3428 = vmatpush.bf16.msra.mxu0 %v2928
        %3429 = vmatpush.bf16.msra.mxu0 %v2927
        %3430 = vmatpush.bf16.msra.mxu0 %v2926
        %3431 = vmatpush.bf16.msra.mxu0 %v2925
        %3432 = vmatpush.bf16.msra.mxu0 %v2924
        %3433 = vmatpush.bf16.msra.mxu0 %v2923
        %3434 = vmatpush.bf16.msra.mxu0 %v2922
        %3435 = vmatpush.bf16.msra.mxu0 %v2921
        %3436 = vmatmul.bf16.gmra.mxu0 %v1278
        %v3437 = vpop.f32.mrf.mxu0
        %v3438 = vadd.f32 %v3309, %v3437
        %v3439 = vpop.f32.mrf.mxu0
        %v3440 = vadd.f32 %v3311, %v3439
        %3441 = vmatmul.bf16.gmra.mxu0 %v1379
        %v3442 = vpop.f32.mrf.mxu0
        %v3443 = vadd.f32 %v3314, %v3442
        %v3444 = vpop.f32.mrf.mxu0
        %v3445 = vadd.f32 %v3316, %v3444
        %3446 = vmatmul.bf16.gmra.mxu0 %v1442
        %v3447 = vpop.f32.mrf.mxu0
        %v3448 = vadd.f32 %v3319, %v3447
        %v3449 = vpop.f32.mrf.mxu0
        %v3450 = vadd.f32 %v3321, %v3449
        %3451 = vmatmul.bf16.gmra.mxu0 %v1488
        %v3452 = vpop.f32.mrf.mxu0
        %v3453 = vadd.f32 %v3324, %v3452
        %v3454 = vpop.f32.mrf.mxu0
        %v3455 = vadd.f32 %v3326, %v3454
        %3456 = vmatmul.bf16.gmra.mxu0 %v1532
        %v3457 = vpop.f32.mrf.mxu0
        %v3458 = vadd.f32 %v3329, %v3457
        %v3459 = vpop.f32.mrf.mxu0
        %v3460 = vadd.f32 %v3331, %v3459
        %3461 = vmatmul.bf16.gmra.mxu0 %v1576
        %v3462 = vpop.f32.mrf.mxu0
        %v3463 = vadd.f32 %v3334, %v3462
        %v3464 = vpop.f32.mrf.mxu0
        %v3465 = vadd.f32 %v3336, %v3464
        %3466 = vmatmul.bf16.gmra.mxu0 %v1620
        %v3467 = vpop.f32.mrf.mxu0
        %v3468 = vadd.f32 %v3339, %v3467
        %v3469 = vpop.f32.mrf.mxu0
        %v3470 = vadd.f32 %v3341, %v3469
        %3471 = vmatmul.bf16.gmra.mxu0 %v1664
        %v3472 = vpop.f32.mrf.mxu0
        %v3473 = vadd.f32 %v3344, %v3472
        %v3474 = vpop.f32.mrf.mxu0
        %v3475 = vadd.f32 %v3346, %v3474
        %3476 = vmatmul.bf16.gmra.mxu0 %v1708
        %v3477 = vpop.f32.mrf.mxu0
        %v3478 = vadd.f32 %v3349, %v3477
        %v3479 = vpop.f32.mrf.mxu0
        %v3480 = vadd.f32 %v3351, %v3479
        %3481 = vmatmul.bf16.gmra.mxu0 %v1752
        %v3482 = vpop.f32.mrf.mxu0
        %v3483 = vadd.f32 %v3354, %v3482
        %v3484 = vpop.f32.mrf.mxu0
        %v3485 = vadd.f32 %v3356, %v3484
        %3486 = vmatmul.bf16.gmra.mxu0 %v1796
        %v3487 = vpop.f32.mrf.mxu0
        %v3488 = vadd.f32 %v3359, %v3487
        %v3489 = vpop.f32.mrf.mxu0
        %v3490 = vadd.f32 %v3361, %v3489
        %3491 = vmatmul.bf16.gmra.mxu0 %v1840
        %v3492 = vpop.f32.mrf.mxu0
        %v3493 = vadd.f32 %v3364, %v3492
        %v3494 = vpop.f32.mrf.mxu0
        %v3495 = vadd.f32 %v3366, %v3494
        %3496 = vmatmul.bf16.gmra.mxu0 %v1884
        %v3497 = vpop.f32.mrf.mxu0
        %v3498 = vadd.f32 %v3369, %v3497
        %v3499 = vpop.f32.mrf.mxu0
        %v3500 = vadd.f32 %v3371, %v3499
        %3501 = vmatmul.bf16.gmra.mxu0 %v1928
        %v3502 = vpop.f32.mrf.mxu0
        %v3503 = vadd.f32 %v3374, %v3502
        %v3504 = vpop.f32.mrf.mxu0
        %v3505 = vadd.f32 %v3376, %v3504
        %3506 = vmatmul.bf16.gmra.mxu0 %v1972
        %v3507 = vpop.f32.mrf.mxu0
        %v3508 = vadd.f32 %v3379, %v3507
        %v3509 = vpop.f32.mrf.mxu0
        %v3510 = vadd.f32 %v3381, %v3509
        %3511 = vmatmul.bf16.gmra.mxu0 %v2016
        %v3512 = vpop.f32.mrf.mxu0
        %v3513 = vadd.f32 %v3384, %v3512
        %v3514 = vpop.f32.mrf.mxu0
        %v3515 = vadd.f32 %v3386, %v3514
        %3516 = vmatmul.bf16.gmra.mxu0 %v2060
        %v3517 = vpop.f32.mrf.mxu0
        %v3518 = vadd.f32 %v3389, %v3517
        %v3519 = vpop.f32.mrf.mxu0
        %v3520 = vadd.f32 %v3391, %v3519
        %3521 = vmatmul.bf16.gmra.mxu0 %v2104
        %v3522 = vpop.f32.mrf.mxu0
        %v3523 = vadd.f32 %v3394, %v3522
        %v3524 = vpop.f32.mrf.mxu0
        %v3525 = vadd.f32 %v3396, %v3524
        %3526 = vmatmul.bf16.gmra.mxu0 %v2148
        %v3527 = vpop.f32.mrf.mxu0
        %v3528 = vadd.f32 %v3399, %v3527
        %v3529 = vpop.f32.mrf.mxu0
        %v3530 = vadd.f32 %v3401, %v3529
        %3531 = vmatmul.bf16.gmra.mxu0 %v2192
        %v3532 = vpop.f32.mrf.mxu0
        %v3533 = vadd.f32 %v3404, %v3532
        %v3534 = vpop.f32.mrf.mxu0
        %v3535 = vadd.f32 %v3406, %v3534
        %3536 = vmatmul.bf16.gmra.mxu0 %v2236
        %v3537 = vpop.f32.mrf.mxu0
        %v3538 = vadd.f32 %v3409, %v3537
        %v3539 = vpop.f32.mrf.mxu0
        %v3540 = vadd.f32 %v3411, %v3539
        %3541 = vmatmul.bf16.gmra.mxu0 %v2280
        %v3542 = vpop.f32.mrf.mxu0
        %v3543 = vadd.f32 %v3414, %v3542
        %v3544 = vpop.f32.mrf.mxu0
        %v3545 = vadd.f32 %v3416, %v3544
        %3546 = vmatmul.bf16.gmra.mxu0 %v2324
        %v3547 = vpop.f32.mrf.mxu0
        %v3548 = vadd.f32 %v3419, %v3547
        %v3549 = vpop.f32.mrf.mxu0
        %v3550 = vadd.f32 %v3421, %v3549
        %3551 = vmatmul.bf16.gmra.mxu0 %v2405
        %v3552 = vpop.f32.mrf.mxu0
        %v3553 = vadd.f32 %v3424, %v3552
        %v3554 = vpop.f32.mrf.mxu0
        %v3555 = vadd.f32 %v3426, %v3554
        %3556 = vdwg.mxu0
        %3557 = vmatpush.bf16.msra.mxu0 %v2936
        %3558 = vmatpush.bf16.msra.mxu0 %v2935
        %3559 = vmatpush.bf16.msra.mxu0 %v2934
        %3560 = vmatpush.bf16.msra.mxu0 %v2933
        %3561 = vmatpush.bf16.msra.mxu0 %v2932
        %3562 = vmatpush.bf16.msra.mxu0 %v2931
        %3563 = vmatpush.bf16.msra.mxu0 %v2930
        %3564 = vmatpush.bf16.msra.mxu0 %v2929
        %3565 = vmatmul.bf16.gmra.mxu0 %v1295
        %v3566 = vpop.f32.mrf.mxu0
        %v3567 = vadd.f32 %v3438, %v3566
        %v3568 = vpop.f32.mrf.mxu0
        %v3569 = vadd.f32 %v3440, %v3568
        %3570 = vmatmul.bf16.gmra.mxu0 %v1388
        %v3571 = vpop.f32.mrf.mxu0
        %v3572 = vadd.f32 %v3443, %v3571
        %v3573 = vpop.f32.mrf.mxu0
        %v3574 = vadd.f32 %v3445, %v3573
        %3575 = vmatmul.bf16.gmra.mxu0 %v1451
        %v3576 = vpop.f32.mrf.mxu0
        %v3577 = vadd.f32 %v3448, %v3576
        %v3578 = vpop.f32.mrf.mxu0
        %v3579 = vadd.f32 %v3450, %v3578
        %3580 = vmatmul.bf16.gmra.mxu0 %v1497
        %v3581 = vpop.f32.mrf.mxu0
        %v3582 = vadd.f32 %v3453, %v3581
        %v3583 = vpop.f32.mrf.mxu0
        %v3584 = vadd.f32 %v3455, %v3583
        %3585 = vmatmul.bf16.gmra.mxu0 %v1541
        %v3586 = vpop.f32.mrf.mxu0
        %v3587 = vadd.f32 %v3458, %v3586
        %v3588 = vpop.f32.mrf.mxu0
        %v3589 = vadd.f32 %v3460, %v3588
        %3590 = vmatmul.bf16.gmra.mxu0 %v1585
        %v3591 = vpop.f32.mrf.mxu0
        %v3592 = vadd.f32 %v3463, %v3591
        %v3593 = vpop.f32.mrf.mxu0
        %v3594 = vadd.f32 %v3465, %v3593
        %3595 = vmatmul.bf16.gmra.mxu0 %v1629
        %v3596 = vpop.f32.mrf.mxu0
        %v3597 = vadd.f32 %v3468, %v3596
        %v3598 = vpop.f32.mrf.mxu0
        %v3599 = vadd.f32 %v3470, %v3598
        %3600 = vmatmul.bf16.gmra.mxu0 %v1673
        %v3601 = vpop.f32.mrf.mxu0
        %v3602 = vadd.f32 %v3473, %v3601
        %v3603 = vpop.f32.mrf.mxu0
        %v3604 = vadd.f32 %v3475, %v3603
        %3605 = vmatmul.bf16.gmra.mxu0 %v1717
        %v3606 = vpop.f32.mrf.mxu0
        %v3607 = vadd.f32 %v3478, %v3606
        %v3608 = vpop.f32.mrf.mxu0
        %v3609 = vadd.f32 %v3480, %v3608
        %3610 = vmatmul.bf16.gmra.mxu0 %v1761
        %v3611 = vpop.f32.mrf.mxu0
        %v3612 = vadd.f32 %v3483, %v3611
        %v3613 = vpop.f32.mrf.mxu0
        %v3614 = vadd.f32 %v3485, %v3613
        %3615 = vmatmul.bf16.gmra.mxu0 %v1805
        %v3616 = vpop.f32.mrf.mxu0
        %v3617 = vadd.f32 %v3488, %v3616
        %v3618 = vpop.f32.mrf.mxu0
        %v3619 = vadd.f32 %v3490, %v3618
        %3620 = vmatmul.bf16.gmra.mxu0 %v1849
        %v3621 = vpop.f32.mrf.mxu0
        %v3622 = vadd.f32 %v3493, %v3621
        %v3623 = vpop.f32.mrf.mxu0
        %v3624 = vadd.f32 %v3495, %v3623
        %3625 = vmatmul.bf16.gmra.mxu0 %v1893
        %v3626 = vpop.f32.mrf.mxu0
        %v3627 = vadd.f32 %v3498, %v3626
        %v3628 = vpop.f32.mrf.mxu0
        %v3629 = vadd.f32 %v3500, %v3628
        %3630 = vmatmul.bf16.gmra.mxu0 %v1937
        %v3631 = vpop.f32.mrf.mxu0
        %v3632 = vadd.f32 %v3503, %v3631
        %v3633 = vpop.f32.mrf.mxu0
        %v3634 = vadd.f32 %v3505, %v3633
        %3635 = vmatmul.bf16.gmra.mxu0 %v1981
        %v3636 = vpop.f32.mrf.mxu0
        %v3637 = vadd.f32 %v3508, %v3636
        %v3638 = vpop.f32.mrf.mxu0
        %v3639 = vadd.f32 %v3510, %v3638
        %3640 = vmatmul.bf16.gmra.mxu0 %v2025
        %v3641 = vpop.f32.mrf.mxu0
        %v3642 = vadd.f32 %v3513, %v3641
        %v3643 = vpop.f32.mrf.mxu0
        %v3644 = vadd.f32 %v3515, %v3643
        %3645 = vmatmul.bf16.gmra.mxu0 %v2069
        %v3646 = vpop.f32.mrf.mxu0
        %v3647 = vadd.f32 %v3518, %v3646
        %v3648 = vpop.f32.mrf.mxu0
        %v3649 = vadd.f32 %v3520, %v3648
        %3650 = vmatmul.bf16.gmra.mxu0 %v2113
        %v3651 = vpop.f32.mrf.mxu0
        %v3652 = vadd.f32 %v3523, %v3651
        %v3653 = vpop.f32.mrf.mxu0
        %v3654 = vadd.f32 %v3525, %v3653
        %3655 = vmatmul.bf16.gmra.mxu0 %v2157
        %v3656 = vpop.f32.mrf.mxu0
        %v3657 = vadd.f32 %v3528, %v3656
        %v3658 = vpop.f32.mrf.mxu0
        %v3659 = vadd.f32 %v3530, %v3658
        %3660 = vmatmul.bf16.gmra.mxu0 %v2201
        %v3661 = vpop.f32.mrf.mxu0
        %v3662 = vadd.f32 %v3533, %v3661
        %v3663 = vpop.f32.mrf.mxu0
        %v3664 = vadd.f32 %v3535, %v3663
        %3665 = vmatmul.bf16.gmra.mxu0 %v2245
        %v3666 = vpop.f32.mrf.mxu0
        %v3667 = vadd.f32 %v3538, %v3666
        %v3668 = vpop.f32.mrf.mxu0
        %v3669 = vadd.f32 %v3540, %v3668
        %3670 = vmatmul.bf16.gmra.mxu0 %v2289
        %v3671 = vpop.f32.mrf.mxu0
        %v3672 = vadd.f32 %v3543, %v3671
        %v3673 = vpop.f32.mrf.mxu0
        %v3674 = vadd.f32 %v3545, %v3673
        %3675 = vmatmul.bf16.gmra.mxu0 %v2333
        %v3676 = vpop.f32.mrf.mxu0
        %v3677 = vadd.f32 %v3548, %v3676
        %v3678 = vpop.f32.mrf.mxu0
        %v3679 = vadd.f32 %v3550, %v3678
        %3680 = vmatmul.bf16.gmra.mxu0 %v2414
        %v3681 = vpop.f32.mrf.mxu0
        %v3682 = vadd.f32 %v3553, %v3681
        %v3683 = vpop.f32.mrf.mxu0
        %v3684 = vadd.f32 %v3555, %v3683
        %3685 = vdwg.mxu0
        %3686 = vmatpush.bf16.msra.mxu0 %v2944
        %3687 = vmatpush.bf16.msra.mxu0 %v2943
        %3688 = vmatpush.bf16.msra.mxu0 %v2942
        %3689 = vmatpush.bf16.msra.mxu0 %v2941
        %3690 = vmatpush.bf16.msra.mxu0 %v2940
        %3691 = vmatpush.bf16.msra.mxu0 %v2939
        %3692 = vmatpush.bf16.msra.mxu0 %v2938
        %3693 = vmatpush.bf16.msra.mxu0 %v2937
        %3694 = vmatmul.bf16.gmra.mxu0 %v1312
        %v3695 = vpop.f32.mrf.mxu0
        %v3696 = vadd.f32 %v3567, %v3695
        %v3697 = vpop.f32.mrf.mxu0
        %v3698 = vadd.f32 %v3569, %v3697
        %3699 = vmatmul.bf16.gmra.mxu0 %v1397
        %v3700 = vpop.f32.mrf.mxu0
        %v3701 = vadd.f32 %v3572, %v3700
        %v3702 = vpop.f32.mrf.mxu0
        %v3703 = vadd.f32 %v3574, %v3702
        %3704 = vmatmul.bf16.gmra.mxu0 %v1460
        %v3705 = vpop.f32.mrf.mxu0
        %v3706 = vadd.f32 %v3577, %v3705
        %v3707 = vpop.f32.mrf.mxu0
        %v3708 = vadd.f32 %v3579, %v3707
        %3709 = vmatmul.bf16.gmra.mxu0 %v1506
        %v3710 = vpop.f32.mrf.mxu0
        %v3711 = vadd.f32 %v3582, %v3710
        %v3712 = vpop.f32.mrf.mxu0
        %v3713 = vadd.f32 %v3584, %v3712
        %3714 = vmatmul.bf16.gmra.mxu0 %v1550
        %v3715 = vpop.f32.mrf.mxu0
        %v3716 = vadd.f32 %v3587, %v3715
        %v3717 = vpop.f32.mrf.mxu0
        %v3718 = vadd.f32 %v3589, %v3717
        %3719 = vmatmul.bf16.gmra.mxu0 %v1594
        %v3720 = vpop.f32.mrf.mxu0
        %v3721 = vadd.f32 %v3592, %v3720
        %v3722 = vpop.f32.mrf.mxu0
        %v3723 = vadd.f32 %v3594, %v3722
        %3724 = vmatmul.bf16.gmra.mxu0 %v1638
        %v3725 = vpop.f32.mrf.mxu0
        %v3726 = vadd.f32 %v3597, %v3725
        %v3727 = vpop.f32.mrf.mxu0
        %v3728 = vadd.f32 %v3599, %v3727
        %3729 = vmatmul.bf16.gmra.mxu0 %v1682
        %v3730 = vpop.f32.mrf.mxu0
        %v3731 = vadd.f32 %v3602, %v3730
        %v3732 = vpop.f32.mrf.mxu0
        %v3733 = vadd.f32 %v3604, %v3732
        %3734 = vmatmul.bf16.gmra.mxu0 %v1726
        %v3735 = vpop.f32.mrf.mxu0
        %v3736 = vadd.f32 %v3607, %v3735
        %v3737 = vpop.f32.mrf.mxu0
        %v3738 = vadd.f32 %v3609, %v3737
        %3739 = vmatmul.bf16.gmra.mxu0 %v1770
        %v3740 = vpop.f32.mrf.mxu0
        %v3741 = vadd.f32 %v3612, %v3740
        %v3742 = vpop.f32.mrf.mxu0
        %v3743 = vadd.f32 %v3614, %v3742
        %3744 = vmatmul.bf16.gmra.mxu0 %v1814
        %v3745 = vpop.f32.mrf.mxu0
        %v3746 = vadd.f32 %v3617, %v3745
        %v3747 = vpop.f32.mrf.mxu0
        %v3748 = vadd.f32 %v3619, %v3747
        %3749 = vmatmul.bf16.gmra.mxu0 %v1858
        %v3750 = vpop.f32.mrf.mxu0
        %v3751 = vadd.f32 %v3622, %v3750
        %v3752 = vpop.f32.mrf.mxu0
        %v3753 = vadd.f32 %v3624, %v3752
        %3754 = vmatmul.bf16.gmra.mxu0 %v1902
        %v3755 = vpop.f32.mrf.mxu0
        %v3756 = vadd.f32 %v3627, %v3755
        %v3757 = vpop.f32.mrf.mxu0
        %v3758 = vadd.f32 %v3629, %v3757
        %3759 = vmatmul.bf16.gmra.mxu0 %v1946
        %v3760 = vpop.f32.mrf.mxu0
        %v3761 = vadd.f32 %v3632, %v3760
        %v3762 = vpop.f32.mrf.mxu0
        %v3763 = vadd.f32 %v3634, %v3762
        %3764 = vmatmul.bf16.gmra.mxu0 %v1990
        %v3765 = vpop.f32.mrf.mxu0
        %v3766 = vadd.f32 %v3637, %v3765
        %v3767 = vpop.f32.mrf.mxu0
        %v3768 = vadd.f32 %v3639, %v3767
        %3769 = vmatmul.bf16.gmra.mxu0 %v2034
        %v3770 = vpop.f32.mrf.mxu0
        %v3771 = vadd.f32 %v3642, %v3770
        %v3772 = vpop.f32.mrf.mxu0
        %v3773 = vadd.f32 %v3644, %v3772
        %3774 = vmatmul.bf16.gmra.mxu0 %v2078
        %v3775 = vpop.f32.mrf.mxu0
        %v3776 = vadd.f32 %v3647, %v3775
        %v3777 = vpop.f32.mrf.mxu0
        %v3778 = vadd.f32 %v3649, %v3777
        %3779 = vmatmul.bf16.gmra.mxu0 %v2122
        %v3780 = vpop.f32.mrf.mxu0
        %v3781 = vadd.f32 %v3652, %v3780
        %v3782 = vpop.f32.mrf.mxu0
        %v3783 = vadd.f32 %v3654, %v3782
        %3784 = vmatmul.bf16.gmra.mxu0 %v2166
        %v3785 = vpop.f32.mrf.mxu0
        %v3786 = vadd.f32 %v3657, %v3785
        %v3787 = vpop.f32.mrf.mxu0
        %v3788 = vadd.f32 %v3659, %v3787
        %3789 = vmatmul.bf16.gmra.mxu0 %v2210
        %v3790 = vpop.f32.mrf.mxu0
        %v3791 = vadd.f32 %v3662, %v3790
        %v3792 = vpop.f32.mrf.mxu0
        %v3793 = vadd.f32 %v3664, %v3792
        %3794 = vmatmul.bf16.gmra.mxu0 %v2254
        %v3795 = vpop.f32.mrf.mxu0
        %v3796 = vadd.f32 %v3667, %v3795
        %v3797 = vpop.f32.mrf.mxu0
        %v3798 = vadd.f32 %v3669, %v3797
        %3799 = vmatmul.bf16.gmra.mxu0 %v2298
        %v3800 = vpop.f32.mrf.mxu0
        %v3801 = vadd.f32 %v3672, %v3800
        %v3802 = vpop.f32.mrf.mxu0
        %v3803 = vadd.f32 %v3674, %v3802
        %3804 = vmatmul.bf16.gmra.mxu0 %v2342
        %v3805 = vpop.f32.mrf.mxu0
        %v3806 = vadd.f32 %v3677, %v3805
        %v3807 = vpop.f32.mrf.mxu0
        %v3808 = vadd.f32 %v3679, %v3807
        %3809 = vmatmul.bf16.gmra.mxu0 %v2423
        %v3810 = vpop.f32.mrf.mxu0
        %v3811 = vadd.f32 %v3682, %v3810
        %v3812 = vpop.f32.mrf.mxu0
        %v3813 = vadd.f32 %v3684, %v3812
        %3814 = vdwg.mxu0
        %3815 = vmatpush.bf16.msra.mxu0 %v2952
        %3816 = vmatpush.bf16.msra.mxu0 %v2951
        %3817 = vmatpush.bf16.msra.mxu0 %v2950
        %3818 = vmatpush.bf16.msra.mxu0 %v2949
        %3819 = vmatpush.bf16.msra.mxu0 %v2948
        %3820 = vmatpush.bf16.msra.mxu0 %v2947
        %3821 = vmatpush.bf16.msra.mxu0 %v2946
        %3822 = vmatpush.bf16.msra.mxu0 %v2945
        %3823 = vmatmul.bf16.gmra.mxu0 %v1319
        %v3824 = vpop.f32.mrf.mxu0
        %v3825 = vadd.f32 %v3696, %v3824
        %v3826 = vpop.f32.mrf.mxu0
        %v3827 = vadd.f32 %v3698, %v3826
        %3828 = vmatmul.bf16.gmra.mxu0 %v1401
        %v3829 = vpop.f32.mrf.mxu0
        %v3830 = vadd.f32 %v3701, %v3829
        %v3831 = vpop.f32.mrf.mxu0
        %v3832 = vadd.f32 %v3703, %v3831
        %3833 = vmatmul.bf16.gmra.mxu0 %v1464
        %v3834 = vpop.f32.mrf.mxu0
        %v3835 = vadd.f32 %v3706, %v3834
        %v3836 = vpop.f32.mrf.mxu0
        %v3837 = vadd.f32 %v3708, %v3836
        %3838 = vmatmul.bf16.gmra.mxu0 %v1510
        %v3839 = vpop.f32.mrf.mxu0
        %v3840 = vadd.f32 %v3711, %v3839
        %v3841 = vpop.f32.mrf.mxu0
        %v3842 = vadd.f32 %v3713, %v3841
        %3843 = vmatmul.bf16.gmra.mxu0 %v1554
        %v3844 = vpop.f32.mrf.mxu0
        %v3845 = vadd.f32 %v3716, %v3844
        %v3846 = vpop.f32.mrf.mxu0
        %v3847 = vadd.f32 %v3718, %v3846
        %3848 = vmatmul.bf16.gmra.mxu0 %v1598
        %v3849 = vpop.f32.mrf.mxu0
        %v3850 = vadd.f32 %v3721, %v3849
        %v3851 = vpop.f32.mrf.mxu0
        %v3852 = vadd.f32 %v3723, %v3851
        %3853 = vmatmul.bf16.gmra.mxu0 %v1642
        %v3854 = vpop.f32.mrf.mxu0
        %v3855 = vadd.f32 %v3726, %v3854
        %v3856 = vpop.f32.mrf.mxu0
        %v3857 = vadd.f32 %v3728, %v3856
        %3858 = vmatmul.bf16.gmra.mxu0 %v1686
        %v3859 = vpop.f32.mrf.mxu0
        %v3860 = vadd.f32 %v3731, %v3859
        %v3861 = vpop.f32.mrf.mxu0
        %v3862 = vadd.f32 %v3733, %v3861
        %3863 = vmatmul.bf16.gmra.mxu0 %v1730
        %v3864 = vpop.f32.mrf.mxu0
        %v3865 = vadd.f32 %v3736, %v3864
        %v3866 = vpop.f32.mrf.mxu0
        %v3867 = vadd.f32 %v3738, %v3866
        %3868 = vmatmul.bf16.gmra.mxu0 %v1774
        %v3869 = vpop.f32.mrf.mxu0
        %v3870 = vadd.f32 %v3741, %v3869
        %v3871 = vpop.f32.mrf.mxu0
        %v3872 = vadd.f32 %v3743, %v3871
        %3873 = vmatmul.bf16.gmra.mxu0 %v1818
        %v3874 = vpop.f32.mrf.mxu0
        %v3875 = vadd.f32 %v3746, %v3874
        %v3876 = vpop.f32.mrf.mxu0
        %v3877 = vadd.f32 %v3748, %v3876
        %3878 = vmatmul.bf16.gmra.mxu0 %v1862
        %v3879 = vpop.f32.mrf.mxu0
        %v3880 = vadd.f32 %v3751, %v3879
        %v3881 = vpop.f32.mrf.mxu0
        %v3882 = vadd.f32 %v3753, %v3881
        %3883 = vmatmul.bf16.gmra.mxu0 %v1906
        %v3884 = vpop.f32.mrf.mxu0
        %v3885 = vadd.f32 %v3756, %v3884
        %v3886 = vpop.f32.mrf.mxu0
        %v3887 = vadd.f32 %v3758, %v3886
        %3888 = vmatmul.bf16.gmra.mxu0 %v1950
        %v3889 = vpop.f32.mrf.mxu0
        %v3890 = vadd.f32 %v3761, %v3889
        %v3891 = vpop.f32.mrf.mxu0
        %v3892 = vadd.f32 %v3763, %v3891
        %3893 = vmatmul.bf16.gmra.mxu0 %v1994
        %v3894 = vpop.f32.mrf.mxu0
        %v3895 = vadd.f32 %v3766, %v3894
        %v3896 = vpop.f32.mrf.mxu0
        %v3897 = vadd.f32 %v3768, %v3896
        %3898 = vmatmul.bf16.gmra.mxu0 %v2038
        %v3899 = vpop.f32.mrf.mxu0
        %v3900 = vadd.f32 %v3771, %v3899
        %v3901 = vpop.f32.mrf.mxu0
        %v3902 = vadd.f32 %v3773, %v3901
        %3903 = vmatmul.bf16.gmra.mxu0 %v2082
        %v3904 = vpop.f32.mrf.mxu0
        %v3905 = vadd.f32 %v3776, %v3904
        %v3906 = vpop.f32.mrf.mxu0
        %v3907 = vadd.f32 %v3778, %v3906
        %3908 = vmatmul.bf16.gmra.mxu0 %v2126
        %v3909 = vpop.f32.mrf.mxu0
        %v3910 = vadd.f32 %v3781, %v3909
        %v3911 = vpop.f32.mrf.mxu0
        %v3912 = vadd.f32 %v3783, %v3911
        %3913 = vmatmul.bf16.gmra.mxu0 %v2170
        %v3914 = vpop.f32.mrf.mxu0
        %v3915 = vadd.f32 %v3786, %v3914
        %v3916 = vpop.f32.mrf.mxu0
        %v3917 = vadd.f32 %v3788, %v3916
        %3918 = vmatmul.bf16.gmra.mxu0 %v2214
        %v3919 = vpop.f32.mrf.mxu0
        %v3920 = vadd.f32 %v3791, %v3919
        %v3921 = vpop.f32.mrf.mxu0
        %v3922 = vadd.f32 %v3793, %v3921
        %3923 = vmatmul.bf16.gmra.mxu0 %v2258
        %v3924 = vpop.f32.mrf.mxu0
        %v3925 = vadd.f32 %v3796, %v3924
        %v3926 = vpop.f32.mrf.mxu0
        %v3927 = vadd.f32 %v3798, %v3926
        %3928 = vmatmul.bf16.gmra.mxu0 %v2302
        %v3929 = vpop.f32.mrf.mxu0
        %v3930 = vadd.f32 %v3801, %v3929
        %v3931 = vpop.f32.mrf.mxu0
        %v3932 = vadd.f32 %v3803, %v3931
        %3933 = vmatmul.bf16.gmra.mxu0 %v2351
        %v3934 = vpop.f32.mrf.mxu0
        %v3935 = vadd.f32 %v3806, %v3934
        %v3936 = vpop.f32.mrf.mxu0
        %v3937 = vadd.f32 %v3808, %v3936
        %3938 = vmatmul.bf16.gmra.mxu0 %v2432
        %v3939 = vpop.f32.mrf.mxu0
        %v3940 = vadd.f32 %v3811, %v3939
        %v3941 = vpop.f32.mrf.mxu0
        %v3942 = vadd.f32 %v3813, %v3941
        %3943 = vdwg.mxu0
        %3944 = vmatpush.bf16.msra.mxu0 %v2960
        %3945 = vmatpush.bf16.msra.mxu0 %v2959
        %3946 = vmatpush.bf16.msra.mxu0 %v2958
        %3947 = vmatpush.bf16.msra.mxu0 %v2957
        %3948 = vmatpush.bf16.msra.mxu0 %v2956
        %3949 = vmatpush.bf16.msra.mxu0 %v2955
        %3950 = vmatpush.bf16.msra.mxu0 %v2954
        %3951 = vmatpush.bf16.msra.mxu0 %v2953
        %3952 = vmatmul.bf16.gmra.mxu0 %v1336
        %v3953 = vpop.f32.mrf.mxu0
        %v3954 = vadd.f32 %v3825, %v3953
        %v3955 = vpop.f32.mrf.mxu0
        %v3956 = vadd.f32 %v3827, %v3955
        %3957 = vmatmul.bf16.gmra.mxu0 %v1410
        %v3958 = vpop.f32.mrf.mxu0
        %v3959 = vadd.f32 %v3830, %v3958
        %v3960 = vpop.f32.mrf.mxu0
        %v3961 = vadd.f32 %v3832, %v3960
        %3962 = vmatmul.bf16.gmra.mxu0 %v1473
        %v3963 = vpop.f32.mrf.mxu0
        %v3964 = vadd.f32 %v3835, %v3963
        %v3965 = vpop.f32.mrf.mxu0
        %v3966 = vadd.f32 %v3837, %v3965
        %3967 = vmatmul.bf16.gmra.mxu0 %v1519
        %v3968 = vpop.f32.mrf.mxu0
        %v3969 = vadd.f32 %v3840, %v3968
        %v3970 = vpop.f32.mrf.mxu0
        %v3971 = vadd.f32 %v3842, %v3970
        %3972 = vmatmul.bf16.gmra.mxu0 %v1563
        %v3973 = vpop.f32.mrf.mxu0
        %v3974 = vadd.f32 %v3845, %v3973
        %v3975 = vpop.f32.mrf.mxu0
        %v3976 = vadd.f32 %v3847, %v3975
        %3977 = vmatmul.bf16.gmra.mxu0 %v1607
        %v3978 = vpop.f32.mrf.mxu0
        %v3979 = vadd.f32 %v3850, %v3978
        %v3980 = vpop.f32.mrf.mxu0
        %v3981 = vadd.f32 %v3852, %v3980
        %3982 = vmatmul.bf16.gmra.mxu0 %v1651
        %v3983 = vpop.f32.mrf.mxu0
        %v3984 = vadd.f32 %v3855, %v3983
        %v3985 = vpop.f32.mrf.mxu0
        %v3986 = vadd.f32 %v3857, %v3985
        %3987 = vmatmul.bf16.gmra.mxu0 %v1695
        %v3988 = vpop.f32.mrf.mxu0
        %v3989 = vadd.f32 %v3860, %v3988
        %v3990 = vpop.f32.mrf.mxu0
        %v3991 = vadd.f32 %v3862, %v3990
        %3992 = vmatmul.bf16.gmra.mxu0 %v1739
        %v3993 = vpop.f32.mrf.mxu0
        %v3994 = vadd.f32 %v3865, %v3993
        %v3995 = vpop.f32.mrf.mxu0
        %v3996 = vadd.f32 %v3867, %v3995
        %3997 = vmatmul.bf16.gmra.mxu0 %v1783
        %v3998 = vpop.f32.mrf.mxu0
        %v3999 = vadd.f32 %v3870, %v3998
        %v4000 = vpop.f32.mrf.mxu0
        %v4001 = vadd.f32 %v3872, %v4000
        %4002 = vmatmul.bf16.gmra.mxu0 %v1827
        %v4003 = vpop.f32.mrf.mxu0
        %v4004 = vadd.f32 %v3875, %v4003
        %v4005 = vpop.f32.mrf.mxu0
        %v4006 = vadd.f32 %v3877, %v4005
        %4007 = vmatmul.bf16.gmra.mxu0 %v1871
        %v4008 = vpop.f32.mrf.mxu0
        %v4009 = vadd.f32 %v3880, %v4008
        %v4010 = vpop.f32.mrf.mxu0
        %v4011 = vadd.f32 %v3882, %v4010
        %4012 = vmatmul.bf16.gmra.mxu0 %v1915
        %v4013 = vpop.f32.mrf.mxu0
        %v4014 = vadd.f32 %v3885, %v4013
        %v4015 = vpop.f32.mrf.mxu0
        %v4016 = vadd.f32 %v3887, %v4015
        %4017 = vmatmul.bf16.gmra.mxu0 %v1959
        %v4018 = vpop.f32.mrf.mxu0
        %v4019 = vadd.f32 %v3890, %v4018
        %v4020 = vpop.f32.mrf.mxu0
        %v4021 = vadd.f32 %v3892, %v4020
        %4022 = vmatmul.bf16.gmra.mxu0 %v2003
        %v4023 = vpop.f32.mrf.mxu0
        %v4024 = vadd.f32 %v3895, %v4023
        %v4025 = vpop.f32.mrf.mxu0
        %v4026 = vadd.f32 %v3897, %v4025
        %4027 = vmatmul.bf16.gmra.mxu0 %v2047
        %v4028 = vpop.f32.mrf.mxu0
        %v4029 = vadd.f32 %v3900, %v4028
        %v4030 = vpop.f32.mrf.mxu0
        %v4031 = vadd.f32 %v3902, %v4030
        %4032 = vmatmul.bf16.gmra.mxu0 %v2091
        %v4033 = vpop.f32.mrf.mxu0
        %v4034 = vadd.f32 %v3905, %v4033
        %v4035 = vpop.f32.mrf.mxu0
        %v4036 = vadd.f32 %v3907, %v4035
        %4037 = vmatmul.bf16.gmra.mxu0 %v2135
        %v4038 = vpop.f32.mrf.mxu0
        %v4039 = vadd.f32 %v3910, %v4038
        %v4040 = vpop.f32.mrf.mxu0
        %v4041 = vadd.f32 %v3912, %v4040
        %4042 = vmatmul.bf16.gmra.mxu0 %v2179
        %v4043 = vpop.f32.mrf.mxu0
        %v4044 = vadd.f32 %v3915, %v4043
        %v4045 = vpop.f32.mrf.mxu0
        %v4046 = vadd.f32 %v3917, %v4045
        %4047 = vmatmul.bf16.gmra.mxu0 %v2223
        %v4048 = vpop.f32.mrf.mxu0
        %v4049 = vadd.f32 %v3920, %v4048
        %v4050 = vpop.f32.mrf.mxu0
        %v4051 = vadd.f32 %v3922, %v4050
        %4052 = vmatmul.bf16.gmra.mxu0 %v2267
        %v4053 = vpop.f32.mrf.mxu0
        %v4054 = vadd.f32 %v3925, %v4053
        %v4055 = vpop.f32.mrf.mxu0
        %v4056 = vadd.f32 %v3927, %v4055
        %4057 = vmatmul.bf16.gmra.mxu0 %v2311
        %v4058 = vpop.f32.mrf.mxu0
        %v4059 = vadd.f32 %v3930, %v4058
        %v4060 = vpop.f32.mrf.mxu0
        %v4061 = vadd.f32 %v3932, %v4060
        %4062 = vmatmul.bf16.gmra.mxu0 %v2360
        %v4063 = vpop.f32.mrf.mxu0
        %v4064 = vadd.f32 %v3935, %v4063
        %v4065 = vpop.f32.mrf.mxu0
        %v4066 = vadd.f32 %v3937, %v4065
        %4067 = vmatmul.bf16.gmra.mxu0 %v2441
        %v4068 = vpop.f32.mrf.mxu0
        %v4069 = vadd.f32 %v3940, %v4068
        %v4070 = vpop.f32.mrf.mxu0
        %v4071 = vadd.f32 %v3942, %v4070
        %4072 = vdwg.mxu0
        %4073 = vmatpush.bf16.msra.mxu0 %v2968
        %4074 = vmatpush.bf16.msra.mxu0 %v2967
        %4075 = vmatpush.bf16.msra.mxu0 %v2966
        %4076 = vmatpush.bf16.msra.mxu0 %v2965
        %4077 = vmatpush.bf16.msra.mxu0 %v2964
        %4078 = vmatpush.bf16.msra.mxu0 %v2963
        %4079 = vmatpush.bf16.msra.mxu0 %v2962
        %4080 = vmatpush.bf16.msra.mxu0 %v2961
        %4081 = vmatmul.bf16.gmra.mxu0 %v1353
        %v4082 = vpop.f32.mrf.mxu0
        %v4083 = vadd.f32 %v3954, %v4082
        %v4084 = vpop.f32.mrf.mxu0
        %v4085 = vadd.f32 %v3956, %v4084
        %4086 = vmatmul.bf16.gmra.mxu0 %v1419
        %v4087 = vpop.f32.mrf.mxu0
        %v4088 = vadd.f32 %v3959, %v4087
        %v4089 = vpop.f32.mrf.mxu0
        %v4090 = vadd.f32 %v3961, %v4089
        %4091 = vmatmul.bf16.gmra.mxu0 %v1482
        %v4092 = vpop.f32.mrf.mxu0
        %v4093 = vadd.f32 %v3964, %v4092
        %v4094 = vpop.f32.mrf.mxu0
        %v4095 = vadd.f32 %v3966, %v4094
        %4096 = vmatmul.bf16.gmra.mxu0 %v1528
        %v4097 = vpop.f32.mrf.mxu0
        %v4098 = vadd.f32 %v3969, %v4097
        %v4099 = vpop.f32.mrf.mxu0
        %v4100 = vadd.f32 %v3971, %v4099
        %4101 = vmatmul.bf16.gmra.mxu0 %v1572
        %v4102 = vpop.f32.mrf.mxu0
        %v4103 = vadd.f32 %v3974, %v4102
        %v4104 = vpop.f32.mrf.mxu0
        %v4105 = vadd.f32 %v3976, %v4104
        %4106 = vmatmul.bf16.gmra.mxu0 %v1616
        %v4107 = vpop.f32.mrf.mxu0
        %v4108 = vadd.f32 %v3979, %v4107
        %v4109 = vpop.f32.mrf.mxu0
        %v4110 = vadd.f32 %v3981, %v4109
        %4111 = vmatmul.bf16.gmra.mxu0 %v1660
        %v4112 = vpop.f32.mrf.mxu0
        %v4113 = vadd.f32 %v3984, %v4112
        %v4114 = vpop.f32.mrf.mxu0
        %v4115 = vadd.f32 %v3986, %v4114
        %4116 = vmatmul.bf16.gmra.mxu0 %v1704
        %v4117 = vpop.f32.mrf.mxu0
        %v4118 = vadd.f32 %v3989, %v4117
        %v4119 = vpop.f32.mrf.mxu0
        %v4120 = vadd.f32 %v3991, %v4119
        %4121 = vmatmul.bf16.gmra.mxu0 %v1748
        %v4122 = vpop.f32.mrf.mxu0
        %v4123 = vadd.f32 %v3994, %v4122
        %v4124 = vpop.f32.mrf.mxu0
        %v4125 = vadd.f32 %v3996, %v4124
        %4126 = vmatmul.bf16.gmra.mxu0 %v1792
        %v4127 = vpop.f32.mrf.mxu0
        %v4128 = vadd.f32 %v3999, %v4127
        %v4129 = vpop.f32.mrf.mxu0
        %v4130 = vadd.f32 %v4001, %v4129
        %4131 = vmatmul.bf16.gmra.mxu0 %v1836
        %v4132 = vpop.f32.mrf.mxu0
        %v4133 = vadd.f32 %v4004, %v4132
        %v4134 = vpop.f32.mrf.mxu0
        %v4135 = vadd.f32 %v4006, %v4134
        %4136 = vmatmul.bf16.gmra.mxu0 %v1880
        %v4137 = vpop.f32.mrf.mxu0
        %v4138 = vadd.f32 %v4009, %v4137
        %v4139 = vpop.f32.mrf.mxu0
        %v4140 = vadd.f32 %v4011, %v4139
        %4141 = vmatmul.bf16.gmra.mxu0 %v1924
        %v4142 = vpop.f32.mrf.mxu0
        %v4143 = vadd.f32 %v4014, %v4142
        %v4144 = vpop.f32.mrf.mxu0
        %v4145 = vadd.f32 %v4016, %v4144
        %4146 = vmatmul.bf16.gmra.mxu0 %v1968
        %v4147 = vpop.f32.mrf.mxu0
        %v4148 = vadd.f32 %v4019, %v4147
        %v4149 = vpop.f32.mrf.mxu0
        %v4150 = vadd.f32 %v4021, %v4149
        %4151 = vmatmul.bf16.gmra.mxu0 %v2012
        %v4152 = vpop.f32.mrf.mxu0
        %v4153 = vadd.f32 %v4024, %v4152
        %v4154 = vpop.f32.mrf.mxu0
        %v4155 = vadd.f32 %v4026, %v4154
        %4156 = vmatmul.bf16.gmra.mxu0 %v2056
        %v4157 = vpop.f32.mrf.mxu0
        %v4158 = vadd.f32 %v4029, %v4157
        %v4159 = vpop.f32.mrf.mxu0
        %v4160 = vadd.f32 %v4031, %v4159
        %4161 = vmatmul.bf16.gmra.mxu0 %v2100
        %v4162 = vpop.f32.mrf.mxu0
        %v4163 = vadd.f32 %v4034, %v4162
        %v4164 = vpop.f32.mrf.mxu0
        %v4165 = vadd.f32 %v4036, %v4164
        %4166 = vmatmul.bf16.gmra.mxu0 %v2144
        %v4167 = vpop.f32.mrf.mxu0
        %v4168 = vadd.f32 %v4039, %v4167
        %v4169 = vpop.f32.mrf.mxu0
        %v4170 = vadd.f32 %v4041, %v4169
        %4171 = vmatmul.bf16.gmra.mxu0 %v2188
        %v4172 = vpop.f32.mrf.mxu0
        %v4173 = vadd.f32 %v4044, %v4172
        %v4174 = vpop.f32.mrf.mxu0
        %v4175 = vadd.f32 %v4046, %v4174
        %4176 = vmatmul.bf16.gmra.mxu0 %v2232
        %v4177 = vpop.f32.mrf.mxu0
        %v4178 = vadd.f32 %v4049, %v4177
        %v4179 = vpop.f32.mrf.mxu0
        %v4180 = vadd.f32 %v4051, %v4179
        %4181 = vmatmul.bf16.gmra.mxu0 %v2276
        %v4182 = vpop.f32.mrf.mxu0
        %v4183 = vadd.f32 %v4054, %v4182
        %v4184 = vpop.f32.mrf.mxu0
        %v4185 = vadd.f32 %v4056, %v4184
        %4186 = vmatmul.bf16.gmra.mxu0 %v2320
        %v4187 = vpop.f32.mrf.mxu0
        %v4188 = vadd.f32 %v4059, %v4187
        %v4189 = vpop.f32.mrf.mxu0
        %v4190 = vadd.f32 %v4061, %v4189
        %4191 = vmatmul.bf16.gmra.mxu0 %v2369
        %v4192 = vpop.f32.mrf.mxu0
        %v4193 = vadd.f32 %v4064, %v4192
        %v4194 = vpop.f32.mrf.mxu0
        %v4195 = vadd.f32 %v4066, %v4194
        %4196 = vmatmul.bf16.gmra.mxu0 %v2450
        %v4197 = vpop.f32.mrf.mxu0
        %v4198 = vadd.f32 %v4069, %v4197
        %v4199 = vpop.f32.mrf.mxu0
        %v4200 = vadd.f32 %v4071, %v4199
        %4201 = vdwg.mxu0
        %v4202 = vlaneseq
        %v4203 = vshrl.u32 %v4202, 7
        %v4204 = vadd.s32 %v4203, 8
        %v4205 = vadd.s32 %v4203, 16
        %vm4206 = vcmp.ge.s32.totalorder %v4203, 1
        %vm4207 = vcmp.ge.s32.totalorder %v4204, 1
        %vm4208 = vcmp.ge.s32.totalorder %v4205, 1
        %vm4209 = vcmp.le.s32.totalorder %v4203, 16
        %vm4210 = vcmp.le.s32.totalorder %v4204, 16
        %vm4211 = vcmp.le.s32.totalorder %v4205, 16
        %vm4212 = vmand %vm4206, %vm4209
        %vm4213 = vmand %vm4207, %vm4210
        %vm4214 = vmand %vm4208, %vm4211
        %v4215 = vmax.f32 %v4083, 0.0
        %v4216 = vmax.f32 %v4085, 0.0
        %v4217 = vmax.f32 %v4088, 0.0
        %v4218 = vmax.f32 %v4090, 0.0
        %v4219 = vmax.f32 %v4093, 0.0
        %v4220 = vmax.f32 %v4095, 0.0
        %v4221 = vmax.f32 %v4098, 0.0
        %v4222 = vmax.f32 %v4100, 0.0
        %v4223 = vmax.f32 %v4103, 0.0
        %v4224 = vmax.f32 %v4105, 0.0
        %v4225 = vmax.f32 %v4108, 0.0
        %v4226 = vmax.f32 %v4110, 0.0
        %v4227 = vmax.f32 %v4113, 0.0
        %v4228 = vmax.f32 %v4115, 0.0
        %v4229 = vmax.f32 %v4118, 0.0
        %v4230 = vmax.f32 %v4120, 0.0
        %v4231 = vmax.f32 %v4123, 0.0
        %v4232 = vmax.f32 %v4125, 0.0
        %v4233 = vmax.f32 %v4128, 0.0
        %v4234 = vmax.f32 %v4130, 0.0
        %v4235 = vmax.f32 %v4133, 0.0
        %v4236 = vmax.f32 %v4135, 0.0
        %v4237 = vmax.f32 %v4138, 0.0
        %v4238 = vmax.f32 %v4140, 0.0
        %v4239 = vmax.f32 %v4143, 0.0
        %v4240 = vmax.f32 %v4145, 0.0
        %v4241 = vmax.f32 %v4148, 0.0
        %v4242 = vmax.f32 %v4150, 0.0
        %v4243 = vmax.f32 %v4153, 0.0
        %v4244 = vmax.f32 %v4155, 0.0
        %v4245 = vmax.f32 %v4158, 0.0
        %v4246 = vmax.f32 %v4160, 0.0
        %v4247 = vmax.f32 %v4163, 0.0
        %v4248 = vmax.f32 %v4165, 0.0
        %v4249 = vmax.f32 %v4168, 0.0
        %v4250 = vmax.f32 %v4170, 0.0
        %v4251 = vmax.f32 %v4173, 0.0
        %v4252 = vmax.f32 %v4175, 0.0
        %v4253 = vmax.f32 %v4178, 0.0
        %v4254 = vmax.f32 %v4180, 0.0
        %v4255 = vmax.f32 %v4183, 0.0
        %v4256 = vmax.f32 %v4185, 0.0
        %v4257 = vmax.f32 %v4188, 0.0
        %v4258 = vmax.f32 %v4190, 0.0
        %v4259 = vmax.f32 %v4193, 0.0
        %v4260 = vmax.f32 %v4195, 0.0
        %v4261 = vmax.f32 %v4198, 0.0
        %v4262 = vmax.f32 %v4200, 0.0
        %v4263 = vsel %vm4212, %v4215, 0.0
        %v4264 = vsel %vm4213, %v4216, 0.0
        %v4265 = vsel %vm4214, %v4217, 0.0
        %v4266 = vsel %vm4212, %v4218, 0.0
        %v4267 = vsel %vm4213, %v4219, 0.0
        %v4268 = vsel %vm4214, %v4220, 0.0
        %v4269 = vsel %vm4212, %v4221, 0.0
        %v4270 = vsel %vm4213, %v4222, 0.0
        %v4271 = vsel %vm4214, %v4223, 0.0
        %v4272 = vsel %vm4212, %v4224, 0.0
        %v4273 = vsel %vm4213, %v4225, 0.0
        %v4274 = vsel %vm4214, %v4226, 0.0
        %v4275 = vsel %vm4212, %v4227, 0.0
        %v4276 = vsel %vm4213, %v4228, 0.0
        %v4277 = vsel %vm4214, %v4229, 0.0
        %v4278 = vsel %vm4212, %v4230, 0.0
        %v4279 = vsel %vm4213, %v4231, 0.0
        %v4280 = vsel %vm4214, %v4232, 0.0
        %v4281 = vsel %vm4212, %v4233, 0.0
        %v4282 = vsel %vm4213, %v4234, 0.0
        %v4283 = vsel %vm4214, %v4235, 0.0
        %v4284 = vsel %vm4212, %v4236, 0.0
        %v4285 = vsel %vm4213, %v4237, 0.0
        %v4286 = vsel %vm4214, %v4238, 0.0
        %v4287 = vsel %vm4212, %v4239, 0.0
        %v4288 = vsel %vm4213, %v4240, 0.0
        %v4289 = vsel %vm4214, %v4241, 0.0
        %v4290 = vsel %vm4212, %v4242, 0.0
        %v4291 = vsel %vm4213, %v4243, 0.0
        %v4292 = vsel %vm4214, %v4244, 0.0
        %v4293 = vsel %vm4212, %v4245, 0.0
        %v4294 = vsel %vm4213, %v4246, 0.0
        %v4295 = vsel %vm4214, %v4247, 0.0
        %v4296 = vsel %vm4212, %v4248, 0.0
        %v4297 = vsel %vm4213, %v4249, 0.0
        %v4298 = vsel %vm4214, %v4250, 0.0
        %v4299 = vsel %vm4212, %v4251, 0.0
        %v4300 = vsel %vm4213, %v4252, 0.0
        %v4301 = vsel %vm4214, %v4253, 0.0
        %v4302 = vsel %vm4212, %v4254, 0.0
        %v4303 = vsel %vm4213, %v4255, 0.0
        %v4304 = vsel %vm4214, %v4256, 0.0
        %v4305 = vsel %vm4212, %v4257, 0.0
        %v4306 = vsel %vm4213, %v4258, 0.0
        %v4307 = vsel %vm4214, %v4259, 0.0
        %v4308 = vsel %vm4212, %v4260, 0.0
        %v4309 = vsel %vm4213, %v4261, 0.0
        %v4310 = vsel %vm4214, %v4262, 0.0
        %v4311 = vpack.c.bf16 %v4263, %v4263
        %v4312 = vpack.c.bf16 %v4264, %v4264
        %v4313 = vpack.c.bf16 %v4265, %v4265
        %v4314 = vpack.c.bf16 %v4266, %v4266
        %v4315 = vpack.c.bf16 %v4267, %v4267
        %v4316 = vpack.c.bf16 %v4268, %v4268
        %v4317 = vpack.c.bf16 %v4269, %v4269
        %v4318 = vpack.c.bf16 %v4270, %v4270
        %v4319 = vpack.c.bf16 %v4271, %v4271
        %v4320 = vpack.c.bf16 %v4272, %v4272
        %v4321 = vpack.c.bf16 %v4273, %v4273
        %v4322 = vpack.c.bf16 %v4274, %v4274
        %v4323 = vpack.c.bf16 %v4275, %v4275
        %v4324 = vpack.c.bf16 %v4276, %v4276
        %v4325 = vpack.c.bf16 %v4277, %v4277
        %v4326 = vpack.c.bf16 %v4278, %v4278
        %v4327 = vpack.c.bf16 %v4279, %v4279
        %v4328 = vpack.c.bf16 %v4280, %v4280
        %v4329 = vpack.c.bf16 %v4281, %v4281
        %v4330 = vpack.c.bf16 %v4282, %v4282
        %v4331 = vpack.c.bf16 %v4283, %v4283
        %v4332 = vpack.c.bf16 %v4284, %v4284
        %v4333 = vpack.c.bf16 %v4285, %v4285
        %v4334 = vpack.c.bf16 %v4286, %v4286
        %v4335 = vpack.c.bf16 %v4287, %v4287
        %v4336 = vpack.c.bf16 %v4288, %v4288
        %v4337 = vpack.c.bf16 %v4289, %v4289
        %v4338 = vpack.c.bf16 %v4290, %v4290
        %v4339 = vpack.c.bf16 %v4291, %v4291
        %v4340 = vpack.c.bf16 %v4292, %v4292
        %v4341 = vpack.c.bf16 %v4293, %v4293
        %v4342 = vpack.c.bf16 %v4294, %v4294
        %v4343 = vpack.c.bf16 %v4295, %v4295
        %v4344 = vpack.c.bf16 %v4296, %v4296
        %v4345 = vpack.c.bf16 %v4297, %v4297
        %v4346 = vpack.c.bf16 %v4298, %v4298
        %v4347 = vpack.c.bf16 %v4299, %v4299
        %v4348 = vpack.c.bf16 %v4300, %v4300
        %v4349 = vpack.c.bf16 %v4301, %v4301
        %v4350 = vpack.c.bf16 %v4302, %v4302
        %v4351 = vpack.c.bf16 %v4303, %v4303
        %v4352 = vpack.c.bf16 %v4304, %v4304
        %v4353 = vpack.c.bf16 %v4305, %v4305
        %v4354 = vpack.c.bf16 %v4306, %v4306
        %v4355 = vpack.c.bf16 %v4307, %v4307
        %v4356 = vpack.c.bf16 %v4308, %v4308
        %v4357 = vpack.c.bf16 %v4309, %v4309
        %v4358 = vpack.c.bf16 %v4310, %v4310
        %v4407 = vunpack.c.l.b16 %v4311
        %v4408 = vunpack.c.l.b16 %v4312
        %v4409 = vunpack.c.l.b16 %v4313
        %v4410 = vunpack.c.l.b16 %v4314
        %v4411 = vunpack.c.l.b16 %v4315
        %v4412 = vunpack.c.l.b16 %v4316
        %v4413 = vunpack.c.l.b16 %v4317
        %v4414 = vunpack.c.l.b16 %v4318
        %v4415 = vunpack.c.l.b16 %v4319
        %v4416 = vunpack.c.l.b16 %v4320
        %v4417 = vunpack.c.l.b16 %v4321
        %v4418 = vunpack.c.l.b16 %v4322
        %v4419 = vunpack.c.l.b16 %v4323
        %v4420 = vunpack.c.l.b16 %v4324
        %v4421 = vunpack.c.l.b16 %v4325
        %v4422 = vunpack.c.l.b16 %v4326
        %v4423 = vunpack.c.l.b16 %v4327
        %v4424 = vunpack.c.l.b16 %v4328
        %v4425 = vunpack.c.l.b16 %v4329
        %v4426 = vunpack.c.l.b16 %v4330
        %v4427 = vunpack.c.l.b16 %v4331
        %v4428 = vunpack.c.l.b16 %v4332
        %v4429 = vunpack.c.l.b16 %v4333
        %v4430 = vunpack.c.l.b16 %v4334
        %v4431 = vunpack.c.l.b16 %v4335
        %v4432 = vunpack.c.l.b16 %v4336
        %v4433 = vunpack.c.l.b16 %v4337
        %v4434 = vunpack.c.l.b16 %v4338
        %v4435 = vunpack.c.l.b16 %v4339
        %v4436 = vunpack.c.l.b16 %v4340
        %v4437 = vunpack.c.l.b16 %v4341
        %v4438 = vunpack.c.l.b16 %v4342
        %v4439 = vunpack.c.l.b16 %v4343
        %v4440 = vunpack.c.l.b16 %v4344
        %v4441 = vunpack.c.l.b16 %v4345
        %v4442 = vunpack.c.l.b16 %v4346
        %v4443 = vunpack.c.l.b16 %v4347
        %v4444 = vunpack.c.l.b16 %v4348
        %v4445 = vunpack.c.l.b16 %v4349
        %v4446 = vunpack.c.l.b16 %v4350
        %v4447 = vunpack.c.l.b16 %v4351
        %v4448 = vunpack.c.l.b16 %v4352
        %v4449 = vunpack.c.l.b16 %v4353
        %v4450 = vunpack.c.l.b16 %v4354
        %v4451 = vunpack.c.l.b16 %v4355
        %v4452 = vunpack.c.l.b16 %v4356
        %v4453 = vunpack.c.l.b16 %v4357
        %v4454 = vunpack.c.l.b16 %v4358
        %v4455 = vpack.c.b16 %v4408, %v4407
        %v4456 = vpack.c.b16 %v4410, %v4409
        %v4457 = vpack.c.b16 %v4412, %v4411
        %v4458 = vpack.c.b16 %v4414, %v4413
        %v4459 = vpack.c.b16 %v4416, %v4415
        %v4460 = vpack.c.b16 %v4418, %v4417
        %v4461 = vpack.c.b16 %v4420, %v4419
        %v4462 = vpack.c.b16 %v4422, %v4421
        %v4463 = vpack.c.b16 %v4424, %v4423
        %v4464 = vpack.c.b16 %v4426, %v4425
        %v4465 = vpack.c.b16 %v4428, %v4427
        %v4466 = vpack.c.b16 %v4430, %v4429
        %v4467 = vpack.c.b16 %v4432, %v4431
        %v4468 = vpack.c.b16 %v4434, %v4433
        %v4469 = vpack.c.b16 %v4436, %v4435
        %v4470 = vpack.c.b16 %v4438, %v4437
        %v4471 = vpack.c.b16 %v4440, %v4439
        %v4472 = vpack.c.b16 %v4442, %v4441
        %v4473 = vpack.c.b16 %v4444, %v4443
        %v4474 = vpack.c.b16 %v4446, %v4445
        %v4475 = vpack.c.b16 %v4448, %v4447
        %v4476 = vpack.c.b16 %v4450, %v4449
        %v4477 = vpack.c.b16 %v4452, %v4451
        %v4478 = vpack.c.b16 %v4454, %v4453
        %vm4479 = vsmask.f32 7424
        %v4481 = vshrl.u32 0, 16
        %v4483 = vshll.u32 0, 16
        %v4485 = vrot.slane %v4483, 1
        %v4486 = vor.u32 %v4481, %v4485
        %v4487 = vsel %vm4479, %v4486, %v4485
        %v4489 = vshll.u32 %v4455, 16
        %v4491 = vrot.slane %v4489, 1
        %v4492 = vsel %vm4479, %v4486, %v4491
        %v4493 = vshrl.u32 %v4455, 16
        %v4495 = vor.u32 %v4493, %v4491
        %v4497 = vshll.u32 %v4456, 16
        %v4499 = vrot.slane %v4497, 1
        %v4500 = vsel %vm4479, %v4495, %v4499
        %v4501 = vshrl.u32 %v4456, 16
        %v4503 = vor.u32 %v4501, %v4499
        %v4505 = vshll.u32 %v4457, 16
        %v4507 = vrot.slane %v4505, 1
        %v4508 = vsel %vm4479, %v4503, %v4507
        %v4509 = vshrl.u32 %v4457, 16
        %v4511 = vor.u32 %v4509, %v4507
        %v4513 = vshll.u32 %v4458, 16
        %v4515 = vrot.slane %v4513, 1
        %v4516 = vsel %vm4479, %v4511, %v4515
        %v4517 = vshrl.u32 %v4458, 16
        %v4519 = vor.u32 %v4517, %v4515
        %v4521 = vshll.u32 %v4459, 16
        %v4523 = vrot.slane %v4521, 1
        %v4524 = vsel %vm4479, %v4519, %v4523
        %v4525 = vshrl.u32 %v4459, 16
        %v4527 = vor.u32 %v4525, %v4523
        %v4529 = vshll.u32 %v4460, 16
        %v4531 = vrot.slane %v4529, 1
        %v4532 = vsel %vm4479, %v4527, %v4531
        %v4533 = vshrl.u32 %v4460, 16
        %v4535 = vor.u32 %v4533, %v4531
        %v4537 = vshll.u32 %v4461, 16
        %v4539 = vrot.slane %v4537, 1
        %v4540 = vsel %vm4479, %v4535, %v4539
        %v4541 = vshrl.u32 %v4461, 16
        %v4543 = vor.u32 %v4541, %v4539
        %v4545 = vshll.u32 %v4462, 16
        %v4547 = vrot.slane %v4545, 1
        %v4548 = vsel %vm4479, %v4543, %v4547
        %v4549 = vshrl.u32 %v4462, 16
        %v4551 = vor.u32 %v4549, %v4547
        %v4553 = vshll.u32 %v4463, 16
        %v4555 = vrot.slane %v4553, 1
        %v4556 = vsel %vm4479, %v4551, %v4555
        %v4557 = vshrl.u32 %v4463, 16
        %v4559 = vor.u32 %v4557, %v4555
        %v4561 = vshll.u32 %v4464, 16
        %v4563 = vrot.slane %v4561, 1
        %v4564 = vsel %vm4479, %v4559, %v4563
        %v4565 = vshrl.u32 %v4464, 16
        %v4567 = vor.u32 %v4565, %v4563
        %v4569 = vshll.u32 %v4465, 16
        %v4571 = vrot.slane %v4569, 1
        %v4572 = vsel %vm4479, %v4567, %v4571
        %v4573 = vshrl.u32 %v4465, 16
        %v4575 = vor.u32 %v4573, %v4571
        %v4577 = vshll.u32 %v4466, 16
        %v4579 = vrot.slane %v4577, 1
        %v4580 = vsel %vm4479, %v4575, %v4579
        %v4581 = vshrl.u32 %v4466, 16
        %v4583 = vor.u32 %v4581, %v4579
        %v4585 = vshll.u32 %v4467, 16
        %v4587 = vrot.slane %v4585, 1
        %v4588 = vsel %vm4479, %v4583, %v4587
        %v4589 = vshrl.u32 %v4467, 16
        %v4591 = vor.u32 %v4589, %v4587
        %v4593 = vshll.u32 %v4468, 16
        %v4595 = vrot.slane %v4593, 1
        %v4596 = vsel %vm4479, %v4591, %v4595
        %v4597 = vshrl.u32 %v4468, 16
        %v4599 = vor.u32 %v4597, %v4595
        %v4601 = vshll.u32 %v4469, 16
        %v4603 = vrot.slane %v4601, 1
        %v4604 = vsel %vm4479, %v4599, %v4603
        %v4605 = vshrl.u32 %v4469, 16
        %v4607 = vor.u32 %v4605, %v4603
        %v4609 = vshll.u32 %v4470, 16
        %v4611 = vrot.slane %v4609, 1
        %v4612 = vsel %vm4479, %v4607, %v4611
        %v4613 = vshrl.u32 %v4470, 16
        %v4615 = vor.u32 %v4613, %v4611
        %v4617 = vshll.u32 %v4471, 16
        %v4619 = vrot.slane %v4617, 1
        %v4620 = vsel %vm4479, %v4615, %v4619
        %v4621 = vshrl.u32 %v4471, 16
        %v4623 = vor.u32 %v4621, %v4619
        %v4625 = vshll.u32 %v4472, 16
        %v4627 = vrot.slane %v4625, 1
        %v4628 = vsel %vm4479, %v4623, %v4627
        %v4629 = vshrl.u32 %v4472, 16
        %v4631 = vor.u32 %v4629, %v4627
        %v4633 = vshll.u32 %v4473, 16
        %v4635 = vrot.slane %v4633, 1
        %v4636 = vsel %vm4479, %v4631, %v4635
        %v4637 = vshrl.u32 %v4473, 16
        %v4639 = vor.u32 %v4637, %v4635
        %v4641 = vshll.u32 %v4474, 16
        %v4643 = vrot.slane %v4641, 1
        %v4644 = vsel %vm4479, %v4639, %v4643
        %v4645 = vshrl.u32 %v4474, 16
        %v4647 = vor.u32 %v4645, %v4643
        %v4649 = vshll.u32 %v4475, 16
        %v4651 = vrot.slane %v4649, 1
        %v4652 = vsel %vm4479, %v4647, %v4651
        %v4653 = vshrl.u32 %v4475, 16
        %v4655 = vor.u32 %v4653, %v4651
        %v4657 = vshll.u32 %v4476, 16
        %v4659 = vrot.slane %v4657, 1
        %v4660 = vsel %vm4479, %v4655, %v4659
        %v4661 = vshrl.u32 %v4476, 16
        %v4663 = vor.u32 %v4661, %v4659
        %v4665 = vshll.u32 %v4477, 16
        %v4667 = vrot.slane %v4665, 1
        %v4668 = vsel %vm4479, %v4663, %v4667
        %v4669 = vshrl.u32 %v4477, 16
        %v4671 = vor.u32 %v4669, %v4667
        %vm4673 = vcmask 1046528
        %v4674 = vrot.slane 0, 1
        %v4675 = vsel %vm4673, %v4674, %v4674
        %v4676 = vrot.slane %v4455, 1
        %v4677 = vsel %vm4673, %v4674, %v4676
        %v4678 = vrot.slane %v4456, 1
        %v4679 = vsel %vm4673, %v4676, %v4678
        %v4680 = vrot.slane %v4457, 1
        %v4681 = vsel %vm4673, %v4678, %v4680
        %v4682 = vrot.slane %v4458, 1
        %v4683 = vsel %vm4673, %v4680, %v4682
        %v4684 = vrot.slane %v4459, 1
        %v4685 = vsel %vm4673, %v4682, %v4684
        %v4686 = vrot.slane %v4460, 1
        %v4687 = vsel %vm4673, %v4684, %v4686
        %v4688 = vrot.slane %v4461, 1
        %v4689 = vsel %vm4673, %v4686, %v4688
        %v4690 = vrot.slane %v4462, 1
        %v4691 = vsel %vm4673, %v4688, %v4690
        %v4692 = vrot.slane %v4463, 1
        %v4693 = vsel %vm4673, %v4690, %v4692
        %v4694 = vrot.slane %v4464, 1
        %v4695 = vsel %vm4673, %v4692, %v4694
        %v4696 = vrot.slane %v4465, 1
        %v4697 = vsel %vm4673, %v4694, %v4696
        %v4698 = vrot.slane %v4466, 1
        %v4699 = vsel %vm4673, %v4696, %v4698
        %v4700 = vrot.slane %v4467, 1
        %v4701 = vsel %vm4673, %v4698, %v4700
        %v4702 = vrot.slane %v4468, 1
        %v4703 = vsel %vm4673, %v4700, %v4702
        %v4704 = vrot.slane %v4469, 1
        %v4705 = vsel %vm4673, %v4702, %v4704
        %v4706 = vrot.slane %v4470, 1
        %v4707 = vsel %vm4673, %v4704, %v4706
        %v4708 = vrot.slane %v4471, 1
        %v4709 = vsel %vm4673, %v4706, %v4708
        %v4710 = vrot.slane %v4472, 1
        %v4711 = vsel %vm4673, %v4708, %v4710
        %v4712 = vrot.slane %v4473, 1
        %v4713 = vsel %vm4673, %v4710, %v4712
        %v4714 = vrot.slane %v4474, 1
        %v4715 = vsel %vm4673, %v4712, %v4714
        %v4716 = vrot.slane %v4475, 1
        %v4717 = vsel %vm4673, %v4714, %v4716
        %v4718 = vrot.slane %v4476, 1
        %v4719 = vsel %vm4673, %v4716, %v4718
        %v4720 = vrot.slane %v4477, 1
        %v4721 = vsel %vm4673, %v4718, %v4720
        %vm4722 = vcmask 1043456
        %v4723 = vrot.slane 0, 4
        %v4724 = vrot.slane %v4455, 4
        %v4725 = vsel %vm4722, %v4723, %v4724
        %v4726 = vrot.slane %v4456, 4
        %v4727 = vsel %vm4722, %v4724, %v4726
        %v4728 = vrot.slane %v4457, 4
        %v4729 = vsel %vm4722, %v4726, %v4728
        %v4730 = vrot.slane %v4458, 4
        %v4731 = vsel %vm4722, %v4728, %v4730
        %v4732 = vrot.slane %v4459, 4
        %v4733 = vsel %vm4722, %v4730, %v4732
        %v4734 = vrot.slane %v4460, 4
        %v4735 = vsel %vm4722, %v4732, %v4734
        %v4736 = vrot.slane %v4461, 4
        %v4737 = vsel %vm4722, %v4734, %v4736
        %v4738 = vrot.slane %v4462, 4
        %v4739 = vsel %vm4722, %v4736, %v4738
        %v4740 = vrot.slane %v4463, 4
        %v4741 = vsel %vm4722, %v4738, %v4740
        %v4742 = vrot.slane %v4464, 4
        %v4743 = vsel %vm4722, %v4740, %v4742
        %v4744 = vrot.slane %v4465, 4
        %v4745 = vsel %vm4722, %v4742, %v4744
        %v4746 = vrot.slane %v4466, 4
        %v4747 = vsel %vm4722, %v4744, %v4746
        %v4748 = vrot.slane %v4467, 4
        %v4749 = vsel %vm4722, %v4746, %v4748
        %v4750 = vrot.slane %v4468, 4
        %v4751 = vsel %vm4722, %v4748, %v4750
        %v4752 = vrot.slane %v4469, 4
        %v4753 = vsel %vm4722, %v4750, %v4752
        %v4754 = vrot.slane %v4470, 4
        %v4755 = vsel %vm4722, %v4752, %v4754
        %v4756 = vrot.slane %v4471, 4
        %v4757 = vsel %vm4722, %v4754, %v4756
        %v4758 = vrot.slane %v4472, 4
        %v4759 = vsel %vm4722, %v4756, %v4758
        %v4760 = vrot.slane %v4473, 4
        %v4761 = vsel %vm4722, %v4758, %v4760
        %v4762 = vrot.slane %v4474, 4
        %v4763 = vsel %vm4722, %v4760, %v4762
        %v4764 = vrot.slane %v4475, 4
        %v4765 = vsel %vm4722, %v4762, %v4764
        %v4766 = vrot.slane %v4476, 4
        %v4767 = vsel %vm4722, %v4764, %v4766
        %v4768 = vrot.slane %v4477, 4
        %v4769 = vsel %vm4722, %v4766, %v4768
        %v4770 = vrot.slane %v4478, 4
        %v4771 = vsel %vm4722, %v4768, %v4770
        %v4772 = vrot.slane %v4493, 4
        %v4773 = vrot.slane %v4489, 5
        %v4774 = vor.u32 %v4772, %v4773
        %v4775 = vrot.slane %v4501, 4
        %v4776 = vrot.slane %v4497, 5
        %v4777 = vor.u32 %v4775, %v4776
        %v4778 = vsel %vm482, %v4774, %v4777
        %v4779 = vrot.slane %v4509, 4
        %v4780 = vrot.slane %v4505, 5
        %v4781 = vor.u32 %v4779, %v4780
        %v4782 = vsel %vm482, %v4777, %v4781
        %v4783 = vrot.slane %v4517, 4
        %v4784 = vrot.slane %v4513, 5
        %v4785 = vor.u32 %v4783, %v4784
        %v4786 = vsel %vm482, %v4781, %v4785
        %v4787 = vrot.slane %v4525, 4
        %v4788 = vrot.slane %v4521, 5
        %v4789 = vor.u32 %v4787, %v4788
        %v4790 = vsel %vm482, %v4785, %v4789
        %v4791 = vrot.slane %v4533, 4
        %v4792 = vrot.slane %v4529, 5
        %v4793 = vor.u32 %v4791, %v4792
        %v4794 = vsel %vm482, %v4789, %v4793
        %v4795 = vrot.slane %v4541, 4
        %v4796 = vrot.slane %v4537, 5
        %v4797 = vor.u32 %v4795, %v4796
        %v4798 = vsel %vm482, %v4793, %v4797
        %v4799 = vrot.slane %v4549, 4
        %v4800 = vrot.slane %v4545, 5
        %v4801 = vor.u32 %v4799, %v4800
        %v4802 = vsel %vm482, %v4797, %v4801
        %v4803 = vrot.slane %v4557, 4
        %v4804 = vrot.slane %v4553, 5
        %v4805 = vor.u32 %v4803, %v4804
        %v4806 = vsel %vm482, %v4801, %v4805
        %v4807 = vrot.slane %v4565, 4
        %v4808 = vrot.slane %v4561, 5
        %v4809 = vor.u32 %v4807, %v4808
        %v4810 = vsel %vm482, %v4805, %v4809
        %v4811 = vrot.slane %v4573, 4
        %v4812 = vrot.slane %v4569, 5
        %v4813 = vor.u32 %v4811, %v4812
        %v4814 = vsel %vm482, %v4809, %v4813
        %v4815 = vrot.slane %v4581, 4
        %v4816 = vrot.slane %v4577, 5
        %v4817 = vor.u32 %v4815, %v4816
        %v4818 = vsel %vm482, %v4813, %v4817
        %v4819 = vrot.slane %v4589, 4
        %v4820 = vrot.slane %v4585, 5
        %v4821 = vor.u32 %v4819, %v4820
        %v4822 = vsel %vm482, %v4817, %v4821
        %v4823 = vrot.slane %v4597, 4
        %v4824 = vrot.slane %v4593, 5
        %v4825 = vor.u32 %v4823, %v4824
        %v4826 = vsel %vm482, %v4821, %v4825
        %v4827 = vrot.slane %v4605, 4
        %v4828 = vrot.slane %v4601, 5
        %v4829 = vor.u32 %v4827, %v4828
        %v4830 = vsel %vm482, %v4825, %v4829
        %v4831 = vrot.slane %v4613, 4
        %v4832 = vrot.slane %v4609, 5
        %v4833 = vor.u32 %v4831, %v4832
        %v4834 = vsel %vm482, %v4829, %v4833
        %v4835 = vrot.slane %v4621, 4
        %v4836 = vrot.slane %v4617, 5
        %v4837 = vor.u32 %v4835, %v4836
        %v4838 = vsel %vm482, %v4833, %v4837
        %v4839 = vrot.slane %v4629, 4
        %v4840 = vrot.slane %v4625, 5
        %v4841 = vor.u32 %v4839, %v4840
        %v4842 = vsel %vm482, %v4837, %v4841
        %v4843 = vrot.slane %v4637, 4
        %v4844 = vrot.slane %v4633, 5
        %v4845 = vor.u32 %v4843, %v4844
        %v4846 = vsel %vm482, %v4841, %v4845
        %v4847 = vrot.slane %v4645, 4
        %v4848 = vrot.slane %v4641, 5
        %v4849 = vor.u32 %v4847, %v4848
        %v4850 = vsel %vm482, %v4845, %v4849
        %v4851 = vrot.slane %v4653, 4
        %v4852 = vrot.slane %v4649, 5
        %v4853 = vor.u32 %v4851, %v4852
        %v4854 = vsel %vm482, %v4849, %v4853
        %v4855 = vrot.slane %v4661, 4
        %v4856 = vrot.slane %v4657, 5
        %v4857 = vor.u32 %v4855, %v4856
        %v4858 = vsel %vm482, %v4853, %v4857
        %v4859 = vrot.slane %v4669, 4
        %v4860 = vrot.slane %v4665, 5
        %v4861 = vor.u32 %v4859, %v4860
        %v4862 = vsel %vm482, %v4857, %v4861
        %v4864 = vshrl.u32 %v4478, 16
        %v4866 = vrot.slane %v4864, 4
        %v4867 = vshll.u32 %v4478, 16
        %v4869 = vrot.slane %v4867, 5
        %v4870 = vor.u32 %v4866, %v4869
        %v4871 = vsel %vm482, %v4861, %v4870
        %v4872 = vrot.slane %v4455, 5
        %v4873 = vrot.slane %v4456, 5
        %v4874 = vsel %vm701, %v4872, %v4873
        %v4875 = vrot.slane %v4457, 5
        %v4876 = vsel %vm701, %v4873, %v4875
        %v4877 = vrot.slane %v4458, 5
        %v4878 = vsel %vm701, %v4875, %v4877
        %v4879 = vrot.slane %v4459, 5
        %v4880 = vsel %vm701, %v4877, %v4879
        %v4881 = vrot.slane %v4460, 5
        %v4882 = vsel %vm701, %v4879, %v4881
        %v4883 = vrot.slane %v4461, 5
        %v4884 = vsel %vm701, %v4881, %v4883
        %v4885 = vrot.slane %v4462, 5
        %v4886 = vsel %vm701, %v4883, %v4885
        %v4887 = vrot.slane %v4463, 5
        %v4888 = vsel %vm701, %v4885, %v4887
        %v4889 = vrot.slane %v4464, 5
        %v4890 = vsel %vm701, %v4887, %v4889
        %v4891 = vrot.slane %v4465, 5
        %v4892 = vsel %vm701, %v4889, %v4891
        %v4893 = vrot.slane %v4466, 5
        %v4894 = vsel %vm701, %v4891, %v4893
        %v4895 = vrot.slane %v4467, 5
        %v4896 = vsel %vm701, %v4893, %v4895
        %v4897 = vrot.slane %v4468, 5
        %v4898 = vsel %vm701, %v4895, %v4897
        %v4899 = vrot.slane %v4469, 5
        %v4900 = vsel %vm701, %v4897, %v4899
        %v4901 = vrot.slane %v4470, 5
        %v4902 = vsel %vm701, %v4899, %v4901
        %v4903 = vrot.slane %v4471, 5
        %v4904 = vsel %vm701, %v4901, %v4903
        %v4905 = vrot.slane %v4472, 5
        %v4906 = vsel %vm701, %v4903, %v4905
        %v4907 = vrot.slane %v4473, 5
        %v4908 = vsel %vm701, %v4905, %v4907
        %v4909 = vrot.slane %v4474, 5
        %v4910 = vsel %vm701, %v4907, %v4909
        %v4911 = vrot.slane %v4475, 5
        %v4912 = vsel %vm701, %v4909, %v4911
        %v4913 = vrot.slane %v4476, 5
        %v4914 = vsel %vm701, %v4911, %v4913
        %v4915 = vrot.slane %v4477, 5
        %v4916 = vsel %vm701, %v4913, %v4915
        %v4917 = vrot.slane %v4478, 5
        %v4918 = vsel %vm701, %v4915, %v4917
        %v4919 = vrot.slane 0, 5
        %v4920 = vsel %vm701, %v4917, %v4919
        %v4921 = vrot.slane %v4867, 1
        %v4922 = vsel %vm4479, %v4671, %v4921
        %v4923 = vor.u32 %v4864, %v4921
        %v4924 = vsel %vm4479, %v4923, %v4485
        %v4925 = vrot.slane %v4478, 1
        %v4926 = vsel %vm4673, %v4720, %v4925
        %v4927 = vsel %vm4673, %v4925, %v4674
        %v4928 = vld [vmem:[#allocation7] sm:$0xf]
        %v4929 = vld [vmem:[#allocation7 + $0x4] sm:$0xf]
        %v4930 = vld [vmem:[#allocation7 + $0x8] sm:$0xf]
        %v4931 = vld [vmem:[#allocation7 + $0xc] sm:$0xf]
        %v4932 = vld [vmem:[#allocation7 + $0x10] sm:$0xf]
        %v4933 = vld [vmem:[#allocation7 + $0x14] sm:$0xf]
        %v4934 = vld [vmem:[#allocation7 + $0x18] sm:$0xf]
        %v4935 = vld [vmem:[#allocation7 + $0x1c] sm:$0xf]
        %v4936 = vld [vmem:[#allocation7 + $0x20] sm:$0xf]
        %v4937 = vld [vmem:[#allocation7 + $0x24] sm:$0xf]
        %v4938 = vld [vmem:[#allocation7 + $0x28] sm:$0xf]
        %v4939 = vld [vmem:[#allocation7 + $0x2c] sm:$0xf]
        %v4940 = vld [vmem:[#allocation7 + $0x30] sm:$0xf]
        %v4941 = vld [vmem:[#allocation7 + $0x34] sm:$0xf]
        %v4942 = vld [vmem:[#allocation7 + $0x38] sm:$0xf]
        %v4943 = vld [vmem:[#allocation7 + $0x3c] sm:$0xf]
        %v4944 = vld [vmem:[#allocation7 + $0x40] sm:$0xf]
        %v4945 = vld [vmem:[#allocation7 + $0x44] sm:$0xf]
        %v4946 = vld [vmem:[#allocation7 + $0x48] sm:$0xf]
        %v4947 = vld [vmem:[#allocation7 + $0x4c] sm:$0xf]
        %v4948 = vld [vmem:[#allocation7 + $0x50] sm:$0xf]
        %v4949 = vld [vmem:[#allocation7 + $0x54] sm:$0xf]
        %v4950 = vld [vmem:[#allocation7 + $0x58] sm:$0xf]
        %v4951 = vld [vmem:[#allocation7 + $0x5c] sm:$0xf]
        %v4952 = vld [vmem:[#allocation7 + $0x60] sm:$0xf]
        %v4953 = vld [vmem:[#allocation7 + $0x64] sm:$0xf]
        %v4954 = vld [vmem:[#allocation7 + $0x68] sm:$0xf]
        %v4955 = vld [vmem:[#allocation7 + $0x6c] sm:$0xf]
        %v4956 = vld [vmem:[#allocation7 + $0x70] sm:$0xf]
        %v4957 = vld [vmem:[#allocation7 + $0x74] sm:$0xf]
        %v4958 = vld [vmem:[#allocation7 + $0x78] sm:$0xf]
        %v4959 = vld [vmem:[#allocation7 + $0x7c] sm:$0xf]
        %v4960 = vld [vmem:[#allocation7 + $0x80] sm:$0xf]
        %v4961 = vld [vmem:[#allocation7 + $0x84] sm:$0xf]
        %v4962 = vld [vmem:[#allocation7 + $0x88] sm:$0xf]
        %v4963 = vld [vmem:[#allocation7 + $0x8c] sm:$0xf]
        %v4964 = vld [vmem:[#allocation7 + $0x90] sm:$0xf]
        %v4965 = vld [vmem:[#allocation7 + $0x94] sm:$0xf]
        %v4966 = vld [vmem:[#allocation7 + $0x98] sm:$0xf]
        %v4967 = vld [vmem:[#allocation7 + $0x9c] sm:$0xf]
        %v4968 = vld [vmem:[#allocation7 + $0xa0] sm:$0xf]
        %v4969 = vld [vmem:[#allocation7 + $0xa4] sm:$0xf]
        %v4970 = vld [vmem:[#allocation7 + $0xa8] sm:$0xf]
        %v4971 = vld [vmem:[#allocation7 + $0xac] sm:$0xf]
        %v4972 = vld [vmem:[#allocation7 + $0xb0] sm:$0xf]
        %v4973 = vld [vmem:[#allocation7 + $0xb4] sm:$0xf]
        %v4974 = vld [vmem:[#allocation7 + $0xb8] sm:$0xf]
        %v4975 = vld [vmem:[#allocation7 + $0xbc] sm:$0xf]
        %v4976 = vld [vmem:[#allocation7 + $0xc0] sm:$0xf]
        %v4977 = vld [vmem:[#allocation7 + $0xc4] sm:$0xf]
        %v4978 = vld [vmem:[#allocation7 + $0xc8] sm:$0xf]
        %v4979 = vld [vmem:[#allocation7 + $0xcc] sm:$0xf]
        %v4980 = vld [vmem:[#allocation7 + $0xd0] sm:$0xf]
        %v4981 = vld [vmem:[#allocation7 + $0xd4] sm:$0xf]
        %v4982 = vld [vmem:[#allocation7 + $0xd8] sm:$0xf]
        %v4983 = vld [vmem:[#allocation7 + $0xdc] sm:$0xf]
        %v4984 = vld [vmem:[#allocation7 + $0xe0] sm:$0xf]
        %v4985 = vld [vmem:[#allocation7 + $0xe4] sm:$0xf]
        %v4986 = vld [vmem:[#allocation7 + $0xe8] sm:$0xf]
        %v4987 = vld [vmem:[#allocation7 + $0xec] sm:$0xf]
        %v4988 = vld [vmem:[#allocation7 + $0xf0] sm:$0xf]
        %v4989 = vld [vmem:[#allocation7 + $0xf4] sm:$0xf]
        %v4990 = vld [vmem:[#allocation7 + $0xf8] sm:$0xf]
        %v4991 = vld [vmem:[#allocation7 + $0xfc] sm:$0xf]
        %v4992 = vld [vmem:[#allocation7 + $0x100] sm:$0xf]
        %v4993 = vld [vmem:[#allocation7 + $0x104] sm:$0xf]
        %v4994 = vld [vmem:[#allocation7 + $0x108] sm:$0xf]
        %v4995 = vld [vmem:[#allocation7 + $0x10c] sm:$0xf]
        %v4996 = vld [vmem:[#allocation7 + $0x110] sm:$0xf]
        %v4997 = vld [vmem:[#allocation7 + $0x114] sm:$0xf]
        %v4998 = vld [vmem:[#allocation7 + $0x118] sm:$0xf]
        %v4999 = vld [vmem:[#allocation7 + $0x11c] sm:$0xf]
        %v5000 = vld [vmem:[#allocation7 + $0x120] sm:$0xf]
        %v5001 = vld [vmem:[#allocation7 + $0x124] sm:$0xf]
        %v5002 = vld [vmem:[#allocation7 + $0x128] sm:$0xf]
        %v5003 = vld [vmem:[#allocation7 + $0x12c] sm:$0xf]
        %v5004 = vld [vmem:[#allocation7 + $0x130] sm:$0xf]
        %v5005 = vld [vmem:[#allocation7 + $0x134] sm:$0xf]
        %v5006 = vld [vmem:[#allocation7 + $0x138] sm:$0xf]
        %v5007 = vld [vmem:[#allocation7 + $0x13c] sm:$0xf]
        %v5008 = vld [vmem:[#allocation7 + $0x140] sm:$0xf]
        %v5009 = vld [vmem:[#allocation7 + $0x144] sm:$0xf]
        %v5010 = vld [vmem:[#allocation7 + $0x148] sm:$0xf]
        %v5011 = vld [vmem:[#allocation7 + $0x14c] sm:$0xf]
        %v5012 = vld [vmem:[#allocation7 + $0x150] sm:$0xf]
        %v5013 = vld [vmem:[#allocation7 + $0x154] sm:$0xf]
        %v5014 = vld [vmem:[#allocation7 + $0x158] sm:$0xf]
        %v5015 = vld [vmem:[#allocation7 + $0x15c] sm:$0xf]
        %v5016 = vld [vmem:[#allocation7 + $0x160] sm:$0xf]
        %v5017 = vld [vmem:[#allocation7 + $0x164] sm:$0xf]
        %v5018 = vld [vmem:[#allocation7 + $0x168] sm:$0xf]
        %v5019 = vld [vmem:[#allocation7 + $0x16c] sm:$0xf]
        %v5020 = vld [vmem:[#allocation7 + $0x170] sm:$0xf]
        %v5021 = vld [vmem:[#allocation7 + $0x174] sm:$0xf]
        %v5022 = vld [vmem:[#allocation7 + $0x178] sm:$0xf]
        %v5023 = vld [vmem:[#allocation7 + $0x17c] sm:$0xf]
        %v5024 = vld [vmem:[#allocation7 + $0x180] sm:$0xf]
        %v5025 = vld [vmem:[#allocation7 + $0x184] sm:$0xf]
        %v5026 = vld [vmem:[#allocation7 + $0x188] sm:$0xf]
        %v5027 = vld [vmem:[#allocation7 + $0x18c] sm:$0xf]
        %v5028 = vld [vmem:[#allocation7 + $0x190] sm:$0xf]
        %v5029 = vld [vmem:[#allocation7 + $0x194] sm:$0xf]
        %v5030 = vld [vmem:[#allocation7 + $0x198] sm:$0xf]
        %v5031 = vld [vmem:[#allocation7 + $0x19c] sm:$0xf]
        %v5032 = vld [vmem:[#allocation7 + $0x1a0] sm:$0xf]
        %v5033 = vld [vmem:[#allocation7 + $0x1a4] sm:$0xf]
        %v5034 = vld [vmem:[#allocation7 + $0x1a8] sm:$0xf]
        %v5035 = vld [vmem:[#allocation7 + $0x1ac] sm:$0xf]
        %v5036 = vld [vmem:[#allocation7 + $0x1b0] sm:$0xf]
        %v5037 = vld [vmem:[#allocation7 + $0x1b4] sm:$0xf]
        %v5038 = vld [vmem:[#allocation7 + $0x1b8] sm:$0xf]
        %v5039 = vld [vmem:[#allocation7 + $0x1bc] sm:$0xf]
        %v5040 = vld [vmem:[#allocation7 + $0x1c0] sm:$0xf]
        %v5041 = vld [vmem:[#allocation7 + $0x1c4] sm:$0xf]
        %v5042 = vld [vmem:[#allocation7 + $0x1c8] sm:$0xf]
        %v5043 = vld [vmem:[#allocation7 + $0x1cc] sm:$0xf]
        %v5044 = vld [vmem:[#allocation7 + $0x1d0] sm:$0xf]
        %v5045 = vld [vmem:[#allocation7 + $0x1d4] sm:$0xf]
        %v5046 = vld [vmem:[#allocation7 + $0x1d8] sm:$0xf]
        %v5047 = vld [vmem:[#allocation7 + $0x1dc] sm:$0xf]
        %v5048 = vld [vmem:[#allocation7 + $0x1e0] sm:$0xf]
        %v5049 = vld [vmem:[#allocation7 + $0x1e4] sm:$0xf]
        %v5050 = vld [vmem:[#allocation7 + $0x1e8] sm:$0xf]
        %v5051 = vld [vmem:[#allocation7 + $0x1ec] sm:$0xf]
        %v5052 = vld [vmem:[#allocation7 + $0x1f0] sm:$0xf]
        %v5053 = vld [vmem:[#allocation7 + $0x1f4] sm:$0xf]
        %v5054 = vld [vmem:[#allocation7 + $0x1f8] sm:$0xf]
        %v5055 = vld [vmem:[#allocation7 + $0x1fc] sm:$0xf]
        %v5056 = vld [vmem:[#allocation7 + $0x200] sm:$0xf]
        %v5057 = vld [vmem:[#allocation7 + $0x204] sm:$0xf]
        %v5058 = vld [vmem:[#allocation7 + $0x208] sm:$0xf]
        %v5059 = vld [vmem:[#allocation7 + $0x20c] sm:$0xf]
        %v5060 = vld [vmem:[#allocation7 + $0x210] sm:$0xf]
        %v5061 = vld [vmem:[#allocation7 + $0x214] sm:$0xf]
        %v5062 = vld [vmem:[#allocation7 + $0x218] sm:$0xf]
        %v5063 = vld [vmem:[#allocation7 + $0x21c] sm:$0xf]
        %v5064 = vld [vmem:[#allocation7 + $0x220] sm:$0xf]
        %v5065 = vld [vmem:[#allocation7 + $0x224] sm:$0xf]
        %v5066 = vld [vmem:[#allocation7 + $0x228] sm:$0xf]
        %v5067 = vld [vmem:[#allocation7 + $0x22c] sm:$0xf]
        %v5068 = vld [vmem:[#allocation7 + $0x230] sm:$0xf]
        %v5069 = vld [vmem:[#allocation7 + $0x234] sm:$0xf]
        %v5070 = vld [vmem:[#allocation7 + $0x238] sm:$0xf]
        %v5071 = vld [vmem:[#allocation7 + $0x23c] sm:$0xf]
        %v5072 = vunpack.c.l.bf16 %v283
        %v5073 = vunpack.c.l.bf16 %v284
        %v5074 = vunpack.c.l.bf16 %v285
        %v5075 = vunpack.c.l.bf16 %v286
        %v5076 = vunpack.c.l.bf16 %v287
        %v5077 = vunpack.c.l.bf16 %v288
        %v5078 = vunpack.c.l.bf16 %v289
        %v5079 = vunpack.c.l.bf16 %v290
        %v5080 = vunpack.c.l.bf16 %v291
        %v5081 = vunpack.c.l.bf16 %v292
        %v5082 = vunpack.c.l.bf16 %v293
        %v5083 = vunpack.c.l.bf16 %v294
        %v5084 = vunpack.c.l.bf16 %v295
        %v5085 = vunpack.c.l.bf16 %v296
        %v5086 = vunpack.c.l.bf16 %v297
        %v5087 = vunpack.c.l.bf16 %v298
        %v5088 = vunpack.c.l.bf16 %v299
        %v5089 = vunpack.c.l.bf16 %v300
        %v5090 = vunpack.c.l.bf16 %v301
        %v5091 = vunpack.c.l.bf16 %v302
        %v5092 = vunpack.c.l.bf16 %v303
        %v5093 = vunpack.c.l.bf16 %v304
        %v5094 = vunpack.c.l.bf16 %v305
        %v5095 = vunpack.c.l.bf16 %v306
        %v5096 = vunpack.c.l.bf16 %v307
        %v5097 = vunpack.c.l.bf16 %v308
        %v5098 = vunpack.c.l.bf16 %v309
        %v5099 = vunpack.c.l.bf16 %v310
        %v5100 = vunpack.c.l.bf16 %v311
        %v5101 = vunpack.c.l.bf16 %v312
        %v5102 = vunpack.c.l.bf16 %v313
        %v5103 = vunpack.c.l.bf16 %v314
        %v5104 = vunpack.c.l.bf16 %v315
        %v5105 = vunpack.c.l.bf16 %v316
        %v5106 = vunpack.c.l.bf16 %v317
        %v5107 = vunpack.c.l.bf16 %v318
        %v5108 = vunpack.c.l.bf16 %v319
        %v5109 = vunpack.c.l.bf16 %v320
        %v5110 = vunpack.c.l.bf16 %v321
        %v5111 = vunpack.c.l.bf16 %v322
        %v5112 = vunpack.c.l.bf16 %v323
        %v5113 = vunpack.c.l.bf16 %v324
        %v5114 = vunpack.c.l.bf16 %v325
        %v5115 = vunpack.c.l.bf16 %v326
        %v5116 = vunpack.c.l.bf16 %v327
        %v5117 = vunpack.c.l.bf16 %v328
        %v5118 = vunpack.c.l.bf16 %v329
        %v5119 = vunpack.c.l.bf16 %v330
        %v5120 = vld [vmem:[%s4] sm:$0x1]
        %v5122 = vperm.slane %v5120, 0
        %v5124 = vrot.slane %v4481, 3
        %v5125 = vrot.slane %v4483, 4
        %v5126 = vor.u32 %v5124, %v5125
        %v5127 = vsel %vm1220, %v5126, %v5126
        %v5129 = vshrl.u32 %v4487, 16
        %v5131 = vrot.slane %v5129, 3
        %v5132 = vshll.u32 %v4487, 16
        %v5134 = vrot.slane %v5132, 4
        %v5135 = vor.u32 %v5131, %v5134
        %v5137 = vshrl.u32 %v4492, 16
        %v5139 = vrot.slane %v5137, 3
        %v5140 = vshll.u32 %v4492, 16
        %v5142 = vrot.slane %v5140, 4
        %v5143 = vor.u32 %v5139, %v5142
        %v5144 = vsel %vm1220, %v5135, %v5143
        %v5146 = vshrl.u32 %v4675, 16
        %v5148 = vrot.slane %v5146, 3
        %v5149 = vshll.u32 %v4675, 16
        %v5151 = vrot.slane %v5149, 4
        %v5152 = vor.u32 %v5148, %v5151
        %v5154 = vshrl.u32 %v4677, 16
        %v5156 = vrot.slane %v5154, 3
        %v5157 = vshll.u32 %v4677, 16
        %v5159 = vrot.slane %v5157, 4
        %v5160 = vor.u32 %v5156, %v5159
        %v5161 = vsel %vm1220, %v5152, %v5160
        %v5163 = vshrl.u32 %v4725, 16
        %v5165 = vrot.slane %v5163, 3
        %v5166 = vshll.u32 %v4725, 16
        %v5168 = vrot.slane %v5166, 4
        %v5169 = vor.u32 %v5165, %v5168
        %v5171 = vshrl.u32 %v4727, 16
        %v5173 = vrot.slane %v5171, 3
        %v5174 = vshll.u32 %v4727, 16
        %v5176 = vrot.slane %v5174, 4
        %v5177 = vor.u32 %v5173, %v5176
        %v5178 = vsel %vm1220, %v5169, %v5177
        %v5180 = vshrl.u32 %v4774, 16
        %v5182 = vrot.slane %v5180, 3
        %v5183 = vshll.u32 %v4774, 16
        %v5185 = vrot.slane %v5183, 4
        %v5186 = vor.u32 %v5182, %v5185
        %v5188 = vshrl.u32 %v4778, 16
        %v5190 = vrot.slane %v5188, 3
        %v5191 = vshll.u32 %v4778, 16
        %v5193 = vrot.slane %v5191, 4
        %v5194 = vor.u32 %v5190, %v5193
        %v5195 = vsel %vm1220, %v5186, %v5194
        %v5197 = vshrl.u32 %v4872, 16
        %v5199 = vrot.slane %v5197, 3
        %v5200 = vshll.u32 %v4872, 16
        %v5202 = vrot.slane %v5200, 4
        %v5203 = vor.u32 %v5199, %v5202
        %v5205 = vshrl.u32 %v4874, 16
        %v5207 = vrot.slane %v5205, 3
        %v5208 = vshll.u32 %v4874, 16
        %v5210 = vrot.slane %v5208, 4
        %v5211 = vor.u32 %v5207, %v5210
        %v5212 = vsel %vm1220, %v5203, %v5211
        %v5213 = vrot.slane %v4501, 3
        %v5214 = vrot.slane %v4497, 4
        %v5215 = vor.u32 %v5213, %v5214
        %v5216 = vrot.slane %v4509, 3
        %v5217 = vrot.slane %v4505, 4
        %v5218 = vor.u32 %v5216, %v5217
        %v5219 = vsel %vm1220, %v5215, %v5218
        %v5221 = vshrl.u32 %v4508, 16
        %v5223 = vrot.slane %v5221, 3
        %v5224 = vshll.u32 %v4508, 16
        %v5226 = vrot.slane %v5224, 4
        %v5227 = vor.u32 %v5223, %v5226
        %v5229 = vshrl.u32 %v4516, 16
        %v5231 = vrot.slane %v5229, 3
        %v5232 = vshll.u32 %v4516, 16
        %v5234 = vrot.slane %v5232, 4
        %v5235 = vor.u32 %v5231, %v5234
        %v5236 = vsel %vm1220, %v5227, %v5235
        %v5238 = vshrl.u32 %v4681, 16
        %v5240 = vrot.slane %v5238, 3
        %v5241 = vshll.u32 %v4681, 16
        %v5243 = vrot.slane %v5241, 4
        %v5244 = vor.u32 %v5240, %v5243
        %v5246 = vshrl.u32 %v4683, 16
        %v5248 = vrot.slane %v5246, 3
        %v5249 = vshll.u32 %v4683, 16
        %v5251 = vrot.slane %v5249, 4
        %v5252 = vor.u32 %v5248, %v5251
        %v5253 = vsel %vm1220, %v5244, %v5252
        %v5254 = vrot.slane %v4493, 3
        %v5255 = vrot.slane %v4489, 4
        %v5256 = vor.u32 %v5254, %v5255
        %v5257 = vsel %vm1220, %v5126, %v5256
        %v5259 = vshrl.u32 %v4500, 16
        %v5261 = vrot.slane %v5259, 3
        %v5262 = vshll.u32 %v4500, 16
        %v5264 = vrot.slane %v5262, 4
        %v5265 = vor.u32 %v5261, %v5264
        %v5266 = vsel %vm1220, %v5143, %v5265
        %v5268 = vshrl.u32 %v4679, 16
        %v5270 = vrot.slane %v5268, 3
        %v5271 = vshll.u32 %v4679, 16
        %v5273 = vrot.slane %v5271, 4
        %v5274 = vor.u32 %v5270, %v5273
        %v5275 = vsel %vm1220, %v5160, %v5274
        %v5277 = vshrl.u32 %v4729, 16
        %v5279 = vrot.slane %v5277, 3
        %v5280 = vshll.u32 %v4729, 16
        %v5282 = vrot.slane %v5280, 4
        %v5283 = vor.u32 %v5279, %v5282
        %v5284 = vsel %vm1220, %v5177, %v5283
        %v5286 = vshrl.u32 %v4782, 16
        %v5288 = vrot.slane %v5286, 3
        %v5289 = vshll.u32 %v4782, 16
        %v5291 = vrot.slane %v5289, 4
        %v5292 = vor.u32 %v5288, %v5291
        %v5293 = vsel %vm1220, %v5194, %v5292
        %v5295 = vshrl.u32 %v4876, 16
        %v5297 = vrot.slane %v5295, 3
        %v5298 = vshll.u32 %v4876, 16
        %v5300 = vrot.slane %v5298, 4
        %v5301 = vor.u32 %v5297, %v5300
        %v5302 = vsel %vm1220, %v5211, %v5301
        %v5303 = vrot.slane %v4517, 3
        %v5304 = vrot.slane %v4513, 4
        %v5305 = vor.u32 %v5303, %v5304
        %v5306 = vsel %vm1220, %v5218, %v5305
        %v5308 = vshrl.u32 %v4524, 16
        %v5310 = vrot.slane %v5308, 3
        %v5311 = vshll.u32 %v4524, 16
        %v5313 = vrot.slane %v5311, 4
        %v5314 = vor.u32 %v5310, %v5313
        %v5315 = vsel %vm1220, %v5235, %v5314
        %v5317 = vshrl.u32 %v4685, 16
        %v5319 = vrot.slane %v5317, 3
        %v5320 = vshll.u32 %v4685, 16
        %v5322 = vrot.slane %v5320, 4
        %v5323 = vor.u32 %v5319, %v5322
        %v5324 = vsel %vm1220, %v5252, %v5323
        %v5325 = vsel %vm1220, %v5256, %v5215
        %v5326 = vsel %vm1220, %v5265, %v5227
        %v5327 = vsel %vm1220, %v5274, %v5244
        %v5329 = vshrl.u32 %v4731, 16
        %v5331 = vrot.slane %v5329, 3
        %v5332 = vshll.u32 %v4731, 16
        %v5334 = vrot.slane %v5332, 4
        %v5335 = vor.u32 %v5331, %v5334
        %v5336 = vsel %vm1220, %v5283, %v5335
        %v5338 = vshrl.u32 %v4786, 16
        %v5340 = vrot.slane %v5338, 3
        %v5341 = vshll.u32 %v4786, 16
        %v5343 = vrot.slane %v5341, 4
        %v5344 = vor.u32 %v5340, %v5343
        %v5345 = vsel %vm1220, %v5292, %v5344
        %v5347 = vshrl.u32 %v4878, 16
        %v5349 = vrot.slane %v5347, 3
        %v5350 = vshll.u32 %v4878, 16
        %v5352 = vrot.slane %v5350, 4
        %v5353 = vor.u32 %v5349, %v5352
        %v5354 = vsel %vm1220, %v5301, %v5353
        %v5355 = vrot.slane %v4525, 3
        %v5356 = vrot.slane %v4521, 4
        %v5357 = vor.u32 %v5355, %v5356
        %v5358 = vsel %vm1220, %v5305, %v5357
        %v5360 = vshrl.u32 %v4532, 16
        %v5362 = vrot.slane %v5360, 3
        %v5363 = vshll.u32 %v4532, 16
        %v5365 = vrot.slane %v5363, 4
        %v5366 = vor.u32 %v5362, %v5365
        %v5367 = vsel %vm1220, %v5314, %v5366
        %v5369 = vshrl.u32 %v4687, 16
        %v5371 = vrot.slane %v5369, 3
        %v5372 = vshll.u32 %v4687, 16
        %v5374 = vrot.slane %v5372, 4
        %v5375 = vor.u32 %v5371, %v5374
        %v5376 = vsel %vm1220, %v5323, %v5375
        %v5378 = vshrl.u32 %v4733, 16
        %v5380 = vrot.slane %v5378, 3
        %v5381 = vshll.u32 %v4733, 16
        %v5383 = vrot.slane %v5381, 4
        %v5384 = vor.u32 %v5380, %v5383
        %v5385 = vsel %vm1220, %v5335, %v5384
        %v5387 = vshrl.u32 %v4790, 16
        %v5389 = vrot.slane %v5387, 3
        %v5390 = vshll.u32 %v4790, 16
        %v5392 = vrot.slane %v5390, 4
        %v5393 = vor.u32 %v5389, %v5392
        %v5394 = vsel %vm1220, %v5344, %v5393
        %v5396 = vshrl.u32 %v4880, 16
        %v5398 = vrot.slane %v5396, 3
        %v5399 = vshll.u32 %v4880, 16
        %v5401 = vrot.slane %v5399, 4
        %v5402 = vor.u32 %v5398, %v5401
        %v5403 = vsel %vm1220, %v5353, %v5402
        %v5404 = vrot.slane %v4533, 3
        %v5405 = vrot.slane %v4529, 4
        %v5406 = vor.u32 %v5404, %v5405
        %v5407 = vsel %vm1220, %v5357, %v5406
        %v5409 = vshrl.u32 %v4540, 16
        %v5411 = vrot.slane %v5409, 3
        %v5412 = vshll.u32 %v4540, 16
        %v5414 = vrot.slane %v5412, 4
        %v5415 = vor.u32 %v5411, %v5414
        %v5416 = vsel %vm1220, %v5366, %v5415
        %v5418 = vshrl.u32 %v4689, 16
        %v5420 = vrot.slane %v5418, 3
        %v5421 = vshll.u32 %v4689, 16
        %v5423 = vrot.slane %v5421, 4
        %v5424 = vor.u32 %v5420, %v5423
        %v5425 = vsel %vm1220, %v5375, %v5424
        %v5427 = vshrl.u32 %v4735, 16
        %v5429 = vrot.slane %v5427, 3
        %v5430 = vshll.u32 %v4735, 16
        %v5432 = vrot.slane %v5430, 4
        %v5433 = vor.u32 %v5429, %v5432
        %v5434 = vsel %vm1220, %v5384, %v5433
        %v5436 = vshrl.u32 %v4794, 16
        %v5438 = vrot.slane %v5436, 3
        %v5439 = vshll.u32 %v4794, 16
        %v5441 = vrot.slane %v5439, 4
        %v5442 = vor.u32 %v5438, %v5441
        %v5443 = vsel %vm1220, %v5393, %v5442
        %v5445 = vshrl.u32 %v4882, 16
        %v5447 = vrot.slane %v5445, 3
        %v5448 = vshll.u32 %v4882, 16
        %v5450 = vrot.slane %v5448, 4
        %v5451 = vor.u32 %v5447, %v5450
        %v5452 = vsel %vm1220, %v5402, %v5451
        %v5453 = vrot.slane %v4541, 3
        %v5454 = vrot.slane %v4537, 4
        %v5455 = vor.u32 %v5453, %v5454
        %v5456 = vsel %vm1220, %v5406, %v5455
        %v5458 = vshrl.u32 %v4548, 16
        %v5460 = vrot.slane %v5458, 3
        %v5461 = vshll.u32 %v4548, 16
        %v5463 = vrot.slane %v5461, 4
        %v5464 = vor.u32 %v5460, %v5463
        %v5465 = vsel %vm1220, %v5415, %v5464
        %v5467 = vshrl.u32 %v4691, 16
        %v5469 = vrot.slane %v5467, 3
        %v5470 = vshll.u32 %v4691, 16
        %v5472 = vrot.slane %v5470, 4
        %v5473 = vor.u32 %v5469, %v5472
        %v5474 = vsel %vm1220, %v5424, %v5473
        %v5476 = vshrl.u32 %v4737, 16
        %v5478 = vrot.slane %v5476, 3
        %v5479 = vshll.u32 %v4737, 16
        %v5481 = vrot.slane %v5479, 4
        %v5482 = vor.u32 %v5478, %v5481
        %v5483 = vsel %vm1220, %v5433, %v5482
        %v5485 = vshrl.u32 %v4798, 16
        %v5487 = vrot.slane %v5485, 3
        %v5488 = vshll.u32 %v4798, 16
        %v5490 = vrot.slane %v5488, 4
        %v5491 = vor.u32 %v5487, %v5490
        %v5492 = vsel %vm1220, %v5442, %v5491
        %v5494 = vshrl.u32 %v4884, 16
        %v5496 = vrot.slane %v5494, 3
        %v5497 = vshll.u32 %v4884, 16
        %v5499 = vrot.slane %v5497, 4
        %v5500 = vor.u32 %v5496, %v5499
        %v5501 = vsel %vm1220, %v5451, %v5500
        %v5502 = vrot.slane %v4549, 3
        %v5503 = vrot.slane %v4545, 4
        %v5504 = vor.u32 %v5502, %v5503
        %v5505 = vsel %vm1220, %v5455, %v5504
        %v5507 = vshrl.u32 %v4556, 16
        %v5509 = vrot.slane %v5507, 3
        %v5510 = vshll.u32 %v4556, 16
        %v5512 = vrot.slane %v5510, 4
        %v5513 = vor.u32 %v5509, %v5512
        %v5514 = vsel %vm1220, %v5464, %v5513
        %v5516 = vshrl.u32 %v4693, 16
        %v5518 = vrot.slane %v5516, 3
        %v5519 = vshll.u32 %v4693, 16
        %v5521 = vrot.slane %v5519, 4
        %v5522 = vor.u32 %v5518, %v5521
        %v5523 = vsel %vm1220, %v5473, %v5522
        %v5525 = vshrl.u32 %v4739, 16
        %v5527 = vrot.slane %v5525, 3
        %v5528 = vshll.u32 %v4739, 16
        %v5530 = vrot.slane %v5528, 4
        %v5531 = vor.u32 %v5527, %v5530
        %v5532 = vsel %vm1220, %v5482, %v5531
        %v5534 = vshrl.u32 %v4802, 16
        %v5536 = vrot.slane %v5534, 3
        %v5537 = vshll.u32 %v4802, 16
        %v5539 = vrot.slane %v5537, 4
        %v5540 = vor.u32 %v5536, %v5539
        %v5541 = vsel %vm1220, %v5491, %v5540
        %v5543 = vshrl.u32 %v4886, 16
        %v5545 = vrot.slane %v5543, 3
        %v5546 = vshll.u32 %v4886, 16
        %v5548 = vrot.slane %v5546, 4
        %v5549 = vor.u32 %v5545, %v5548
        %v5550 = vsel %vm1220, %v5500, %v5549
        %v5551 = vrot.slane %v4557, 3
        %v5552 = vrot.slane %v4553, 4
        %v5553 = vor.u32 %v5551, %v5552
        %v5554 = vsel %vm1220, %v5504, %v5553
        %v5556 = vshrl.u32 %v4564, 16
        %v5558 = vrot.slane %v5556, 3
        %v5559 = vshll.u32 %v4564, 16
        %v5561 = vrot.slane %v5559, 4
        %v5562 = vor.u32 %v5558, %v5561
        %v5563 = vsel %vm1220, %v5513, %v5562
        %v5565 = vshrl.u32 %v4695, 16
        %v5567 = vrot.slane %v5565, 3
        %v5568 = vshll.u32 %v4695, 16
        %v5570 = vrot.slane %v5568, 4
        %v5571 = vor.u32 %v5567, %v5570
        %v5572 = vsel %vm1220, %v5522, %v5571
        %v5574 = vshrl.u32 %v4741, 16
        %v5576 = vrot.slane %v5574, 3
        %v5577 = vshll.u32 %v4741, 16
        %v5579 = vrot.slane %v5577, 4
        %v5580 = vor.u32 %v5576, %v5579
        %v5581 = vsel %vm1220, %v5531, %v5580
        %v5583 = vshrl.u32 %v4806, 16
        %v5585 = vrot.slane %v5583, 3
        %v5586 = vshll.u32 %v4806, 16
        %v5588 = vrot.slane %v5586, 4
        %v5589 = vor.u32 %v5585, %v5588
        %v5590 = vsel %vm1220, %v5540, %v5589
        %v5592 = vshrl.u32 %v4888, 16
        %v5594 = vrot.slane %v5592, 3
        %v5595 = vshll.u32 %v4888, 16
        %v5597 = vrot.slane %v5595, 4
        %v5598 = vor.u32 %v5594, %v5597
        %v5599 = vsel %vm1220, %v5549, %v5598
        %v5600 = vrot.slane %v4565, 3
        %v5601 = vrot.slane %v4561, 4
        %v5602 = vor.u32 %v5600, %v5601
        %v5603 = vsel %vm1220, %v5553, %v5602
        %v5605 = vshrl.u32 %v4572, 16
        %v5607 = vrot.slane %v5605, 3
        %v5608 = vshll.u32 %v4572, 16
        %v5610 = vrot.slane %v5608, 4
        %v5611 = vor.u32 %v5607, %v5610
        %v5612 = vsel %vm1220, %v5562, %v5611
        %v5614 = vshrl.u32 %v4697, 16
        %v5616 = vrot.slane %v5614, 3
        %v5617 = vshll.u32 %v4697, 16
        %v5619 = vrot.slane %v5617, 4
        %v5620 = vor.u32 %v5616, %v5619
        %v5621 = vsel %vm1220, %v5571, %v5620
        %v5623 = vshrl.u32 %v4743, 16
        %v5625 = vrot.slane %v5623, 3
        %v5626 = vshll.u32 %v4743, 16
        %v5628 = vrot.slane %v5626, 4
        %v5629 = vor.u32 %v5625, %v5628
        %v5630 = vsel %vm1220, %v5580, %v5629
        %v5632 = vshrl.u32 %v4810, 16
        %v5634 = vrot.slane %v5632, 3
        %v5635 = vshll.u32 %v4810, 16
        %v5637 = vrot.slane %v5635, 4
        %v5638 = vor.u32 %v5634, %v5637
        %v5639 = vsel %vm1220, %v5589, %v5638
        %v5641 = vshrl.u32 %v4890, 16
        %v5643 = vrot.slane %v5641, 3
        %v5644 = vshll.u32 %v4890, 16
        %v5646 = vrot.slane %v5644, 4
        %v5647 = vor.u32 %v5643, %v5646
        %v5648 = vsel %vm1220, %v5598, %v5647
        %v5649 = vrot.slane %v4573, 3
        %v5650 = vrot.slane %v4569, 4
        %v5651 = vor.u32 %v5649, %v5650
        %v5652 = vsel %vm1220, %v5602, %v5651
        %v5654 = vshrl.u32 %v4580, 16
        %v5656 = vrot.slane %v5654, 3
        %v5657 = vshll.u32 %v4580, 16
        %v5659 = vrot.slane %v5657, 4
        %v5660 = vor.u32 %v5656, %v5659
        %v5661 = vsel %vm1220, %v5611, %v5660
        %v5663 = vshrl.u32 %v4699, 16
        %v5665 = vrot.slane %v5663, 3
        %v5666 = vshll.u32 %v4699, 16
        %v5668 = vrot.slane %v5666, 4
        %v5669 = vor.u32 %v5665, %v5668
        %v5670 = vsel %vm1220, %v5620, %v5669
        %v5672 = vshrl.u32 %v4745, 16
        %v5674 = vrot.slane %v5672, 3
        %v5675 = vshll.u32 %v4745, 16
        %v5677 = vrot.slane %v5675, 4
        %v5678 = vor.u32 %v5674, %v5677
        %v5679 = vsel %vm1220, %v5629, %v5678
        %v5681 = vshrl.u32 %v4814, 16
        %v5683 = vrot.slane %v5681, 3
        %v5684 = vshll.u32 %v4814, 16
        %v5686 = vrot.slane %v5684, 4
        %v5687 = vor.u32 %v5683, %v5686
        %v5688 = vsel %vm1220, %v5638, %v5687
        %v5690 = vshrl.u32 %v4892, 16
        %v5692 = vrot.slane %v5690, 3
        %v5693 = vshll.u32 %v4892, 16
        %v5695 = vrot.slane %v5693, 4
        %v5696 = vor.u32 %v5692, %v5695
        %v5697 = vsel %vm1220, %v5647, %v5696
        %v5698 = vrot.slane %v4581, 3
        %v5699 = vrot.slane %v4577, 4
        %v5700 = vor.u32 %v5698, %v5699
        %v5701 = vsel %vm1220, %v5651, %v5700
        %v5703 = vshrl.u32 %v4588, 16
        %v5705 = vrot.slane %v5703, 3
        %v5706 = vshll.u32 %v4588, 16
        %v5708 = vrot.slane %v5706, 4
        %v5709 = vor.u32 %v5705, %v5708
        %v5710 = vsel %vm1220, %v5660, %v5709
        %v5712 = vshrl.u32 %v4701, 16
        %v5714 = vrot.slane %v5712, 3
        %v5715 = vshll.u32 %v4701, 16
        %v5717 = vrot.slane %v5715, 4
        %v5718 = vor.u32 %v5714, %v5717
        %v5719 = vsel %vm1220, %v5669, %v5718
        %v5721 = vshrl.u32 %v4747, 16
        %v5723 = vrot.slane %v5721, 3
        %v5724 = vshll.u32 %v4747, 16
        %v5726 = vrot.slane %v5724, 4
        %v5727 = vor.u32 %v5723, %v5726
        %v5728 = vsel %vm1220, %v5678, %v5727
        %v5730 = vshrl.u32 %v4818, 16
        %v5732 = vrot.slane %v5730, 3
        %v5733 = vshll.u32 %v4818, 16
        %v5735 = vrot.slane %v5733, 4
        %v5736 = vor.u32 %v5732, %v5735
        %v5737 = vsel %vm1220, %v5687, %v5736
        %v5739 = vshrl.u32 %v4894, 16
        %v5741 = vrot.slane %v5739, 3
        %v5742 = vshll.u32 %v4894, 16
        %v5744 = vrot.slane %v5742, 4
        %v5745 = vor.u32 %v5741, %v5744
        %v5746 = vsel %vm1220, %v5696, %v5745
        %v5747 = vrot.slane %v4589, 3
        %v5748 = vrot.slane %v4585, 4
        %v5749 = vor.u32 %v5747, %v5748
        %v5750 = vsel %vm1220, %v5700, %v5749
        %v5752 = vshrl.u32 %v4596, 16
        %v5754 = vrot.slane %v5752, 3
        %v5755 = vshll.u32 %v4596, 16
        %v5757 = vrot.slane %v5755, 4
        %v5758 = vor.u32 %v5754, %v5757
        %v5759 = vsel %vm1220, %v5709, %v5758
        %v5761 = vshrl.u32 %v4703, 16
        %v5763 = vrot.slane %v5761, 3
        %v5764 = vshll.u32 %v4703, 16
        %v5766 = vrot.slane %v5764, 4
        %v5767 = vor.u32 %v5763, %v5766
        %v5768 = vsel %vm1220, %v5718, %v5767
        %v5770 = vshrl.u32 %v4749, 16
        %v5772 = vrot.slane %v5770, 3
        %v5773 = vshll.u32 %v4749, 16
        %v5775 = vrot.slane %v5773, 4
        %v5776 = vor.u32 %v5772, %v5775
        %v5777 = vsel %vm1220, %v5727, %v5776
        %v5779 = vshrl.u32 %v4822, 16
        %v5781 = vrot.slane %v5779, 3
        %v5782 = vshll.u32 %v4822, 16
        %v5784 = vrot.slane %v5782, 4
        %v5785 = vor.u32 %v5781, %v5784
        %v5786 = vsel %vm1220, %v5736, %v5785
        %v5788 = vshrl.u32 %v4896, 16
        %v5790 = vrot.slane %v5788, 3
        %v5791 = vshll.u32 %v4896, 16
        %v5793 = vrot.slane %v5791, 4
        %v5794 = vor.u32 %v5790, %v5793
        %v5795 = vsel %vm1220, %v5745, %v5794
        %v5796 = vrot.slane %v4597, 3
        %v5797 = vrot.slane %v4593, 4
        %v5798 = vor.u32 %v5796, %v5797
        %v5799 = vsel %vm1220, %v5749, %v5798
        %v5801 = vshrl.u32 %v4604, 16
        %v5803 = vrot.slane %v5801, 3
        %v5804 = vshll.u32 %v4604, 16
        %v5806 = vrot.slane %v5804, 4
        %v5807 = vor.u32 %v5803, %v5806
        %v5808 = vsel %vm1220, %v5758, %v5807
        %v5810 = vshrl.u32 %v4705, 16
        %v5812 = vrot.slane %v5810, 3
        %v5813 = vshll.u32 %v4705, 16
        %v5815 = vrot.slane %v5813, 4
        %v5816 = vor.u32 %v5812, %v5815
        %v5817 = vsel %vm1220, %v5767, %v5816
        %v5819 = vshrl.u32 %v4751, 16
        %v5821 = vrot.slane %v5819, 3
        %v5822 = vshll.u32 %v4751, 16
        %v5824 = vrot.slane %v5822, 4
        %v5825 = vor.u32 %v5821, %v5824
        %v5826 = vsel %vm1220, %v5776, %v5825
        %v5828 = vshrl.u32 %v4826, 16
        %v5830 = vrot.slane %v5828, 3
        %v5831 = vshll.u32 %v4826, 16
        %v5833 = vrot.slane %v5831, 4
        %v5834 = vor.u32 %v5830, %v5833
        %v5835 = vsel %vm1220, %v5785, %v5834
        %v5837 = vshrl.u32 %v4898, 16
        %v5839 = vrot.slane %v5837, 3
        %v5840 = vshll.u32 %v4898, 16
        %v5842 = vrot.slane %v5840, 4
        %v5843 = vor.u32 %v5839, %v5842
        %v5844 = vsel %vm1220, %v5794, %v5843
        %v5845 = vrot.slane %v4605, 3
        %v5846 = vrot.slane %v4601, 4
        %v5847 = vor.u32 %v5845, %v5846
        %v5848 = vsel %vm1220, %v5798, %v5847
        %v5850 = vshrl.u32 %v4612, 16
        %v5852 = vrot.slane %v5850, 3
        %v5853 = vshll.u32 %v4612, 16
        %v5855 = vrot.slane %v5853, 4
        %v5856 = vor.u32 %v5852, %v5855
        %v5857 = vsel %vm1220, %v5807, %v5856
        %v5859 = vshrl.u32 %v4707, 16
        %v5861 = vrot.slane %v5859, 3
        %v5862 = vshll.u32 %v4707, 16
        %v5864 = vrot.slane %v5862, 4
        %v5865 = vor.u32 %v5861, %v5864
        %v5866 = vsel %vm1220, %v5816, %v5865
        %v5868 = vshrl.u32 %v4753, 16
        %v5870 = vrot.slane %v5868, 3
        %v5871 = vshll.u32 %v4753, 16
        %v5873 = vrot.slane %v5871, 4
        %v5874 = vor.u32 %v5870, %v5873
        %v5875 = vsel %vm1220, %v5825, %v5874
        %v5877 = vshrl.u32 %v4830, 16
        %v5879 = vrot.slane %v5877, 3
        %v5880 = vshll.u32 %v4830, 16
        %v5882 = vrot.slane %v5880, 4
        %v5883 = vor.u32 %v5879, %v5882
        %v5884 = vsel %vm1220, %v5834, %v5883
        %v5886 = vshrl.u32 %v4900, 16
        %v5888 = vrot.slane %v5886, 3
        %v5889 = vshll.u32 %v4900, 16
        %v5891 = vrot.slane %v5889, 4
        %v5892 = vor.u32 %v5888, %v5891
        %v5893 = vsel %vm1220, %v5843, %v5892
        %v5894 = vrot.slane %v4613, 3
        %v5895 = vrot.slane %v4609, 4
        %v5896 = vor.u32 %v5894, %v5895
        %v5897 = vsel %vm1220, %v5847, %v5896
        %v5899 = vshrl.u32 %v4620, 16
        %v5901 = vrot.slane %v5899, 3
        %v5902 = vshll.u32 %v4620, 16
        %v5904 = vrot.slane %v5902, 4
        %v5905 = vor.u32 %v5901, %v5904
        %v5906 = vsel %vm1220, %v5856, %v5905
        %v5908 = vshrl.u32 %v4709, 16
        %v5910 = vrot.slane %v5908, 3
        %v5911 = vshll.u32 %v4709, 16
        %v5913 = vrot.slane %v5911, 4
        %v5914 = vor.u32 %v5910, %v5913
        %v5915 = vsel %vm1220, %v5865, %v5914
        %v5917 = vshrl.u32 %v4755, 16
        %v5919 = vrot.slane %v5917, 3
        %v5920 = vshll.u32 %v4755, 16
        %v5922 = vrot.slane %v5920, 4
        %v5923 = vor.u32 %v5919, %v5922
        %v5924 = vsel %vm1220, %v5874, %v5923
        %v5926 = vshrl.u32 %v4834, 16
        %v5928 = vrot.slane %v5926, 3
        %v5929 = vshll.u32 %v4834, 16
        %v5931 = vrot.slane %v5929, 4
        %v5932 = vor.u32 %v5928, %v5931
        %v5933 = vsel %vm1220, %v5883, %v5932
        %v5935 = vshrl.u32 %v4902, 16
        %v5937 = vrot.slane %v5935, 3
        %v5938 = vshll.u32 %v4902, 16
        %v5940 = vrot.slane %v5938, 4
        %v5941 = vor.u32 %v5937, %v5940
        %v5942 = vsel %vm1220, %v5892, %v5941
        %v5943 = vrot.slane %v4621, 3
        %v5944 = vrot.slane %v4617, 4
        %v5945 = vor.u32 %v5943, %v5944
        %v5946 = vsel %vm1220, %v5896, %v5945
        %v5948 = vshrl.u32 %v4628, 16
        %v5950 = vrot.slane %v5948, 3
        %v5951 = vshll.u32 %v4628, 16
        %v5953 = vrot.slane %v5951, 4
        %v5954 = vor.u32 %v5950, %v5953
        %v5955 = vsel %vm1220, %v5905, %v5954
        %v5957 = vshrl.u32 %v4711, 16
        %v5959 = vrot.slane %v5957, 3
        %v5960 = vshll.u32 %v4711, 16
        %v5962 = vrot.slane %v5960, 4
        %v5963 = vor.u32 %v5959, %v5962
        %v5964 = vsel %vm1220, %v5914, %v5963
        %v5966 = vshrl.u32 %v4757, 16
        %v5968 = vrot.slane %v5966, 3
        %v5969 = vshll.u32 %v4757, 16
        %v5971 = vrot.slane %v5969, 4
        %v5972 = vor.u32 %v5968, %v5971
        %v5973 = vsel %vm1220, %v5923, %v5972
        %v5975 = vshrl.u32 %v4838, 16
        %v5977 = vrot.slane %v5975, 3
        %v5978 = vshll.u32 %v4838, 16
        %v5980 = vrot.slane %v5978, 4
        %v5981 = vor.u32 %v5977, %v5980
        %v5982 = vsel %vm1220, %v5932, %v5981
        %v5984 = vshrl.u32 %v4904, 16
        %v5986 = vrot.slane %v5984, 3
        %v5987 = vshll.u32 %v4904, 16
        %v5989 = vrot.slane %v5987, 4
        %v5990 = vor.u32 %v5986, %v5989
        %v5991 = vsel %vm1220, %v5941, %v5990
        %v5992 = vrot.slane %v4629, 3
        %v5993 = vrot.slane %v4625, 4
        %v5994 = vor.u32 %v5992, %v5993
        %v5995 = vsel %vm1220, %v5945, %v5994
        %v5997 = vshrl.u32 %v4636, 16
        %v5999 = vrot.slane %v5997, 3
        %v6000 = vshll.u32 %v4636, 16
        %v6002 = vrot.slane %v6000, 4
        %v6003 = vor.u32 %v5999, %v6002
        %v6004 = vsel %vm1220, %v5954, %v6003
        %v6006 = vshrl.u32 %v4713, 16
        %v6008 = vrot.slane %v6006, 3
        %v6009 = vshll.u32 %v4713, 16
        %v6011 = vrot.slane %v6009, 4
        %v6012 = vor.u32 %v6008, %v6011
        %v6013 = vsel %vm1220, %v5963, %v6012
        %v6015 = vshrl.u32 %v4759, 16
        %v6017 = vrot.slane %v6015, 3
        %v6018 = vshll.u32 %v4759, 16
        %v6020 = vrot.slane %v6018, 4
        %v6021 = vor.u32 %v6017, %v6020
        %v6022 = vsel %vm1220, %v5972, %v6021
        %v6024 = vshrl.u32 %v4842, 16
        %v6026 = vrot.slane %v6024, 3
        %v6027 = vshll.u32 %v4842, 16
        %v6029 = vrot.slane %v6027, 4
        %v6030 = vor.u32 %v6026, %v6029
        %v6031 = vsel %vm1220, %v5981, %v6030
        %v6033 = vshrl.u32 %v4906, 16
        %v6035 = vrot.slane %v6033, 3
        %v6036 = vshll.u32 %v4906, 16
        %v6038 = vrot.slane %v6036, 4
        %v6039 = vor.u32 %v6035, %v6038
        %v6040 = vsel %vm1220, %v5990, %v6039
        %v6041 = vrot.slane %v4637, 3
        %v6042 = vrot.slane %v4633, 4
        %v6043 = vor.u32 %v6041, %v6042
        %v6044 = vsel %vm1220, %v5994, %v6043
        %v6046 = vshrl.u32 %v4644, 16
        %v6048 = vrot.slane %v6046, 3
        %v6049 = vshll.u32 %v4644, 16
        %v6051 = vrot.slane %v6049, 4
        %v6052 = vor.u32 %v6048, %v6051
        %v6053 = vsel %vm1220, %v6003, %v6052
        %v6055 = vshrl.u32 %v4715, 16
        %v6057 = vrot.slane %v6055, 3
        %v6058 = vshll.u32 %v4715, 16
        %v6060 = vrot.slane %v6058, 4
        %v6061 = vor.u32 %v6057, %v6060
        %v6062 = vsel %vm1220, %v6012, %v6061
        %v6064 = vshrl.u32 %v4761, 16
        %v6066 = vrot.slane %v6064, 3
        %v6067 = vshll.u32 %v4761, 16
        %v6069 = vrot.slane %v6067, 4
        %v6070 = vor.u32 %v6066, %v6069
        %v6071 = vsel %vm1220, %v6021, %v6070
        %v6073 = vshrl.u32 %v4846, 16
        %v6075 = vrot.slane %v6073, 3
        %v6076 = vshll.u32 %v4846, 16
        %v6078 = vrot.slane %v6076, 4
        %v6079 = vor.u32 %v6075, %v6078
        %v6080 = vsel %vm1220, %v6030, %v6079
        %v6082 = vshrl.u32 %v4908, 16
        %v6084 = vrot.slane %v6082, 3
        %v6085 = vshll.u32 %v4908, 16
        %v6087 = vrot.slane %v6085, 4
        %v6088 = vor.u32 %v6084, %v6087
        %v6089 = vsel %vm1220, %v6039, %v6088
        %v6090 = vrot.slane %v4645, 3
        %v6091 = vrot.slane %v4641, 4
        %v6092 = vor.u32 %v6090, %v6091
        %v6093 = vsel %vm1220, %v6043, %v6092
        %v6095 = vshrl.u32 %v4652, 16
        %v6097 = vrot.slane %v6095, 3
        %v6098 = vshll.u32 %v4652, 16
        %v6100 = vrot.slane %v6098, 4
        %v6101 = vor.u32 %v6097, %v6100
        %v6102 = vsel %vm1220, %v6052, %v6101
        %v6104 = vshrl.u32 %v4717, 16
        %v6106 = vrot.slane %v6104, 3
        %v6107 = vshll.u32 %v4717, 16
        %v6109 = vrot.slane %v6107, 4
        %v6110 = vor.u32 %v6106, %v6109
        %v6111 = vsel %vm1220, %v6061, %v6110
        %v6113 = vshrl.u32 %v4763, 16
        %v6115 = vrot.slane %v6113, 3
        %v6116 = vshll.u32 %v4763, 16
        %v6118 = vrot.slane %v6116, 4
        %v6119 = vor.u32 %v6115, %v6118
        %v6120 = vsel %vm1220, %v6070, %v6119
        %v6122 = vshrl.u32 %v4850, 16
        %v6124 = vrot.slane %v6122, 3
        %v6125 = vshll.u32 %v4850, 16
        %v6127 = vrot.slane %v6125, 4
        %v6128 = vor.u32 %v6124, %v6127
        %v6129 = vsel %vm1220, %v6079, %v6128
        %v6131 = vshrl.u32 %v4910, 16
        %v6133 = vrot.slane %v6131, 3
        %v6134 = vshll.u32 %v4910, 16
        %v6136 = vrot.slane %v6134, 4
        %v6137 = vor.u32 %v6133, %v6136
        %v6138 = vsel %vm1220, %v6088, %v6137
        %v6139 = vrot.slane %v4653, 3
        %v6140 = vrot.slane %v4649, 4
        %v6141 = vor.u32 %v6139, %v6140
        %v6142 = vsel %vm1220, %v6092, %v6141
        %v6144 = vshrl.u32 %v4660, 16
        %v6146 = vrot.slane %v6144, 3
        %v6147 = vshll.u32 %v4660, 16
        %v6149 = vrot.slane %v6147, 4
        %v6150 = vor.u32 %v6146, %v6149
        %v6151 = vsel %vm1220, %v6101, %v6150
        %v6153 = vshrl.u32 %v4719, 16
        %v6155 = vrot.slane %v6153, 3
        %v6156 = vshll.u32 %v4719, 16
        %v6158 = vrot.slane %v6156, 4
        %v6159 = vor.u32 %v6155, %v6158
        %v6160 = vsel %vm1220, %v6110, %v6159
        %v6162 = vshrl.u32 %v4765, 16
        %v6164 = vrot.slane %v6162, 3
        %v6165 = vshll.u32 %v4765, 16
        %v6167 = vrot.slane %v6165, 4
        %v6168 = vor.u32 %v6164, %v6167
        %v6169 = vsel %vm1220, %v6119, %v6168
        %v6171 = vshrl.u32 %v4854, 16
        %v6173 = vrot.slane %v6171, 3
        %v6174 = vshll.u32 %v4854, 16
        %v6176 = vrot.slane %v6174, 4
        %v6177 = vor.u32 %v6173, %v6176
        %v6178 = vsel %vm1220, %v6128, %v6177
        %v6180 = vshrl.u32 %v4912, 16
        %v6182 = vrot.slane %v6180, 3
        %v6183 = vshll.u32 %v4912, 16
        %v6185 = vrot.slane %v6183, 4
        %v6186 = vor.u32 %v6182, %v6185
        %v6187 = vsel %vm1220, %v6137, %v6186
        %v6188 = vrot.slane %v4661, 3
        %v6189 = vrot.slane %v4657, 4
        %v6190 = vor.u32 %v6188, %v6189
        %v6191 = vsel %vm1220, %v6141, %v6190
        %v6193 = vshrl.u32 %v4668, 16
        %v6195 = vrot.slane %v6193, 3
        %v6196 = vshll.u32 %v4668, 16
        %v6198 = vrot.slane %v6196, 4
        %v6199 = vor.u32 %v6195, %v6198
        %v6200 = vsel %vm1220, %v6150, %v6199
        %v6202 = vshrl.u32 %v4721, 16
        %v6204 = vrot.slane %v6202, 3
        %v6205 = vshll.u32 %v4721, 16
        %v6207 = vrot.slane %v6205, 4
        %v6208 = vor.u32 %v6204, %v6207
        %v6209 = vsel %vm1220, %v6159, %v6208
        %v6211 = vshrl.u32 %v4767, 16
        %v6213 = vrot.slane %v6211, 3
        %v6214 = vshll.u32 %v4767, 16
        %v6216 = vrot.slane %v6214, 4
        %v6217 = vor.u32 %v6213, %v6216
        %v6218 = vsel %vm1220, %v6168, %v6217
        %v6220 = vshrl.u32 %v4858, 16
        %v6222 = vrot.slane %v6220, 3
        %v6223 = vshll.u32 %v4858, 16
        %v6225 = vrot.slane %v6223, 4
        %v6226 = vor.u32 %v6222, %v6225
        %v6227 = vsel %vm1220, %v6177, %v6226
        %v6229 = vshrl.u32 %v4914, 16
        %v6231 = vrot.slane %v6229, 3
        %v6232 = vshll.u32 %v4914, 16
        %v6234 = vrot.slane %v6232, 4
        %v6235 = vor.u32 %v6231, %v6234
        %v6236 = vsel %vm1220, %v6186, %v6235
        %v6237 = vrot.slane %v4669, 3
        %v6238 = vrot.slane %v4665, 4
        %v6239 = vor.u32 %v6237, %v6238
        %v6240 = vsel %vm1220, %v6190, %v6239
        %v6242 = vshrl.u32 %v4922, 16
        %v6244 = vrot.slane %v6242, 3
        %v6245 = vshll.u32 %v4922, 16
        %v6247 = vrot.slane %v6245, 4
        %v6248 = vor.u32 %v6244, %v6247
        %v6249 = vsel %vm1220, %v6199, %v6248
        %v6251 = vshrl.u32 %v4926, 16
        %v6253 = vrot.slane %v6251, 3
        %v6254 = vshll.u32 %v4926, 16
        %v6256 = vrot.slane %v6254, 4
        %v6257 = vor.u32 %v6253, %v6256
        %v6258 = vsel %vm1220, %v6208, %v6257
        %v6260 = vshrl.u32 %v4769, 16
        %v6262 = vrot.slane %v6260, 3
        %v6263 = vshll.u32 %v4769, 16
        %v6265 = vrot.slane %v6263, 4
        %v6266 = vor.u32 %v6262, %v6265
        %v6267 = vsel %vm1220, %v6217, %v6266
        %v6269 = vshrl.u32 %v4862, 16
        %v6271 = vrot.slane %v6269, 3
        %v6272 = vshll.u32 %v4862, 16
        %v6274 = vrot.slane %v6272, 4
        %v6275 = vor.u32 %v6271, %v6274
        %v6276 = vsel %vm1220, %v6226, %v6275
        %v6278 = vshrl.u32 %v4916, 16
        %v6280 = vrot.slane %v6278, 3
        %v6281 = vshll.u32 %v4916, 16
        %v6283 = vrot.slane %v6281, 4
        %v6284 = vor.u32 %v6280, %v6283
        %v6285 = vsel %vm1220, %v6235, %v6284
        %v6286 = vrot.slane %v4864, 3
        %v6287 = vrot.slane %v4867, 4
        %v6288 = vor.u32 %v6286, %v6287
        %v6289 = vsel %vm1220, %v6239, %v6288
        %v6291 = vshrl.u32 %v4924, 16
        %v6293 = vrot.slane %v6291, 3
        %v6294 = vshll.u32 %v4924, 16
        %v6296 = vrot.slane %v6294, 4
        %v6297 = vor.u32 %v6293, %v6296
        %v6298 = vsel %vm1220, %v6248, %v6297
        %v6300 = vshrl.u32 %v4927, 16
        %v6302 = vrot.slane %v6300, 3
        %v6303 = vshll.u32 %v4927, 16
        %v6305 = vrot.slane %v6303, 4
        %v6306 = vor.u32 %v6302, %v6305
        %v6307 = vsel %vm1220, %v6257, %v6306
        %v6309 = vshrl.u32 %v4771, 16
        %v6311 = vrot.slane %v6309, 3
        %v6312 = vshll.u32 %v4771, 16
        %v6314 = vrot.slane %v6312, 4
        %v6315 = vor.u32 %v6311, %v6314
        %v6316 = vsel %vm1220, %v6266, %v6315
        %v6318 = vshrl.u32 %v4871, 16
        %v6320 = vrot.slane %v6318, 3
        %v6321 = vshll.u32 %v4871, 16
        %v6323 = vrot.slane %v6321, 4
        %v6324 = vor.u32 %v6320, %v6323
        %v6325 = vsel %vm1220, %v6275, %v6324
        %v6327 = vshrl.u32 %v4918, 16
        %v6329 = vrot.slane %v6327, 3
        %v6330 = vshll.u32 %v4918, 16
        %v6332 = vrot.slane %v6330, 4
        %v6333 = vor.u32 %v6329, %v6332
        %v6334 = vsel %vm1220, %v6284, %v6333
        %v6335 = vsel %vm1220, %v6288, %v5126
        %v6336 = vsel %vm1220, %v6297, %v5135
        %v6337 = vsel %vm1220, %v6306, %v5152
        %v6339 = vshrl.u32 %v4671, 16
        %v6341 = vrot.slane %v6339, 3
        %v6342 = vshll.u32 %v4671, 16
        %v6344 = vrot.slane %v6342, 4
        %v6345 = vor.u32 %v6341, %v6344
        %v6346 = vsel %vm1220, %v6199, %v6345
        %v6348 = vshrl.u32 %v4720, 16
        %v6350 = vrot.slane %v6348, 3
        %v6351 = vshll.u32 %v4720, 16
        %v6353 = vrot.slane %v6351, 4
        %v6354 = vor.u32 %v6350, %v6353
        %v6355 = vsel %vm1220, %v6208, %v6354
        %v6357 = vshrl.u32 %v4770, 16
        %v6359 = vrot.slane %v6357, 3
        %v6360 = vshll.u32 %v4770, 16
        %v6362 = vrot.slane %v6360, 4
        %v6363 = vor.u32 %v6359, %v6362
        %v6364 = vsel %vm1220, %v6315, %v6363
        %v6366 = vshrl.u32 %v4870, 16
        %v6368 = vrot.slane %v6366, 3
        %v6369 = vshll.u32 %v4870, 16
        %v6371 = vrot.slane %v6369, 4
        %v6372 = vor.u32 %v6368, %v6371
        %v6373 = vsel %vm1220, %v6324, %v6372
        %v6375 = vshrl.u32 %v4920, 16
        %v6377 = vrot.slane %v6375, 3
        %v6378 = vshll.u32 %v4920, 16
        %v6380 = vrot.slane %v6378, 4
        %v6381 = vor.u32 %v6377, %v6380
        %v6382 = vsel %vm1220, %v6333, %v6381
        %v6384 = vshrl.u32 %v4486, 16
        %v6386 = vrot.slane %v6384, 3
        %v6387 = vshll.u32 %v4486, 16
        %v6389 = vrot.slane %v6387, 4
        %v6390 = vor.u32 %v6386, %v6389
        %v6391 = vsel %vm1220, %v5135, %v6390
        %v6393 = vshrl.u32 %v4674, 16
        %v6395 = vrot.slane %v6393, 3
        %v6396 = vshll.u32 %v4674, 16
        %v6398 = vrot.slane %v6396, 4
        %v6399 = vor.u32 %v6395, %v6398
        %v6400 = vsel %vm1220, %v5152, %v6399
        %v6699 = vunpack.c.l.b16 %v4928
        %v6700 = vunpack.c.l.b16 %v4929
        %v6701 = vunpack.c.l.b16 %v4930
        %v6702 = vunpack.c.l.b16 %v4931
        %v6703 = vunpack.c.l.b16 %v4932
        %v6704 = vunpack.c.l.b16 %v4933
        %v6705 = vunpack.c.l.b16 %v4934
        %v6706 = vunpack.c.l.b16 %v4935
        %v6707 = vunpack.c.l.b16 %v4936
        %v6708 = vunpack.c.l.b16 %v4937
        %v6709 = vunpack.c.l.b16 %v4938
        %v6710 = vunpack.c.l.b16 %v4939
        %v6711 = vunpack.c.l.b16 %v4940
        %v6712 = vunpack.c.l.b16 %v4941
        %v6713 = vunpack.c.l.b16 %v4942
        %v6714 = vunpack.c.l.b16 %v4943
        %v6715 = vunpack.c.l.b16 %v4944
        %v6716 = vunpack.c.l.b16 %v4945
        %v6717 = vunpack.c.l.b16 %v4946
        %v6718 = vunpack.c.l.b16 %v4947
        %v6719 = vunpack.c.l.b16 %v4948
        %v6720 = vunpack.c.l.b16 %v4949
        %v6721 = vunpack.c.l.b16 %v4950
        %v6722 = vunpack.c.l.b16 %v4951
        %v6723 = vunpack.c.l.b16 %v4952
        %v6724 = vunpack.c.l.b16 %v4953
        %v6725 = vunpack.c.l.b16 %v4954
        %v6726 = vunpack.c.l.b16 %v4955
        %v6727 = vunpack.c.l.b16 %v4956
        %v6728 = vunpack.c.l.b16 %v4957
        %v6729 = vunpack.c.l.b16 %v4958
        %v6730 = vunpack.c.l.b16 %v4959
        %v6731 = vunpack.c.l.b16 %v4960
        %v6732 = vunpack.c.l.b16 %v4961
        %v6733 = vunpack.c.l.b16 %v4962
        %v6734 = vunpack.c.l.b16 %v4963
        %v6735 = vunpack.c.l.b16 %v4964
        %v6736 = vunpack.c.l.b16 %v4965
        %v6737 = vunpack.c.l.b16 %v4966
        %v6738 = vunpack.c.l.b16 %v4967
        %v6739 = vunpack.c.l.b16 %v4968
        %v6740 = vunpack.c.l.b16 %v4969
        %v6741 = vunpack.c.l.b16 %v4970
        %v6742 = vunpack.c.l.b16 %v4971
        %v6743 = vunpack.c.l.b16 %v4972
        %v6744 = vunpack.c.l.b16 %v4973
        %v6745 = vunpack.c.l.b16 %v4974
        %v6746 = vunpack.c.l.b16 %v4975
        %v6747 = vunpack.c.l.b16 %v4976
        %v6748 = vunpack.c.l.b16 %v4977
        %v6749 = vunpack.c.l.b16 %v4978
        %v6750 = vunpack.c.l.b16 %v4979
        %v6751 = vunpack.c.l.b16 %v4980
        %v6752 = vunpack.c.l.b16 %v4981
        %v6753 = vunpack.c.l.b16 %v4982
        %v6754 = vunpack.c.l.b16 %v4983
        %v6755 = vunpack.c.l.b16 %v4984
        %v6756 = vunpack.c.l.b16 %v4985
        %v6757 = vunpack.c.l.b16 %v4986
        %v6758 = vunpack.c.l.b16 %v4987
        %v6759 = vunpack.c.l.b16 %v4988
        %v6760 = vunpack.c.l.b16 %v4989
        %v6761 = vunpack.c.l.b16 %v4990
        %v6762 = vunpack.c.l.b16 %v4991
        %v6763 = vunpack.c.l.b16 %v4992
        %v6764 = vunpack.c.l.b16 %v4993
        %v6765 = vunpack.c.l.b16 %v4994
        %v6766 = vunpack.c.l.b16 %v4995
        %v6767 = vunpack.c.l.b16 %v4996
        %v6768 = vunpack.c.l.b16 %v4997
        %v6769 = vunpack.c.l.b16 %v4998
        %v6770 = vunpack.c.l.b16 %v4999
        %v6771 = vunpack.c.l.b16 %v5000
        %v6772 = vunpack.c.l.b16 %v5001
        %v6773 = vunpack.c.l.b16 %v5002
        %v6774 = vunpack.c.l.b16 %v5003
        %v6775 = vunpack.c.l.b16 %v5004
        %v6776 = vunpack.c.l.b16 %v5005
        %v6777 = vunpack.c.l.b16 %v5006
        %v6778 = vunpack.c.l.b16 %v5007
        %v6779 = vunpack.c.l.b16 %v5008
        %v6780 = vunpack.c.l.b16 %v5009
        %v6781 = vunpack.c.l.b16 %v5010
        %v6782 = vunpack.c.l.b16 %v5011
        %v6783 = vunpack.c.l.b16 %v5012
        %v6784 = vunpack.c.l.b16 %v5013
        %v6785 = vunpack.c.l.b16 %v5014
        %v6786 = vunpack.c.l.b16 %v5015
        %v6787 = vunpack.c.l.b16 %v5016
        %v6788 = vunpack.c.l.b16 %v5017
        %v6789 = vunpack.c.l.b16 %v5018
        %v6790 = vunpack.c.l.b16 %v5019
        %v6791 = vunpack.c.l.b16 %v5020
        %v6792 = vunpack.c.l.b16 %v5021
        %v6793 = vunpack.c.l.b16 %v5022
        %v6794 = vunpack.c.l.b16 %v5023
        %v6795 = vunpack.c.l.b16 %v5024
        %v6796 = vunpack.c.l.b16 %v5025
        %v6797 = vunpack.c.l.b16 %v5026
        %v6798 = vunpack.c.l.b16 %v5027
        %v6799 = vunpack.c.l.b16 %v5028
        %v6800 = vunpack.c.l.b16 %v5029
        %v6801 = vunpack.c.l.b16 %v5030
        %v6802 = vunpack.c.l.b16 %v5031
        %v6803 = vunpack.c.l.b16 %v5032
        %v6804 = vunpack.c.l.b16 %v5033
        %v6805 = vunpack.c.l.b16 %v5034
        %v6806 = vunpack.c.l.b16 %v5035
        %v6807 = vunpack.c.l.b16 %v5036
        %v6808 = vunpack.c.l.b16 %v5037
        %v6809 = vunpack.c.l.b16 %v5038
        %v6810 = vunpack.c.l.b16 %v5039
        %v6811 = vunpack.c.l.b16 %v5040
        %v6812 = vunpack.c.l.b16 %v5041
        %v6813 = vunpack.c.l.b16 %v5042
        %v6814 = vunpack.c.l.b16 %v5043
        %v6815 = vunpack.c.l.b16 %v5044
        %v6816 = vunpack.c.l.b16 %v5045
        %v6817 = vunpack.c.l.b16 %v5046
        %v6818 = vunpack.c.l.b16 %v5047
        %v6819 = vunpack.c.l.b16 %v5048
        %v6820 = vunpack.c.l.b16 %v5049
        %v6821 = vunpack.c.l.b16 %v5050
        %v6822 = vunpack.c.l.b16 %v5051
        %v6823 = vunpack.c.l.b16 %v5052
        %v6824 = vunpack.c.l.b16 %v5053
        %v6825 = vunpack.c.l.b16 %v5054
        %v6826 = vunpack.c.l.b16 %v5055
        %v6827 = vunpack.c.l.b16 %v5056
        %v6828 = vunpack.c.l.b16 %v5057
        %v6829 = vunpack.c.l.b16 %v5058
        %v6830 = vunpack.c.l.b16 %v5059
        %v6831 = vunpack.c.l.b16 %v5060
        %v6832 = vunpack.c.l.b16 %v5061
        %v6833 = vunpack.c.l.b16 %v5062
        %v6834 = vunpack.c.l.b16 %v5063
        %v6835 = vunpack.c.l.b16 %v5064
        %v6836 = vunpack.c.l.b16 %v5065
        %v6837 = vunpack.c.l.b16 %v5066
        %v6838 = vunpack.c.l.b16 %v5067
        %v6839 = vunpack.c.l.b16 %v5068
        %v6840 = vunpack.c.l.b16 %v5069
        %v6841 = vunpack.c.l.b16 %v5070
        %v6842 = vunpack.c.l.b16 %v5071
        %v6843 = vpack.c.b16 %v6700, %v6699
        %v6844 = vpack.c.b16 %v6702, %v6701
        %v6845 = vpack.c.b16 %v6704, %v6703
        %v6846 = vpack.c.b16 %v6706, %v6705
        %v6847 = vpack.c.b16 %v6708, %v6707
        %v6848 = vpack.c.b16 %v6710, %v6709
        %v6849 = vpack.c.b16 %v6712, %v6711
        %v6850 = vpack.c.b16 %v6714, %v6713
        %v6851 = vpack.c.b16 %v6716, %v6715
        %v6852 = vpack.c.b16 %v6718, %v6717
        %v6853 = vpack.c.b16 %v6720, %v6719
        %v6854 = vpack.c.b16 %v6722, %v6721
        %v6855 = vpack.c.b16 %v6724, %v6723
        %v6856 = vpack.c.b16 %v6726, %v6725
        %v6857 = vpack.c.b16 %v6728, %v6727
        %v6858 = vpack.c.b16 %v6730, %v6729
        %v6859 = vpack.c.b16 %v6732, %v6731
        %v6860 = vpack.c.b16 %v6734, %v6733
        %v6861 = vpack.c.b16 %v6736, %v6735
        %v6862 = vpack.c.b16 %v6738, %v6737
        %v6863 = vpack.c.b16 %v6740, %v6739
        %v6864 = vpack.c.b16 %v6742, %v6741
        %v6865 = vpack.c.b16 %v6744, %v6743
        %v6866 = vpack.c.b16 %v6746, %v6745
        %v6867 = vpack.c.b16 %v6748, %v6747
        %v6868 = vpack.c.b16 %v6750, %v6749
        %v6869 = vpack.c.b16 %v6752, %v6751
        %v6870 = vpack.c.b16 %v6754, %v6753
        %v6871 = vpack.c.b16 %v6756, %v6755
        %v6872 = vpack.c.b16 %v6758, %v6757
        %v6873 = vpack.c.b16 %v6760, %v6759
        %v6874 = vpack.c.b16 %v6762, %v6761
        %v6875 = vpack.c.b16 %v6764, %v6763
        %v6876 = vpack.c.b16 %v6766, %v6765
        %v6877 = vpack.c.b16 %v6768, %v6767
        %v6878 = vpack.c.b16 %v6770, %v6769
        %v6879 = vpack.c.b16 %v6772, %v6771
        %v6880 = vpack.c.b16 %v6774, %v6773
        %v6881 = vpack.c.b16 %v6776, %v6775
        %v6882 = vpack.c.b16 %v6778, %v6777
        %v6883 = vpack.c.b16 %v6780, %v6779
        %v6884 = vpack.c.b16 %v6782, %v6781
        %v6885 = vpack.c.b16 %v6784, %v6783
        %v6886 = vpack.c.b16 %v6786, %v6785
        %v6887 = vpack.c.b16 %v6788, %v6787
        %v6888 = vpack.c.b16 %v6790, %v6789
        %v6889 = vpack.c.b16 %v6792, %v6791
        %v6890 = vpack.c.b16 %v6794, %v6793
        %v6891 = vpack.c.b16 %v6796, %v6795
        %v6892 = vpack.c.b16 %v6798, %v6797
        %v6893 = vpack.c.b16 %v6800, %v6799
        %v6894 = vpack.c.b16 %v6802, %v6801
        %v6895 = vpack.c.b16 %v6804, %v6803
        %v6896 = vpack.c.b16 %v6806, %v6805
        %v6897 = vpack.c.b16 %v6808, %v6807
        %v6898 = vpack.c.b16 %v6810, %v6809
        %v6899 = vpack.c.b16 %v6812, %v6811
        %v6900 = vpack.c.b16 %v6814, %v6813
        %v6901 = vpack.c.b16 %v6816, %v6815
        %v6902 = vpack.c.b16 %v6818, %v6817
        %v6903 = vpack.c.b16 %v6820, %v6819
        %v6904 = vpack.c.b16 %v6822, %v6821
        %v6905 = vpack.c.b16 %v6824, %v6823
        %v6906 = vpack.c.b16 %v6826, %v6825
        %v6907 = vpack.c.b16 %v6828, %v6827
        %v6908 = vpack.c.b16 %v6830, %v6829
        %v6909 = vpack.c.b16 %v6832, %v6831
        %v6910 = vpack.c.b16 %v6834, %v6833
        %v6911 = vpack.c.b16 %v6836, %v6835
        %v6912 = vpack.c.b16 %v6838, %v6837
        %v6913 = vpack.c.b16 %v6840, %v6839
        %v6914 = vpack.c.b16 %v6842, %v6841
        %6987 = vmatpush.bf16.msra.mxu0 %v6850
        %6988 = vmatpush.bf16.msra.mxu0 %v6849
        %6989 = vmatpush.bf16.msra.mxu0 %v6848
        %6990 = vmatpush.bf16.msra.mxu0 %v6847
        %6991 = vmatpush.bf16.msra.mxu0 %v6846
        %6992 = vmatpush.bf16.msra.mxu0 %v6845
        %6993 = vmatpush.bf16.msra.mxu0 %v6844
        %6994 = vmatpush.bf16.msra.mxu0 %v6843
        %6995 = vmatmul.bf16.gmra.mxu0 %v5127
        %v6996 = vpop.f32.mrf.mxu0
        %v6997 = vadd.f32 %v5122, %v6996
        %v6998 = vpop.f32.mrf.mxu0
        %v6999 = vadd.f32 %v5122, %v6998
        %7000 = vmatmul.bf16.gmra.mxu0 %v5257
        %v7001 = vpop.f32.mrf.mxu0
        %v7002 = vadd.f32 %v5122, %v7001
        %v7003 = vpop.f32.mrf.mxu0
        %v7004 = vadd.f32 %v5122, %v7003
        %7005 = vmatmul.bf16.gmra.mxu0 %v5325
        %v7006 = vpop.f32.mrf.mxu0
        %v7007 = vadd.f32 %v5122, %v7006
        %v7008 = vpop.f32.mrf.mxu0
        %v7009 = vadd.f32 %v5122, %v7008
        %7010 = vmatmul.bf16.gmra.mxu0 %v5219
        %v7011 = vpop.f32.mrf.mxu0
        %v7012 = vadd.f32 %v5122, %v7011
        %v7013 = vpop.f32.mrf.mxu0
        %v7014 = vadd.f32 %v5122, %v7013
        %7015 = vmatmul.bf16.gmra.mxu0 %v5306
        %v7016 = vpop.f32.mrf.mxu0
        %v7017 = vadd.f32 %v5122, %v7016
        %v7018 = vpop.f32.mrf.mxu0
        %v7019 = vadd.f32 %v5122, %v7018
        %7020 = vmatmul.bf16.gmra.mxu0 %v5358
        %v7021 = vpop.f32.mrf.mxu0
        %v7022 = vadd.f32 %v5122, %v7021
        %v7023 = vpop.f32.mrf.mxu0
        %v7024 = vadd.f32 %v5122, %v7023
        %7025 = vmatmul.bf16.gmra.mxu0 %v5407
        %v7026 = vpop.f32.mrf.mxu0
        %v7027 = vadd.f32 %v5122, %v7026
        %v7028 = vpop.f32.mrf.mxu0
        %v7029 = vadd.f32 %v5122, %v7028
        %7030 = vmatmul.bf16.gmra.mxu0 %v5456
        %v7031 = vpop.f32.mrf.mxu0
        %v7032 = vadd.f32 %v5122, %v7031
        %v7033 = vpop.f32.mrf.mxu0
        %v7034 = vadd.f32 %v5122, %v7033
        %7035 = vmatmul.bf16.gmra.mxu0 %v5505
        %v7036 = vpop.f32.mrf.mxu0
        %v7037 = vadd.f32 %v5122, %v7036
        %v7038 = vpop.f32.mrf.mxu0
        %v7039 = vadd.f32 %v5122, %v7038
        %7040 = vmatmul.bf16.gmra.mxu0 %v5554
        %v7041 = vpop.f32.mrf.mxu0
        %v7042 = vadd.f32 %v5122, %v7041
        %v7043 = vpop.f32.mrf.mxu0
        %v7044 = vadd.f32 %v5122, %v7043
        %7045 = vmatmul.bf16.gmra.mxu0 %v5603
        %v7046 = vpop.f32.mrf.mxu0
        %v7047 = vadd.f32 %v5122, %v7046
        %v7048 = vpop.f32.mrf.mxu0
        %v7049 = vadd.f32 %v5122, %v7048
        %7050 = vmatmul.bf16.gmra.mxu0 %v5652
        %v7051 = vpop.f32.mrf.mxu0
        %v7052 = vadd.f32 %v5122, %v7051
        %v7053 = vpop.f32.mrf.mxu0
        %v7054 = vadd.f32 %v5122, %v7053
        %7055 = vmatmul.bf16.gmra.mxu0 %v5701
        %v7056 = vpop.f32.mrf.mxu0
        %v7057 = vadd.f32 %v5122, %v7056
        %v7058 = vpop.f32.mrf.mxu0
        %v7059 = vadd.f32 %v5122, %v7058
        %7060 = vmatmul.bf16.gmra.mxu0 %v5750
        %v7061 = vpop.f32.mrf.mxu0
        %v7062 = vadd.f32 %v5122, %v7061
        %v7063 = vpop.f32.mrf.mxu0
        %v7064 = vadd.f32 %v5122, %v7063
        %7065 = vmatmul.bf16.gmra.mxu0 %v5799
        %v7066 = vpop.f32.mrf.mxu0
        %v7067 = vadd.f32 %v5122, %v7066
        %v7068 = vpop.f32.mrf.mxu0
        %v7069 = vadd.f32 %v5122, %v7068
        %7070 = vmatmul.bf16.gmra.mxu0 %v5848
        %v7071 = vpop.f32.mrf.mxu0
        %v7072 = vadd.f32 %v5122, %v7071
        %v7073 = vpop.f32.mrf.mxu0
        %v7074 = vadd.f32 %v5122, %v7073
        %7075 = vmatmul.bf16.gmra.mxu0 %v5897
        %v7076 = vpop.f32.mrf.mxu0
        %v7077 = vadd.f32 %v5122, %v7076
        %v7078 = vpop.f32.mrf.mxu0
        %v7079 = vadd.f32 %v5122, %v7078
        %7080 = vmatmul.bf16.gmra.mxu0 %v5946
        %v7081 = vpop.f32.mrf.mxu0
        %v7082 = vadd.f32 %v5122, %v7081
        %v7083 = vpop.f32.mrf.mxu0
        %v7084 = vadd.f32 %v5122, %v7083
        %7085 = vmatmul.bf16.gmra.mxu0 %v5995
        %v7086 = vpop.f32.mrf.mxu0
        %v7087 = vadd.f32 %v5122, %v7086
        %v7088 = vpop.f32.mrf.mxu0
        %v7089 = vadd.f32 %v5122, %v7088
        %7090 = vmatmul.bf16.gmra.mxu0 %v6044
        %v7091 = vpop.f32.mrf.mxu0
        %v7092 = vadd.f32 %v5122, %v7091
        %v7093 = vpop.f32.mrf.mxu0
        %v7094 = vadd.f32 %v5122, %v7093
        %7095 = vmatmul.bf16.gmra.mxu0 %v6093
        %v7096 = vpop.f32.mrf.mxu0
        %v7097 = vadd.f32 %v5122, %v7096
        %v7098 = vpop.f32.mrf.mxu0
        %v7099 = vadd.f32 %v5122, %v7098
        %7100 = vmatmul.bf16.gmra.mxu0 %v6142
        %v7101 = vpop.f32.mrf.mxu0
        %v7102 = vadd.f32 %v5122, %v7101
        %v7103 = vpop.f32.mrf.mxu0
        %v7104 = vadd.f32 %v5122, %v7103
        %7105 = vmatmul.bf16.gmra.mxu0 %v6191
        %v7106 = vpop.f32.mrf.mxu0
        %v7107 = vadd.f32 %v5122, %v7106
        %v7108 = vpop.f32.mrf.mxu0
        %v7109 = vadd.f32 %v5122, %v7108
        %7110 = vmatmul.bf16.gmra.mxu0 %v6240
        %v7111 = vpop.f32.mrf.mxu0
        %v7112 = vadd.f32 %v5122, %v7111
        %v7113 = vpop.f32.mrf.mxu0
        %v7114 = vadd.f32 %v5122, %v7113
        %7115 = vdwg.mxu0
        %7116 = vmatpush.bf16.msra.mxu0 %v6858
        %7117 = vmatpush.bf16.msra.mxu0 %v6857
        %7118 = vmatpush.bf16.msra.mxu0 %v6856
        %7119 = vmatpush.bf16.msra.mxu0 %v6855
        %7120 = vmatpush.bf16.msra.mxu0 %v6854
        %7121 = vmatpush.bf16.msra.mxu0 %v6853
        %7122 = vmatpush.bf16.msra.mxu0 %v6852
        %7123 = vmatpush.bf16.msra.mxu0 %v6851
        %7124 = vmatmul.bf16.gmra.mxu0 %v5144
        %v7125 = vpop.f32.mrf.mxu0
        %v7126 = vadd.f32 %v6997, %v7125
        %v7127 = vpop.f32.mrf.mxu0
        %v7128 = vadd.f32 %v6999, %v7127
        %7129 = vmatmul.bf16.gmra.mxu0 %v5266
        %v7130 = vpop.f32.mrf.mxu0
        %v7131 = vadd.f32 %v7002, %v7130
        %v7132 = vpop.f32.mrf.mxu0
        %v7133 = vadd.f32 %v7004, %v7132
        %7134 = vmatmul.bf16.gmra.mxu0 %v5326
        %v7135 = vpop.f32.mrf.mxu0
        %v7136 = vadd.f32 %v7007, %v7135
        %v7137 = vpop.f32.mrf.mxu0
        %v7138 = vadd.f32 %v7009, %v7137
        %7139 = vmatmul.bf16.gmra.mxu0 %v5236
        %v7140 = vpop.f32.mrf.mxu0
        %v7141 = vadd.f32 %v7012, %v7140
        %v7142 = vpop.f32.mrf.mxu0
        %v7143 = vadd.f32 %v7014, %v7142
        %7144 = vmatmul.bf16.gmra.mxu0 %v5315
        %v7145 = vpop.f32.mrf.mxu0
        %v7146 = vadd.f32 %v7017, %v7145
        %v7147 = vpop.f32.mrf.mxu0
        %v7148 = vadd.f32 %v7019, %v7147
        %7149 = vmatmul.bf16.gmra.mxu0 %v5367
        %v7150 = vpop.f32.mrf.mxu0
        %v7151 = vadd.f32 %v7022, %v7150
        %v7152 = vpop.f32.mrf.mxu0
        %v7153 = vadd.f32 %v7024, %v7152
        %7154 = vmatmul.bf16.gmra.mxu0 %v5416
        %v7155 = vpop.f32.mrf.mxu0
        %v7156 = vadd.f32 %v7027, %v7155
        %v7157 = vpop.f32.mrf.mxu0
        %v7158 = vadd.f32 %v7029, %v7157
        %7159 = vmatmul.bf16.gmra.mxu0 %v5465
        %v7160 = vpop.f32.mrf.mxu0
        %v7161 = vadd.f32 %v7032, %v7160
        %v7162 = vpop.f32.mrf.mxu0
        %v7163 = vadd.f32 %v7034, %v7162
        %7164 = vmatmul.bf16.gmra.mxu0 %v5514
        %v7165 = vpop.f32.mrf.mxu0
        %v7166 = vadd.f32 %v7037, %v7165
        %v7167 = vpop.f32.mrf.mxu0
        %v7168 = vadd.f32 %v7039, %v7167
        %7169 = vmatmul.bf16.gmra.mxu0 %v5563
        %v7170 = vpop.f32.mrf.mxu0
        %v7171 = vadd.f32 %v7042, %v7170
        %v7172 = vpop.f32.mrf.mxu0
        %v7173 = vadd.f32 %v7044, %v7172
        %7174 = vmatmul.bf16.gmra.mxu0 %v5612
        %v7175 = vpop.f32.mrf.mxu0
        %v7176 = vadd.f32 %v7047, %v7175
        %v7177 = vpop.f32.mrf.mxu0
        %v7178 = vadd.f32 %v7049, %v7177
        %7179 = vmatmul.bf16.gmra.mxu0 %v5661
        %v7180 = vpop.f32.mrf.mxu0
        %v7181 = vadd.f32 %v7052, %v7180
        %v7182 = vpop.f32.mrf.mxu0
        %v7183 = vadd.f32 %v7054, %v7182
        %7184 = vmatmul.bf16.gmra.mxu0 %v5710
        %v7185 = vpop.f32.mrf.mxu0
        %v7186 = vadd.f32 %v7057, %v7185
        %v7187 = vpop.f32.mrf.mxu0
        %v7188 = vadd.f32 %v7059, %v7187
        %7189 = vmatmul.bf16.gmra.mxu0 %v5759
        %v7190 = vpop.f32.mrf.mxu0
        %v7191 = vadd.f32 %v7062, %v7190
        %v7192 = vpop.f32.mrf.mxu0
        %v7193 = vadd.f32 %v7064, %v7192
        %7194 = vmatmul.bf16.gmra.mxu0 %v5808
        %v7195 = vpop.f32.mrf.mxu0
        %v7196 = vadd.f32 %v7067, %v7195
        %v7197 = vpop.f32.mrf.mxu0
        %v7198 = vadd.f32 %v7069, %v7197
        %7199 = vmatmul.bf16.gmra.mxu0 %v5857
        %v7200 = vpop.f32.mrf.mxu0
        %v7201 = vadd.f32 %v7072, %v7200
        %v7202 = vpop.f32.mrf.mxu0
        %v7203 = vadd.f32 %v7074, %v7202
        %7204 = vmatmul.bf16.gmra.mxu0 %v5906
        %v7205 = vpop.f32.mrf.mxu0
        %v7206 = vadd.f32 %v7077, %v7205
        %v7207 = vpop.f32.mrf.mxu0
        %v7208 = vadd.f32 %v7079, %v7207
        %7209 = vmatmul.bf16.gmra.mxu0 %v5955
        %v7210 = vpop.f32.mrf.mxu0
        %v7211 = vadd.f32 %v7082, %v7210
        %v7212 = vpop.f32.mrf.mxu0
        %v7213 = vadd.f32 %v7084, %v7212
        %7214 = vmatmul.bf16.gmra.mxu0 %v6004
        %v7215 = vpop.f32.mrf.mxu0
        %v7216 = vadd.f32 %v7087, %v7215
        %v7217 = vpop.f32.mrf.mxu0
        %v7218 = vadd.f32 %v7089, %v7217
        %7219 = vmatmul.bf16.gmra.mxu0 %v6053
        %v7220 = vpop.f32.mrf.mxu0
        %v7221 = vadd.f32 %v7092, %v7220
        %v7222 = vpop.f32.mrf.mxu0
        %v7223 = vadd.f32 %v7094, %v7222
        %7224 = vmatmul.bf16.gmra.mxu0 %v6102
        %v7225 = vpop.f32.mrf.mxu0
        %v7226 = vadd.f32 %v7097, %v7225
        %v7227 = vpop.f32.mrf.mxu0
        %v7228 = vadd.f32 %v7099, %v7227
        %7229 = vmatmul.bf16.gmra.mxu0 %v6151
        %v7230 = vpop.f32.mrf.mxu0
        %v7231 = vadd.f32 %v7102, %v7230
        %v7232 = vpop.f32.mrf.mxu0
        %v7233 = vadd.f32 %v7104, %v7232
        %7234 = vmatmul.bf16.gmra.mxu0 %v6200
        %v7235 = vpop.f32.mrf.mxu0
        %v7236 = vadd.f32 %v7107, %v7235
        %v7237 = vpop.f32.mrf.mxu0
        %v7238 = vadd.f32 %v7109, %v7237
        %7239 = vmatmul.bf16.gmra.mxu0 %v6346
        %v7240 = vpop.f32.mrf.mxu0
        %v7241 = vadd.f32 %v7112, %v7240
        %v7242 = vpop.f32.mrf.mxu0
        %v7243 = vadd.f32 %v7114, %v7242
        %7244 = vdwg.mxu0
        %7245 = vmatpush.bf16.msra.mxu0 %v6866
        %7246 = vmatpush.bf16.msra.mxu0 %v6865
        %7247 = vmatpush.bf16.msra.mxu0 %v6864
        %7248 = vmatpush.bf16.msra.mxu0 %v6863
        %7249 = vmatpush.bf16.msra.mxu0 %v6862
        %7250 = vmatpush.bf16.msra.mxu0 %v6861
        %7251 = vmatpush.bf16.msra.mxu0 %v6860
        %7252 = vmatpush.bf16.msra.mxu0 %v6859
        %7253 = vmatmul.bf16.gmra.mxu0 %v5161
        %v7254 = vpop.f32.mrf.mxu0
        %v7255 = vadd.f32 %v7126, %v7254
        %v7256 = vpop.f32.mrf.mxu0
        %v7257 = vadd.f32 %v7128, %v7256
        %7258 = vmatmul.bf16.gmra.mxu0 %v5275
        %v7259 = vpop.f32.mrf.mxu0
        %v7260 = vadd.f32 %v7131, %v7259
        %v7261 = vpop.f32.mrf.mxu0
        %v7262 = vadd.f32 %v7133, %v7261
        %7263 = vmatmul.bf16.gmra.mxu0 %v5327
        %v7264 = vpop.f32.mrf.mxu0
        %v7265 = vadd.f32 %v7136, %v7264
        %v7266 = vpop.f32.mrf.mxu0
        %v7267 = vadd.f32 %v7138, %v7266
        %7268 = vmatmul.bf16.gmra.mxu0 %v5253
        %v7269 = vpop.f32.mrf.mxu0
        %v7270 = vadd.f32 %v7141, %v7269
        %v7271 = vpop.f32.mrf.mxu0
        %v7272 = vadd.f32 %v7143, %v7271
        %7273 = vmatmul.bf16.gmra.mxu0 %v5324
        %v7274 = vpop.f32.mrf.mxu0
        %v7275 = vadd.f32 %v7146, %v7274
        %v7276 = vpop.f32.mrf.mxu0
        %v7277 = vadd.f32 %v7148, %v7276
        %7278 = vmatmul.bf16.gmra.mxu0 %v5376
        %v7279 = vpop.f32.mrf.mxu0
        %v7280 = vadd.f32 %v7151, %v7279
        %v7281 = vpop.f32.mrf.mxu0
        %v7282 = vadd.f32 %v7153, %v7281
        %7283 = vmatmul.bf16.gmra.mxu0 %v5425
        %v7284 = vpop.f32.mrf.mxu0
        %v7285 = vadd.f32 %v7156, %v7284
        %v7286 = vpop.f32.mrf.mxu0
        %v7287 = vadd.f32 %v7158, %v7286
        %7288 = vmatmul.bf16.gmra.mxu0 %v5474
        %v7289 = vpop.f32.mrf.mxu0
        %v7290 = vadd.f32 %v7161, %v7289
        %v7291 = vpop.f32.mrf.mxu0
        %v7292 = vadd.f32 %v7163, %v7291
        %7293 = vmatmul.bf16.gmra.mxu0 %v5523
        %v7294 = vpop.f32.mrf.mxu0
        %v7295 = vadd.f32 %v7166, %v7294
        %v7296 = vpop.f32.mrf.mxu0
        %v7297 = vadd.f32 %v7168, %v7296
        %7298 = vmatmul.bf16.gmra.mxu0 %v5572
        %v7299 = vpop.f32.mrf.mxu0
        %v7300 = vadd.f32 %v7171, %v7299
        %v7301 = vpop.f32.mrf.mxu0
        %v7302 = vadd.f32 %v7173, %v7301
        %7303 = vmatmul.bf16.gmra.mxu0 %v5621
        %v7304 = vpop.f32.mrf.mxu0
        %v7305 = vadd.f32 %v7176, %v7304
        %v7306 = vpop.f32.mrf.mxu0
        %v7307 = vadd.f32 %v7178, %v7306
        %7308 = vmatmul.bf16.gmra.mxu0 %v5670
        %v7309 = vpop.f32.mrf.mxu0
        %v7310 = vadd.f32 %v7181, %v7309
        %v7311 = vpop.f32.mrf.mxu0
        %v7312 = vadd.f32 %v7183, %v7311
        %7313 = vmatmul.bf16.gmra.mxu0 %v5719
        %v7314 = vpop.f32.mrf.mxu0
        %v7315 = vadd.f32 %v7186, %v7314
        %v7316 = vpop.f32.mrf.mxu0
        %v7317 = vadd.f32 %v7188, %v7316
        %7318 = vmatmul.bf16.gmra.mxu0 %v5768
        %v7319 = vpop.f32.mrf.mxu0
        %v7320 = vadd.f32 %v7191, %v7319
        %v7321 = vpop.f32.mrf.mxu0
        %v7322 = vadd.f32 %v7193, %v7321
        %7323 = vmatmul.bf16.gmra.mxu0 %v5817
        %v7324 = vpop.f32.mrf.mxu0
        %v7325 = vadd.f32 %v7196, %v7324
        %v7326 = vpop.f32.mrf.mxu0
        %v7327 = vadd.f32 %v7198, %v7326
        %7328 = vmatmul.bf16.gmra.mxu0 %v5866
        %v7329 = vpop.f32.mrf.mxu0
        %v7330 = vadd.f32 %v7201, %v7329
        %v7331 = vpop.f32.mrf.mxu0
        %v7332 = vadd.f32 %v7203, %v7331
        %7333 = vmatmul.bf16.gmra.mxu0 %v5915
        %v7334 = vpop.f32.mrf.mxu0
        %v7335 = vadd.f32 %v7206, %v7334
        %v7336 = vpop.f32.mrf.mxu0
        %v7337 = vadd.f32 %v7208, %v7336
        %7338 = vmatmul.bf16.gmra.mxu0 %v5964
        %v7339 = vpop.f32.mrf.mxu0
        %v7340 = vadd.f32 %v7211, %v7339
        %v7341 = vpop.f32.mrf.mxu0
        %v7342 = vadd.f32 %v7213, %v7341
        %7343 = vmatmul.bf16.gmra.mxu0 %v6013
        %v7344 = vpop.f32.mrf.mxu0
        %v7345 = vadd.f32 %v7216, %v7344
        %v7346 = vpop.f32.mrf.mxu0
        %v7347 = vadd.f32 %v7218, %v7346
        %7348 = vmatmul.bf16.gmra.mxu0 %v6062
        %v7349 = vpop.f32.mrf.mxu0
        %v7350 = vadd.f32 %v7221, %v7349
        %v7351 = vpop.f32.mrf.mxu0
        %v7352 = vadd.f32 %v7223, %v7351
        %7353 = vmatmul.bf16.gmra.mxu0 %v6111
        %v7354 = vpop.f32.mrf.mxu0
        %v7355 = vadd.f32 %v7226, %v7354
        %v7356 = vpop.f32.mrf.mxu0
        %v7357 = vadd.f32 %v7228, %v7356
        %7358 = vmatmul.bf16.gmra.mxu0 %v6160
        %v7359 = vpop.f32.mrf.mxu0
        %v7360 = vadd.f32 %v7231, %v7359
        %v7361 = vpop.f32.mrf.mxu0
        %v7362 = vadd.f32 %v7233, %v7361
        %7363 = vmatmul.bf16.gmra.mxu0 %v6209
        %v7364 = vpop.f32.mrf.mxu0
        %v7365 = vadd.f32 %v7236, %v7364
        %v7366 = vpop.f32.mrf.mxu0
        %v7367 = vadd.f32 %v7238, %v7366
        %7368 = vmatmul.bf16.gmra.mxu0 %v6355
        %v7369 = vpop.f32.mrf.mxu0
        %v7370 = vadd.f32 %v7241, %v7369
        %v7371 = vpop.f32.mrf.mxu0
        %v7372 = vadd.f32 %v7243, %v7371
        %7373 = vdwg.mxu0
        %7374 = vmatpush.bf16.msra.mxu0 %v6874
        %7375 = vmatpush.bf16.msra.mxu0 %v6873
        %7376 = vmatpush.bf16.msra.mxu0 %v6872
        %7377 = vmatpush.bf16.msra.mxu0 %v6871
        %7378 = vmatpush.bf16.msra.mxu0 %v6870
        %7379 = vmatpush.bf16.msra.mxu0 %v6869
        %7380 = vmatpush.bf16.msra.mxu0 %v6868
        %7381 = vmatpush.bf16.msra.mxu0 %v6867
        %7382 = vmatmul.bf16.gmra.mxu0 %v5178
        %v7383 = vpop.f32.mrf.mxu0
        %v7384 = vadd.f32 %v7255, %v7383
        %v7385 = vpop.f32.mrf.mxu0
        %v7386 = vadd.f32 %v7257, %v7385
        %7387 = vmatmul.bf16.gmra.mxu0 %v5284
        %v7388 = vpop.f32.mrf.mxu0
        %v7389 = vadd.f32 %v7260, %v7388
        %v7390 = vpop.f32.mrf.mxu0
        %v7391 = vadd.f32 %v7262, %v7390
        %7392 = vmatmul.bf16.gmra.mxu0 %v5336
        %v7393 = vpop.f32.mrf.mxu0
        %v7394 = vadd.f32 %v7265, %v7393
        %v7395 = vpop.f32.mrf.mxu0
        %v7396 = vadd.f32 %v7267, %v7395
        %7397 = vmatmul.bf16.gmra.mxu0 %v5385
        %v7398 = vpop.f32.mrf.mxu0
        %v7399 = vadd.f32 %v7270, %v7398
        %v7400 = vpop.f32.mrf.mxu0
        %v7401 = vadd.f32 %v7272, %v7400
        %7402 = vmatmul.bf16.gmra.mxu0 %v5434
        %v7403 = vpop.f32.mrf.mxu0
        %v7404 = vadd.f32 %v7275, %v7403
        %v7405 = vpop.f32.mrf.mxu0
        %v7406 = vadd.f32 %v7277, %v7405
        %7407 = vmatmul.bf16.gmra.mxu0 %v5483
        %v7408 = vpop.f32.mrf.mxu0
        %v7409 = vadd.f32 %v7280, %v7408
        %v7410 = vpop.f32.mrf.mxu0
        %v7411 = vadd.f32 %v7282, %v7410
        %7412 = vmatmul.bf16.gmra.mxu0 %v5532
        %v7413 = vpop.f32.mrf.mxu0
        %v7414 = vadd.f32 %v7285, %v7413
        %v7415 = vpop.f32.mrf.mxu0
        %v7416 = vadd.f32 %v7287, %v7415
        %7417 = vmatmul.bf16.gmra.mxu0 %v5581
        %v7418 = vpop.f32.mrf.mxu0
        %v7419 = vadd.f32 %v7290, %v7418
        %v7420 = vpop.f32.mrf.mxu0
        %v7421 = vadd.f32 %v7292, %v7420
        %7422 = vmatmul.bf16.gmra.mxu0 %v5630
        %v7423 = vpop.f32.mrf.mxu0
        %v7424 = vadd.f32 %v7295, %v7423
        %v7425 = vpop.f32.mrf.mxu0
        %v7426 = vadd.f32 %v7297, %v7425
        %7427 = vmatmul.bf16.gmra.mxu0 %v5679
        %v7428 = vpop.f32.mrf.mxu0
        %v7429 = vadd.f32 %v7300, %v7428
        %v7430 = vpop.f32.mrf.mxu0
        %v7431 = vadd.f32 %v7302, %v7430
        %7432 = vmatmul.bf16.gmra.mxu0 %v5728
        %v7433 = vpop.f32.mrf.mxu0
        %v7434 = vadd.f32 %v7305, %v7433
        %v7435 = vpop.f32.mrf.mxu0
        %v7436 = vadd.f32 %v7307, %v7435
        %7437 = vmatmul.bf16.gmra.mxu0 %v5777
        %v7438 = vpop.f32.mrf.mxu0
        %v7439 = vadd.f32 %v7310, %v7438
        %v7440 = vpop.f32.mrf.mxu0
        %v7441 = vadd.f32 %v7312, %v7440
        %7442 = vmatmul.bf16.gmra.mxu0 %v5826
        %v7443 = vpop.f32.mrf.mxu0
        %v7444 = vadd.f32 %v7315, %v7443
        %v7445 = vpop.f32.mrf.mxu0
        %v7446 = vadd.f32 %v7317, %v7445
        %7447 = vmatmul.bf16.gmra.mxu0 %v5875
        %v7448 = vpop.f32.mrf.mxu0
        %v7449 = vadd.f32 %v7320, %v7448
        %v7450 = vpop.f32.mrf.mxu0
        %v7451 = vadd.f32 %v7322, %v7450
        %7452 = vmatmul.bf16.gmra.mxu0 %v5924
        %v7453 = vpop.f32.mrf.mxu0
        %v7454 = vadd.f32 %v7325, %v7453
        %v7455 = vpop.f32.mrf.mxu0
        %v7456 = vadd.f32 %v7327, %v7455
        %7457 = vmatmul.bf16.gmra.mxu0 %v5973
        %v7458 = vpop.f32.mrf.mxu0
        %v7459 = vadd.f32 %v7330, %v7458
        %v7460 = vpop.f32.mrf.mxu0
        %v7461 = vadd.f32 %v7332, %v7460
        %7462 = vmatmul.bf16.gmra.mxu0 %v6022
        %v7463 = vpop.f32.mrf.mxu0
        %v7464 = vadd.f32 %v7335, %v7463
        %v7465 = vpop.f32.mrf.mxu0
        %v7466 = vadd.f32 %v7337, %v7465
        %7467 = vmatmul.bf16.gmra.mxu0 %v6071
        %v7468 = vpop.f32.mrf.mxu0
        %v7469 = vadd.f32 %v7340, %v7468
        %v7470 = vpop.f32.mrf.mxu0
        %v7471 = vadd.f32 %v7342, %v7470
        %7472 = vmatmul.bf16.gmra.mxu0 %v6120
        %v7473 = vpop.f32.mrf.mxu0
        %v7474 = vadd.f32 %v7345, %v7473
        %v7475 = vpop.f32.mrf.mxu0
        %v7476 = vadd.f32 %v7347, %v7475
        %7477 = vmatmul.bf16.gmra.mxu0 %v6169
        %v7478 = vpop.f32.mrf.mxu0
        %v7479 = vadd.f32 %v7350, %v7478
        %v7480 = vpop.f32.mrf.mxu0
        %v7481 = vadd.f32 %v7352, %v7480
        %7482 = vmatmul.bf16.gmra.mxu0 %v6218
        %v7483 = vpop.f32.mrf.mxu0
        %v7484 = vadd.f32 %v7355, %v7483
        %v7485 = vpop.f32.mrf.mxu0
        %v7486 = vadd.f32 %v7357, %v7485
        %7487 = vmatmul.bf16.gmra.mxu0 %v6267
        %v7488 = vpop.f32.mrf.mxu0
        %v7489 = vadd.f32 %v7360, %v7488
        %v7490 = vpop.f32.mrf.mxu0
        %v7491 = vadd.f32 %v7362, %v7490
        %7492 = vmatmul.bf16.gmra.mxu0 %v6316
        %v7493 = vpop.f32.mrf.mxu0
        %v7494 = vadd.f32 %v7365, %v7493
        %v7495 = vpop.f32.mrf.mxu0
        %v7496 = vadd.f32 %v7367, %v7495
        %7497 = vmatmul.bf16.gmra.mxu0 %v6364
        %v7498 = vpop.f32.mrf.mxu0
        %v7499 = vadd.f32 %v7370, %v7498
        %v7500 = vpop.f32.mrf.mxu0
        %v7501 = vadd.f32 %v7372, %v7500
        %7502 = vdwg.mxu0
        %7503 = vmatpush.bf16.msra.mxu0 %v6882
        %7504 = vmatpush.bf16.msra.mxu0 %v6881
        %7505 = vmatpush.bf16.msra.mxu0 %v6880
        %7506 = vmatpush.bf16.msra.mxu0 %v6879
        %7507 = vmatpush.bf16.msra.mxu0 %v6878
        %7508 = vmatpush.bf16.msra.mxu0 %v6877
        %7509 = vmatpush.bf16.msra.mxu0 %v6876
        %7510 = vmatpush.bf16.msra.mxu0 %v6875
        %7511 = vmatmul.bf16.gmra.mxu0 %v5195
        %v7512 = vpop.f32.mrf.mxu0
        %v7513 = vadd.f32 %v7384, %v7512
        %v7514 = vpop.f32.mrf.mxu0
        %v7515 = vadd.f32 %v7386, %v7514
        %7516 = vmatmul.bf16.gmra.mxu0 %v5293
        %v7517 = vpop.f32.mrf.mxu0
        %v7518 = vadd.f32 %v7389, %v7517
        %v7519 = vpop.f32.mrf.mxu0
        %v7520 = vadd.f32 %v7391, %v7519
        %7521 = vmatmul.bf16.gmra.mxu0 %v5345
        %v7522 = vpop.f32.mrf.mxu0
        %v7523 = vadd.f32 %v7394, %v7522
        %v7524 = vpop.f32.mrf.mxu0
        %v7525 = vadd.f32 %v7396, %v7524
        %7526 = vmatmul.bf16.gmra.mxu0 %v5394
        %v7527 = vpop.f32.mrf.mxu0
        %v7528 = vadd.f32 %v7399, %v7527
        %v7529 = vpop.f32.mrf.mxu0
        %v7530 = vadd.f32 %v7401, %v7529
        %7531 = vmatmul.bf16.gmra.mxu0 %v5443
        %v7532 = vpop.f32.mrf.mxu0
        %v7533 = vadd.f32 %v7404, %v7532
        %v7534 = vpop.f32.mrf.mxu0
        %v7535 = vadd.f32 %v7406, %v7534
        %7536 = vmatmul.bf16.gmra.mxu0 %v5492
        %v7537 = vpop.f32.mrf.mxu0
        %v7538 = vadd.f32 %v7409, %v7537
        %v7539 = vpop.f32.mrf.mxu0
        %v7540 = vadd.f32 %v7411, %v7539
        %7541 = vmatmul.bf16.gmra.mxu0 %v5541
        %v7542 = vpop.f32.mrf.mxu0
        %v7543 = vadd.f32 %v7414, %v7542
        %v7544 = vpop.f32.mrf.mxu0
        %v7545 = vadd.f32 %v7416, %v7544
        %7546 = vmatmul.bf16.gmra.mxu0 %v5590
        %v7547 = vpop.f32.mrf.mxu0
        %v7548 = vadd.f32 %v7419, %v7547
        %v7549 = vpop.f32.mrf.mxu0
        %v7550 = vadd.f32 %v7421, %v7549
        %7551 = vmatmul.bf16.gmra.mxu0 %v5639
        %v7552 = vpop.f32.mrf.mxu0
        %v7553 = vadd.f32 %v7424, %v7552
        %v7554 = vpop.f32.mrf.mxu0
        %v7555 = vadd.f32 %v7426, %v7554
        %7556 = vmatmul.bf16.gmra.mxu0 %v5688
        %v7557 = vpop.f32.mrf.mxu0
        %v7558 = vadd.f32 %v7429, %v7557
        %v7559 = vpop.f32.mrf.mxu0
        %v7560 = vadd.f32 %v7431, %v7559
        %7561 = vmatmul.bf16.gmra.mxu0 %v5737
        %v7562 = vpop.f32.mrf.mxu0
        %v7563 = vadd.f32 %v7434, %v7562
        %v7564 = vpop.f32.mrf.mxu0
        %v7565 = vadd.f32 %v7436, %v7564
        %7566 = vmatmul.bf16.gmra.mxu0 %v5786
        %v7567 = vpop.f32.mrf.mxu0
        %v7568 = vadd.f32 %v7439, %v7567
        %v7569 = vpop.f32.mrf.mxu0
        %v7570 = vadd.f32 %v7441, %v7569
        %7571 = vmatmul.bf16.gmra.mxu0 %v5835
        %v7572 = vpop.f32.mrf.mxu0
        %v7573 = vadd.f32 %v7444, %v7572
        %v7574 = vpop.f32.mrf.mxu0
        %v7575 = vadd.f32 %v7446, %v7574
        %7576 = vmatmul.bf16.gmra.mxu0 %v5884
        %v7577 = vpop.f32.mrf.mxu0
        %v7578 = vadd.f32 %v7449, %v7577
        %v7579 = vpop.f32.mrf.mxu0
        %v7580 = vadd.f32 %v7451, %v7579
        %7581 = vmatmul.bf16.gmra.mxu0 %v5933
        %v7582 = vpop.f32.mrf.mxu0
        %v7583 = vadd.f32 %v7454, %v7582
        %v7584 = vpop.f32.mrf.mxu0
        %v7585 = vadd.f32 %v7456, %v7584
        %7586 = vmatmul.bf16.gmra.mxu0 %v5982
        %v7587 = vpop.f32.mrf.mxu0
        %v7588 = vadd.f32 %v7459, %v7587
        %v7589 = vpop.f32.mrf.mxu0
        %v7590 = vadd.f32 %v7461, %v7589
        %7591 = vmatmul.bf16.gmra.mxu0 %v6031
        %v7592 = vpop.f32.mrf.mxu0
        %v7593 = vadd.f32 %v7464, %v7592
        %v7594 = vpop.f32.mrf.mxu0
        %v7595 = vadd.f32 %v7466, %v7594
        %7596 = vmatmul.bf16.gmra.mxu0 %v6080
        %v7597 = vpop.f32.mrf.mxu0
        %v7598 = vadd.f32 %v7469, %v7597
        %v7599 = vpop.f32.mrf.mxu0
        %v7600 = vadd.f32 %v7471, %v7599
        %7601 = vmatmul.bf16.gmra.mxu0 %v6129
        %v7602 = vpop.f32.mrf.mxu0
        %v7603 = vadd.f32 %v7474, %v7602
        %v7604 = vpop.f32.mrf.mxu0
        %v7605 = vadd.f32 %v7476, %v7604
        %7606 = vmatmul.bf16.gmra.mxu0 %v6178
        %v7607 = vpop.f32.mrf.mxu0
        %v7608 = vadd.f32 %v7479, %v7607
        %v7609 = vpop.f32.mrf.mxu0
        %v7610 = vadd.f32 %v7481, %v7609
        %7611 = vmatmul.bf16.gmra.mxu0 %v6227
        %v7612 = vpop.f32.mrf.mxu0
        %v7613 = vadd.f32 %v7484, %v7612
        %v7614 = vpop.f32.mrf.mxu0
        %v7615 = vadd.f32 %v7486, %v7614
        %7616 = vmatmul.bf16.gmra.mxu0 %v6276
        %v7617 = vpop.f32.mrf.mxu0
        %v7618 = vadd.f32 %v7489, %v7617
        %v7619 = vpop.f32.mrf.mxu0
        %v7620 = vadd.f32 %v7491, %v7619
        %7621 = vmatmul.bf16.gmra.mxu0 %v6325
        %v7622 = vpop.f32.mrf.mxu0
        %v7623 = vadd.f32 %v7494, %v7622
        %v7624 = vpop.f32.mrf.mxu0
        %v7625 = vadd.f32 %v7496, %v7624
        %7626 = vmatmul.bf16.gmra.mxu0 %v6373
        %v7627 = vpop.f32.mrf.mxu0
        %v7628 = vadd.f32 %v7499, %v7627
        %v7629 = vpop.f32.mrf.mxu0
        %v7630 = vadd.f32 %v7501, %v7629
        %7631 = vdwg.mxu0
        %7632 = vmatpush.bf16.msra.mxu0 %v6890
        %7633 = vmatpush.bf16.msra.mxu0 %v6889
        %7634 = vmatpush.bf16.msra.mxu0 %v6888
        %7635 = vmatpush.bf16.msra.mxu0 %v6887
        %7636 = vmatpush.bf16.msra.mxu0 %v6886
        %7637 = vmatpush.bf16.msra.mxu0 %v6885
        %7638 = vmatpush.bf16.msra.mxu0 %v6884
        %7639 = vmatpush.bf16.msra.mxu0 %v6883
        %7640 = vmatmul.bf16.gmra.mxu0 %v5212
        %v7641 = vpop.f32.mrf.mxu0
        %v7642 = vadd.f32 %v7513, %v7641
        %v7643 = vpop.f32.mrf.mxu0
        %v7644 = vadd.f32 %v7515, %v7643
        %7645 = vmatmul.bf16.gmra.mxu0 %v5302
        %v7646 = vpop.f32.mrf.mxu0
        %v7647 = vadd.f32 %v7518, %v7646
        %v7648 = vpop.f32.mrf.mxu0
        %v7649 = vadd.f32 %v7520, %v7648
        %7650 = vmatmul.bf16.gmra.mxu0 %v5354
        %v7651 = vpop.f32.mrf.mxu0
        %v7652 = vadd.f32 %v7523, %v7651
        %v7653 = vpop.f32.mrf.mxu0
        %v7654 = vadd.f32 %v7525, %v7653
        %7655 = vmatmul.bf16.gmra.mxu0 %v5403
        %v7656 = vpop.f32.mrf.mxu0
        %v7657 = vadd.f32 %v7528, %v7656
        %v7658 = vpop.f32.mrf.mxu0
        %v7659 = vadd.f32 %v7530, %v7658
        %7660 = vmatmul.bf16.gmra.mxu0 %v5452
        %v7661 = vpop.f32.mrf.mxu0
        %v7662 = vadd.f32 %v7533, %v7661
        %v7663 = vpop.f32.mrf.mxu0
        %v7664 = vadd.f32 %v7535, %v7663
        %7665 = vmatmul.bf16.gmra.mxu0 %v5501
        %v7666 = vpop.f32.mrf.mxu0
        %v7667 = vadd.f32 %v7538, %v7666
        %v7668 = vpop.f32.mrf.mxu0
        %v7669 = vadd.f32 %v7540, %v7668
        %7670 = vmatmul.bf16.gmra.mxu0 %v5550
        %v7671 = vpop.f32.mrf.mxu0
        %v7672 = vadd.f32 %v7543, %v7671
        %v7673 = vpop.f32.mrf.mxu0
        %v7674 = vadd.f32 %v7545, %v7673
        %7675 = vmatmul.bf16.gmra.mxu0 %v5599
        %v7676 = vpop.f32.mrf.mxu0
        %v7677 = vadd.f32 %v7548, %v7676
        %v7678 = vpop.f32.mrf.mxu0
        %v7679 = vadd.f32 %v7550, %v7678
        %7680 = vmatmul.bf16.gmra.mxu0 %v5648
        %v7681 = vpop.f32.mrf.mxu0
        %v7682 = vadd.f32 %v7553, %v7681
        %v7683 = vpop.f32.mrf.mxu0
        %v7684 = vadd.f32 %v7555, %v7683
        %7685 = vmatmul.bf16.gmra.mxu0 %v5697
        %v7686 = vpop.f32.mrf.mxu0
        %v7687 = vadd.f32 %v7558, %v7686
        %v7688 = vpop.f32.mrf.mxu0
        %v7689 = vadd.f32 %v7560, %v7688
        %7690 = vmatmul.bf16.gmra.mxu0 %v5746
        %v7691 = vpop.f32.mrf.mxu0
        %v7692 = vadd.f32 %v7563, %v7691
        %v7693 = vpop.f32.mrf.mxu0
        %v7694 = vadd.f32 %v7565, %v7693
        %7695 = vmatmul.bf16.gmra.mxu0 %v5795
        %v7696 = vpop.f32.mrf.mxu0
        %v7697 = vadd.f32 %v7568, %v7696
        %v7698 = vpop.f32.mrf.mxu0
        %v7699 = vadd.f32 %v7570, %v7698
        %7700 = vmatmul.bf16.gmra.mxu0 %v5844
        %v7701 = vpop.f32.mrf.mxu0
        %v7702 = vadd.f32 %v7573, %v7701
        %v7703 = vpop.f32.mrf.mxu0
        %v7704 = vadd.f32 %v7575, %v7703
        %7705 = vmatmul.bf16.gmra.mxu0 %v5893
        %v7706 = vpop.f32.mrf.mxu0
        %v7707 = vadd.f32 %v7578, %v7706
        %v7708 = vpop.f32.mrf.mxu0
        %v7709 = vadd.f32 %v7580, %v7708
        %7710 = vmatmul.bf16.gmra.mxu0 %v5942
        %v7711 = vpop.f32.mrf.mxu0
        %v7712 = vadd.f32 %v7583, %v7711
        %v7713 = vpop.f32.mrf.mxu0
        %v7714 = vadd.f32 %v7585, %v7713
        %7715 = vmatmul.bf16.gmra.mxu0 %v5991
        %v7716 = vpop.f32.mrf.mxu0
        %v7717 = vadd.f32 %v7588, %v7716
        %v7718 = vpop.f32.mrf.mxu0
        %v7719 = vadd.f32 %v7590, %v7718
        %7720 = vmatmul.bf16.gmra.mxu0 %v6040
        %v7721 = vpop.f32.mrf.mxu0
        %v7722 = vadd.f32 %v7593, %v7721
        %v7723 = vpop.f32.mrf.mxu0
        %v7724 = vadd.f32 %v7595, %v7723
        %7725 = vmatmul.bf16.gmra.mxu0 %v6089
        %v7726 = vpop.f32.mrf.mxu0
        %v7727 = vadd.f32 %v7598, %v7726
        %v7728 = vpop.f32.mrf.mxu0
        %v7729 = vadd.f32 %v7600, %v7728
        %7730 = vmatmul.bf16.gmra.mxu0 %v6138
        %v7731 = vpop.f32.mrf.mxu0
        %v7732 = vadd.f32 %v7603, %v7731
        %v7733 = vpop.f32.mrf.mxu0
        %v7734 = vadd.f32 %v7605, %v7733
        %7735 = vmatmul.bf16.gmra.mxu0 %v6187
        %v7736 = vpop.f32.mrf.mxu0
        %v7737 = vadd.f32 %v7608, %v7736
        %v7738 = vpop.f32.mrf.mxu0
        %v7739 = vadd.f32 %v7610, %v7738
        %7740 = vmatmul.bf16.gmra.mxu0 %v6236
        %v7741 = vpop.f32.mrf.mxu0
        %v7742 = vadd.f32 %v7613, %v7741
        %v7743 = vpop.f32.mrf.mxu0
        %v7744 = vadd.f32 %v7615, %v7743
        %7745 = vmatmul.bf16.gmra.mxu0 %v6285
        %v7746 = vpop.f32.mrf.mxu0
        %v7747 = vadd.f32 %v7618, %v7746
        %v7748 = vpop.f32.mrf.mxu0
        %v7749 = vadd.f32 %v7620, %v7748
        %7750 = vmatmul.bf16.gmra.mxu0 %v6334
        %v7751 = vpop.f32.mrf.mxu0
        %v7752 = vadd.f32 %v7623, %v7751
        %v7753 = vpop.f32.mrf.mxu0
        %v7754 = vadd.f32 %v7625, %v7753
        %7755 = vmatmul.bf16.gmra.mxu0 %v6382
        %v7756 = vpop.f32.mrf.mxu0
        %v7757 = vadd.f32 %v7628, %v7756
        %v7758 = vpop.f32.mrf.mxu0
        %v7759 = vadd.f32 %v7630, %v7758
        %7760 = vdwg.mxu0
        %7761 = vmatpush.bf16.msra.mxu0 %v6898
        %7762 = vmatpush.bf16.msra.mxu0 %v6897
        %7763 = vmatpush.bf16.msra.mxu0 %v6896
        %7764 = vmatpush.bf16.msra.mxu0 %v6895
        %7765 = vmatpush.bf16.msra.mxu0 %v6894
        %7766 = vmatpush.bf16.msra.mxu0 %v6893
        %7767 = vmatpush.bf16.msra.mxu0 %v6892
        %7768 = vmatpush.bf16.msra.mxu0 %v6891
        %7769 = vmatmul.bf16.gmra.mxu0 %v5219
        %v7770 = vpop.f32.mrf.mxu0
        %v7771 = vadd.f32 %v7642, %v7770
        %v7772 = vpop.f32.mrf.mxu0
        %v7773 = vadd.f32 %v7644, %v7772
        %7774 = vmatmul.bf16.gmra.mxu0 %v5306
        %v7775 = vpop.f32.mrf.mxu0
        %v7776 = vadd.f32 %v7647, %v7775
        %v7777 = vpop.f32.mrf.mxu0
        %v7778 = vadd.f32 %v7649, %v7777
        %7779 = vmatmul.bf16.gmra.mxu0 %v5358
        %v7780 = vpop.f32.mrf.mxu0
        %v7781 = vadd.f32 %v7652, %v7780
        %v7782 = vpop.f32.mrf.mxu0
        %v7783 = vadd.f32 %v7654, %v7782
        %7784 = vmatmul.bf16.gmra.mxu0 %v5407
        %v7785 = vpop.f32.mrf.mxu0
        %v7786 = vadd.f32 %v7657, %v7785
        %v7787 = vpop.f32.mrf.mxu0
        %v7788 = vadd.f32 %v7659, %v7787
        %7789 = vmatmul.bf16.gmra.mxu0 %v5456
        %v7790 = vpop.f32.mrf.mxu0
        %v7791 = vadd.f32 %v7662, %v7790
        %v7792 = vpop.f32.mrf.mxu0
        %v7793 = vadd.f32 %v7664, %v7792
        %7794 = vmatmul.bf16.gmra.mxu0 %v5505
        %v7795 = vpop.f32.mrf.mxu0
        %v7796 = vadd.f32 %v7667, %v7795
        %v7797 = vpop.f32.mrf.mxu0
        %v7798 = vadd.f32 %v7669, %v7797
        %7799 = vmatmul.bf16.gmra.mxu0 %v5554
        %v7800 = vpop.f32.mrf.mxu0
        %v7801 = vadd.f32 %v7672, %v7800
        %v7802 = vpop.f32.mrf.mxu0
        %v7803 = vadd.f32 %v7674, %v7802
        %7804 = vmatmul.bf16.gmra.mxu0 %v5603
        %v7805 = vpop.f32.mrf.mxu0
        %v7806 = vadd.f32 %v7677, %v7805
        %v7807 = vpop.f32.mrf.mxu0
        %v7808 = vadd.f32 %v7679, %v7807
        %7809 = vmatmul.bf16.gmra.mxu0 %v5652
        %v7810 = vpop.f32.mrf.mxu0
        %v7811 = vadd.f32 %v7682, %v7810
        %v7812 = vpop.f32.mrf.mxu0
        %v7813 = vadd.f32 %v7684, %v7812
        %7814 = vmatmul.bf16.gmra.mxu0 %v5701
        %v7815 = vpop.f32.mrf.mxu0
        %v7816 = vadd.f32 %v7687, %v7815
        %v7817 = vpop.f32.mrf.mxu0
        %v7818 = vadd.f32 %v7689, %v7817
        %7819 = vmatmul.bf16.gmra.mxu0 %v5750
        %v7820 = vpop.f32.mrf.mxu0
        %v7821 = vadd.f32 %v7692, %v7820
        %v7822 = vpop.f32.mrf.mxu0
        %v7823 = vadd.f32 %v7694, %v7822
        %7824 = vmatmul.bf16.gmra.mxu0 %v5799
        %v7825 = vpop.f32.mrf.mxu0
        %v7826 = vadd.f32 %v7697, %v7825
        %v7827 = vpop.f32.mrf.mxu0
        %v7828 = vadd.f32 %v7699, %v7827
        %7829 = vmatmul.bf16.gmra.mxu0 %v5848
        %v7830 = vpop.f32.mrf.mxu0
        %v7831 = vadd.f32 %v7702, %v7830
        %v7832 = vpop.f32.mrf.mxu0
        %v7833 = vadd.f32 %v7704, %v7832
        %7834 = vmatmul.bf16.gmra.mxu0 %v5897
        %v7835 = vpop.f32.mrf.mxu0
        %v7836 = vadd.f32 %v7707, %v7835
        %v7837 = vpop.f32.mrf.mxu0
        %v7838 = vadd.f32 %v7709, %v7837
        %7839 = vmatmul.bf16.gmra.mxu0 %v5946
        %v7840 = vpop.f32.mrf.mxu0
        %v7841 = vadd.f32 %v7712, %v7840
        %v7842 = vpop.f32.mrf.mxu0
        %v7843 = vadd.f32 %v7714, %v7842
        %7844 = vmatmul.bf16.gmra.mxu0 %v5995
        %v7845 = vpop.f32.mrf.mxu0
        %v7846 = vadd.f32 %v7717, %v7845
        %v7847 = vpop.f32.mrf.mxu0
        %v7848 = vadd.f32 %v7719, %v7847
        %7849 = vmatmul.bf16.gmra.mxu0 %v6044
        %v7850 = vpop.f32.mrf.mxu0
        %v7851 = vadd.f32 %v7722, %v7850
        %v7852 = vpop.f32.mrf.mxu0
        %v7853 = vadd.f32 %v7724, %v7852
        %7854 = vmatmul.bf16.gmra.mxu0 %v6093
        %v7855 = vpop.f32.mrf.mxu0
        %v7856 = vadd.f32 %v7727, %v7855
        %v7857 = vpop.f32.mrf.mxu0
        %v7858 = vadd.f32 %v7729, %v7857
        %7859 = vmatmul.bf16.gmra.mxu0 %v6142
        %v7860 = vpop.f32.mrf.mxu0
        %v7861 = vadd.f32 %v7732, %v7860
        %v7862 = vpop.f32.mrf.mxu0
        %v7863 = vadd.f32 %v7734, %v7862
        %7864 = vmatmul.bf16.gmra.mxu0 %v6191
        %v7865 = vpop.f32.mrf.mxu0
        %v7866 = vadd.f32 %v7737, %v7865
        %v7867 = vpop.f32.mrf.mxu0
        %v7868 = vadd.f32 %v7739, %v7867
        %7869 = vmatmul.bf16.gmra.mxu0 %v6240
        %v7870 = vpop.f32.mrf.mxu0
        %v7871 = vadd.f32 %v7742, %v7870
        %v7872 = vpop.f32.mrf.mxu0
        %v7873 = vadd.f32 %v7744, %v7872
        %7874 = vmatmul.bf16.gmra.mxu0 %v6289
        %v7875 = vpop.f32.mrf.mxu0
        %v7876 = vadd.f32 %v7747, %v7875
        %v7877 = vpop.f32.mrf.mxu0
        %v7878 = vadd.f32 %v7749, %v7877
        %7879 = vmatmul.bf16.gmra.mxu0 %v6335
        %v7880 = vpop.f32.mrf.mxu0
        %v7881 = vadd.f32 %v7752, %v7880
        %v7882 = vpop.f32.mrf.mxu0
        %v7883 = vadd.f32 %v7754, %v7882
        %7884 = vmatmul.bf16.gmra.mxu0 %v5127
        %v7885 = vpop.f32.mrf.mxu0
        %v7886 = vadd.f32 %v7757, %v7885
        %v7887 = vpop.f32.mrf.mxu0
        %v7888 = vadd.f32 %v7759, %v7887
        %7889 = vdwg.mxu0
        %7890 = vmatpush.bf16.msra.mxu0 %v6906
        %7891 = vmatpush.bf16.msra.mxu0 %v6905
        %7892 = vmatpush.bf16.msra.mxu0 %v6904
        %7893 = vmatpush.bf16.msra.mxu0 %v6903
        %7894 = vmatpush.bf16.msra.mxu0 %v6902
        %7895 = vmatpush.bf16.msra.mxu0 %v6901
        %7896 = vmatpush.bf16.msra.mxu0 %v6900
        %7897 = vmatpush.bf16.msra.mxu0 %v6899
        %7898 = vmatmul.bf16.gmra.mxu0 %v5236
        %v7899 = vpop.f32.mrf.mxu0
        %v7900 = vadd.f32 %v7771, %v7899
        %v7901 = vpop.f32.mrf.mxu0
        %v7902 = vadd.f32 %v7773, %v7901
        %7903 = vmatmul.bf16.gmra.mxu0 %v5315
        %v7904 = vpop.f32.mrf.mxu0
        %v7905 = vadd.f32 %v7776, %v7904
        %v7906 = vpop.f32.mrf.mxu0
        %v7907 = vadd.f32 %v7778, %v7906
        %7908 = vmatmul.bf16.gmra.mxu0 %v5367
        %v7909 = vpop.f32.mrf.mxu0
        %v7910 = vadd.f32 %v7781, %v7909
        %v7911 = vpop.f32.mrf.mxu0
        %v7912 = vadd.f32 %v7783, %v7911
        %7913 = vmatmul.bf16.gmra.mxu0 %v5416
        %v7914 = vpop.f32.mrf.mxu0
        %v7915 = vadd.f32 %v7786, %v7914
        %v7916 = vpop.f32.mrf.mxu0
        %v7917 = vadd.f32 %v7788, %v7916
        %7918 = vmatmul.bf16.gmra.mxu0 %v5465
        %v7919 = vpop.f32.mrf.mxu0
        %v7920 = vadd.f32 %v7791, %v7919
        %v7921 = vpop.f32.mrf.mxu0
        %v7922 = vadd.f32 %v7793, %v7921
        %7923 = vmatmul.bf16.gmra.mxu0 %v5514
        %v7924 = vpop.f32.mrf.mxu0
        %v7925 = vadd.f32 %v7796, %v7924
        %v7926 = vpop.f32.mrf.mxu0
        %v7927 = vadd.f32 %v7798, %v7926
        %7928 = vmatmul.bf16.gmra.mxu0 %v5563
        %v7929 = vpop.f32.mrf.mxu0
        %v7930 = vadd.f32 %v7801, %v7929
        %v7931 = vpop.f32.mrf.mxu0
        %v7932 = vadd.f32 %v7803, %v7931
        %7933 = vmatmul.bf16.gmra.mxu0 %v5612
        %v7934 = vpop.f32.mrf.mxu0
        %v7935 = vadd.f32 %v7806, %v7934
        %v7936 = vpop.f32.mrf.mxu0
        %v7937 = vadd.f32 %v7808, %v7936
        %7938 = vmatmul.bf16.gmra.mxu0 %v5661
        %v7939 = vpop.f32.mrf.mxu0
        %v7940 = vadd.f32 %v7811, %v7939
        %v7941 = vpop.f32.mrf.mxu0
        %v7942 = vadd.f32 %v7813, %v7941
        %7943 = vmatmul.bf16.gmra.mxu0 %v5710
        %v7944 = vpop.f32.mrf.mxu0
        %v7945 = vadd.f32 %v7816, %v7944
        %v7946 = vpop.f32.mrf.mxu0
        %v7947 = vadd.f32 %v7818, %v7946
        %7948 = vmatmul.bf16.gmra.mxu0 %v5759
        %v7949 = vpop.f32.mrf.mxu0
        %v7950 = vadd.f32 %v7821, %v7949
        %v7951 = vpop.f32.mrf.mxu0
        %v7952 = vadd.f32 %v7823, %v7951
        %7953 = vmatmul.bf16.gmra.mxu0 %v5808
        %v7954 = vpop.f32.mrf.mxu0
        %v7955 = vadd.f32 %v7826, %v7954
        %v7956 = vpop.f32.mrf.mxu0
        %v7957 = vadd.f32 %v7828, %v7956
        %7958 = vmatmul.bf16.gmra.mxu0 %v5857
        %v7959 = vpop.f32.mrf.mxu0
        %v7960 = vadd.f32 %v7831, %v7959
        %v7961 = vpop.f32.mrf.mxu0
        %v7962 = vadd.f32 %v7833, %v7961
        %7963 = vmatmul.bf16.gmra.mxu0 %v5906
        %v7964 = vpop.f32.mrf.mxu0
        %v7965 = vadd.f32 %v7836, %v7964
        %v7966 = vpop.f32.mrf.mxu0
        %v7967 = vadd.f32 %v7838, %v7966
        %7968 = vmatmul.bf16.gmra.mxu0 %v5955
        %v7969 = vpop.f32.mrf.mxu0
        %v7970 = vadd.f32 %v7841, %v7969
        %v7971 = vpop.f32.mrf.mxu0
        %v7972 = vadd.f32 %v7843, %v7971
        %7973 = vmatmul.bf16.gmra.mxu0 %v6004
        %v7974 = vpop.f32.mrf.mxu0
        %v7975 = vadd.f32 %v7846, %v7974
        %v7976 = vpop.f32.mrf.mxu0
        %v7977 = vadd.f32 %v7848, %v7976
        %7978 = vmatmul.bf16.gmra.mxu0 %v6053
        %v7979 = vpop.f32.mrf.mxu0
        %v7980 = vadd.f32 %v7851, %v7979
        %v7981 = vpop.f32.mrf.mxu0
        %v7982 = vadd.f32 %v7853, %v7981
        %7983 = vmatmul.bf16.gmra.mxu0 %v6102
        %v7984 = vpop.f32.mrf.mxu0
        %v7985 = vadd.f32 %v7856, %v7984
        %v7986 = vpop.f32.mrf.mxu0
        %v7987 = vadd.f32 %v7858, %v7986
        %7988 = vmatmul.bf16.gmra.mxu0 %v6151
        %v7989 = vpop.f32.mrf.mxu0
        %v7990 = vadd.f32 %v7861, %v7989
        %v7991 = vpop.f32.mrf.mxu0
        %v7992 = vadd.f32 %v7863, %v7991
        %7993 = vmatmul.bf16.gmra.mxu0 %v6200
        %v7994 = vpop.f32.mrf.mxu0
        %v7995 = vadd.f32 %v7866, %v7994
        %v7996 = vpop.f32.mrf.mxu0
        %v7997 = vadd.f32 %v7868, %v7996
        %7998 = vmatmul.bf16.gmra.mxu0 %v6249
        %v7999 = vpop.f32.mrf.mxu0
        %v8000 = vadd.f32 %v7871, %v7999
        %v8001 = vpop.f32.mrf.mxu0
        %v8002 = vadd.f32 %v7873, %v8001
        %8003 = vmatmul.bf16.gmra.mxu0 %v6298
        %v8004 = vpop.f32.mrf.mxu0
        %v8005 = vadd.f32 %v7876, %v8004
        %v8006 = vpop.f32.mrf.mxu0
        %v8007 = vadd.f32 %v7878, %v8006
        %8008 = vmatmul.bf16.gmra.mxu0 %v6336
        %v8009 = vpop.f32.mrf.mxu0
        %v8010 = vadd.f32 %v7881, %v8009
        %v8011 = vpop.f32.mrf.mxu0
        %v8012 = vadd.f32 %v7883, %v8011
        %8013 = vmatmul.bf16.gmra.mxu0 %v6391
        %v8014 = vpop.f32.mrf.mxu0
        %v8015 = vadd.f32 %v7886, %v8014
        %v8016 = vpop.f32.mrf.mxu0
        %v8017 = vadd.f32 %v7888, %v8016
        %8018 = vdwg.mxu0
        %8019 = vmatpush.bf16.msra.mxu0 %v6914
        %8020 = vmatpush.bf16.msra.mxu0 %v6913
        %8021 = vmatpush.bf16.msra.mxu0 %v6912
        %8022 = vmatpush.bf16.msra.mxu0 %v6911
        %8023 = vmatpush.bf16.msra.mxu0 %v6910
        %8024 = vmatpush.bf16.msra.mxu0 %v6909
        %8025 = vmatpush.bf16.msra.mxu0 %v6908
        %8026 = vmatpush.bf16.msra.mxu0 %v6907
        %8027 = vmatmul.bf16.gmra.mxu0 %v5253
        %v8028 = vpop.f32.mrf.mxu0
        %v8029 = vadd.f32 %v7900, %v8028
        %v8030 = vpop.f32.mrf.mxu0
        %v8031 = vadd.f32 %v7902, %v8030
        %8032 = vmatmul.bf16.gmra.mxu0 %v5324
        %v8033 = vpop.f32.mrf.mxu0
        %v8034 = vadd.f32 %v7905, %v8033
        %v8035 = vpop.f32.mrf.mxu0
        %v8036 = vadd.f32 %v7907, %v8035
        %8037 = vmatmul.bf16.gmra.mxu0 %v5376
        %v8038 = vpop.f32.mrf.mxu0
        %v8039 = vadd.f32 %v7910, %v8038
        %v8040 = vpop.f32.mrf.mxu0
        %v8041 = vadd.f32 %v7912, %v8040
        %8042 = vmatmul.bf16.gmra.mxu0 %v5425
        %v8043 = vpop.f32.mrf.mxu0
        %v8044 = vadd.f32 %v7915, %v8043
        %v8045 = vpop.f32.mrf.mxu0
        %v8046 = vadd.f32 %v7917, %v8045
        %8047 = vmatmul.bf16.gmra.mxu0 %v5474
        %v8048 = vpop.f32.mrf.mxu0
        %v8049 = vadd.f32 %v7920, %v8048
        %v8050 = vpop.f32.mrf.mxu0
        %v8051 = vadd.f32 %v7922, %v8050
        %8052 = vmatmul.bf16.gmra.mxu0 %v5523
        %v8053 = vpop.f32.mrf.mxu0
        %v8054 = vadd.f32 %v7925, %v8053
        %v8055 = vpop.f32.mrf.mxu0
        %v8056 = vadd.f32 %v7927, %v8055
        %8057 = vmatmul.bf16.gmra.mxu0 %v5572
        %v8058 = vpop.f32.mrf.mxu0
        %v8059 = vadd.f32 %v7930, %v8058
        %v8060 = vpop.f32.mrf.mxu0
        %v8061 = vadd.f32 %v7932, %v8060
        %8062 = vmatmul.bf16.gmra.mxu0 %v5621
        %v8063 = vpop.f32.mrf.mxu0
        %v8064 = vadd.f32 %v7935, %v8063
        %v8065 = vpop.f32.mrf.mxu0
        %v8066 = vadd.f32 %v7937, %v8065
        %8067 = vmatmul.bf16.gmra.mxu0 %v5670
        %v8068 = vpop.f32.mrf.mxu0
        %v8069 = vadd.f32 %v7940, %v8068
        %v8070 = vpop.f32.mrf.mxu0
        %v8071 = vadd.f32 %v7942, %v8070
        %8072 = vmatmul.bf16.gmra.mxu0 %v5719
        %v8073 = vpop.f32.mrf.mxu0
        %v8074 = vadd.f32 %v7945, %v8073
        %v8075 = vpop.f32.mrf.mxu0
        %v8076 = vadd.f32 %v7947, %v8075
        %8077 = vmatmul.bf16.gmra.mxu0 %v5768
        %v8078 = vpop.f32.mrf.mxu0
        %v8079 = vadd.f32 %v7950, %v8078
        %v8080 = vpop.f32.mrf.mxu0
        %v8081 = vadd.f32 %v7952, %v8080
        %8082 = vmatmul.bf16.gmra.mxu0 %v5817
        %v8083 = vpop.f32.mrf.mxu0
        %v8084 = vadd.f32 %v7955, %v8083
        %v8085 = vpop.f32.mrf.mxu0
        %v8086 = vadd.f32 %v7957, %v8085
        %8087 = vmatmul.bf16.gmra.mxu0 %v5866
        %v8088 = vpop.f32.mrf.mxu0
        %v8089 = vadd.f32 %v7960, %v8088
        %v8090 = vpop.f32.mrf.mxu0
        %v8091 = vadd.f32 %v7962, %v8090
        %8092 = vmatmul.bf16.gmra.mxu0 %v5915
        %v8093 = vpop.f32.mrf.mxu0
        %v8094 = vadd.f32 %v7965, %v8093
        %v8095 = vpop.f32.mrf.mxu0
        %v8096 = vadd.f32 %v7967, %v8095
        %8097 = vmatmul.bf16.gmra.mxu0 %v5964
        %v8098 = vpop.f32.mrf.mxu0
        %v8099 = vadd.f32 %v7970, %v8098
        %v8100 = vpop.f32.mrf.mxu0
        %v8101 = vadd.f32 %v7972, %v8100
        %8102 = vmatmul.bf16.gmra.mxu0 %v6013
        %v8103 = vpop.f32.mrf.mxu0
        %v8104 = vadd.f32 %v7975, %v8103
        %v8105 = vpop.f32.mrf.mxu0
        %v8106 = vadd.f32 %v7977, %v8105
        %8107 = vmatmul.bf16.gmra.mxu0 %v6062
        %v8108 = vpop.f32.mrf.mxu0
        %v8109 = vadd.f32 %v7980, %v8108
        %v8110 = vpop.f32.mrf.mxu0
        %v8111 = vadd.f32 %v7982, %v8110
        %8112 = vmatmul.bf16.gmra.mxu0 %v6111
        %v8113 = vpop.f32.mrf.mxu0
        %v8114 = vadd.f32 %v7985, %v8113
        %v8115 = vpop.f32.mrf.mxu0
        %v8116 = vadd.f32 %v7987, %v8115
        %8117 = vmatmul.bf16.gmra.mxu0 %v6160
        %v8118 = vpop.f32.mrf.mxu0
        %v8119 = vadd.f32 %v7990, %v8118
        %v8120 = vpop.f32.mrf.mxu0
        %v8121 = vadd.f32 %v7992, %v8120
        %8122 = vmatmul.bf16.gmra.mxu0 %v6209
        %v8123 = vpop.f32.mrf.mxu0
        %v8124 = vadd.f32 %v7995, %v8123
        %v8125 = vpop.f32.mrf.mxu0
        %v8126 = vadd.f32 %v7997, %v8125
        %8127 = vmatmul.bf16.gmra.mxu0 %v6258
        %v8128 = vpop.f32.mrf.mxu0
        %v8129 = vadd.f32 %v8000, %v8128
        %v8130 = vpop.f32.mrf.mxu0
        %v8131 = vadd.f32 %v8002, %v8130
        %8132 = vmatmul.bf16.gmra.mxu0 %v6307
        %v8133 = vpop.f32.mrf.mxu0
        %v8134 = vadd.f32 %v8005, %v8133
        %v8135 = vpop.f32.mrf.mxu0
        %v8136 = vadd.f32 %v8007, %v8135
        %8137 = vmatmul.bf16.gmra.mxu0 %v6337
        %v8138 = vpop.f32.mrf.mxu0
        %v8139 = vadd.f32 %v8010, %v8138
        %v8140 = vpop.f32.mrf.mxu0
        %v8141 = vadd.f32 %v8012, %v8140
        %8142 = vmatmul.bf16.gmra.mxu0 %v6400
        %v8143 = vpop.f32.mrf.mxu0
        %v8144 = vadd.f32 %v8015, %v8143
        %v8145 = vpop.f32.mrf.mxu0
        %v8146 = vadd.f32 %v8017, %v8145
        %8147 = vdwg.mxu0
        %v8148 = vadd.f32 %v8029, %v5072
        %v8149 = vadd.f32 %v8031, %v5073
        %v8150 = vadd.f32 %v8034, %v5074
        %v8151 = vadd.f32 %v8036, %v5075
        %v8152 = vadd.f32 %v8039, %v5076
        %v8153 = vadd.f32 %v8041, %v5077
        %v8154 = vadd.f32 %v8044, %v5078
        %v8155 = vadd.f32 %v8046, %v5079
        %v8156 = vadd.f32 %v8049, %v5080
        %v8157 = vadd.f32 %v8051, %v5081
        %v8158 = vadd.f32 %v8054, %v5082
        %v8159 = vadd.f32 %v8056, %v5083
        %v8160 = vadd.f32 %v8059, %v5084
        %v8161 = vadd.f32 %v8061, %v5085
        %v8162 = vadd.f32 %v8064, %v5086
        %v8163 = vadd.f32 %v8066, %v5087
        %v8164 = vadd.f32 %v8069, %v5088
        %v8165 = vadd.f32 %v8071, %v5089
        %v8166 = vadd.f32 %v8074, %v5090
        %v8167 = vadd.f32 %v8076, %v5091
        %v8168 = vadd.f32 %v8079, %v5092
        %v8169 = vadd.f32 %v8081, %v5093
        %v8170 = vadd.f32 %v8084, %v5094
        %v8171 = vadd.f32 %v8086, %v5095
        %v8172 = vadd.f32 %v8089, %v5096
        %v8173 = vadd.f32 %v8091, %v5097
        %v8174 = vadd.f32 %v8094, %v5098
        %v8175 = vadd.f32 %v8096, %v5099
        %v8176 = vadd.f32 %v8099, %v5100
        %v8177 = vadd.f32 %v8101, %v5101
        %v8178 = vadd.f32 %v8104, %v5102
        %v8179 = vadd.f32 %v8106, %v5103
        %v8180 = vadd.f32 %v8109, %v5104
        %v8181 = vadd.f32 %v8111, %v5105
        %v8182 = vadd.f32 %v8114, %v5106
        %v8183 = vadd.f32 %v8116, %v5107
        %v8184 = vadd.f32 %v8119, %v5108
        %v8185 = vadd.f32 %v8121, %v5109
        %v8186 = vadd.f32 %v8124, %v5110
        %v8187 = vadd.f32 %v8126, %v5111
        %v8188 = vadd.f32 %v8129, %v5112
        %v8189 = vadd.f32 %v8131, %v5113
        %v8190 = vadd.f32 %v8134, %v5114
        %v8191 = vadd.f32 %v8136, %v5115
        %v8192 = vadd.f32 %v8139, %v5116
        %v8193 = vadd.f32 %v8141, %v5117
        %v8194 = vadd.f32 %v8144, %v5118
        %v8195 = vadd.f32 %v8146, %v5119
        %v8196 = vmax.f32 %v8148, 0.0
        %v8197 = vmax.f32 %v8149, 0.0
        %v8198 = vmax.f32 %v8150, 0.0
        %v8199 = vmax.f32 %v8151, 0.0
        %v8200 = vmax.f32 %v8152, 0.0
        %v8201 = vmax.f32 %v8153, 0.0
        %v8202 = vmax.f32 %v8154, 0.0
        %v8203 = vmax.f32 %v8155, 0.0
        %v8204 = vmax.f32 %v8156, 0.0
        %v8205 = vmax.f32 %v8157, 0.0
        %v8206 = vmax.f32 %v8158, 0.0
        %v8207 = vmax.f32 %v8159, 0.0
        %v8208 = vmax.f32 %v8160, 0.0
        %v8209 = vmax.f32 %v8161, 0.0
        %v8210 = vmax.f32 %v8162, 0.0
        %v8211 = vmax.f32 %v8163, 0.0
        %v8212 = vmax.f32 %v8164, 0.0
        %v8213 = vmax.f32 %v8165, 0.0
        %v8214 = vmax.f32 %v8166, 0.0
        %v8215 = vmax.f32 %v8167, 0.0
        %v8216 = vmax.f32 %v8168, 0.0
        %v8217 = vmax.f32 %v8169, 0.0
        %v8218 = vmax.f32 %v8170, 0.0
        %v8219 = vmax.f32 %v8171, 0.0
        %v8220 = vmax.f32 %v8172, 0.0
        %v8221 = vmax.f32 %v8173, 0.0
        %v8222 = vmax.f32 %v8174, 0.0
        %v8223 = vmax.f32 %v8175, 0.0
        %v8224 = vmax.f32 %v8176, 0.0
        %v8225 = vmax.f32 %v8177, 0.0
        %v8226 = vmax.f32 %v8178, 0.0
        %v8227 = vmax.f32 %v8179, 0.0
        %v8228 = vmax.f32 %v8180, 0.0
        %v8229 = vmax.f32 %v8181, 0.0
        %v8230 = vmax.f32 %v8182, 0.0
        %v8231 = vmax.f32 %v8183, 0.0
        %v8232 = vmax.f32 %v8184, 0.0
        %v8233 = vmax.f32 %v8185, 0.0
        %v8234 = vmax.f32 %v8186, 0.0
        %v8235 = vmax.f32 %v8187, 0.0
        %v8236 = vmax.f32 %v8188, 0.0
        %v8237 = vmax.f32 %v8189, 0.0
        %v8238 = vmax.f32 %v8190, 0.0
        %v8239 = vmax.f32 %v8191, 0.0
        %v8240 = vmax.f32 %v8192, 0.0
        %v8241 = vmax.f32 %v8193, 0.0
        %v8242 = vmax.f32 %v8194, 0.0
        %v8243 = vmax.f32 %v8195, 0.0
        %8244 = vst [vmem:[%s277] sm:$0xff] %v8196
        %8245 = vst [vmem:[%s277 + $0x8] sm:$0xff] %v8197
        %8246 = vst [vmem:[%s277 + $0x10] sm:$0xff] %v8198
        %8247 = vst [vmem:[%s277 + $0x18] sm:$0xff] %v8199
        %8248 = vst [vmem:[%s277 + $0x20] sm:$0xff] %v8200
        %8249 = vst [vmem:[%s277 + $0x28] sm:$0xff] %v8201
        %8250 = vst [vmem:[%s277 + $0x30] sm:$0xff] %v8202
        %8251 = vst [vmem:[%s277 + $0x38] sm:$0xff] %v8203
        %8252 = vst [vmem:[%s277 + $0x40] sm:$0xff] %v8204
        %8253 = vst [vmem:[%s277 + $0x48] sm:$0xff] %v8205
        %8254 = vst [vmem:[%s277 + $0x50] sm:$0xff] %v8206
        %8255 = vst [vmem:[%s277 + $0x58] sm:$0xff] %v8207
        %8256 = vst [vmem:[%s277 + $0x60] sm:$0xff] %v8208
        %8257 = vst [vmem:[%s277 + $0x68] sm:$0xff] %v8209
        %8258 = vst [vmem:[%s277 + $0x70] sm:$0xff] %v8210
        %8259 = vst [vmem:[%s277 + $0x78] sm:$0xff] %v8211
        %8260 = vst [vmem:[%s277 + $0x80] sm:$0xff] %v8212
        %8261 = vst [vmem:[%s277 + $0x88] sm:$0xff] %v8213
        %8262 = vst [vmem:[%s277 + $0x90] sm:$0xff] %v8214
        %8263 = vst [vmem:[%s277 + $0x98] sm:$0xff] %v8215
        %8264 = vst [vmem:[%s277 + $0xa0] sm:$0xff] %v8216
        %8265 = vst [vmem:[%s277 + $0xa8] sm:$0xff] %v8217
        %8266 = vst [vmem:[%s277 + $0xb0] sm:$0xff] %v8218
        %8267 = vst [vmem:[%s277 + $0xb8] sm:$0xff] %v8219
        %8268 = vst [vmem:[%s277 + $0xc0] sm:$0xff] %v8220
        %8269 = vst [vmem:[%s277 + $0xc8] sm:$0xff] %v8221
        %8270 = vst [vmem:[%s277 + $0xd0] sm:$0xff] %v8222
        %8271 = vst [vmem:[%s277 + $0xd8] sm:$0xff] %v8223
        %8272 = vst [vmem:[%s277 + $0xe0] sm:$0xff] %v8224
        %8273 = vst [vmem:[%s277 + $0xe8] sm:$0xff] %v8225
        %8274 = vst [vmem:[%s277 + $0xf0] sm:$0xff] %v8226
        %8275 = vst [vmem:[%s277 + $0xf8] sm:$0xff] %v8227
        %8276 = vst [vmem:[%s277 + $0x100] sm:$0xff] %v8228
        %8277 = vst [vmem:[%s277 + $0x108] sm:$0xff] %v8229
        %8278 = vst [vmem:[%s277 + $0x110] sm:$0xff] %v8230
        %8279 = vst [vmem:[%s277 + $0x118] sm:$0xff] %v8231
        %8280 = vst [vmem:[%s277 + $0x120] sm:$0xff] %v8232
        %8281 = vst [vmem:[%s277 + $0x128] sm:$0xff] %v8233
        %8282 = vst [vmem:[%s277 + $0x130] sm:$0xff] %v8234
        %8283 = vst [vmem:[%s277 + $0x138] sm:$0xff] %v8235
        %8284 = vst [vmem:[%s277 + $0x140] sm:$0xff] %v8236
        %8285 = vst [vmem:[%s277 + $0x148] sm:$0xff] %v8237
        %8286 = vst [vmem:[%s277 + $0x150] sm:$0xff] %v8238
        %8287 = vst [vmem:[%s277 + $0x158] sm:$0xff] %v8239
        %8288 = vst [vmem:[%s277 + $0x160] sm:$0xff] %v8240
        %8289 = vst [vmem:[%s277 + $0x168] sm:$0xff] %v8241
        %8290 = vst [vmem:[%s277 + $0x170] sm:$0xff] %v8242
        %8291 = vst [vmem:[%s277 + $0x178] sm:$0xff] %v8243
        %s8292 = sand.u32 %s141, 1
        %s8293 = scalar_lea.sflag [#allocation4], %s8292
        %s8294 = sand.u32 %s141, 1
        %s8295 = smul.addr %s8294, 384
        %s8296 = scalar_lea.vmem [#allocation8], %s8295
        // Predicated region
        $region53: #{tpu_custom_call.1} parent=39 // pred_check
          %p8297 = pneg %p151
        $region54: #{tpu_custom_call.1} parent=39 // pred_check_branch
          %8299 = sbr.rel (%p8297) target = $region56
        $region55: #{tpu_custom_call.1} parent=39 // pred_region
          %8301 = vsyncadd %s8293, 0
          %s8302 = smul.addr %s23, 48
          %s8303 = smul.addr %s8302, 8
          %s8304 = scalar_lea.hbm %s5, %s8303
          %s8305 = sshll.u32 %s8296, 4
          %s8306 = int_to_ptr.vmem [resolvable:$true] %s8305
          %s8307 = sshll.u32 %s8304, 4
          %s8308 = int_to_ptr.hbm [resolvable:$true] %s8307
          %8313 = dma.vmem_to_hbm [thread:$0]  %s8306, 6144, %s8308, %s8293, 128, 128, 8
        $region56: #{tpu_custom_call.1} parent=39 // pred_fallthru
          _
      $region40: #{tpu_custom_call.1} parent=5 // pred_fallthru
        _
      %p8314 = scmp.le.s32.totalorder 2, %s18
      // Predicated region
      $region57: #{tpu_custom_call.1} parent=5 // pred_check
        %p8315 = pneg %p8314
      $region58: #{tpu_custom_call.1} parent=5 // pred_check_branch
        %8317 = sbr.rel (%p8315) target = $region60
      $region59: #{tpu_custom_call.1} parent=5 // pred_region
        %s8318 = ssub.s32 %s18, 2
        // Predicated region
        $region61: #{tpu_custom_call.1} parent=59 // pred_check
          %p8319 = pneg %p157
        $region62: #{tpu_custom_call.1} parent=59 // pred_check_branch
          %8321 = sbr.rel (%p8319) target = $region64
        $region63: #{tpu_custom_call.1} parent=59 // pred_region
          %s8322 = sand.u32 %s142, 1
          %s8323 = scalar_lea.sflag [#allocation4], %s8322
          %s8324 = sand.u32 %s142, 1
          %s8325 = smul.addr %s8324, 384
          %s8326 = scalar_lea.vmem [#allocation8], %s8325
          %8328 = dma.done %s8323, 6144
        $region64: #{tpu_custom_call.1} parent=59 // pred_fallthru
          _
      $region60: #{tpu_custom_call.1} parent=5 // pred_fallthru
        _
    $region6: #{tpu_custom_call.1} parent=1 // loop_footer
      %s22 = sadd.s32 1, %s18
    $region7: #{tpu_custom_call.1} parent=1 // loop_footer_branch
      %17 = sbr.rel target = $region3
    $region8: #{tpu_custom_call.1} parent=1 // loop_exit
      _
    %8329 = vsyncpa [#allocation3], 1
    %s8330 = scalar_lea.sflag [#allocation3], 1
    %8331 = vsyncpa %s8330, 1
    %8332 = vsyncpa [#allocation6], 1
    %8333 = vsyncpa [#allocation4], 1
    %s8334 = scalar_lea.sflag [#allocation4], 1
    %8335 = vsyncpa %s8334, 1

</llo_original>
